<compile_context>
chip_gen: v5e
topology: v5e:2x2
jax: 0.10.0
libtpu: 0.0.40
codegen_flags: <defaults>
</compile_context>

<pallas_src>
import functools

import jax
import jax.numpy as jnp
from jax.experimental import pallas as pl
from jax.experimental.pallas import tpu as pltpu

F32 = jnp.float32
_VMEM_LIMIT = 32 * 1024 * 1024  # explicit scoped-VMEM cap; safe on v5e/v6e (128 MiB) and v7x (64 MiB)


# ----------------------------- helpers -----------------------------

def _cparams(*sem):
    return pltpu.CompilerParams(dimension_semantics=sem,
                                vmem_limit_bytes=_VMEM_LIMIT)


def _pick_block(fb, max_bk=256):
    """Largest divisor of fb that is <= max_bk, preferring >= 2 grid steps so both v7x
    TensorCores get work while keeping blocks large enough to amortize per-step overhead."""
    cap = min(max_bk, fb)
    if fb >= 2:
        cap = max(min(cap, fb // 2), 1)
    bk = max(cap, 1)
    while fb % bk != 0:
        bk -= 1
    return bk


def _sym(x):
    return 0.5 * (x + jnp.swapaxes(x, -1, -2))


# ----------------------------- Pallas kernels -----------------------------
#
# All symmetrizations inside kernels use the identity
#   transpose(einsum('bik,bjk->bij', A, B)) == einsum('bik,bjk->bij', B, A)
# so no in-kernel transpose is ever needed and outputs are exactly symmetric.


def _reig_bimap_kernel(u_ref, d_ref, w_ref, o_ref, *, eps):
    """Fused ReLUConvBNSPDNet body for one batch element:
       X_c = U_c relu(L_c) U_c^T  (ReEig recon),  Y_o = sym( sum_c W_oc X_c W_oc^T )  (BiMap)."""
    u = u_ref[0]                                    # (Ci, N, N) eigenvectors of the input SPDs
    d = jnp.maximum(d_ref[0], eps)                  # (Ci, 1, N)  ReEig eigenvalue rectification
    w = w_ref[...]                                  # (Co, Ci, N, N)
    x = jnp.einsum('cik,cjk->cij', u * d, u, preferred_element_type=F32)   # U relu(L) U^T
    co = w.shape[0]
    for o in range(co):                             # static unroll over output channels
        wo = w[o]                                   # (Ci, N, N)
        p = jnp.einsum('cij,cjk->cik', wo, x, preferred_element_type=F32)  # W X
        y = jnp.einsum('cik,cjk->cij', p, wo, preferred_element_type=F32)  # (W X) W^T
        yt = jnp.einsum('cik,cjk->cij', wo, p, preferred_element_type=F32)  # its transpose
        o_ref[0, o] = 0.5 * jnp.sum(y + yt, axis=0)


def _bary_prep_kernel(u_ref, d_ref, a_ref, b_ref, gs_ref, y_ref, *, eps):
    """From eig(G0): emit G0^{1/2} and the two whitened operands
       YA = G0^{-1/2} A G0^{-1/2}, YB = G0^{-1/2} B G0^{-1/2} (G0^{-1/2} never leaves VMEM)."""
    u = u_ref[...]                                  # (bk, N, N)
    d = jnp.maximum(d_ref[...], eps)                # (bk, 1, N)
    sd = jnp.sqrt(d)
    isd = 1.0 / sd
    g_sqrt = jnp.einsum('bik,bjk->bij', u * sd, u, preferred_element_type=F32)
    g_isqrt = jnp.einsum('bik,bjk->bij', u * isd, u, preferred_element_type=F32)
    gs_ref[...] = g_sqrt

    def whiten(x):
        p = jnp.einsum('bij,bjk->bik', g_isqrt, x, preferred_element_type=F32)
        y = jnp.einsum('bik,bjk->bij', p, g_isqrt, preferred_element_type=F32)
        yt = jnp.einsum('bik,bjk->bij', g_isqrt, p, preferred_element_type=F32)
        return 0.5 * (y + yt)

    y_ref[0] = whiten(a_ref[...])
    y_ref[1] = whiten(b_ref[...])


def _bary_log_kernel(u_ref, d_ref, t_ref, *, eps, w1, w2):
    """T = sym( w1 * logm(YA) + w2 * logm(YB) ) from the stacked eigendecomposition of YA/YB."""
    d = jnp.log(jnp.maximum(d_ref[...], eps))       # (2, bk, 1, N)
    u0 = u_ref[0]                                   # (bk, N, N)
    u1 = u_ref[1]
    d0 = d[0]
    d1 = d[1]
    la = jnp.einsum('bik,bjk->bij', u0 * d0, u0, preferred_element_type=F32)
    lat = jnp.einsum('bik,bjk->bij', u0, u0 * d0, preferred_element_type=F32)
    lb = jnp.einsum('bik,bjk->bij', u1 * d1, u1, preferred_element_type=F32)
    lbt = jnp.einsum('bik,bjk->bij', u1, u1 * d1, preferred_element_type=F32)
    t_ref[...] = 0.5 * (w1 * (la + lat) + w2 * (lb + lbt))


def _bary_exp_kernel(u_ref, d_ref, gs_ref, o_ref):
    """Out = sym( G0^{1/2} expm(T) G0^{1/2} ) from eig(T)."""
    u = u_ref[...]                                  # (bk, N, N)
    ed = jnp.exp(d_ref[...])                        # (bk, 1, N)
    expt = jnp.einsum('bik,bjk->bij', u * ed, u, preferred_element_type=F32)
    gs = gs_ref[...]
    p = jnp.einsum('bij,bjk->bik', gs, expt, preferred_element_type=F32)
    y = jnp.einsum('bik,bjk->bij', p, gs, preferred_element_type=F32)
    yt = jnp.einsum('bik,bjk->bij', gs, p, preferred_element_type=F32)
    o_ref[...] = 0.5 * (y + yt)


# ----------------------------- SPD building blocks -----------------------------

def _reig_bimap(u, d, w, eps):
    """u: (B, Ci, N, N) eigvecs, d: (B, Ci, 1, N) eigvals, w: (Co, Ci, N, N) -> (B, Co, N, N)."""
    b, ci, n, _ = u.shape
    co = w.shape[0]
    return pl.pallas_call(
        functools.partial(_reig_bimap_kernel, eps=eps),
        out_shape=jax.ShapeDtypeStruct((b, co, n, n), F32),
        grid=(b,),
        in_specs=[pl.BlockSpec((1, ci, n, n), lambda i: (i, 0, 0, 0)),
                  pl.BlockSpec((1, ci, 1, n), lambda i: (i, 0, 0, 0)),
                  pl.BlockSpec((co, ci, n, n), lambda i: (0, 0, 0, 0))],
        out_specs=pl.BlockSpec((1, co, n, n), lambda i: (i, 0, 0, 0)),
        compiler_params=_cparams("parallel"),
    )(u, d, w)


def preprocess_pair(s0, s1, w0, w1, eps=1e-4):
    """Both ReLUConvBNSPDNet preprocess paths with a single batched eigh (ReEig) call.
    # TODO(synk): BatchNormSPD (Riemannian batch norm, nn_spd) source unavailable; omitted."""
    b, c0, n, _ = s0.shape
    _, c1, _, _ = s1.shape
    stacked = jnp.concatenate(
        [_sym(s0).reshape(b * c0, n, n), _sym(s1).reshape(b * c1, n, n)], axis=0)
    d, u = jnp.linalg.eigh(stacked)                  # one eigh for both preprocess paths
    d0 = d[: b * c0].reshape(b, c0, 1, n).astype(F32)
    u0 = u[: b * c0].reshape(b, c0, n, n).astype(F32)
    d1 = d[b * c0:].reshape(b, c1, 1, n).astype(F32)
    u1 = u[b * c0:].reshape(b, c1, n, n).astype(F32)
    return _reig_bimap(u0, d0, w0, eps), _reig_bimap(u1, d1, w1, eps)


def bary_geom_pair(a, b, w1=0.5, w2=0.5, eps=1e-8):
    """Weighted geometric barycenter of two SPD batches a, b: (FB, N, N).
    One Karcher-flow step from the weighted Euclidean mean:
      G0 = w1 A + w2 B
      G  = G0^{1/2} expm( w1 logm(G0^{-1/2} A G0^{-1/2})
                        + w2 logm(G0^{-1/2} B G0^{-1/2}) ) G0^{1/2}
    # TODO(synk): exact iteration count of functional.bary_geom_weightedbatch is not
    # reproducible without its source; a single weighted Karcher-flow step is used.
    """
    fb, n, _ = a.shape
    bk = _pick_block(fb)
    grid = (fb // bk,)

    # Weighted Euclidean mean + its eigendecomposition (a, b are exactly symmetric).
    g0 = w1 * a + w2 * b
    d0, u0 = jnp.linalg.eigh(g0)
    d0 = d0.reshape(fb, 1, n).astype(F32)
    u0 = u0.astype(F32)

    # Kernel 1: G0^{1/2} and both whitened operands in one launch.
    g_sqrt, y = pl.pallas_call(
        functools.partial(_bary_prep_kernel, eps=eps),
        out_shape=(jax.ShapeDtypeStruct((fb, n, n), F32),
                   jax.ShapeDtypeStruct((2, fb, n, n), F32)),
        grid=grid,
        in_specs=[pl.BlockSpec((bk, n, n), lambda i: (i, 0, 0)),
                  pl.BlockSpec((bk, 1, n), lambda i: (i, 0, 0)),
                  pl.BlockSpec((bk, n, n), lambda i: (i, 0, 0)),
                  pl.BlockSpec((bk, n, n), lambda i: (i, 0, 0))],
        out_specs=[pl.BlockSpec((bk, n, n), lambda i: (i, 0, 0)),
                   pl.BlockSpec((2, bk, n, n), lambda i: (0, i, 0, 0))],
        compiler_params=_cparams("parallel"),
    )(u0, d0, a, b)

    # One batched eigh for both whitened operands.
    dy, uy = jnp.linalg.eigh(y.reshape(2 * fb, n, n))
    dy = dy.reshape(2, fb, 1, n).astype(F32)
    uy = uy.reshape(2, fb, n, n).astype(F32)

    # Kernel 2: weighted log-mean T.
    t = pl.pallas_call(
        functools.partial(_bary_log_kernel, eps=eps, w1=w1, w2=w2),
        out_shape=jax.ShapeDtypeStruct((fb, n, n), F32),
        grid=grid,
        in_specs=[pl.BlockSpec((2, bk, n, n), lambda i: (0, i, 0, 0)),
                  pl.BlockSpec((2, bk, 1, n), lambda i: (0, i, 0, 0))],
        out_specs=pl.BlockSpec((bk, n, n), lambda i: (i, 0, 0)),
        compiler_params=_cparams("parallel"),
    )(uy, dy)

    dt, ut = jnp.linalg.eigh(t)
    dt = dt.reshape(fb, 1, n).astype(F32)
    ut = ut.astype(F32)

    # Kernel 3: exp-reconstruction + congruence with G0^{1/2} + symmetrization.
    return pl.pallas_call(
        _bary_exp_kernel,
        out_shape=jax.ShapeDtypeStruct((fb, n, n), F32),
        grid=grid,
        in_specs=[pl.BlockSpec((bk, n, n), lambda i: (i, 0, 0)),
                  pl.BlockSpec((bk, 1, n), lambda i: (i, 0, 0)),
                  pl.BlockSpec((bk, n, n), lambda i: (i, 0, 0))],
        out_specs=pl.BlockSpec((bk, n, n), lambda i: (i, 0, 0)),
        compiler_params=_cparams("parallel"),
    )(ut, dt, g_sqrt)


# ----------------------------- Cell -----------------------------

def init_bimap_weight(key, c_out, c_in, n_out, n_in):
    a = jax.random.normal(key, (c_out, c_in, n_out, n_in), dtype=jnp.float32)
    q, _ = jnp.linalg.qr(a)                 # per-(co, ci) semi-orthogonal map (Stiefel-like)
    return (q / jnp.sqrt(jnp.float32(c_in))).astype(jnp.float32)


class CellPallas:
    """Normal (non-reduction) SPD cell with the fixed synthetic genotype:
       ops = ('skip_connect',)*4, indices = (0, 1, 1, 2), concat = (2, 3)."""

    def __init__(self, key, c_prev_prev, c_prev, c, dim_in):
        k0, k1 = jax.random.split(key)
        self._steps = 2
        self._indices = (0, 1, 1, 2)
        self._concat = (2, 3)
        self.multiplier = len(self._concat)
        # preprocess0 / preprocess1 = ReLUConvBNSPDNet(C_in, C, dim_in, dim_in)
        self.w0 = init_bimap_weight(k0, c, c_prev_prev, dim_in, dim_in)
        self.w1 = init_bimap_weight(k1, c, c_prev, dim_in, dim_in)

    def __call__(self, s0, s1, drop_prob=0.0):
        # drop_prob is accepted but unused, exactly as in the reference forward() for skip ops.
        s0, s1 = preprocess_pair(s0, s1, self.w0, self.w1)
        states = [s0, s1]
        for i in range(self._steps):
            h1 = states[self._indices[2 * i]]       # op1 = skip_connect (identity)
            h2 = states[self._indices[2 * i + 1]]   # op2 = skip_connect (identity)
            b, c, n, _ = h1.shape
            # weights_batched = 1/2 for each of the 2 ops, per (batch, channel) SPD matrix
            s = bary_geom_pair(h1.reshape(b * c, n, n),
                               h2.reshape(b * c, n, n)).reshape(b, c, n, n)
            states.append(s)
        return jnp.concatenate([states[i] for i in self._concat], axis=1)


# ----------------------------- demo -----------------------------

if __name__ == "__main__":
    key = jax.random.PRNGKey(0)
    B, C, N = 2, 4, 16                        # batch, channels, SPD matrix dim
    k_s0, k_s1, k_cell = jax.random.split(key, 3)

    def make_spd(k, lead):
        a = jax.random.normal(k, lead + (N, N), dtype=jnp.float32)
        return (jnp.einsum('...ij,...kj->...ik', a, a) / N
                + 0.5 * jnp.eye(N, dtype=jnp.float32))

    s0 = make_spd(k_s0, (B, C))               # (2, 4, 16, 16)
    s1 = make_spd(k_s1, (B, C))               # (2, 4, 16, 16)

    cell = CellPallas(k_cell, c_prev_prev=C, c_prev=C, c=C, dim_in=N)
    fwd = jax.jit(lambda a, b: cell(a, b, 0.0))
    out = jax.block_until_ready(fwd(s0, s1))

    assert out.shape == (B, cell.multiplier * C, N, N), out.shape
    assert bool(jnp.all(jnp.isfinite(out)))
    # output channels are symmetric (SPD) matrices
    assert bool(jnp.allclose(out, jnp.swapaxes(out, -1, -2), atol=1e-4))
    print("KERNEL_OK")
</pallas_src>

<mosaic_0001>
module attributes {stable_mosaic.version = 11 : i64} {
  func.func @_reig_bimap_kernel(%arg0: i32, %arg1: memref<1x4x16x16xf32, #tpu.memory_space<vmem>>, %arg2: memref<1x4x1x16xf32, #tpu.memory_space<vmem>>, %arg3: memref<4x4x16x16xf32, #tpu.memory_space<vmem>>, %arg4: memref<1x4x16x16xf32, #tpu.memory_space<vmem>>) attributes {dimension_semantics = [#tpu.dimension_semantics<parallel>], iteration_bounds = array<i64: 2>, scalar_prefetch = 0 : i64, scratch_operands = 0 : i64, tpu.core_type = #tpu.core_type<tc>, window_params = [{transform_indices = @transform_0, window_bounds = array<i64: 1, 4, 16, 16>}, {transform_indices = @transform_1, window_bounds = array<i64: 1, 4, 1, 16>}, {pipeline_mode = #tpu.pipeline_mode<synchronous>, transform_indices = @transform_2, window_bounds = array<i64: 4, 4, 16, 16>}, {transform_indices = @transform_3, window_bounds = array<i64: 1, 4, 16, 16>}]} {
    %c0 = arith.constant 0 : index
    %c0_0 = arith.constant 0 : index
    %c0_1 = arith.constant 0 : index
    %c0_2 = arith.constant 0 : index
    %0 = vector.load %arg1[%c0, %c0_0, %c0_1, %c0_2] : memref<1x4x16x16xf32, #tpu.memory_space<vmem>>, vector<1x4x16x16xf32>
    %1 = vector.shape_cast %0 : vector<1x4x16x16xf32> to vector<4x16x16xf32>
    %c0_3 = arith.constant 0 : index
    %c0_4 = arith.constant 0 : index
    %c0_5 = arith.constant 0 : index
    %c0_6 = arith.constant 0 : index
    %2 = vector.load %arg2[%c0_3, %c0_4, %c0_5, %c0_6] : memref<1x4x1x16xf32, #tpu.memory_space<vmem>>, vector<1x4x1x16xf32>
    %3 = vector.shape_cast %2 : vector<1x4x1x16xf32> to vector<4x1x16xf32>
    %cst = arith.constant 9.99999974E-5 : f32
    %4 = vector.broadcast %cst : f32 to vector<4x1x16xf32>
    %5 = arith.maximumf %3, %4 : vector<4x1x16xf32>
    %c0_7 = arith.constant 0 : index
    %c0_8 = arith.constant 0 : index
    %c0_9 = arith.constant 0 : index
    %c0_10 = arith.constant 0 : index
    %6 = vector.load %arg3[%c0_7, %c0_8, %c0_9, %c0_10] : memref<4x4x16x16xf32, #tpu.memory_space<vmem>>, vector<4x4x16x16xf32>
    %7 = vector.broadcast %5 : vector<4x1x16xf32> to vector<4x16x16xf32>
    %8 = arith.mulf %1, %7 : vector<4x16x16xf32>
    "tpu.trace_start"() <{level = 10 : i32, message = "cik,cjk->cij"}> : () -> ()
    %cst_11 = arith.constant dense<0.000000e+00> : vector<4x16x16xf32>
    %9 = tpu.matmul %8, %1, %cst_11 {dimension_numbers = #tpu.dot_dimension_numbers<[2], [2], [1], [1], [0, 0, 0, 1, 1, 1], [0], [0]>} : vector<4x16x16xf32>, vector<4x16x16xf32>, vector<4x16x16xf32> -> vector<4x16x16xf32>
    "tpu.trace_stop"() : () -> ()
    %10 = vector.extract_strided_slice %6 {offsets = [0, 0, 0, 0], sizes = [1, 4, 16, 16], strides = [1, 1, 1, 1]} : vector<4x4x16x16xf32> to vector<1x4x16x16xf32>
    %11 = vector.shape_cast %10 : vector<1x4x16x16xf32> to vector<4x16x16xf32>
    "tpu.trace_start"() <{level = 10 : i32, message = "cij,cjk->cik"}> : () -> ()
    %cst_12 = arith.constant dense<0.000000e+00> : vector<4x16x16xf32>
    %12 = tpu.matmul %11, %9, %cst_12 {dimension_numbers = #tpu.dot_dimension_numbers<[2], [1], [1], [2], [0, 0, 0, 1, 1, 2], [0], [0]>} : vector<4x16x16xf32>, vector<4x16x16xf32>, vector<4x16x16xf32> -> vector<4x16x16xf32>
    "tpu.trace_stop"() : () -> ()
    "tpu.trace_start"() <{level = 10 : i32, message = "cik,cjk->cij"}> : () -> ()
    %cst_13 = arith.constant dense<0.000000e+00> : vector<4x16x16xf32>
    %13 = tpu.matmul %12, %11, %cst_13 {dimension_numbers = #tpu.dot_dimension_numbers<[2], [2], [1], [1], [0, 0, 0, 1, 1, 1], [0], [0]>} : vector<4x16x16xf32>, vector<4x16x16xf32>, vector<4x16x16xf32> -> vector<4x16x16xf32>
    %cst_14 = arith.constant dense<0.000000e+00> : vector<4x16x16xf32>
    %14 = tpu.matmul %11, %12, %cst_14 {dimension_numbers = #tpu.dot_dimension_numbers<[2], [2], [1], [1], [0, 0, 0, 1, 1, 1], [0], [0]>} : vector<4x16x16xf32>, vector<4x16x16xf32>, vector<4x16x16xf32> -> vector<4x16x16xf32>
    "tpu.trace_stop"() : () -> ()
    %15 = arith.addf %13, %14 : vector<4x16x16xf32>
    %cst_15 = arith.constant dense<0.000000e+00> : vector<16x16xf32>
    %16 = vector.multi_reduction <add>, %15, %cst_15 [0] : vector<4x16x16xf32> to vector<16x16xf32>
    %cst_16 = arith.constant 5.000000e-01 : f32
    %17 = vector.broadcast %cst_16 : f32 to vector<16x16xf32>
    %18 = arith.mulf %17, %16 : vector<16x16xf32>
    %c0_17 = arith.constant 0 : index
    %c0_18 = arith.constant 0 : index
    %c0_19 = arith.constant 0 : index
    %c0_20 = arith.constant 0 : index
    %19 = vector.load %arg4[%c0_17, %c0_18, %c0_19, %c0_20] : memref<1x4x16x16xf32, #tpu.memory_space<vmem>>, vector<1x1x16x16xf32>
    %20 = vector.shape_cast %19 : vector<1x1x16x16xf32> to vector<16x16xf32>
    %21 = vector.shape_cast %18 : vector<16x16xf32> to vector<1x1x16x16xf32>
    tpu.vector_store %arg4[%c0_17, %c0_18, %c0_19, %c0_20], %21 {strides = array<i32>} : memref<1x4x16x16xf32, #tpu.memory_space<vmem>>, vector<1x1x16x16xf32>,
    %22 = vector.extract_strided_slice %6 {offsets = [1, 0, 0, 0], sizes = [1, 4, 16, 16], strides = [1, 1, 1, 1]} : vector<4x4x16x16xf32> to vector<1x4x16x16xf32>
    %23 = vector.shape_cast %22 : vector<1x4x16x16xf32> to vector<4x16x16xf32>
    "tpu.trace_start"() <{level = 10 : i32, message = "cij,cjk->cik"}> : () -> ()
    %cst_21 = arith.constant dense<0.000000e+00> : vector<4x16x16xf32>
    %24 = tpu.matmul %23, %9, %cst_21 {dimension_numbers = #tpu.dot_dimension_numbers<[2], [1], [1], [2], [0, 0, 0, 1, 1, 2], [0], [0]>} : vector<4x16x16xf32>, vector<4x16x16xf32>, vector<4x16x16xf32> -> vector<4x16x16xf32>
    "tpu.trace_stop"() : () -> ()
    "tpu.trace_start"() <{level = 10 : i32, message = "cik,cjk->cij"}> : () -> ()
    %cst_22 = arith.constant dense<0.000000e+00> : vector<4x16x16xf32>
    %25 = tpu.matmul %24, %23, %cst_22 {dimension_numbers = #tpu.dot_dimension_numbers<[2], [2], [1], [1], [0, 0, 0, 1, 1, 1], [0], [0]>} : vector<4x16x16xf32>, vector<4x16x16xf32>, vector<4x16x16xf32> -> vector<4x16x16xf32>
    %cst_23 = arith.constant dense<0.000000e+00> : vector<4x16x16xf32>
    %26 = tpu.matmul %23, %24, %cst_23 {dimension_numbers = #tpu.dot_dimension_numbers<[2], [2], [1], [1], [0, 0, 0, 1, 1, 1], [0], [0]>} : vector<4x16x16xf32>, vector<4x16x16xf32>, vector<4x16x16xf32> -> vector<4x16x16xf32>
    "tpu.trace_stop"() : () -> ()
    %27 = arith.addf %25, %26 : vector<4x16x16xf32>
    %cst_24 = arith.constant dense<0.000000e+00> : vector<16x16xf32>
    %28 = vector.multi_reduction <add>, %27, %cst_24 [0] : vector<4x16x16xf32> to vector<16x16xf32>
    %cst_25 = arith.constant 5.000000e-01 : f32
    %29 = vector.broadcast %cst_25 : f32 to vector<16x16xf32>
    %30 = arith.mulf %29, %28 : vector<16x16xf32>
    %c0_26 = arith.constant 0 : index
    %c1 = arith.constant 1 : index
    %c0_27 = arith.constant 0 : index
    %c0_28 = arith.constant 0 : index
    %31 = vector.load %arg4[%c0_26, %c1, %c0_27, %c0_28] : memref<1x4x16x16xf32, #tpu.memory_space<vmem>>, vector<1x1x16x16xf32>
    %32 = vector.shape_cast %31 : vector<1x1x16x16xf32> to vector<16x16xf32>
    %33 = vector.shape_cast %30 : vector<16x16xf32> to vector<1x1x16x16xf32>
    tpu.vector_store %arg4[%c0_26, %c1, %c0_27, %c0_28], %33 {strides = array<i32>} : memref<1x4x16x16xf32, #tpu.memory_space<vmem>>, vector<1x1x16x16xf32>,
    %34 = vector.extract_strided_slice %6 {offsets = [2, 0, 0, 0], sizes = [1, 4, 16, 16], strides = [1, 1, 1, 1]} : vector<4x4x16x16xf32> to vector<1x4x16x16xf32>
    %35 = vector.shape_cast %34 : vector<1x4x16x16xf32> to vector<4x16x16xf32>
    "tpu.trace_start"() <{level = 10 : i32, message = "cij,cjk->cik"}> : () -> ()
    %cst_29 = arith.constant dense<0.000000e+00> : vector<4x16x16xf32>
    %36 = tpu.matmul %35, %9, %cst_29 {dimension_numbers = #tpu.dot_dimension_numbers<[2], [1], [1], [2], [0, 0, 0, 1, 1, 2], [0], [0]>} : vector<4x16x16xf32>, vector<4x16x16xf32>, vector<4x16x16xf32> -> vector<4x16x16xf32>
    "tpu.trace_stop"() : () -> ()
    "tpu.trace_start"() <{level = 10 : i32, message = "cik,cjk->cij"}> : () -> ()
    %cst_30 = arith.constant dense<0.000000e+00> : vector<4x16x16xf32>
    %37 = tpu.matmul %36, %35, %cst_30 {dimension_numbers = #tpu.dot_dimension_numbers<[2], [2], [1], [1], [0, 0, 0, 1, 1, 1], [0], [0]>} : vector<4x16x16xf32>, vector<4x16x16xf32>, vector<4x16x16xf32> -> vector<4x16x16xf32>
    %cst_31 = arith.constant dense<0.000000e+00> : vector<4x16x16xf32>
    %38 = tpu.matmul %35, %36, %cst_31 {dimension_numbers = #tpu.dot_dimension_numbers<[2], [2], [1], [1], [0, 0, 0, 1, 1, 1], [0], [0]>} : vector<4x16x16xf32>, vector<4x16x16xf32>, vector<4x16x16xf32> -> vector<4x16x16xf32>
    "tpu.trace_stop"() : () -> ()
    %39 = arith.addf %37, %38 : vector<4x16x16xf32>
    %cst_32 = arith.constant dense<0.000000e+00> : vector<16x16xf32>
    %40 = vector.multi_reduction <add>, %39, %cst_32 [0] : vector<4x16x16xf32> to vector<16x16xf32>
    %cst_33 = arith.constant 5.000000e-01 : f32
    %41 = vector.broadcast %cst_33 : f32 to vector<16x16xf32>
    %42 = arith.mulf %41, %40 : vector<16x16xf32>
    %c0_34 = arith.constant 0 : index
    %c2 = arith.constant 2 : index
    %c0_35 = arith.constant 0 : index
    %c0_36 = arith.constant 0 : index
    %43 = vector.load %arg4[%c0_34, %c2, %c0_35, %c0_36] : memref<1x4x16x16xf32, #tpu.memory_space<vmem>>, vector<1x1x16x16xf32>
    %44 = vector.shape_cast %43 : vector<1x1x16x16xf32> to vector<16x16xf32>
    %45 = vector.shape_cast %42 : vector<16x16xf32> to vector<1x1x16x16xf32>
    tpu.vector_store %arg4[%c0_34, %c2, %c0_35, %c0_36], %45 {strides = array<i32>} : memref<1x4x16x16xf32, #tpu.memory_space<vmem>>, vector<1x1x16x16xf32>,
    %46 = vector.extract_strided_slice %6 {offsets = [3, 0, 0, 0], sizes = [1, 4, 16, 16], strides = [1, 1, 1, 1]} : vector<4x4x16x16xf32> to vector<1x4x16x16xf32>
    %47 = vector.shape_cast %46 : vector<1x4x16x16xf32> to vector<4x16x16xf32>
    "tpu.trace_start"() <{level = 10 : i32, message = "cij,cjk->cik"}> : () -> ()
    %cst_37 = arith.constant dense<0.000000e+00> : vector<4x16x16xf32>
    %48 = tpu.matmul %47, %9, %cst_37 {dimension_numbers = #tpu.dot_dimension_numbers<[2], [1], [1], [2], [0, 0, 0, 1, 1, 2], [0], [0]>} : vector<4x16x16xf32>, vector<4x16x16xf32>, vector<4x16x16xf32> -> vector<4x16x16xf32>
    "tpu.trace_stop"() : () -> ()
    "tpu.trace_start"() <{level = 10 : i32, message = "cik,cjk->cij"}> : () -> ()
    %cst_38 = arith.constant dense<0.000000e+00> : vector<4x16x16xf32>
    %49 = tpu.matmul %48, %47, %cst_38 {dimension_numbers = #tpu.dot_dimension_numbers<[2], [2], [1], [1], [0, 0, 0, 1, 1, 1], [0], [0]>} : vector<4x16x16xf32>, vector<4x16x16xf32>, vector<4x16x16xf32> -> vector<4x16x16xf32>
    %cst_39 = arith.constant dense<0.000000e+00> : vector<4x16x16xf32>
    %50 = tpu.matmul %47, %48, %cst_39 {dimension_numbers = #tpu.dot_dimension_numbers<[2], [2], [1], [1], [0, 0, 0, 1, 1, 1], [0], [0]>} : vector<4x16x16xf32>, vector<4x16x16xf32>, vector<4x16x16xf32> -> vector<4x16x16xf32>
    "tpu.trace_stop"() : () -> ()
    %51 = arith.addf %49, %50 : vector<4x16x16xf32>
    %cst_40 = arith.constant dense<0.000000e+00> : vector<16x16xf32>
    %52 = vector.multi_reduction <add>, %51, %cst_40 [0] : vector<4x16x16xf32> to vector<16x16xf32>
    %cst_41 = arith.constant 5.000000e-01 : f32
    %53 = vector.broadcast %cst_41 : f32 to vector<16x16xf32>
    %54 = arith.mulf %53, %52 : vector<16x16xf32>
    %c0_42 = arith.constant 0 : index
    %c3 = arith.constant 3 : index
    %c0_43 = arith.constant 0 : index
    %c0_44 = arith.constant 0 : index
    %55 = vector.load %arg4[%c0_42, %c3, %c0_43, %c0_44] : memref<1x4x16x16xf32, #tpu.memory_space<vmem>>, vector<1x1x16x16xf32>
    %56 = vector.shape_cast %55 : vector<1x1x16x16xf32> to vector<16x16xf32>
    %57 = vector.shape_cast %54 : vector<16x16xf32> to vector<1x1x16x16xf32>
    tpu.vector_store %arg4[%c0_42, %c3, %c0_43, %c0_44], %57 {strides = array<i32>} : memref<1x4x16x16xf32, #tpu.memory_space<vmem>>, vector<1x1x16x16xf32>,
    return
  }
  func.func @transform_0(%arg0: i32) -> (i32, i32, i32, i32) {
    %c0_i32 = arith.constant 0 : i32
    %c0_i32_0 = arith.constant 0 : i32
    %c0_i32_1 = arith.constant 0 : i32
    %c0_i32_2 = arith.constant 0 : i32
    return %arg0, %c0_i32, %c0_i32_0, %c0_i32_1 : i32, i32, i32, i32
  }
  func.func @transform_1(%arg0: i32) -> (i32, i32, i32, i32) {
    %c0_i32 = arith.constant 0 : i32
    %c0_i32_0 = arith.constant 0 : i32
    %c0_i32_1 = arith.constant 0 : i32
    %c0_i32_2 = arith.constant 0 : i32
    return %arg0, %c0_i32, %c0_i32_0, %c0_i32_1 : i32, i32, i32, i32
  }
  func.func @transform_2(%arg0: i32) -> (i32, i32, i32, i32) {
    %c0_i32 = arith.constant 0 : i32
    %c0_i32_0 = arith.constant 0 : i32
    %c0_i32_1 = arith.constant 0 : i32
    %c0_i32_2 = arith.constant 0 : i32
    %c0_i32_3 = arith.constant 0 : i32
    return %c0_i32, %c0_i32_0, %c0_i32_1, %c0_i32_2 : i32, i32, i32, i32
  }
  func.func @transform_3(%arg0: i32) -> (i32, i32, i32, i32) {
    %c0_i32 = arith.constant 0 : i32
    %c0_i32_0 = arith.constant 0 : i32
    %c0_i32_1 = arith.constant 0 : i32
    %c0_i32_2 = arith.constant 0 : i32
    return %arg0, %c0_i32, %c0_i32_0, %c0_i32_1 : i32, i32, i32, i32
  }
}

module attributes {stable_mosaic.version = 11 : i64} {
  func.func @_bary_prep_kernel(%arg0: i32, %arg1: memref<4x16x16xf32, #tpu.memory_space<vmem>>, %arg2: memref<4x1x16xf32, #tpu.memory_space<vmem>>, %arg3: memref<4x16x16xf32, #tpu.memory_space<vmem>>, %arg4: memref<4x16x16xf32, #tpu.memory_space<vmem>>, %arg5: memref<4x16x16xf32, #tpu.memory_space<vmem>>, %arg6: memref<2x4x16x16xf32, #tpu.memory_space<vmem>>) attributes {dimension_semantics = [#tpu.dimension_semantics<parallel>], iteration_bounds = array<i64: 2>, scalar_prefetch = 0 : i64, scratch_operands = 0 : i64, tpu.core_type = #tpu.core_type<tc>, window_params = [{transform_indices = @transform_0, window_bounds = array<i64: 4, 16, 16>}, {transform_indices = @transform_1, window_bounds = array<i64: 4, 1, 16>}, {transform_indices = @transform_2, window_bounds = array<i64: 4, 16, 16>}, {transform_indices = @transform_3, window_bounds = array<i64: 4, 16, 16>}, {transform_indices = @transform_4, window_bounds = array<i64: 4, 16, 16>}, {transform_indices = @transform_5, window_bounds = array<i64: 2, 4, 16, 16>}]} {
    %c0 = arith.constant 0 : index
    %c0_0 = arith.constant 0 : index
    %c0_1 = arith.constant 0 : index
    %0 = vector.load %arg1[%c0, %c0_0, %c0_1] : memref<4x16x16xf32, #tpu.memory_space<vmem>>, vector<4x16x16xf32>
    %c0_2 = arith.constant 0 : index
    %c0_3 = arith.constant 0 : index
    %c0_4 = arith.constant 0 : index
    %1 = vector.load %arg2[%c0_2, %c0_3, %c0_4] : memref<4x1x16xf32, #tpu.memory_space<vmem>>, vector<4x1x16xf32>
    %cst = arith.constant 9.99999993E-9 : f32
    %2 = vector.broadcast %cst : f32 to vector<4x1x16xf32>
    %3 = arith.maximumf %1, %2 : vector<4x1x16xf32>
    %4 = math.sqrt %3 : vector<4x1x16xf32>
    %cst_5 = arith.constant 1.000000e+00 : f32
    %5 = vector.broadcast %cst_5 : f32 to vector<4x1x16xf32>
    %6 = arith.divf %5, %4 : vector<4x1x16xf32>
    %7 = vector.broadcast %4 : vector<4x1x16xf32> to vector<4x16x16xf32>
    %8 = arith.mulf %0, %7 : vector<4x16x16xf32>
    "tpu.trace_start"() <{level = 10 : i32, message = "bik,bjk->bij"}> : () -> ()
    %cst_6 = arith.constant dense<0.000000e+00> : vector<4x16x16xf32>
    %9 = tpu.matmul %8, %0, %cst_6 {dimension_numbers = #tpu.dot_dimension_numbers<[2], [2], [1], [1], [0, 0, 0, 1, 1, 1], [0], [0]>} : vector<4x16x16xf32>, vector<4x16x16xf32>, vector<4x16x16xf32> -> vector<4x16x16xf32>
    "tpu.trace_stop"() : () -> ()
    %10 = vector.broadcast %6 : vector<4x1x16xf32> to vector<4x16x16xf32>
    %11 = arith.mulf %0, %10 : vector<4x16x16xf32>
    "tpu.trace_start"() <{level = 10 : i32, message = "bik,bjk->bij"}> : () -> ()
    %cst_7 = arith.constant dense<0.000000e+00> : vector<4x16x16xf32>
    %12 = tpu.matmul %11, %0, %cst_7 {dimension_numbers = #tpu.dot_dimension_numbers<[2], [2], [1], [1], [0, 0, 0, 1, 1, 1], [0], [0]>} : vector<4x16x16xf32>, vector<4x16x16xf32>, vector<4x16x16xf32> -> vector<4x16x16xf32>
    "tpu.trace_stop"() : () -> ()
    %c0_8 = arith.constant 0 : index
    %c0_9 = arith.constant 0 : index
    %c0_10 = arith.constant 0 : index
    %13 = vector.load %arg5[%c0_8, %c0_9, %c0_10] : memref<4x16x16xf32, #tpu.memory_space<vmem>>, vector<4x16x16xf32>
    tpu.vector_store %arg5[%c0_8, %c0_9, %c0_10], %9 {strides = array<i32>} : memref<4x16x16xf32, #tpu.memory_space<vmem>>, vector<4x16x16xf32>,
    %c0_11 = arith.constant 0 : index
    %c0_12 = arith.constant 0 : index
    %c0_13 = arith.constant 0 : index
    %14 = vector.load %arg3[%c0_11, %c0_12, %c0_13] : memref<4x16x16xf32, #tpu.memory_space<vmem>>, vector<4x16x16xf32>
    "tpu.trace_start"() <{level = 10 : i32, message = "bij,bjk->bik"}> : () -> ()
    %cst_14 = arith.constant dense<0.000000e+00> : vector<4x16x16xf32>
    %15 = tpu.matmul %12, %14, %cst_14 {dimension_numbers = #tpu.dot_dimension_numbers<[2], [1], [1], [2], [0, 0, 0, 1, 1, 2], [0], [0]>} : vector<4x16x16xf32>, vector<4x16x16xf32>, vector<4x16x16xf32> -> vector<4x16x16xf32>
    "tpu.trace_stop"() : () -> ()
    "tpu.trace_start"() <{level = 10 : i32, message = "bik,bjk->bij"}> : () -> ()
    %cst_15 = arith.constant dense<0.000000e+00> : vector<4x16x16xf32>
    %16 = tpu.matmul %15, %12, %cst_15 {dimension_numbers = #tpu.dot_dimension_numbers<[2], [2], [1], [1], [0, 0, 0, 1, 1, 1], [0], [0]>} : vector<4x16x16xf32>, vector<4x16x16xf32>, vector<4x16x16xf32> -> vector<4x16x16xf32>
    %cst_16 = arith.constant dense<0.000000e+00> : vector<4x16x16xf32>
    %17 = tpu.matmul %12, %15, %cst_16 {dimension_numbers = #tpu.dot_dimension_numbers<[2], [2], [1], [1], [0, 0, 0, 1, 1, 1], [0], [0]>} : vector<4x16x16xf32>, vector<4x16x16xf32>, vector<4x16x16xf32> -> vector<4x16x16xf32>
    "tpu.trace_stop"() : () -> ()
    %18 = arith.addf %16, %17 : vector<4x16x16xf32>
    %cst_17 = arith.constant 5.000000e-01 : f32
    %19 = vector.broadcast %cst_17 : f32 to vector<4x16x16xf32>
    %20 = arith.mulf %19, %18 : vector<4x16x16xf32>
    %c0_18 = arith.constant 0 : index
    %c0_19 = arith.constant 0 : index
    %c0_20 = arith.constant 0 : index
    %c0_21 = arith.constant 0 : index
    %21 = vector.load %arg6[%c0_18, %c0_19, %c0_20, %c0_21] : memref<2x4x16x16xf32, #tpu.memory_space<vmem>>, vector<1x4x16x16xf32>
    %22 = vector.shape_cast %21 : vector<1x4x16x16xf32> to vector<4x16x16xf32>
    %23 = vector.shape_cast %20 : vector<4x16x16xf32> to vector<1x4x16x16xf32>
    tpu.vector_store %arg6[%c0_18, %c0_19, %c0_20, %c0_21], %23 {strides = array<i32>} : memref<2x4x16x16xf32, #tpu.memory_space<vmem>>, vector<1x4x16x16xf32>,
    %c0_22 = arith.constant 0 : index
    %c0_23 = arith.constant 0 : index
    %c0_24 = arith.constant 0 : index
    %24 = vector.load %arg4[%c0_22, %c0_23, %c0_24] : memref<4x16x16xf32, #tpu.memory_space<vmem>>, vector<4x16x16xf32>
    "tpu.trace_start"() <{level = 10 : i32, message = "bij,bjk->bik"}> : () -> ()
    %cst_25 = arith.constant dense<0.000000e+00> : vector<4x16x16xf32>
    %25 = tpu.matmul %12, %24, %cst_25 {dimension_numbers = #tpu.dot_dimension_numbers<[2], [1], [1], [2], [0, 0, 0, 1, 1, 2], [0], [0]>} : vector<4x16x16xf32>, vector<4x16x16xf32>, vector<4x16x16xf32> -> vector<4x16x16xf32>
    "tpu.trace_stop"() : () -> ()
    "tpu.trace_start"() <{level = 10 : i32, message = "bik,bjk->bij"}> : () -> ()
    %cst_26 = arith.constant dense<0.000000e+00> : vector<4x16x16xf32>
    %26 = tpu.matmul %25, %12, %cst_26 {dimension_numbers = #tpu.dot_dimension_numbers<[2], [2], [1], [1], [0, 0, 0, 1, 1, 1], [0], [0]>} : vector<4x16x16xf32>, vector<4x16x16xf32>, vector<4x16x16xf32> -> vector<4x16x16xf32>
    %cst_27 = arith.constant dense<0.000000e+00> : vector<4x16x16xf32>
    %27 = tpu.matmul %12, %25, %cst_27 {dimension_numbers = #tpu.dot_dimension_numbers<[2], [2], [1], [1], [0, 0, 0, 1, 1, 1], [0], [0]>} : vector<4x16x16xf32>, vector<4x16x16xf32>, vector<4x16x16xf32> -> vector<4x16x16xf32>
    "tpu.trace_stop"() : () -> ()
    %28 = arith.addf %26, %27 : vector<4x16x16xf32>
    %cst_28 = arith.constant 5.000000e-01 : f32
    %29 = vector.broadcast %cst_28 : f32 to vector<4x16x16xf32>
    %30 = arith.mulf %29, %28 : vector<4x16x16xf32>
    %c1 = arith.constant 1 : index
    %c0_29 = arith.constant 0 : index
    %c0_30 = arith.constant 0 : index
    %c0_31 = arith.constant 0 : index
    %31 = vector.load %arg6[%c1, %c0_29, %c0_30, %c0_31] : memref<2x4x16x16xf32, #tpu.memory_space<vmem>>, vector<1x4x16x16xf32>
    %32 = vector.shape_cast %31 : vector<1x4x16x16xf32> to vector<4x16x16xf32>
    %33 = vector.shape_cast %30 : vector<4x16x16xf32> to vector<1x4x16x16xf32>
    tpu.vector_store %arg6[%c1, %c0_29, %c0_30, %c0_31], %33 {strides = array<i32>} : memref<2x4x16x16xf32, #tpu.memory_space<vmem>>, vector<1x4x16x16xf32>,
    return
  }
  func.func @transform_0(%arg0: i32) -> (i32, i32, i32) {
    %c0_i32 = arith.constant 0 : i32
    %c0_i32_0 = arith.constant 0 : i32
    %c0_i32_1 = arith.constant 0 : i32
    return %arg0, %c0_i32, %c0_i32_0 : i32, i32, i32
  }
  func.func @transform_1(%arg0: i32) -> (i32, i32, i32) {
    %c0_i32 = arith.constant 0 : i32
    %c0_i32_0 = arith.constant 0 : i32
    %c0_i32_1 = arith.constant 0 : i32
    return %arg0, %c0_i32, %c0_i32_0 : i32, i32, i32
  }
  func.func @transform_2(%arg0: i32) -> (i32, i32, i32) {
    %c0_i32 = arith.constant 0 : i32
    %c0_i32_0 = arith.constant 0 : i32
    %c0_i32_1 = arith.constant 0 : i32
    return %arg0, %c0_i32, %c0_i32_0 : i32, i32, i32
  }
  func.func @transform_3(%arg0: i32) -> (i32, i32, i32) {
    %c0_i32 = arith.constant 0 : i32
    %c0_i32_0 = arith.constant 0 : i32
    %c0_i32_1 = arith.constant 0 : i32
    return %arg0, %c0_i32, %c0_i32_0 : i32, i32, i32
  }
  func.func @transform_4(%arg0: i32) -> (i32, i32, i32) {
    %c0_i32 = arith.constant 0 : i32
    %c0_i32_0 = arith.constant 0 : i32
    %c0_i32_1 = arith.constant 0 : i32
    return %arg0, %c0_i32, %c0_i32_0 : i32, i32, i32
  }
  func.func @transform_5(%arg0: i32) -> (i32, i32, i32, i32) {
    %c0_i32 = arith.constant 0 : i32
    %c0_i32_0 = arith.constant 0 : i32
    %c0_i32_1 = arith.constant 0 : i32
    %c0_i32_2 = arith.constant 0 : i32
    return %c0_i32, %arg0, %c0_i32_0, %c0_i32_1 : i32, i32, i32, i32
  }
}

module attributes {stable_mosaic.version = 11 : i64} {
  func.func @_bary_log_kernel(%arg0: i32, %arg1: memref<2x4x16x16xf32, #tpu.memory_space<vmem>>, %arg2: memref<2x4x1x16xf32, #tpu.memory_space<vmem>>, %arg3: memref<4x16x16xf32, #tpu.memory_space<vmem>>) attributes {dimension_semantics = [#tpu.dimension_semantics<parallel>], iteration_bounds = array<i64: 2>, scalar_prefetch = 0 : i64, scratch_operands = 0 : i64, tpu.core_type = #tpu.core_type<tc>, window_params = [{transform_indices = @transform_0, window_bounds = array<i64: 2, 4, 16, 16>}, {transform_indices = @transform_1, window_bounds = array<i64: 2, 4, 1, 16>}, {transform_indices = @transform_2, window_bounds = array<i64: 4, 16, 16>}]} {
    %c0 = arith.constant 0 : index
    %c0_0 = arith.constant 0 : index
    %c0_1 = arith.constant 0 : index
    %c0_2 = arith.constant 0 : index
    %0 = vector.load %arg2[%c0, %c0_0, %c0_1, %c0_2] : memref<2x4x1x16xf32, #tpu.memory_space<vmem>>, vector<2x4x1x16xf32>
    %cst = arith.constant 9.99999993E-9 : f32
    %1 = vector.broadcast %cst : f32 to vector<2x4x1x16xf32>
    %2 = arith.maximumf %0, %1 : vector<2x4x1x16xf32>
    %3 = math.log %2 : vector<2x4x1x16xf32>
    %c0_3 = arith.constant 0 : index
    %c0_4 = arith.constant 0 : index
    %c0_5 = arith.constant 0 : index
    %c0_6 = arith.constant 0 : index
    %4 = vector.load %arg1[%c0_3, %c0_4, %c0_5, %c0_6] : memref<2x4x16x16xf32, #tpu.memory_space<vmem>>, vector<1x4x16x16xf32>
    %5 = vector.shape_cast %4 : vector<1x4x16x16xf32> to vector<4x16x16xf32>
    %c1 = arith.constant 1 : index
    %c0_7 = arith.constant 0 : index
    %c0_8 = arith.constant 0 : index
    %c0_9 = arith.constant 0 : index
    %6 = vector.load %arg1[%c1, %c0_7, %c0_8, %c0_9] : memref<2x4x16x16xf32, #tpu.memory_space<vmem>>, vector<1x4x16x16xf32>
    %7 = vector.shape_cast %6 : vector<1x4x16x16xf32> to vector<4x16x16xf32>
    %8 = vector.extract_strided_slice %3 {offsets = [0, 0, 0, 0], sizes = [1, 4, 1, 16], strides = [1, 1, 1, 1]} : vector<2x4x1x16xf32> to vector<1x4x1x16xf32>
    %9 = vector.shape_cast %8 : vector<1x4x1x16xf32> to vector<4x1x16xf32>
    %10 = vector.extract_strided_slice %3 {offsets = [1, 0, 0, 0], sizes = [1, 4, 1, 16], strides = [1, 1, 1, 1]} : vector<2x4x1x16xf32> to vector<1x4x1x16xf32>
    %11 = vector.shape_cast %10 : vector<1x4x1x16xf32> to vector<4x1x16xf32>
    %12 = vector.broadcast %9 : vector<4x1x16xf32> to vector<4x16x16xf32>
    %13 = arith.mulf %5, %12 : vector<4x16x16xf32>
    "tpu.trace_start"() <{level = 10 : i32, message = "bik,bjk->bij"}> : () -> ()
    %cst_10 = arith.constant dense<0.000000e+00> : vector<4x16x16xf32>
    %14 = tpu.matmul %13, %5, %cst_10 {dimension_numbers = #tpu.dot_dimension_numbers<[2], [2], [1], [1], [0, 0, 0, 1, 1, 1], [0], [0]>} : vector<4x16x16xf32>, vector<4x16x16xf32>, vector<4x16x16xf32> -> vector<4x16x16xf32>
    "tpu.trace_stop"() : () -> ()
    %15 = vector.broadcast %9 : vector<4x1x16xf32> to vector<4x16x16xf32>
    %16 = arith.mulf %5, %15 : vector<4x16x16xf32>
    "tpu.trace_start"() <{level = 10 : i32, message = "bik,bjk->bij"}> : () -> ()
    %cst_11 = arith.constant dense<0.000000e+00> : vector<4x16x16xf32>
    %17 = tpu.matmul %5, %16, %cst_11 {dimension_numbers = #tpu.dot_dimension_numbers<[2], [2], [1], [1], [0, 0, 0, 1, 1, 1], [0], [0]>} : vector<4x16x16xf32>, vector<4x16x16xf32>, vector<4x16x16xf32> -> vector<4x16x16xf32>
    "tpu.trace_stop"() : () -> ()
    %18 = vector.broadcast %11 : vector<4x1x16xf32> to vector<4x16x16xf32>
    %19 = arith.mulf %7, %18 : vector<4x16x16xf32>
    "tpu.trace_start"() <{level = 10 : i32, message = "bik,bjk->bij"}> : () -> ()
    %cst_12 = arith.constant dense<0.000000e+00> : vector<4x16x16xf32>
    %20 = tpu.matmul %19, %7, %cst_12 {dimension_numbers = #tpu.dot_dimension_numbers<[2], [2], [1], [1], [0, 0, 0, 1, 1, 1], [0], [0]>} : vector<4x16x16xf32>, vector<4x16x16xf32>, vector<4x16x16xf32> -> vector<4x16x16xf32>
    "tpu.trace_stop"() : () -> ()
    %21 = vector.broadcast %11 : vector<4x1x16xf32> to vector<4x16x16xf32>
    %22 = arith.mulf %7, %21 : vector<4x16x16xf32>
    "tpu.trace_start"() <{level = 10 : i32, message = "bik,bjk->bij"}> : () -> ()
    %cst_13 = arith.constant dense<0.000000e+00> : vector<4x16x16xf32>
    %23 = tpu.matmul %7, %22, %cst_13 {dimension_numbers = #tpu.dot_dimension_numbers<[2], [2], [1], [1], [0, 0, 0, 1, 1, 1], [0], [0]>} : vector<4x16x16xf32>, vector<4x16x16xf32>, vector<4x16x16xf32> -> vector<4x16x16xf32>
    "tpu.trace_stop"() : () -> ()
    %24 = arith.addf %14, %17 : vector<4x16x16xf32>
    %cst_14 = arith.constant 5.000000e-01 : f32
    %25 = vector.broadcast %cst_14 : f32 to vector<4x16x16xf32>
    %26 = arith.mulf %25, %24 : vector<4x16x16xf32>
    %27 = arith.addf %20, %23 : vector<4x16x16xf32>
    %cst_15 = arith.constant 5.000000e-01 : f32
    %28 = vector.broadcast %cst_15 : f32 to vector<4x16x16xf32>
    %29 = arith.mulf %28, %27 : vector<4x16x16xf32>
    %30 = arith.addf %26, %29 : vector<4x16x16xf32>
    %cst_16 = arith.constant 5.000000e-01 : f32
    %31 = vector.broadcast %cst_16 : f32 to vector<4x16x16xf32>
    %32 = arith.mulf %31, %30 : vector<4x16x16xf32>
    %c0_17 = arith.constant 0 : index
    %c0_18 = arith.constant 0 : index
    %c0_19 = arith.constant 0 : index
    %33 = vector.load %arg3[%c0_17, %c0_18, %c0_19] : memref<4x16x16xf32, #tpu.memory_space<vmem>>, vector<4x16x16xf32>
    tpu.vector_store %arg3[%c0_17, %c0_18, %c0_19], %32 {strides = array<i32>} : memref<4x16x16xf32, #tpu.memory_space<vmem>>, vector<4x16x16xf32>,
    return
  }
  func.func @transform_0(%arg0: i32) -> (i32, i32, i32, i32) {
    %c0_i32 = arith.constant 0 : i32
    %c0_i32_0 = arith.constant 0 : i32
    %c0_i32_1 = arith.constant 0 : i32
    %c0_i32_2 = arith.constant 0 : i32
    return %c0_i32, %arg0, %c0_i32_0, %c0_i32_1 : i32, i32, i32, i32
  }
  func.func @transform_1(%arg0: i32) -> (i32, i32, i32, i32) {
    %c0_i32 = arith.constant 0 : i32
    %c0_i32_0 = arith.constant 0 : i32
    %c0_i32_1 = arith.constant 0 : i32
    %c0_i32_2 = arith.constant 0 : i32
    return %c0_i32, %arg0, %c0_i32_0, %c0_i32_1 : i32, i32, i32, i32
  }
  func.func @transform_2(%arg0: i32) -> (i32, i32, i32) {
    %c0_i32 = arith.constant 0 : i32
    %c0_i32_0 = arith.constant 0 : i32
    %c0_i32_1 = arith.constant 0 : i32
    return %arg0, %c0_i32, %c0_i32_0 : i32, i32, i32
  }
}

module attributes {stable_mosaic.version = 11 : i64} {
  func.func @_bary_exp_kernel(%arg0: i32, %arg1: memref<4x16x16xf32, #tpu.memory_space<vmem>>, %arg2: memref<4x1x16xf32, #tpu.memory_space<vmem>>, %arg3: memref<4x16x16xf32, #tpu.memory_space<vmem>>, %arg4: memref<4x16x16xf32, #tpu.memory_space<vmem>>) attributes {dimension_semantics = [#tpu.dimension_semantics<parallel>], iteration_bounds = array<i64: 2>, scalar_prefetch = 0 : i64, scratch_operands = 0 : i64, tpu.core_type = #tpu.core_type<tc>, window_params = [{transform_indices = @transform_0, window_bounds = array<i64: 4, 16, 16>}, {transform_indices = @transform_1, window_bounds = array<i64: 4, 1, 16>}, {transform_indices = @transform_2, window_bounds = array<i64: 4, 16, 16>}, {transform_indices = @transform_3, window_bounds = array<i64: 4, 16, 16>}]} {
    %c0 = arith.constant 0 : index
    %c0_0 = arith.constant 0 : index
    %c0_1 = arith.constant 0 : index
    %0 = vector.load %arg1[%c0, %c0_0, %c0_1] : memref<4x16x16xf32, #tpu.memory_space<vmem>>, vector<4x16x16xf32>
    %c0_2 = arith.constant 0 : index
    %c0_3 = arith.constant 0 : index
    %c0_4 = arith.constant 0 : index
    %1 = vector.load %arg2[%c0_2, %c0_3, %c0_4] : memref<4x1x16xf32, #tpu.memory_space<vmem>>, vector<4x1x16xf32>
    %2 = math.exp %1 : vector<4x1x16xf32>
    %3 = vector.broadcast %2 : vector<4x1x16xf32> to vector<4x16x16xf32>
    %4 = arith.mulf %0, %3 : vector<4x16x16xf32>
    "tpu.trace_start"() <{level = 10 : i32, message = "bik,bjk->bij"}> : () -> ()
    %cst = arith.constant dense<0.000000e+00> : vector<4x16x16xf32>
    %5 = tpu.matmul %4, %0, %cst {dimension_numbers = #tpu.dot_dimension_numbers<[2], [2], [1], [1], [0, 0, 0, 1, 1, 1], [0], [0]>} : vector<4x16x16xf32>, vector<4x16x16xf32>, vector<4x16x16xf32> -> vector<4x16x16xf32>
    "tpu.trace_stop"() : () -> ()
    %c0_5 = arith.constant 0 : index
    %c0_6 = arith.constant 0 : index
    %c0_7 = arith.constant 0 : index
    %6 = vector.load %arg3[%c0_5, %c0_6, %c0_7] : memref<4x16x16xf32, #tpu.memory_space<vmem>>, vector<4x16x16xf32>
    "tpu.trace_start"() <{level = 10 : i32, message = "bij,bjk->bik"}> : () -> ()
    %cst_8 = arith.constant dense<0.000000e+00> : vector<4x16x16xf32>
    %7 = tpu.matmul %6, %5, %cst_8 {dimension_numbers = #tpu.dot_dimension_numbers<[2], [1], [1], [2], [0, 0, 0, 1, 1, 2], [0], [0]>} : vector<4x16x16xf32>, vector<4x16x16xf32>, vector<4x16x16xf32> -> vector<4x16x16xf32>
    "tpu.trace_stop"() : () -> ()
    "tpu.trace_start"() <{level = 10 : i32, message = "bik,bjk->bij"}> : () -> ()
    %cst_9 = arith.constant dense<0.000000e+00> : vector<4x16x16xf32>
    %8 = tpu.matmul %7, %6, %cst_9 {dimension_numbers = #tpu.dot_dimension_numbers<[2], [2], [1], [1], [0, 0, 0, 1, 1, 1], [0], [0]>} : vector<4x16x16xf32>, vector<4x16x16xf32>, vector<4x16x16xf32> -> vector<4x16x16xf32>
    %cst_10 = arith.constant dense<0.000000e+00> : vector<4x16x16xf32>
    %9 = tpu.matmul %6, %7, %cst_10 {dimension_numbers = #tpu.dot_dimension_numbers<[2], [2], [1], [1], [0, 0, 0, 1, 1, 1], [0], [0]>} : vector<4x16x16xf32>, vector<4x16x16xf32>, vector<4x16x16xf32> -> vector<4x16x16xf32>
    "tpu.trace_stop"() : () -> ()
    %10 = arith.addf %8, %9 : vector<4x16x16xf32>
    %cst_11 = arith.constant 5.000000e-01 : f32
    %11 = vector.broadcast %cst_11 : f32 to vector<4x16x16xf32>
    %12 = arith.mulf %11, %10 : vector<4x16x16xf32>
    %c0_12 = arith.constant 0 : index
    %c0_13 = arith.constant 0 : index
    %c0_14 = arith.constant 0 : index
    %13 = vector.load %arg4[%c0_12, %c0_13, %c0_14] : memref<4x16x16xf32, #tpu.memory_space<vmem>>, vector<4x16x16xf32>
    tpu.vector_store %arg4[%c0_12, %c0_13, %c0_14], %12 {strides = array<i32>} : memref<4x16x16xf32, #tpu.memory_space<vmem>>, vector<4x16x16xf32>,
    return
  }
  func.func @transform_0(%arg0: i32) -> (i32, i32, i32) {
    %c0_i32 = arith.constant 0 : i32
    %c0_i32_0 = arith.constant 0 : i32
    %c0_i32_1 = arith.constant 0 : i32
    return %arg0, %c0_i32, %c0_i32_0 : i32, i32, i32
  }
  func.func @transform_1(%arg0: i32) -> (i32, i32, i32) {
    %c0_i32 = arith.constant 0 : i32
    %c0_i32_0 = arith.constant 0 : i32
    %c0_i32_1 = arith.constant 0 : i32
    return %arg0, %c0_i32, %c0_i32_0 : i32, i32, i32
  }
  func.func @transform_2(%arg0: i32) -> (i32, i32, i32) {
    %c0_i32 = arith.constant 0 : i32
    %c0_i32_0 = arith.constant 0 : i32
    %c0_i32_1 = arith.constant 0 : i32
    return %arg0, %c0_i32, %c0_i32_0 : i32, i32, i32
  }
  func.func @transform_3(%arg0: i32) -> (i32, i32, i32) {
    %c0_i32 = arith.constant 0 : i32
    %c0_i32_0 = arith.constant 0 : i32
    %c0_i32_1 = arith.constant 0 : i32
    return %arg0, %c0_i32, %c0_i32_0 : i32, i32, i32
  }
}

</mosaic_0001>

<llo_original>
// kernel: custom-call.9
$region0: #{custom-call.9}
  %s0 = inlined_call_operand.vmem [shape: f32[16,8,8], index: 0, kind: input, shape index: {}]
  %s1 = inlined_call_operand.vmem [shape: f32[16,8,8], index: 1, kind: input, shape index: {}]
  %s2 = inlined_call_operand.vmem [shape: f32[16,8,8], index: 2, kind: input, shape index: {}]
  %s3 = inlined_call_operand.vmem [shape: f32[16,8,8], index: 3, kind: input, shape index: {}]
  %s4 = inlined_call_operand.vmem [shape: f32[16,8], index: 4, kind: output, shape index: {0}]
  %s5 = inlined_call_operand.vmem [shape: f32[16,8], index: 5, kind: output, shape index: {1}]
  %s6 = inlined_call_operand.vmem [shape: f32[16,8,8], index: 6, kind: output, shape index: {2}]
  %s7 = inlined_call_operand.vmem [shape: f32[16,8,8], index: 7, kind: output, shape index: {3}]
  %s8 = inlined_call_operand.vmem [shape: f32[16,8,8], index: 8, kind: output, shape index: {4}]
  %s9 = inlined_call_operand.vmem [shape: f32[16,8,8], index: 9, kind: output, shape index: {5}]
  %10 = xla_tuple %s4, %s5, %s6, %s7, %s8, %s9
  $region1: #{custom-call.9} parent=0
    #allocation0 [shape = 'u8[8192]{0}', space=vmem, size = 0x2000, scoped, tag = 'operand span for operand 0']
    #allocation1 [shape = 'u8[8192]{0}', space=vmem, size = 0x2000, scoped, tag = 'operand span for operand 1']
    #allocation2 [shape = 'u8[8192]{0}', space=vmem, size = 0x2000, scoped, tag = 'operand span for operand 2']
    #allocation3 [shape = 'u8[8192]{0}', space=vmem, size = 0x2000, scoped, tag = 'operand span for operand 3']
    #allocation4 [shape = 'u8[8192]{0}', space=vmem, size = 0x2000, scoped, tag = 'operand span for operand 4']
    #allocation5 [shape = 'u8[8192]{0}', space=vmem, size = 0x2000, scoped, tag = 'operand span for operand 5']
    #allocation6 [shape = 'u8[8192]{0}', space=vmem, size = 0x2000, scoped, tag = 'operand span for operand 6']
    #allocation7 [shape = 'u8[8192]{0}', space=vmem, size = 0x2000, scoped, tag = 'operand span for operand 7']
    #allocation8 [shape = 'u8[8192]{0}', space=vmem, size = 0x2000, scoped, tag = 'operand span for operand 8']
    #allocation9 [shape = 'u8[8192]{0}', space=vmem, size = 0x2000, scoped, tag = 'operand span for operand 9']
    loop: start=0, step=1, limit=18
    $region2: #{custom-call.9} parent=1 // loop_pre_header
      _
    $region3: #{custom-call.9} parent=1 // loop_header
      %s12 = sphi 0, %s16
      %p13 = scmp.ge.s32.totalorder %s12, 18
      %s24 = sphi 0, %s26
      %s27 = sphi 0, %s24
      %s28 = sphi 0, %s27
      %s44 = sphi 0, %s28
      %s52 = sphi 0, %s54
      %s55 = sphi 0, %s52
      %s56 = sphi 0, %s55
      %s72 = sphi 0, %s56
    $region4: #{custom-call.9} parent=1 // loop_header_branch
      %15 = sbr.rel (%p13) target = $region8
    $region5: #{custom-call.9} parent=1 // loop_body
      %s17 = ssub.s32 %s12, 1
      %s18 = ssub.s32 %s12, 2
      %s19 = sadd.s32 %s12, 1
      %s20 = sshrl.u32 %s12, 3
      %s21 = sshrl.u32 %s19, 3
      %s22 = ssub.s32 %s20, %s21
      %p23 = scmp.eq.s32.totalorder %s22, 0
      %s25 = sadd.s32 %s24, 1
      %s26 = scalar_select %p23, %s24, %s25
      %p29 = pneg %p23
      %p30 = scmp.eq.s32.totalorder %s12, 15
      %p31 = por %p29, %p30
      %p32 = scmp.ne.s32.totalorder %s24, %s27
      %p33 = scmp.eq.s32.totalorder %s12, 0
      %p34 = por %p32, %p33
      %p35 = scmp.ne.s32.totalorder %s24, %s27
      %p36 = scmp.eq.s32.totalorder %s17, 15
      %p37 = por %p35, %p36
      %p38 = scmp.ne.s32.totalorder %s27, %s28
      %p39 = scmp.eq.s32.totalorder %s17, 0
      %p40 = por %p38, %p39
      %p41 = scmp.ne.s32.totalorder %s27, %s28
      %p42 = scmp.eq.s32.totalorder %s18, 15
      %p43 = por %p41, %p42
      %p45 = scmp.ne.s32.totalorder %s28, %s44
      %p46 = scmp.eq.s32.totalorder %s18, 0
      %p47 = por %p45, %p46
      %s48 = sshrl.u32 %s12, 3
      %s49 = sshrl.u32 %s19, 3
      %s50 = ssub.s32 %s48, %s49
      %p51 = scmp.eq.s32.totalorder %s50, 0
      %s53 = sadd.s32 %s52, 1
      %s54 = scalar_select %p51, %s52, %s53
      %p57 = pneg %p51
      %p58 = scmp.eq.s32.totalorder %s12, 15
      %p59 = por %p57, %p58
      %p60 = scmp.ne.s32.totalorder %s52, %s55
      %p61 = scmp.eq.s32.totalorder %s12, 0
      %p62 = por %p60, %p61
      %p63 = scmp.ne.s32.totalorder %s52, %s55
      %p64 = scmp.eq.s32.totalorder %s17, 15
      %p65 = por %p63, %p64
      %p66 = scmp.ne.s32.totalorder %s55, %s56
      %p67 = scmp.eq.s32.totalorder %s17, 0
      %p68 = por %p66, %p67
      %p69 = scmp.ne.s32.totalorder %s55, %s56
      %p70 = scmp.eq.s32.totalorder %s18, 15
      %p71 = por %p69, %p70
      %p73 = scmp.ne.s32.totalorder %s56, %s72
      %p74 = scmp.eq.s32.totalorder %s18, 0
      %p75 = por %p73, %p74
      %p76 = scmp.le.s32.totalorder 1, %s12
      %p77 = scmp.lt.s32.totalorder %s12, 17
      %p78 = pnand %p76, %p77
      %p79 = pneg %p78
      // Predicated region
      $region9: #{custom-call.9} parent=5 // pred_check
        _
      $region10: #{custom-call.9} parent=5 // pred_check_branch
        %81 = sbr.rel (%p78) target = $region12
      $region11: #{custom-call.9} parent=5 // pred_region
        %s82 = ssub.s32 %s12, 1
      $region12: #{custom-call.9} parent=5 // pred_fallthru
        _
      %p83 = scmp.lt.s32.totalorder %s12, 16
      // Predicated region
      $region13: #{custom-call.9} parent=5 // pred_check
        %p84 = pneg %p83
      $region14: #{custom-call.9} parent=5 // pred_check_branch
        %86 = sbr.rel (%p84) target = $region16
      $region15: #{custom-call.9} parent=5 // pred_region
        %s87 = sand.u32 %s12, 1
        %s88 = sand.u32 %s12, 1
        %s89 = smul.addr %s88, 8
        %s90 = scalar_lea.vmem [#allocation0], %s89
        %s91 = smul.addr %s12, 8
        %s92 = scalar_lea.vmem %s0, %s91
        // Predicated region
        $region17: #{custom-call.9} parent=15 // pred_check
          _
        $region18: #{custom-call.9} parent=15 // pred_check_branch
          %94 = sbr.rel (0) target = $region20
        $region19: #{custom-call.9} parent=15 // pred_region
          // Predicated region
          $region21: #{custom-call.9} parent=19 // pred_check
            _
          $region22: #{custom-call.9} parent=19 // pred_check_branch
            %96 = sbr.rel (0) target = $region24
          $region23: #{custom-call.9} parent=19 // pred_region
            // Predicated region
            $region36: #{custom-call.9} parent=23 // pred_check
              _
            $region37: #{custom-call.9} parent=23 // pred_check_branch
              %112 = sbr.rel (0) target = $region39
            $region38: #{custom-call.9} parent=23 // pred_region
              loop: start=0, step=1, limit=1
              $region40: #{custom-call.9} parent=38 // loop_pre_header
                _
              $region41: #{custom-call.9} parent=38 // loop_header
                %s114 = sphi 0, %s118
                %p115 = scmp.ge.s32.totalorder %s114, 1
                %s119 = sphi %s92, %s92
                %s120 = sphi %s90, %s90
              $region42: #{custom-call.9} parent=38 // loop_header_branch
                %117 = sbr.rel (%p115) target = $region46
              $region43: #{custom-call.9} parent=38 // loop_body
                %v121 = vld [vmem:[%s119] sm:$0xff]
                %122 = vst [vmem:[%s120] sm:$0xff] %v121
              $region44: #{custom-call.9} parent=38 // loop_footer
                %s118 = sadd.s32 1, %s114
              $region45: #{custom-call.9} parent=38 // loop_footer_branch
                %113 = sbr.rel target = $region41
              $region46: #{custom-call.9} parent=38 // loop_exit
                _
            $region39: #{custom-call.9} parent=23 // pred_fallthru
              _
            // Predicated region
            $region47: #{custom-call.9} parent=23 // pred_check
              _
            $region48: #{custom-call.9} parent=23 // pred_check_branch
              %124 = sbr.rel target = $region50
            $region49: #{custom-call.9} parent=23 // pred_region
              _
            $region50: #{custom-call.9} parent=23 // pred_fallthru
              _
          $region24: #{custom-call.9} parent=19 // pred_fallthru
            _
          // Predicated region
          $region25: #{custom-call.9} parent=19 // pred_check
            _
          $region26: #{custom-call.9} parent=19 // pred_check_branch
            %98 = sbr.rel target = $region28
          $region27: #{custom-call.9} parent=19 // pred_region
            %s100 = ssub.s32 256, 1
            loop: start=0, step=1, limit=1
            $region29: #{custom-call.9} parent=27 // loop_pre_header
              _
            $region30: #{custom-call.9} parent=27 // loop_header
              %s102 = sphi 0, %s106
              %p103 = scmp.ge.s32.totalorder %s102, 1
              %s107 = sphi %s92, %s92
              %s108 = sphi %s90, %s90
            $region31: #{custom-call.9} parent=27 // loop_header_branch
              %105 = sbr.rel (%p103) target = $region35
            $region32: #{custom-call.9} parent=27 // loop_body
              %v109 = vld [vmem:[%s107] sm:%s100]
              %110 = vst [vmem:[%s108] sm:%s100] %v109
            $region33: #{custom-call.9} parent=27 // loop_footer
              %s106 = sadd.s32 1, %s102
            $region34: #{custom-call.9} parent=27 // loop_footer_branch
              %101 = sbr.rel target = $region30
            $region35: #{custom-call.9} parent=27 // loop_exit
              _
          $region28: #{custom-call.9} parent=19 // pred_fallthru
            _
        $region20: #{custom-call.9} parent=15 // pred_fallthru
          _
        %125 = vnop
        %s126 = sand.u32 %s12, 1
        %s127 = sand.u32 %s12, 1
        %s128 = smul.addr %s127, 8
        %s129 = scalar_lea.vmem [#allocation1], %s128
        %s130 = smul.addr %s12, 8
        %s131 = scalar_lea.vmem %s1, %s130
        // Predicated region
        $region51: #{custom-call.9} parent=15 // pred_check
          _
        $region52: #{custom-call.9} parent=15 // pred_check_branch
          %133 = sbr.rel (0) target = $region54
        $region53: #{custom-call.9} parent=15 // pred_region
          // Predicated region
          $region55: #{custom-call.9} parent=53 // pred_check
            _
          $region56: #{custom-call.9} parent=53 // pred_check_branch
            %135 = sbr.rel (0) target = $region58
          $region57: #{custom-call.9} parent=53 // pred_region
            // Predicated region
            $region70: #{custom-call.9} parent=57 // pred_check
              _
            $region71: #{custom-call.9} parent=57 // pred_check_branch
              %151 = sbr.rel (0) target = $region73
            $region72: #{custom-call.9} parent=57 // pred_region
              loop: start=0, step=1, limit=1
              $region74: #{custom-call.9} parent=72 // loop_pre_header
                _
              $region75: #{custom-call.9} parent=72 // loop_header
                %s153 = sphi 0, %s157
                %p154 = scmp.ge.s32.totalorder %s153, 1
                %s158 = sphi %s131, %s131
                %s159 = sphi %s129, %s129
              $region76: #{custom-call.9} parent=72 // loop_header_branch
                %156 = sbr.rel (%p154) target = $region80
              $region77: #{custom-call.9} parent=72 // loop_body
                %v160 = vld [vmem:[%s158] sm:$0xff]
                %161 = vst [vmem:[%s159] sm:$0xff] %v160
              $region78: #{custom-call.9} parent=72 // loop_footer
                %s157 = sadd.s32 1, %s153
              $region79: #{custom-call.9} parent=72 // loop_footer_branch
                %152 = sbr.rel target = $region75
              $region80: #{custom-call.9} parent=72 // loop_exit
                _
            $region73: #{custom-call.9} parent=57 // pred_fallthru
              _
            // Predicated region
            $region81: #{custom-call.9} parent=57 // pred_check
              _
            $region82: #{custom-call.9} parent=57 // pred_check_branch
              %163 = sbr.rel target = $region84
            $region83: #{custom-call.9} parent=57 // pred_region
              _
            $region84: #{custom-call.9} parent=57 // pred_fallthru
              _
          $region58: #{custom-call.9} parent=53 // pred_fallthru
            _
          // Predicated region
          $region59: #{custom-call.9} parent=53 // pred_check
            _
          $region60: #{custom-call.9} parent=53 // pred_check_branch
            %137 = sbr.rel target = $region62
          $region61: #{custom-call.9} parent=53 // pred_region
            %s139 = ssub.s32 256, 1
            loop: start=0, step=1, limit=1
            $region63: #{custom-call.9} parent=61 // loop_pre_header
              _
            $region64: #{custom-call.9} parent=61 // loop_header
              %s141 = sphi 0, %s145
              %p142 = scmp.ge.s32.totalorder %s141, 1
              %s146 = sphi %s131, %s131
              %s147 = sphi %s129, %s129
            $region65: #{custom-call.9} parent=61 // loop_header_branch
              %144 = sbr.rel (%p142) target = $region69
            $region66: #{custom-call.9} parent=61 // loop_body
              %v148 = vld [vmem:[%s146] sm:%s139]
              %149 = vst [vmem:[%s147] sm:%s139] %v148
            $region67: #{custom-call.9} parent=61 // loop_footer
              %s145 = sadd.s32 1, %s141
            $region68: #{custom-call.9} parent=61 // loop_footer_branch
              %140 = sbr.rel target = $region64
            $region69: #{custom-call.9} parent=61 // loop_exit
              _
          $region62: #{custom-call.9} parent=53 // pred_fallthru
            _
        $region54: #{custom-call.9} parent=15 // pred_fallthru
          _
        %164 = vnop
        %s165 = sand.u32 %s12, 1
        %s166 = sand.u32 %s12, 1
        %s167 = smul.addr %s166, 8
        %s168 = scalar_lea.vmem [#allocation2], %s167
        %s169 = smul.addr %s12, 8
        %s170 = scalar_lea.vmem %s2, %s169
        // Predicated region
        $region85: #{custom-call.9} parent=15 // pred_check
          _
        $region86: #{custom-call.9} parent=15 // pred_check_branch
          %172 = sbr.rel (0) target = $region88
        $region87: #{custom-call.9} parent=15 // pred_region
          // Predicated region
          $region89: #{custom-call.9} parent=87 // pred_check
            _
          $region90: #{custom-call.9} parent=87 // pred_check_branch
            %174 = sbr.rel (0) target = $region92
          $region91: #{custom-call.9} parent=87 // pred_region
            // Predicated region
            $region104: #{custom-call.9} parent=91 // pred_check
              _
            $region105: #{custom-call.9} parent=91 // pred_check_branch
              %190 = sbr.rel (0) target = $region107
            $region106: #{custom-call.9} parent=91 // pred_region
              loop: start=0, step=1, limit=1
              $region108: #{custom-call.9} parent=106 // loop_pre_header
                _
              $region109: #{custom-call.9} parent=106 // loop_header
                %s192 = sphi 0, %s196
                %p193 = scmp.ge.s32.totalorder %s192, 1
                %s197 = sphi %s170, %s170
                %s198 = sphi %s168, %s168
              $region110: #{custom-call.9} parent=106 // loop_header_branch
                %195 = sbr.rel (%p193) target = $region114
              $region111: #{custom-call.9} parent=106 // loop_body
                %v199 = vld [vmem:[%s197] sm:$0xff]
                %200 = vst [vmem:[%s198] sm:$0xff] %v199
              $region112: #{custom-call.9} parent=106 // loop_footer
                %s196 = sadd.s32 1, %s192
              $region113: #{custom-call.9} parent=106 // loop_footer_branch
                %191 = sbr.rel target = $region109
              $region114: #{custom-call.9} parent=106 // loop_exit
                _
            $region107: #{custom-call.9} parent=91 // pred_fallthru
              _
            // Predicated region
            $region115: #{custom-call.9} parent=91 // pred_check
              _
            $region116: #{custom-call.9} parent=91 // pred_check_branch
              %202 = sbr.rel target = $region118
            $region117: #{custom-call.9} parent=91 // pred_region
              _
            $region118: #{custom-call.9} parent=91 // pred_fallthru
              _
          $region92: #{custom-call.9} parent=87 // pred_fallthru
            _
          // Predicated region
          $region93: #{custom-call.9} parent=87 // pred_check
            _
          $region94: #{custom-call.9} parent=87 // pred_check_branch
            %176 = sbr.rel target = $region96
          $region95: #{custom-call.9} parent=87 // pred_region
            %s178 = ssub.s32 256, 1
            loop: start=0, step=1, limit=1
            $region97: #{custom-call.9} parent=95 // loop_pre_header
              _
            $region98: #{custom-call.9} parent=95 // loop_header
              %s180 = sphi 0, %s184
              %p181 = scmp.ge.s32.totalorder %s180, 1
              %s185 = sphi %s170, %s170
              %s186 = sphi %s168, %s168
            $region99: #{custom-call.9} parent=95 // loop_header_branch
              %183 = sbr.rel (%p181) target = $region103
            $region100: #{custom-call.9} parent=95 // loop_body
              %v187 = vld [vmem:[%s185] sm:%s178]
              %188 = vst [vmem:[%s186] sm:%s178] %v187
            $region101: #{custom-call.9} parent=95 // loop_footer
              %s184 = sadd.s32 1, %s180
            $region102: #{custom-call.9} parent=95 // loop_footer_branch
              %179 = sbr.rel target = $region98
            $region103: #{custom-call.9} parent=95 // loop_exit
              _
          $region96: #{custom-call.9} parent=87 // pred_fallthru
            _
        $region88: #{custom-call.9} parent=15 // pred_fallthru
          _
        %203 = vnop
        %s204 = sand.u32 %s12, 1
        %s205 = sand.u32 %s12, 1
        %s206 = smul.addr %s205, 8
        %s207 = scalar_lea.vmem [#allocation3], %s206
        %s208 = smul.addr %s12, 8
        %s209 = scalar_lea.vmem %s3, %s208
        // Predicated region
        $region119: #{custom-call.9} parent=15 // pred_check
          _
        $region120: #{custom-call.9} parent=15 // pred_check_branch
          %211 = sbr.rel (0) target = $region122
        $region121: #{custom-call.9} parent=15 // pred_region
          // Predicated region
          $region123: #{custom-call.9} parent=121 // pred_check
            _
          $region124: #{custom-call.9} parent=121 // pred_check_branch
            %213 = sbr.rel (0) target = $region126
          $region125: #{custom-call.9} parent=121 // pred_region
            // Predicated region
            $region138: #{custom-call.9} parent=125 // pred_check
              _
            $region139: #{custom-call.9} parent=125 // pred_check_branch
              %229 = sbr.rel (0) target = $region141
            $region140: #{custom-call.9} parent=125 // pred_region
              loop: start=0, step=1, limit=1
              $region142: #{custom-call.9} parent=140 // loop_pre_header
                _
              $region143: #{custom-call.9} parent=140 // loop_header
                %s231 = sphi 0, %s235
                %p232 = scmp.ge.s32.totalorder %s231, 1
                %s236 = sphi %s209, %s209
                %s237 = sphi %s207, %s207
              $region144: #{custom-call.9} parent=140 // loop_header_branch
                %234 = sbr.rel (%p232) target = $region148
              $region145: #{custom-call.9} parent=140 // loop_body
                %v238 = vld [vmem:[%s236] sm:$0xff]
                %239 = vst [vmem:[%s237] sm:$0xff] %v238
              $region146: #{custom-call.9} parent=140 // loop_footer
                %s235 = sadd.s32 1, %s231
              $region147: #{custom-call.9} parent=140 // loop_footer_branch
                %230 = sbr.rel target = $region143
              $region148: #{custom-call.9} parent=140 // loop_exit
                _
            $region141: #{custom-call.9} parent=125 // pred_fallthru
              _
            // Predicated region
            $region149: #{custom-call.9} parent=125 // pred_check
              _
            $region150: #{custom-call.9} parent=125 // pred_check_branch
              %241 = sbr.rel target = $region152
            $region151: #{custom-call.9} parent=125 // pred_region
              _
            $region152: #{custom-call.9} parent=125 // pred_fallthru
              _
          $region126: #{custom-call.9} parent=121 // pred_fallthru
            _
          // Predicated region
          $region127: #{custom-call.9} parent=121 // pred_check
            _
          $region128: #{custom-call.9} parent=121 // pred_check_branch
            %215 = sbr.rel target = $region130
          $region129: #{custom-call.9} parent=121 // pred_region
            %s217 = ssub.s32 256, 1
            loop: start=0, step=1, limit=1
            $region131: #{custom-call.9} parent=129 // loop_pre_header
              _
            $region132: #{custom-call.9} parent=129 // loop_header
              %s219 = sphi 0, %s223
              %p220 = scmp.ge.s32.totalorder %s219, 1
              %s224 = sphi %s209, %s209
              %s225 = sphi %s207, %s207
            $region133: #{custom-call.9} parent=129 // loop_header_branch
              %222 = sbr.rel (%p220) target = $region137
            $region134: #{custom-call.9} parent=129 // loop_body
              %v226 = vld [vmem:[%s224] sm:%s217]
              %227 = vst [vmem:[%s225] sm:%s217] %v226
            $region135: #{custom-call.9} parent=129 // loop_footer
              %s223 = sadd.s32 1, %s219
            $region136: #{custom-call.9} parent=129 // loop_footer_branch
              %218 = sbr.rel target = $region132
            $region137: #{custom-call.9} parent=129 // loop_exit
              _
          $region130: #{custom-call.9} parent=121 // pred_fallthru
            _
        $region122: #{custom-call.9} parent=15 // pred_fallthru
          _
        %242 = vnop
      $region16: #{custom-call.9} parent=5 // pred_fallthru
        _
      %p243 = scmp.le.s32.totalorder 1, %s12
      %p244 = scmp.lt.s32.totalorder %s12, 17
      %p245 = pnand %p243, %p244
      %p246 = pneg %p245
      // Predicated region
      $region153: #{custom-call.9} parent=5 // pred_check
        _
      $region154: #{custom-call.9} parent=5 // pred_check_branch
        %248 = sbr.rel (%p245) target = $region156
      $region155: #{custom-call.9} parent=5 // pred_region
        #allocation10 [shape = 'f32[8,8]{1,0}', space=vmem, size = 0x1000, scoped, tag = 'a top-left matrix']
        #allocation11 [shape = 'f32[8,8]{1,0}', space=vmem, size = 0x1000, scoped, tag = 'a top-right matrix']
        #allocation12 [shape = 'f32[8,8]{1,0}', space=vmem, size = 0x1000, scoped, tag = 'a bottom-left matrix']
        #allocation13 [shape = 'f32[8,8]{1,0}', space=vmem, size = 0x1000, scoped, tag = 'a bottom-right matrix']
        %s249 = ssub.s32 %s12, 1
        %s250 = sand.u32 %s17, 1
        %s251 = sand.u32 %s17, 1
        %s252 = smul.addr %s251, 8
        %s253 = scalar_lea.vmem [#allocation0], %s252
        %s254 = sand.u32 %s17, 1
        %s255 = sand.u32 %s17, 1
        %s256 = smul.addr %s255, 8
        %s257 = scalar_lea.vmem [#allocation1], %s256
        %s258 = sand.u32 %s17, 1
        %s259 = sand.u32 %s17, 1
        %s260 = smul.addr %s259, 8
        %s261 = scalar_lea.vmem [#allocation2], %s260
        %s262 = sand.u32 %s17, 1
        %s263 = sand.u32 %s17, 1
        %s264 = smul.addr %s263, 8
        %s265 = scalar_lea.vmem [#allocation3], %s264
        %s266 = sand.u32 %s17, 1
        %s267 = sand.u32 %s17, 1
        %s268 = smul.addr %s267, 8
        %s269 = scalar_lea.vmem [#allocation0], %s268
        %s270 = sand.u32 %s17, 1
        %s271 = sand.u32 %s17, 1
        %s272 = smul.addr %s271, 8
        %s273 = scalar_lea.vmem [#allocation1], %s272
        %s274 = sand.u32 %s17, 1
        %s275 = sand.u32 %s17, 1
        %s276 = smul.addr %s275, 8
        %s277 = scalar_lea.vmem [#allocation2], %s276
        %s278 = sand.u32 %s17, 1
        %s279 = sand.u32 %s17, 1
        %s280 = smul.addr %s279, 8
        %s281 = scalar_lea.vmem [#allocation3], %s280
        %p282 = pneg %p40
        %p283 = pneg %p37
        %s284 = sand.u32 %s27, 1
        %s285 = sand.u32 %s27, 1
        %s286 = smul.addr %s285, 8
        %s287 = scalar_lea.vmem [#allocation4], %s286
        %p288 = pneg %p68
        %p289 = pneg %p65
        %s290 = sand.u32 %s55, 1
        %s291 = sand.u32 %s55, 1
        %s292 = smul.addr %s291, 8
        %s293 = scalar_lea.vmem [#allocation5], %s292
        %s294 = sand.u32 %s17, 1
        %s295 = sand.u32 %s17, 1
        %s296 = smul.addr %s295, 8
        %s297 = scalar_lea.vmem [#allocation6], %s296
        %s298 = sand.u32 %s17, 1
        %s299 = sand.u32 %s17, 1
        %s300 = smul.addr %s299, 8
        %s301 = scalar_lea.vmem [#allocation7], %s300
        %s302 = sand.u32 %s17, 1
        %s303 = sand.u32 %s17, 1
        %s304 = smul.addr %s303, 8
        %s305 = scalar_lea.vmem [#allocation8], %s304
        %s306 = sand.u32 %s17, 1
        %s307 = sand.u32 %s17, 1
        %s308 = smul.addr %s307, 8
        %s309 = scalar_lea.vmem [#allocation9], %s308
        %s310 = sshrl.u32 %s17, 3
        %s311 = sshrl.u32 %s17, 3
        %s312 = smov [#allocation10]
        %v313 = vld [vmem:[%s253] sm:$0xff]
        %314 = vst [vmem:[%s312] sm:$0xff] %v313
        %s315 = smov [#allocation11]
        %v316 = vld [vmem:[%s257] sm:$0xff]
        %317 = vst [vmem:[%s315] sm:$0xff] %v316
        %s318 = smov [#allocation12]
        %v319 = vld [vmem:[%s261] sm:$0xff]
        %320 = vst [vmem:[%s318] sm:$0xff] %v319
        %s321 = smov [#allocation13]
        %v322 = vld [vmem:[%s265] sm:$0xff]
        %323 = vst [vmem:[%s321] sm:$0xff] %v322
        %324 = vst [vmem:[%s297] sm:$0xff] 0.0
        %325 = vst [vmem:[%s301] sm:$0xff] 0.0
        %326 = vst [vmem:[%s305] sm:$0xff] 0.0
        %327 = vst [vmem:[%s309] sm:$0xff] 0.0
        %s328 = smov %s297
        %v329 = vlaneseq
        %v330 = vand.u32 %v329, 127
        %v331 = vmov %v330
        %v332 = vlaneseq
        %v333 = vshrl.u32 %v332, 7
        %v334 = vmov %v333
        %v335 = vld [vmem:[%s328] sm:$0xff]
        %vm338 = vcmp.eq.s32.totalorder %v334, %v331
        %v339 = vsel %vm338, 1.0, %v335
        %340 = vst [vmem:[%s328] sm:$0xff] %v339
        %s341 = smov %s309
        %v342 = vlaneseq
        %v343 = vand.u32 %v342, 127
        %v344 = vmov %v343
        %v345 = vlaneseq
        %v346 = vshrl.u32 %v345, 7
        %v347 = vmov %v346
        %v348 = vld [vmem:[%s341] sm:$0xff]
        %vm351 = vcmp.eq.s32.totalorder %v347, %v344
        %v352 = vsel %vm351, 1.0, %v348
        %353 = vst [vmem:[%s341] sm:$0xff] %v352
        // While loop
        $region157: #{custom-call.9} parent=155 // loop_pre_header
          _
        $region158: #{custom-call.9} parent=155 // loop_header
          %s355 = sphi 0, %s937
          %v356 = vlaneseq
          %v357 = vand.u32 %v356, 127
          %v358 = vmov %v357
          %v359 = vlaneseq
          %v360 = vshrl.u32 %v359, 7
          %v361 = vmov %v360
          %s362 = smov [#allocation10]
          %v363 = vlaneseq
          %v364 = vand.u32 %v363, 127
          %vm365 = vcmp.ge.s32.totalorder %v364, 0
          %vm366 = vcmp.lt.s32.totalorder %v364, 8
          %vm367 = vmand %vm365, %vm366
          %v368 = vld [vmem:[%s362] sm:$0xff]
          %v369 = vsel %vm367, %v368, 0.0
          %v370 = vmul.f32 %v369, %v369
          %vm373 = vcmp.eq.s32.totalorder %v361, %v358
          %v374 = vsel %vm373, 0.0, %v370
          %v375 = vlaneseq
          %v376 = vand.u32 %v375, 127
          %v377 = vmov %v376
          %v378 = vlaneseq
          %v379 = vshrl.u32 %v378, 7
          %v380 = vmov %v379
          %s381 = smov [#allocation11]
          %v382 = vlaneseq
          %v383 = vand.u32 %v382, 127
          %vm384 = vcmp.ge.s32.totalorder %v383, 0
          %vm385 = vcmp.lt.s32.totalorder %v383, 8
          %vm386 = vmand %vm384, %vm385
          %v387 = vld [vmem:[%s381] sm:$0xff]
          %v388 = vsel %vm386, %v387, 0.0
          %v389 = vmul.f32 %v388, %v388
          %v390 = vadd.f32 %v374, %v389
          %v391 = vadd.f32 %v370, %v389
          %v392 = vlaneseq
          %v393 = vand.u32 %v392, 127
          %v394 = vmov %v393
          %v395 = vlaneseq
          %v396 = vshrl.u32 %v395, 7
          %v397 = vmov %v396
          %s398 = smov [#allocation12]
          %v399 = vlaneseq
          %v400 = vand.u32 %v399, 127
          %vm401 = vcmp.ge.s32.totalorder %v400, 0
          %vm402 = vcmp.lt.s32.totalorder %v400, 8
          %vm403 = vmand %vm401, %vm402
          %v404 = vld [vmem:[%s398] sm:$0xff]
          %v405 = vsel %vm403, %v404, 0.0
          %v406 = vmul.f32 %v405, %v405
          %v407 = vadd.f32 %v390, %v406
          %v408 = vadd.f32 %v391, %v406
          %v409 = vlaneseq
          %v410 = vand.u32 %v409, 127
          %v411 = vmov %v410
          %v412 = vlaneseq
          %v413 = vshrl.u32 %v412, 7
          %v414 = vmov %v413
          %s415 = smov [#allocation13]
          %v416 = vlaneseq
          %v417 = vand.u32 %v416, 127
          %vm418 = vcmp.ge.s32.totalorder %v417, 0
          %vm419 = vcmp.lt.s32.totalorder %v417, 8
          %vm420 = vmand %vm418, %vm419
          %v421 = vld [vmem:[%s415] sm:$0xff]
          %v422 = vsel %vm420, %v421, 0.0
          %v423 = vmul.f32 %v422, %v422
          %vm426 = vcmp.eq.s32.totalorder %v414, %v411
          %v427 = vsel %vm426, 0.0, %v423
          %v428 = vadd.f32 %v407, %v427
          %v429 = vadd.f32 %v408, %v423
          %430 = vadd.xlane.f32.xlu0 %v429
          %v431 = vpop.xlane.xlu0 %430
          %v432 = vrot.slane %v431, 4
          %v433 = vadd.f32 %v431, %v432
          %v434 = vrot.slane %v433, 2
          %v435 = vadd.f32 %v433, %v434
          %v436 = vrot.slane %v435, 1
          %v437 = vadd.f32 %v435, %v436
          %438 = vadd.xlane.f32.xlu0 %v428
          %v439 = vpop.xlane.xlu0 %438
          %v440 = vrot.slane %v439, 4
          %v441 = vadd.f32 %v439, %v440
          %v442 = vrot.slane %v441, 2
          %v443 = vadd.f32 %v441, %v442
          %v444 = vrot.slane %v443, 1
          %v445 = vadd.f32 %v443, %v444
          %s446 = vtos %v445
          %s447 = vtos %v437
          %s448 = smul.f32 1e-10, %s447
          %p449 = scmp.le.f32.partialorder %s446, %s448
          %p450 = scmp.ge.s32.totalorder %s355, 15
          %p451 = por %p449, %p450
        $region159: #{custom-call.9} parent=155 // loop_header_branch
          %939 = sbr.rel (%p451) target = $region163
        $region160: #{custom-call.9} parent=155 // loop_body
          loop: start=0, step=1, limit=15
          $region164: #{custom-call.9} parent=160 // loop_pre_header
            _
          $region165: #{custom-call.9} parent=160 // loop_header
            %s453 = sphi 0, %s457
            %p454 = scmp.ge.s32.totalorder %s453, 15
          $region166: #{custom-call.9} parent=160 // loop_header_branch
            %456 = sbr.rel (%p454) target = $region170
          $region167: #{custom-call.9} parent=160 // loop_body
            #allocation14 [shape = 'f32[1024]{0}', space=vmem, size = 0x1000, scoped, tag = 'a_tl_diag vmem']
            #allocation15 [shape = 'f32[1024]{0}', space=vmem, size = 0x1000, scoped, tag = 'a_tr_diag vmem']
            #allocation16 [shape = 'f32[1024]{0}', space=vmem, size = 0x1000, scoped, tag = 'a_br_diag vmem']
            #allocation17 [shape = 'f32[1024]{0}', space=vmem, size = 0x1000, scoped, tag = 'rt1 vmem']
            #allocation18 [shape = 'f32[1024]{0}', space=vmem, size = 0x1000, scoped, tag = 'rt2 vmem']
            #allocation19 [shape = 'f32[1024]{0}', space=vmem, size = 0x1000, scoped, tag = 'c vmem']
            #allocation20 [shape = 'f32[1024]{0}', space=vmem, size = 0x1000, scoped, tag = 's vmem']
            #allocation21 [shape = 'f32[4096]{0}', space=vmem, size = 0x4000, scoped, tag = 'c broadcast']
            #allocation22 [shape = 'f32[4096]{0}', space=vmem, size = 0x4000, scoped, tag = 's broadcast']
            %s458 = smov [#allocation10]
            %s459 = smov [#allocation14]
            %v460 = vlaneseq
            %v461 = vand.u32 %v460, 127
            %v462 = vmov %v461
            %v463 = vlaneseq
            %v464 = vshrl.u32 %v463, 7
            %v465 = vmov %v464
            %v466 = vld [vmem:[%s458] sm:$0xff]
            %vm469 = vcmp.eq.s32.totalorder %v465, %v462
            %v470 = vsel %vm469, %v466, 0.0
            %v471 = vrot.slane %v470, 4
            %v472 = vadd.f32 %v470, %v471
            %v473 = vrot.slane %v472, 2
            %v474 = vadd.f32 %v472, %v473
            %v475 = vrot.slane %v474, 1
            %v476 = vadd.f32 %v474, %v475
            %477 = vst [vmem:[%s459] sm:$0x1] %v476
            %s478 = smov [#allocation11]
            %s479 = smov [#allocation15]
            %v480 = vlaneseq
            %v481 = vand.u32 %v480, 127
            %v482 = vmov %v481
            %v483 = vlaneseq
            %v484 = vshrl.u32 %v483, 7
            %v485 = vmov %v484
            %v486 = vld [vmem:[%s478] sm:$0xff]
            %vm489 = vcmp.eq.s32.totalorder %v485, %v482
            %v490 = vsel %vm489, %v486, 0.0
            %v491 = vrot.slane %v490, 4
            %v492 = vadd.f32 %v490, %v491
            %v493 = vrot.slane %v492, 2
            %v494 = vadd.f32 %v492, %v493
            %v495 = vrot.slane %v494, 1
            %v496 = vadd.f32 %v494, %v495
            %497 = vst [vmem:[%s479] sm:$0x1] %v496
            %s498 = smov [#allocation13]
            %s499 = smov [#allocation16]
            %v500 = vlaneseq
            %v501 = vand.u32 %v500, 127
            %v502 = vmov %v501
            %v503 = vlaneseq
            %v504 = vshrl.u32 %v503, 7
            %v505 = vmov %v504
            %v506 = vld [vmem:[%s498] sm:$0xff]
            %vm509 = vcmp.eq.s32.totalorder %v505, %v502
            %v510 = vsel %vm509, %v506, 0.0
            %v511 = vrot.slane %v510, 4
            %v512 = vadd.f32 %v510, %v511
            %v513 = vrot.slane %v512, 2
            %v514 = vadd.f32 %v512, %v513
            %v515 = vrot.slane %v514, 1
            %v516 = vadd.f32 %v514, %v515
            %517 = vst [vmem:[%s499] sm:$0x1] %v516
            %s518 = smov [#allocation19]
            %s519 = smov [#allocation20]
            %s520 = smov [#allocation14]
            %v521 = vld [vmem:[%s520] sm:$0xff]
            %s522 = smov [#allocation15]
            %v523 = vld [vmem:[%s522] sm:$0xff]
            %s524 = smov [#allocation16]
            %v525 = vld [vmem:[%s524] sm:$0xff]
            %v526 = vsub.f32 %v525, %v521
            %v527 = vmul.f32 2.0, %v523
            %v528 = vrcp.pop %v527
            %v529 = vmul.f32 %v527, %v528
            %v530 = vsub.f32 1.0, %v529
            %v531 = vmul.f32 %v528, %v530
            %v532 = vadd.f32 %v528, %v531
            %vm533 = vweird.f32 %v527
            %vm534 = vweird.f32 %v528
            %vm535 = vmor %vm533, %vm534
            %v536 = vsel %vm535, %v528, %v532
            %v537 = vand.u32 2147483647, %v527
            %vm538 = vcmp.eq.f32.partialorder %v537, 8.507059e+37
            %v539 = vand.u32 %v527, 2147483648
            %v540 = vor.u32 1.1754944e-38, %v539
            %v541 = vsel %vm538, %v540, %v536
            %v542 = vmul.f32 %v526, %v541
            %vm543 = vcmp.ge.f32.partialorder %v542, 0.0
            %v544 = vmul.f32 %v542, %v542
            %v545 = vadd.f32 1.0, %v544
            %v546 = vrsqrt.pop %v545
            %v547 = vmul.f32 %v546, %v545
            %v548 = vmul.f32 %v547, %v546
            %v549 = vmul.f32 0.5, %v548
            %v550 = vsub.f32 1.5, %v549
            %v551 = vmul.f32 %v546, %v550
            %v552 = vmul.f32 %v545, %v551
            %vm553 = vcmp.eq.f32.partialorder %v545, inf
            %v554 = vsel %vm553, %v545, %v552
            %vm555 = vcmp.eq.f32.partialorder %v545, 0.0
            %v556 = vand.u32 %v545, 2147483648
            %v557 = vsel %vm555, %v556, %v554
            %v558 = vxor.u32 %v557, 2147483648
            %v559 = vsel %vm543, %v557, %v558
            %v560 = vadd.f32 %v542, %v559
            %v561 = vrcp.pop %v560
            %v562 = vmul.f32 %v560, %v561
            %v563 = vsub.f32 1.0, %v562
            %v564 = vmul.f32 %v561, %v563
            %v565 = vadd.f32 %v561, %v564
            %vm566 = vweird.f32 %v560
            %vm567 = vweird.f32 %v561
            %vm568 = vmor %vm566, %vm567
            %v569 = vsel %vm568, %v561, %v565
            %v570 = vand.u32 2147483647, %v560
            %vm571 = vcmp.eq.f32.partialorder %v570, 8.507059e+37
            %v572 = vand.u32 %v560, 2147483648
            %v573 = vor.u32 1.1754944e-38, %v572
            %v574 = vsel %vm571, %v573, %v569
            %v575 = vand.u32 2147483647, %v521
            %v576 = vand.u32 2147483647, %v523
            %v577 = vand.u32 2147483647, %v525
            %v578 = vmin.f32 %v575, %v577
            %v579 = vmul.f32 1.1920929e-08, %v578
            %vm580 = vcmp.le.f32.partialorder %v576, %v579
            %v581 = vsel %vm580, 0.0, %v574
            %v582 = vmul.f32 %v581, %v581
            %v583 = vadd.f32 1.0, %v582
            %v584 = vrsqrt.pop %v583
            %v585 = vmul.f32 %v584, %v583
            %v586 = vmul.f32 %v585, %v584
            %v587 = vmul.f32 0.5, %v586
            %v588 = vsub.f32 1.5, %v587
            %v589 = vmul.f32 %v584, %v588
            %vm590 = vweird.f32 %v583
            %vm591 = vweird.f32 %v584
            %vm592 = vmor %vm590, %vm591
            %v593 = vsel %vm592, %v584, %v589
            %v594 = vmul.f32 %v581, %v593
            %v595 = vmul.f32 %v581, %v523
            %v596 = vsub.f32 %v521, %v595
            %v597 = vmul.f32 %v581, %v523
            %v598 = vadd.f32 %v525, %v597
            %s599 = smov [#allocation17]
            %600 = vst [vmem:[%s599] sm:$0xff] %v596
            %s601 = smov [#allocation18]
            %602 = vst [vmem:[%s601] sm:$0xff] %v598
            %s603 = smov %s518
            %604 = vst [vmem:[%s603] sm:$0xff] %v593
            %s605 = smov %s519
            %606 = vst [vmem:[%s605] sm:$0xff] %v594
            %s607 = smov [#allocation19]
            %v608 = vld [vmem:[%s607] ss:$0 sm:$0xff]
            %v609 = vlaneseq
            %v610 = vand.u32 %v609, 127
            %v611 = vmov %v610
            %v612 = vlaneseq
            %v613 = vshrl.u32 %v612, 7
            %v614 = vmov %v613
            %vm616 = vcmp.eq.s32.totalorder %v614, %v611
            %v617 = vsel %vm616, %v608, 0.0
            %618 = vadd.xlane.f32.xlu0 %v617
            %v619 = vpop.xlane.xlu0 %618
            %s620 = smov [#allocation21]
            %621 = vst [vmem:[%s620] sm:$0xff] %v619
            %s622 = smov [#allocation20]
            %v623 = vld [vmem:[%s622] ss:$0 sm:$0xff]
            %v624 = vlaneseq
            %v625 = vand.u32 %v624, 127
            %v626 = vmov %v625
            %v627 = vlaneseq
            %v628 = vshrl.u32 %v627, 7
            %v629 = vmov %v628
            %vm631 = vcmp.eq.s32.totalorder %v629, %v626
            %v632 = vsel %vm631, %v623, 0.0
            %633 = vadd.xlane.f32.xlu0 %v632
            %v634 = vpop.xlane.xlu0 %633
            %s635 = smov [#allocation22]
            %636 = vst [vmem:[%s635] sm:$0xff] %v634
            %s637 = smov [#allocation21]
            %v638 = vld [vmem:[%s637] sm:$0xff]
            %s639 = smov [#allocation22]
            %v640 = vld [vmem:[%s639] sm:$0xff]
            %s641 = smov [#allocation10]
            %s642 = smov [#allocation11]
            %s643 = smov [#allocation12]
            %s644 = smov [#allocation13]
            %v645 = vld [vmem:[%s641] sm:$0xff]
            %v646 = vld [vmem:[%s642] sm:$0xff]
            %v647 = vld [vmem:[%s643] sm:$0xff]
            %v648 = vld [vmem:[%s644] sm:$0xff]
            %v649 = vmul.f32 %v638, %v645
            %v650 = vmul.f32 %v640, %v647
            %v651 = vsub.f32 %v649, %v650
            %v652 = vmul.f32 %v638, %v646
            %v653 = vmul.f32 %v640, %v648
            %v654 = vsub.f32 %v652, %v653
            %v655 = vmul.f32 %v640, %v645
            %v656 = vmul.f32 %v638, %v647
            %v657 = vadd.f32 %v655, %v656
            %v658 = vmul.f32 %v640, %v646
            %v659 = vmul.f32 %v638, %v648
            %v660 = vadd.f32 %v658, %v659
            %661 = vst [vmem:[%s641] sm:$0xff] %v651
            %662 = vst [vmem:[%s642] sm:$0xff] %v654
            %663 = vst [vmem:[%s643] sm:$0xff] %v657
            %664 = vst [vmem:[%s644] sm:$0xff] %v660
            %s665 = smov [#allocation19]
            %v666 = vld [vmem:[%s665] ss:$0 sm:$0xff]
            %s667 = smov [#allocation20]
            %v668 = vld [vmem:[%s667] ss:$0 sm:$0xff]
            %s669 = smov [#allocation10]
            %s670 = smov [#allocation11]
            %s671 = smov [#allocation12]
            %s672 = smov [#allocation13]
            %v673 = vld [vmem:[%s669] sm:$0xff]
            %v674 = vld [vmem:[%s670] sm:$0xff]
            %v675 = vld [vmem:[%s671] sm:$0xff]
            %v676 = vld [vmem:[%s672] sm:$0xff]
            %v677 = vmul.f32 %v666, %v673
            %v678 = vmul.f32 %v668, %v674
            %v679 = vsub.f32 %v677, %v678
            %v680 = vmul.f32 %v668, %v673
            %v681 = vmul.f32 %v666, %v674
            %v682 = vadd.f32 %v680, %v681
            %v683 = vmul.f32 %v666, %v675
            %v684 = vmul.f32 %v668, %v676
            %v685 = vsub.f32 %v683, %v684
            %v686 = vmul.f32 %v668, %v675
            %v687 = vmul.f32 %v666, %v676
            %v688 = vadd.f32 %v686, %v687
            %689 = vst [vmem:[%s669] sm:$0xff] %v679
            %690 = vst [vmem:[%s670] sm:$0xff] %v682
            %691 = vst [vmem:[%s671] sm:$0xff] %v685
            %692 = vst [vmem:[%s672] sm:$0xff] %v688
            %s693 = smov [#allocation10]
            %s694 = smov [#allocation17]
            %v695 = vlaneseq
            %v696 = vand.u32 %v695, 127
            %v697 = vmov %v696
            %v698 = vlaneseq
            %v699 = vshrl.u32 %v698, 7
            %v700 = vmov %v699
            %v701 = vld [vmem:[%s694] ss:$0 sm:$0xff]
            %v702 = vld [vmem:[%s693] sm:$0xff]
            %vm705 = vcmp.eq.s32.totalorder %v700, %v697
            %v706 = vsel %vm705, %v701, %v702
            %707 = vst [vmem:[%s693] sm:$0xff] %v706
            %s708 = smov [#allocation11]
            %v709 = vlaneseq
            %v710 = vand.u32 %v709, 127
            %v711 = vmov %v710
            %v712 = vlaneseq
            %v713 = vshrl.u32 %v712, 7
            %v714 = vmov %v713
            %v715 = vld [vmem:[%s708] sm:$0xff]
            %vm718 = vcmp.eq.s32.totalorder %v714, %v711
            %v719 = vsel %vm718, 0.0, %v715
            %720 = vst [vmem:[%s708] sm:$0xff] %v719
            %s721 = smov [#allocation12]
            %v722 = vlaneseq
            %v723 = vand.u32 %v722, 127
            %v724 = vmov %v723
            %v725 = vlaneseq
            %v726 = vshrl.u32 %v725, 7
            %v727 = vmov %v726
            %v728 = vld [vmem:[%s721] sm:$0xff]
            %vm731 = vcmp.eq.s32.totalorder %v727, %v724
            %v732 = vsel %vm731, 0.0, %v728
            %733 = vst [vmem:[%s721] sm:$0xff] %v732
            %s734 = smov [#allocation13]
            %s735 = smov [#allocation18]
            %v736 = vlaneseq
            %v737 = vand.u32 %v736, 127
            %v738 = vmov %v737
            %v739 = vlaneseq
            %v740 = vshrl.u32 %v739, 7
            %v741 = vmov %v740
            %v742 = vld [vmem:[%s735] ss:$0 sm:$0xff]
            %v743 = vld [vmem:[%s734] sm:$0xff]
            %vm746 = vcmp.eq.s32.totalorder %v741, %v738
            %v747 = vsel %vm746, %v742, %v743
            %748 = vst [vmem:[%s734] sm:$0xff] %v747
            %s749 = smov [#allocation10]
            %s750 = smov [#allocation11]
            %v751 = vld [vmem:[%s750] sm:$0xff]
            %752 = vrot.lane.b32.xlu0 %v751, 1
            %v753 = vpop.permute.xlu0 %752
            %v754 = vld [vmem:[%s749] sm:$0xff]
            %v755 = vld [vmem:[%s749] sm:$0xff]
            %756 = vrot.lane.b32.xlu0 %v755, 1
            %v757 = vpop.permute.xlu0 %756
            %v758 = vlaneseq
            %v759 = vand.u32 %v758, 127
            %vm760 = vcmp.eq.s32.totalorder %v759, 0
            %v761 = vsel %vm760, %v755, %v757
            %v762 = vlaneseq
            %v763 = vand.u32 %v762, 127
            %vm764 = vcmp.eq.s32.totalorder %v763, 1
            %v765 = vsel %vm764, %v753, %v761
            %v766 = vlaneseq
            %v767 = vand.u32 %v766, 127
            %vm768 = vcmp.ge.s32.totalorder %v767, 0
            %vm769 = vcmp.lt.s32.totalorder %v767, 8
            %vm770 = vmand %vm768, %vm769
            %v771 = vsel %vm770, %v765, 0.0
            %v772 = vld [vmem:[%s750] sm:$0xff]
            %773 = vrot.lane.b32.xlu0 %v772, 127
            %v774 = vpop.permute.xlu0 %773
            %v775 = vlaneseq
            %v776 = vand.u32 %v775, 127
            %vm777 = vcmp.eq.s32.totalorder %v776, 7
            %v778 = vsel %vm777, %v754, %v774
            %779 = vst [vmem:[%s749] sm:$0xff] %v771
            %780 = vst [vmem:[%s750] sm:$0xff] %v778
            %s781 = smov [#allocation12]
            %s782 = smov [#allocation13]
            %v783 = vld [vmem:[%s782] sm:$0xff]
            %784 = vrot.lane.b32.xlu0 %v783, 1
            %v785 = vpop.permute.xlu0 %784
            %v786 = vld [vmem:[%s781] sm:$0xff]
            %v787 = vld [vmem:[%s781] sm:$0xff]
            %788 = vrot.lane.b32.xlu0 %v787, 1
            %v789 = vpop.permute.xlu0 %788
            %v790 = vlaneseq
            %v791 = vand.u32 %v790, 127
            %vm792 = vcmp.eq.s32.totalorder %v791, 0
            %v793 = vsel %vm792, %v787, %v789
            %v794 = vlaneseq
            %v795 = vand.u32 %v794, 127
            %vm796 = vcmp.eq.s32.totalorder %v795, 1
            %v797 = vsel %vm796, %v785, %v793
            %v798 = vlaneseq
            %v799 = vand.u32 %v798, 127
            %vm800 = vcmp.ge.s32.totalorder %v799, 0
            %vm801 = vcmp.lt.s32.totalorder %v799, 8
            %vm802 = vmand %vm800, %vm801
            %v803 = vsel %vm802, %v797, 0.0
            %v804 = vld [vmem:[%s782] sm:$0xff]
            %805 = vrot.lane.b32.xlu0 %v804, 127
            %v806 = vpop.permute.xlu0 %805
            %v807 = vlaneseq
            %v808 = vand.u32 %v807, 127
            %vm809 = vcmp.eq.s32.totalorder %v808, 7
            %v810 = vsel %vm809, %v786, %v806
            %811 = vst [vmem:[%s781] sm:$0xff] %v803
            %812 = vst [vmem:[%s782] sm:$0xff] %v810
            %s813 = smov [#allocation10]
            %s814 = smov [#allocation12]
            %v815 = vld [vmem:[%s813] ss:$0 sm:$0xff]
            %s817 = scalar_lea.vmem %s813, 4294967295
            %v818 = vld [vmem:[%s817] sm:$0xfe]
            %v819 = vlaneseq
            %v820 = vshrl.u32 %v819, 7
            %vm821 = vcmp.eq.s32.totalorder %v820, 0
            %v822 = vsel %vm821, %v815, %v818
            %s823 = scalar_lea.vmem %s813, 7
            %v824 = vld [vmem:[%s823] ss:$0 sm:$0xff]
            %825 = vst [vmem:[%s813] sm:$0xff] %v822
            %v826 = vld [vmem:[%s814] ss:$0 sm:$0xff]
            %s827 = scalar_lea.vmem %s813, 1
            %828 = vst [vmem:[%s827] sm:$0x1] %v826
            %s829 = scalar_lea.vmem %s814, 1
            %v830 = vld [vmem:[%s829] sm:$0x7f]
            %v831 = vlaneseq
            %v832 = vshrl.u32 %v831, 7
            %vm833 = vcmp.eq.s32.totalorder %v832, 7
            %v834 = vsel %vm833, %v824, %v830
            %v835 = vld [vmem:[%s814] ss:$0 sm:$0xff]
            %836 = vst [vmem:[%s814] sm:$0xff] %v834
            %s837 = smov [#allocation11]
            %s838 = smov [#allocation13]
            %v839 = vld [vmem:[%s837] ss:$0 sm:$0xff]
            %s841 = scalar_lea.vmem %s837, 4294967295
            %v842 = vld [vmem:[%s841] sm:$0xfe]
            %v843 = vlaneseq
            %v844 = vshrl.u32 %v843, 7
            %vm845 = vcmp.eq.s32.totalorder %v844, 0
            %v846 = vsel %vm845, %v839, %v842
            %s847 = scalar_lea.vmem %s837, 7
            %v848 = vld [vmem:[%s847] ss:$0 sm:$0xff]
            %849 = vst [vmem:[%s837] sm:$0xff] %v846
            %v850 = vld [vmem:[%s838] ss:$0 sm:$0xff]
            %s851 = scalar_lea.vmem %s837, 1
            %852 = vst [vmem:[%s851] sm:$0x1] %v850
            %s853 = scalar_lea.vmem %s838, 1
            %v854 = vld [vmem:[%s853] sm:$0x7f]
            %v855 = vlaneseq
            %v856 = vshrl.u32 %v855, 7
            %vm857 = vcmp.eq.s32.totalorder %v856, 7
            %v858 = vsel %vm857, %v848, %v854
            %v859 = vld [vmem:[%s838] ss:$0 sm:$0xff]
            %860 = vst [vmem:[%s838] sm:$0xff] %v858
            %s861 = smov [#allocation21]
            %v862 = vld [vmem:[%s861] sm:$0xff]
            %s863 = smov [#allocation22]
            %v864 = vld [vmem:[%s863] sm:$0xff]
            %s865 = smov %s297
            %s866 = smov %s301
            %s867 = smov %s305
            %s868 = smov %s309
            %v869 = vld [vmem:[%s865] sm:$0xff]
            %v870 = vld [vmem:[%s866] sm:$0xff]
            %v871 = vld [vmem:[%s867] sm:$0xff]
            %v872 = vld [vmem:[%s868] sm:$0xff]
            %v873 = vmul.f32 %v862, %v869
            %v874 = vmul.f32 %v864, %v871
            %v875 = vsub.f32 %v873, %v874
            %v876 = vmul.f32 %v862, %v870
            %v877 = vmul.f32 %v864, %v872
            %v878 = vsub.f32 %v876, %v877
            %v879 = vmul.f32 %v864, %v869
            %v880 = vmul.f32 %v862, %v871
            %v881 = vadd.f32 %v879, %v880
            %v882 = vmul.f32 %v864, %v870
            %v883 = vmul.f32 %v862, %v872
            %v884 = vadd.f32 %v882, %v883
            %885 = vst [vmem:[%s865] sm:$0xff] %v875
            %886 = vst [vmem:[%s866] sm:$0xff] %v878
            %887 = vst [vmem:[%s867] sm:$0xff] %v881
            %888 = vst [vmem:[%s868] sm:$0xff] %v884
            %s889 = smov %s297
            %s890 = smov %s305
            %v891 = vld [vmem:[%s889] ss:$0 sm:$0xff]
            %s893 = scalar_lea.vmem %s889, 4294967295
            %v894 = vld [vmem:[%s893] sm:$0xfe]
            %v895 = vlaneseq
            %v896 = vshrl.u32 %v895, 7
            %vm897 = vcmp.eq.s32.totalorder %v896, 0
            %v898 = vsel %vm897, %v891, %v894
            %s899 = scalar_lea.vmem %s889, 7
            %v900 = vld [vmem:[%s899] ss:$0 sm:$0xff]
            %901 = vst [vmem:[%s889] sm:$0xff] %v898
            %v902 = vld [vmem:[%s890] ss:$0 sm:$0xff]
            %s903 = scalar_lea.vmem %s889, 1
            %904 = vst [vmem:[%s903] sm:$0x1] %v902
            %s905 = scalar_lea.vmem %s890, 1
            %v906 = vld [vmem:[%s905] sm:$0x7f]
            %v907 = vlaneseq
            %v908 = vshrl.u32 %v907, 7
            %vm909 = vcmp.eq.s32.totalorder %v908, 7
            %v910 = vsel %vm909, %v900, %v906
            %v911 = vld [vmem:[%s890] ss:$0 sm:$0xff]
            %912 = vst [vmem:[%s890] sm:$0xff] %v910
            %s913 = smov %s301
            %s914 = smov %s309
            %v915 = vld [vmem:[%s913] ss:$0 sm:$0xff]
            %s917 = scalar_lea.vmem %s913, 4294967295
            %v918 = vld [vmem:[%s917] sm:$0xfe]
            %v919 = vlaneseq
            %v920 = vshrl.u32 %v919, 7
            %vm921 = vcmp.eq.s32.totalorder %v920, 0
            %v922 = vsel %vm921, %v915, %v918
            %s923 = scalar_lea.vmem %s913, 7
            %v924 = vld [vmem:[%s923] ss:$0 sm:$0xff]
            %925 = vst [vmem:[%s913] sm:$0xff] %v922
            %v926 = vld [vmem:[%s914] ss:$0 sm:$0xff]
            %s927 = scalar_lea.vmem %s913, 1
            %928 = vst [vmem:[%s927] sm:$0x1] %v926
            %s929 = scalar_lea.vmem %s914, 1
            %v930 = vld [vmem:[%s929] sm:$0x7f]
            %v931 = vlaneseq
            %v932 = vshrl.u32 %v931, 7
            %vm933 = vcmp.eq.s32.totalorder %v932, 7
            %v934 = vsel %vm933, %v924, %v930
            %v935 = vld [vmem:[%s914] ss:$0 sm:$0xff]
            %936 = vst [vmem:[%s914] sm:$0xff] %v934
          $region168: #{custom-call.9} parent=160 // loop_footer
            %s457 = sadd.s32 1, %s453
          $region169: #{custom-call.9} parent=160 // loop_footer_branch
            %452 = sbr.rel target = $region165
          $region170: #{custom-call.9} parent=160 // loop_exit
            _
          %s937 = sadd.s32 %s355, 1
        $region161: #{custom-call.9} parent=155 // loop_footer
          _
        $region162: #{custom-call.9} parent=155 // loop_footer_branch
          %354 = sbr.rel target = $region158
        $region163: #{custom-call.9} parent=155 // loop_exit
          _
        %s940 = sand.u32 %s17, 7
        %s941 = scalar_lea.vmem %s287, %s940 [#allocation4]
        %s942 = sand.u32 %s17, 7
        %s943 = scalar_lea.vmem %s293, %s942 [#allocation5]
        %s944 = smov [#allocation10]
        %s945 = smov %s941
        %v946 = vlaneseq
        %v947 = vand.u32 %v946, 127
        %v948 = vmov %v947
        %v949 = vlaneseq
        %v950 = vshrl.u32 %v949, 7
        %v951 = vmov %v950
        %v952 = vld [vmem:[%s944] sm:$0xff]
        %vm955 = vcmp.eq.s32.totalorder %v951, %v948
        %v956 = vsel %vm955, %v952, 0.0
        %v957 = vrot.slane %v956, 4
        %v958 = vadd.f32 %v956, %v957
        %v959 = vrot.slane %v958, 2
        %v960 = vadd.f32 %v958, %v959
        %v961 = vrot.slane %v960, 1
        %v962 = vadd.f32 %v960, %v961
        %963 = vst [vmem:[%s945] sm:$0x1] %v962
        %s964 = smov [#allocation13]
        %s965 = smov %s943
        %v966 = vlaneseq
        %v967 = vand.u32 %v966, 127
        %v968 = vmov %v967
        %v969 = vlaneseq
        %v970 = vshrl.u32 %v969, 7
        %v971 = vmov %v970
        %v972 = vld [vmem:[%s964] sm:$0xff]
        %vm975 = vcmp.eq.s32.totalorder %v971, %v968
        %v976 = vsel %vm975, %v972, 0.0
        %v977 = vrot.slane %v976, 4
        %v978 = vadd.f32 %v976, %v977
        %v979 = vrot.slane %v978, 2
        %v980 = vadd.f32 %v978, %v979
        %v981 = vrot.slane %v980, 1
        %v982 = vadd.f32 %v980, %v981
        %983 = vst [vmem:[%s965] sm:$0x1] %v982
        %s984 = sand.u32 %s27, 1
        %s985 = sand.u32 %s27, 1
        %s986 = smul.addr %s985, 8
        %s987 = scalar_lea.vmem [#allocation4], %s986
        %s988 = sand.u32 %s55, 1
        %s989 = sand.u32 %s55, 1
        %s990 = smul.addr %s989, 8
        %s991 = scalar_lea.vmem [#allocation5], %s990
        %s992 = sand.u32 %s17, 1
        %s993 = sand.u32 %s17, 1
        %s994 = smul.addr %s993, 8
        %s995 = scalar_lea.vmem [#allocation6], %s994
        %s996 = sand.u32 %s17, 1
        %s997 = sand.u32 %s17, 1
        %s998 = smul.addr %s997, 8
        %s999 = scalar_lea.vmem [#allocation7], %s998
        %s1000 = sand.u32 %s17, 1
        %s1001 = sand.u32 %s17, 1
        %s1002 = smul.addr %s1001, 8
        %s1003 = scalar_lea.vmem [#allocation8], %s1002
        %s1004 = sand.u32 %s17, 1
        %s1005 = sand.u32 %s17, 1
        %s1006 = smul.addr %s1005, 8
        %s1007 = scalar_lea.vmem [#allocation9], %s1006
        // Predicated region
        $region171: #{custom-call.9} parent=155 // pred_check
          %p1008 = pneg %p37
        $region172: #{custom-call.9} parent=155 // pred_check_branch
          %1010 = sbr.rel (%p1008) target = $region174
        $region173: #{custom-call.9} parent=155 // pred_region
          %s1011 = sshrl.u32 %s17, 3
          %s1012 = smul.addr %s1011, 8
          %s1013 = scalar_lea.vmem %s4, %s1012
          // Predicated region
          $region175: #{custom-call.9} parent=173 // pred_check
            _
          $region176: #{custom-call.9} parent=173 // pred_check_branch
            %1015 = sbr.rel (0) target = $region178
          $region177: #{custom-call.9} parent=173 // pred_region
            // Predicated region
            $region179: #{custom-call.9} parent=177 // pred_check
              _
            $region180: #{custom-call.9} parent=177 // pred_check_branch
              %1017 = sbr.rel (0) target = $region182
            $region181: #{custom-call.9} parent=177 // pred_region
              // Predicated region
              $region194: #{custom-call.9} parent=181 // pred_check
                _
              $region195: #{custom-call.9} parent=181 // pred_check_branch
                %1033 = sbr.rel (0) target = $region197
              $region196: #{custom-call.9} parent=181 // pred_region
                loop: start=0, step=1, limit=1
                $region198: #{custom-call.9} parent=196 // loop_pre_header
                  _
                $region199: #{custom-call.9} parent=196 // loop_header
                  %s1035 = sphi 0, %s1039
                  %p1036 = scmp.ge.s32.totalorder %s1035, 1
                  %s1040 = sphi %s987, %s987
                  %s1041 = sphi %s1013, %s1013
                $region200: #{custom-call.9} parent=196 // loop_header_branch
                  %1038 = sbr.rel (%p1036) target = $region204
                $region201: #{custom-call.9} parent=196 // loop_body
                  %v1042 = vld [vmem:[%s1040] sm:$0xff]
                  %1043 = vst [vmem:[%s1041] sm:$0xff] %v1042
                $region202: #{custom-call.9} parent=196 // loop_footer
                  %s1039 = sadd.s32 1, %s1035
                $region203: #{custom-call.9} parent=196 // loop_footer_branch
                  %1034 = sbr.rel target = $region199
                $region204: #{custom-call.9} parent=196 // loop_exit
                  _
              $region197: #{custom-call.9} parent=181 // pred_fallthru
                _
              // Predicated region
              $region205: #{custom-call.9} parent=181 // pred_check
                _
              $region206: #{custom-call.9} parent=181 // pred_check_branch
                %1045 = sbr.rel target = $region208
              $region207: #{custom-call.9} parent=181 // pred_region
                _
              $region208: #{custom-call.9} parent=181 // pred_fallthru
                _
            $region182: #{custom-call.9} parent=177 // pred_fallthru
              _
            // Predicated region
            $region183: #{custom-call.9} parent=177 // pred_check
              _
            $region184: #{custom-call.9} parent=177 // pred_check_branch
              %1019 = sbr.rel target = $region186
            $region185: #{custom-call.9} parent=177 // pred_region
              %s1021 = ssub.s32 256, 1
              loop: start=0, step=1, limit=1
              $region187: #{custom-call.9} parent=185 // loop_pre_header
                _
              $region188: #{custom-call.9} parent=185 // loop_header
                %s1023 = sphi 0, %s1027
                %p1024 = scmp.ge.s32.totalorder %s1023, 1
                %s1028 = sphi %s987, %s987
                %s1029 = sphi %s1013, %s1013
              $region189: #{custom-call.9} parent=185 // loop_header_branch
                %1026 = sbr.rel (%p1024) target = $region193
              $region190: #{custom-call.9} parent=185 // loop_body
                %v1030 = vld [vmem:[%s1028] sm:%s1021]
                %1031 = vst [vmem:[%s1029] sm:%s1021] %v1030
              $region191: #{custom-call.9} parent=185 // loop_footer
                %s1027 = sadd.s32 1, %s1023
              $region192: #{custom-call.9} parent=185 // loop_footer_branch
                %1022 = sbr.rel target = $region188
              $region193: #{custom-call.9} parent=185 // loop_exit
                _
            $region186: #{custom-call.9} parent=177 // pred_fallthru
              _
          $region178: #{custom-call.9} parent=173 // pred_fallthru
            _
          %1046 = vnop
        $region174: #{custom-call.9} parent=155 // pred_fallthru
          _
        // Predicated region
        $region209: #{custom-call.9} parent=155 // pred_check
          %p1047 = pneg %p65
        $region210: #{custom-call.9} parent=155 // pred_check_branch
          %1049 = sbr.rel (%p1047) target = $region212
        $region211: #{custom-call.9} parent=155 // pred_region
          %s1050 = sshrl.u32 %s17, 3
          %s1051 = smul.addr %s1050, 8
          %s1052 = scalar_lea.vmem %s5, %s1051
          // Predicated region
          $region213: #{custom-call.9} parent=211 // pred_check
            _
          $region214: #{custom-call.9} parent=211 // pred_check_branch
            %1054 = sbr.rel (0) target = $region216
          $region215: #{custom-call.9} parent=211 // pred_region
            // Predicated region
            $region217: #{custom-call.9} parent=215 // pred_check
              _
            $region218: #{custom-call.9} parent=215 // pred_check_branch
              %1056 = sbr.rel (0) target = $region220
            $region219: #{custom-call.9} parent=215 // pred_region
              // Predicated region
              $region232: #{custom-call.9} parent=219 // pred_check
                _
              $region233: #{custom-call.9} parent=219 // pred_check_branch
                %1072 = sbr.rel (0) target = $region235
              $region234: #{custom-call.9} parent=219 // pred_region
                loop: start=0, step=1, limit=1
                $region236: #{custom-call.9} parent=234 // loop_pre_header
                  _
                $region237: #{custom-call.9} parent=234 // loop_header
                  %s1074 = sphi 0, %s1078
                  %p1075 = scmp.ge.s32.totalorder %s1074, 1
                  %s1079 = sphi %s991, %s991
                  %s1080 = sphi %s1052, %s1052
                $region238: #{custom-call.9} parent=234 // loop_header_branch
                  %1077 = sbr.rel (%p1075) target = $region242
                $region239: #{custom-call.9} parent=234 // loop_body
                  %v1081 = vld [vmem:[%s1079] sm:$0xff]
                  %1082 = vst [vmem:[%s1080] sm:$0xff] %v1081
                $region240: #{custom-call.9} parent=234 // loop_footer
                  %s1078 = sadd.s32 1, %s1074
                $region241: #{custom-call.9} parent=234 // loop_footer_branch
                  %1073 = sbr.rel target = $region237
                $region242: #{custom-call.9} parent=234 // loop_exit
                  _
              $region235: #{custom-call.9} parent=219 // pred_fallthru
                _
              // Predicated region
              $region243: #{custom-call.9} parent=219 // pred_check
                _
              $region244: #{custom-call.9} parent=219 // pred_check_branch
                %1084 = sbr.rel target = $region246
              $region245: #{custom-call.9} parent=219 // pred_region
                _
              $region246: #{custom-call.9} parent=219 // pred_fallthru
                _
            $region220: #{custom-call.9} parent=215 // pred_fallthru
              _
            // Predicated region
            $region221: #{custom-call.9} parent=215 // pred_check
              _
            $region222: #{custom-call.9} parent=215 // pred_check_branch
              %1058 = sbr.rel target = $region224
            $region223: #{custom-call.9} parent=215 // pred_region
              %s1060 = ssub.s32 256, 1
              loop: start=0, step=1, limit=1
              $region225: #{custom-call.9} parent=223 // loop_pre_header
                _
              $region226: #{custom-call.9} parent=223 // loop_header
                %s1062 = sphi 0, %s1066
                %p1063 = scmp.ge.s32.totalorder %s1062, 1
                %s1067 = sphi %s991, %s991
                %s1068 = sphi %s1052, %s1052
              $region227: #{custom-call.9} parent=223 // loop_header_branch
                %1065 = sbr.rel (%p1063) target = $region231
              $region228: #{custom-call.9} parent=223 // loop_body
                %v1069 = vld [vmem:[%s1067] sm:%s1060]
                %1070 = vst [vmem:[%s1068] sm:%s1060] %v1069
              $region229: #{custom-call.9} parent=223 // loop_footer
                %s1066 = sadd.s32 1, %s1062
              $region230: #{custom-call.9} parent=223 // loop_footer_branch
                %1061 = sbr.rel target = $region226
              $region231: #{custom-call.9} parent=223 // loop_exit
                _
            $region224: #{custom-call.9} parent=215 // pred_fallthru
              _
          $region216: #{custom-call.9} parent=211 // pred_fallthru
            _
          %1085 = vnop
        $region212: #{custom-call.9} parent=155 // pred_fallthru
          _
        %s1086 = smul.addr %s17, 8
        %s1087 = scalar_lea.vmem %s6, %s1086
        // Predicated region
        $region247: #{custom-call.9} parent=155 // pred_check
          _
        $region248: #{custom-call.9} parent=155 // pred_check_branch
          %1089 = sbr.rel (0) target = $region250
        $region249: #{custom-call.9} parent=155 // pred_region
          // Predicated region
          $region251: #{custom-call.9} parent=249 // pred_check
            _
          $region252: #{custom-call.9} parent=249 // pred_check_branch
            %1091 = sbr.rel (0) target = $region254
          $region253: #{custom-call.9} parent=249 // pred_region
            // Predicated region
            $region266: #{custom-call.9} parent=253 // pred_check
              _
            $region267: #{custom-call.9} parent=253 // pred_check_branch
              %1107 = sbr.rel (0) target = $region269
            $region268: #{custom-call.9} parent=253 // pred_region
              loop: start=0, step=1, limit=1
              $region270: #{custom-call.9} parent=268 // loop_pre_header
                _
              $region271: #{custom-call.9} parent=268 // loop_header
                %s1109 = sphi 0, %s1113
                %p1110 = scmp.ge.s32.totalorder %s1109, 1
                %s1114 = sphi %s995, %s995
                %s1115 = sphi %s1087, %s1087
              $region272: #{custom-call.9} parent=268 // loop_header_branch
                %1112 = sbr.rel (%p1110) target = $region276
              $region273: #{custom-call.9} parent=268 // loop_body
                %v1116 = vld [vmem:[%s1114] sm:$0xff]
                %1117 = vst [vmem:[%s1115] sm:$0xff] %v1116
              $region274: #{custom-call.9} parent=268 // loop_footer
                %s1113 = sadd.s32 1, %s1109
              $region275: #{custom-call.9} parent=268 // loop_footer_branch
                %1108 = sbr.rel target = $region271
              $region276: #{custom-call.9} parent=268 // loop_exit
                _
            $region269: #{custom-call.9} parent=253 // pred_fallthru
              _
            // Predicated region
            $region277: #{custom-call.9} parent=253 // pred_check
              _
            $region278: #{custom-call.9} parent=253 // pred_check_branch
              %1119 = sbr.rel target = $region280
            $region279: #{custom-call.9} parent=253 // pred_region
              _
            $region280: #{custom-call.9} parent=253 // pred_fallthru
              _
          $region254: #{custom-call.9} parent=249 // pred_fallthru
            _
          // Predicated region
          $region255: #{custom-call.9} parent=249 // pred_check
            _
          $region256: #{custom-call.9} parent=249 // pred_check_branch
            %1093 = sbr.rel target = $region258
          $region257: #{custom-call.9} parent=249 // pred_region
            %s1095 = ssub.s32 256, 1
            loop: start=0, step=1, limit=1
            $region259: #{custom-call.9} parent=257 // loop_pre_header
              _
            $region260: #{custom-call.9} parent=257 // loop_header
              %s1097 = sphi 0, %s1101
              %p1098 = scmp.ge.s32.totalorder %s1097, 1
              %s1102 = sphi %s995, %s995
              %s1103 = sphi %s1087, %s1087
            $region261: #{custom-call.9} parent=257 // loop_header_branch
              %1100 = sbr.rel (%p1098) target = $region265
            $region262: #{custom-call.9} parent=257 // loop_body
              %v1104 = vld [vmem:[%s1102] sm:%s1095]
              %1105 = vst [vmem:[%s1103] sm:%s1095] %v1104
            $region263: #{custom-call.9} parent=257 // loop_footer
              %s1101 = sadd.s32 1, %s1097
            $region264: #{custom-call.9} parent=257 // loop_footer_branch
              %1096 = sbr.rel target = $region260
            $region265: #{custom-call.9} parent=257 // loop_exit
              _
          $region258: #{custom-call.9} parent=249 // pred_fallthru
            _
        $region250: #{custom-call.9} parent=155 // pred_fallthru
          _
        %1120 = vnop
        %s1121 = smul.addr %s17, 8
        %s1122 = scalar_lea.vmem %s7, %s1121
        // Predicated region
        $region281: #{custom-call.9} parent=155 // pred_check
          _
        $region282: #{custom-call.9} parent=155 // pred_check_branch
          %1124 = sbr.rel (0) target = $region284
        $region283: #{custom-call.9} parent=155 // pred_region
          // Predicated region
          $region285: #{custom-call.9} parent=283 // pred_check
            _
          $region286: #{custom-call.9} parent=283 // pred_check_branch
            %1126 = sbr.rel (0) target = $region288
          $region287: #{custom-call.9} parent=283 // pred_region
            // Predicated region
            $region300: #{custom-call.9} parent=287 // pred_check
              _
            $region301: #{custom-call.9} parent=287 // pred_check_branch
              %1142 = sbr.rel (0) target = $region303
            $region302: #{custom-call.9} parent=287 // pred_region
              loop: start=0, step=1, limit=1
              $region304: #{custom-call.9} parent=302 // loop_pre_header
                _
              $region305: #{custom-call.9} parent=302 // loop_header
                %s1144 = sphi 0, %s1148
                %p1145 = scmp.ge.s32.totalorder %s1144, 1
                %s1149 = sphi %s999, %s999
                %s1150 = sphi %s1122, %s1122
              $region306: #{custom-call.9} parent=302 // loop_header_branch
                %1147 = sbr.rel (%p1145) target = $region310
              $region307: #{custom-call.9} parent=302 // loop_body
                %v1151 = vld [vmem:[%s1149] sm:$0xff]
                %1152 = vst [vmem:[%s1150] sm:$0xff] %v1151
              $region308: #{custom-call.9} parent=302 // loop_footer
                %s1148 = sadd.s32 1, %s1144
              $region309: #{custom-call.9} parent=302 // loop_footer_branch
                %1143 = sbr.rel target = $region305
              $region310: #{custom-call.9} parent=302 // loop_exit
                _
            $region303: #{custom-call.9} parent=287 // pred_fallthru
              _
            // Predicated region
            $region311: #{custom-call.9} parent=287 // pred_check
              _
            $region312: #{custom-call.9} parent=287 // pred_check_branch
              %1154 = sbr.rel target = $region314
            $region313: #{custom-call.9} parent=287 // pred_region
              _
            $region314: #{custom-call.9} parent=287 // pred_fallthru
              _
          $region288: #{custom-call.9} parent=283 // pred_fallthru
            _
          // Predicated region
          $region289: #{custom-call.9} parent=283 // pred_check
            _
          $region290: #{custom-call.9} parent=283 // pred_check_branch
            %1128 = sbr.rel target = $region292
          $region291: #{custom-call.9} parent=283 // pred_region
            %s1130 = ssub.s32 256, 1
            loop: start=0, step=1, limit=1
            $region293: #{custom-call.9} parent=291 // loop_pre_header
              _
            $region294: #{custom-call.9} parent=291 // loop_header
              %s1132 = sphi 0, %s1136
              %p1133 = scmp.ge.s32.totalorder %s1132, 1
              %s1137 = sphi %s999, %s999
              %s1138 = sphi %s1122, %s1122
            $region295: #{custom-call.9} parent=291 // loop_header_branch
              %1135 = sbr.rel (%p1133) target = $region299
            $region296: #{custom-call.9} parent=291 // loop_body
              %v1139 = vld [vmem:[%s1137] sm:%s1130]
              %1140 = vst [vmem:[%s1138] sm:%s1130] %v1139
            $region297: #{custom-call.9} parent=291 // loop_footer
              %s1136 = sadd.s32 1, %s1132
            $region298: #{custom-call.9} parent=291 // loop_footer_branch
              %1131 = sbr.rel target = $region294
            $region299: #{custom-call.9} parent=291 // loop_exit
              _
          $region292: #{custom-call.9} parent=283 // pred_fallthru
            _
        $region284: #{custom-call.9} parent=155 // pred_fallthru
          _
        %1155 = vnop
        %s1156 = smul.addr %s17, 8
        %s1157 = scalar_lea.vmem %s8, %s1156
        // Predicated region
        $region315: #{custom-call.9} parent=155 // pred_check
          _
        $region316: #{custom-call.9} parent=155 // pred_check_branch
          %1159 = sbr.rel (0) target = $region318
        $region317: #{custom-call.9} parent=155 // pred_region
          // Predicated region
          $region319: #{custom-call.9} parent=317 // pred_check
            _
          $region320: #{custom-call.9} parent=317 // pred_check_branch
            %1161 = sbr.rel (0) target = $region322
          $region321: #{custom-call.9} parent=317 // pred_region
            // Predicated region
            $region334: #{custom-call.9} parent=321 // pred_check
              _
            $region335: #{custom-call.9} parent=321 // pred_check_branch
              %1177 = sbr.rel (0) target = $region337
            $region336: #{custom-call.9} parent=321 // pred_region
              loop: start=0, step=1, limit=1
              $region338: #{custom-call.9} parent=336 // loop_pre_header
                _
              $region339: #{custom-call.9} parent=336 // loop_header
                %s1179 = sphi 0, %s1183
                %p1180 = scmp.ge.s32.totalorder %s1179, 1
                %s1184 = sphi %s1003, %s1003
                %s1185 = sphi %s1157, %s1157
              $region340: #{custom-call.9} parent=336 // loop_header_branch
                %1182 = sbr.rel (%p1180) target = $region344
              $region341: #{custom-call.9} parent=336 // loop_body
                %v1186 = vld [vmem:[%s1184] sm:$0xff]
                %1187 = vst [vmem:[%s1185] sm:$0xff] %v1186
              $region342: #{custom-call.9} parent=336 // loop_footer
                %s1183 = sadd.s32 1, %s1179
              $region343: #{custom-call.9} parent=336 // loop_footer_branch
                %1178 = sbr.rel target = $region339
              $region344: #{custom-call.9} parent=336 // loop_exit
                _
            $region337: #{custom-call.9} parent=321 // pred_fallthru
              _
            // Predicated region
            $region345: #{custom-call.9} parent=321 // pred_check
              _
            $region346: #{custom-call.9} parent=321 // pred_check_branch
              %1189 = sbr.rel target = $region348
            $region347: #{custom-call.9} parent=321 // pred_region
              _
            $region348: #{custom-call.9} parent=321 // pred_fallthru
              _
          $region322: #{custom-call.9} parent=317 // pred_fallthru
            _
          // Predicated region
          $region323: #{custom-call.9} parent=317 // pred_check
            _
          $region324: #{custom-call.9} parent=317 // pred_check_branch
            %1163 = sbr.rel target = $region326
          $region325: #{custom-call.9} parent=317 // pred_region
            %s1165 = ssub.s32 256, 1
            loop: start=0, step=1, limit=1
            $region327: #{custom-call.9} parent=325 // loop_pre_header
              _
            $region328: #{custom-call.9} parent=325 // loop_header
              %s1167 = sphi 0, %s1171
              %p1168 = scmp.ge.s32.totalorder %s1167, 1
              %s1172 = sphi %s1003, %s1003
              %s1173 = sphi %s1157, %s1157
            $region329: #{custom-call.9} parent=325 // loop_header_branch
              %1170 = sbr.rel (%p1168) target = $region333
            $region330: #{custom-call.9} parent=325 // loop_body
              %v1174 = vld [vmem:[%s1172] sm:%s1165]
              %1175 = vst [vmem:[%s1173] sm:%s1165] %v1174
            $region331: #{custom-call.9} parent=325 // loop_footer
              %s1171 = sadd.s32 1, %s1167
            $region332: #{custom-call.9} parent=325 // loop_footer_branch
              %1166 = sbr.rel target = $region328
            $region333: #{custom-call.9} parent=325 // loop_exit
              _
          $region326: #{custom-call.9} parent=317 // pred_fallthru
            _
        $region318: #{custom-call.9} parent=155 // pred_fallthru
          _
        %1190 = vnop
        %s1191 = smul.addr %s17, 8
        %s1192 = scalar_lea.vmem %s9, %s1191
        // Predicated region
        $region349: #{custom-call.9} parent=155 // pred_check
          _
        $region350: #{custom-call.9} parent=155 // pred_check_branch
          %1194 = sbr.rel (0) target = $region352
        $region351: #{custom-call.9} parent=155 // pred_region
          // Predicated region
          $region353: #{custom-call.9} parent=351 // pred_check
            _
          $region354: #{custom-call.9} parent=351 // pred_check_branch
            %1196 = sbr.rel (0) target = $region356
          $region355: #{custom-call.9} parent=351 // pred_region
            // Predicated region
            $region368: #{custom-call.9} parent=355 // pred_check
              _
            $region369: #{custom-call.9} parent=355 // pred_check_branch
              %1212 = sbr.rel (0) target = $region371
            $region370: #{custom-call.9} parent=355 // pred_region
              loop: start=0, step=1, limit=1
              $region372: #{custom-call.9} parent=370 // loop_pre_header
                _
              $region373: #{custom-call.9} parent=370 // loop_header
                %s1214 = sphi 0, %s1218
                %p1215 = scmp.ge.s32.totalorder %s1214, 1
                %s1219 = sphi %s1007, %s1007
                %s1220 = sphi %s1192, %s1192
              $region374: #{custom-call.9} parent=370 // loop_header_branch
                %1217 = sbr.rel (%p1215) target = $region378
              $region375: #{custom-call.9} parent=370 // loop_body
                %v1221 = vld [vmem:[%s1219] sm:$0xff]
                %1222 = vst [vmem:[%s1220] sm:$0xff] %v1221
              $region376: #{custom-call.9} parent=370 // loop_footer
                %s1218 = sadd.s32 1, %s1214
              $region377: #{custom-call.9} parent=370 // loop_footer_branch
                %1213 = sbr.rel target = $region373
              $region378: #{custom-call.9} parent=370 // loop_exit
                _
            $region371: #{custom-call.9} parent=355 // pred_fallthru
              _
            // Predicated region
            $region379: #{custom-call.9} parent=355 // pred_check
              _
            $region380: #{custom-call.9} parent=355 // pred_check_branch
              %1224 = sbr.rel target = $region382
            $region381: #{custom-call.9} parent=355 // pred_region
              _
            $region382: #{custom-call.9} parent=355 // pred_fallthru
              _
          $region356: #{custom-call.9} parent=351 // pred_fallthru
            _
          // Predicated region
          $region357: #{custom-call.9} parent=351 // pred_check
            _
          $region358: #{custom-call.9} parent=351 // pred_check_branch
            %1198 = sbr.rel target = $region360
          $region359: #{custom-call.9} parent=351 // pred_region
            %s1200 = ssub.s32 256, 1
            loop: start=0, step=1, limit=1
            $region361: #{custom-call.9} parent=359 // loop_pre_header
              _
            $region362: #{custom-call.9} parent=359 // loop_header
              %s1202 = sphi 0, %s1206
              %p1203 = scmp.ge.s32.totalorder %s1202, 1
              %s1207 = sphi %s1007, %s1007
              %s1208 = sphi %s1192, %s1192
            $region363: #{custom-call.9} parent=359 // loop_header_branch
              %1205 = sbr.rel (%p1203) target = $region367
            $region364: #{custom-call.9} parent=359 // loop_body
              %v1209 = vld [vmem:[%s1207] sm:%s1200]
              %1210 = vst [vmem:[%s1208] sm:%s1200] %v1209
            $region365: #{custom-call.9} parent=359 // loop_footer
              %s1206 = sadd.s32 1, %s1202
            $region366: #{custom-call.9} parent=359 // loop_footer_branch
              %1201 = sbr.rel target = $region362
            $region367: #{custom-call.9} parent=359 // loop_exit
              _
          $region360: #{custom-call.9} parent=351 // pred_fallthru
            _
        $region352: #{custom-call.9} parent=155 // pred_fallthru
          _
        %1225 = vnop
      $region156: #{custom-call.9} parent=5 // pred_fallthru
        _
      %p1226 = scmp.le.s32.totalorder 2, %s12
      // Predicated region
      $region383: #{custom-call.9} parent=5 // pred_check
        %p1227 = pneg %p1226
      $region384: #{custom-call.9} parent=5 // pred_check_branch
        %1229 = sbr.rel (%p1227) target = $region386
      $region385: #{custom-call.9} parent=5 // pred_region
        %s1230 = ssub.s32 %s12, 2
        // Predicated region
        $region387: #{custom-call.9} parent=385 // pred_check
          %p1231 = pneg %p43
        $region388: #{custom-call.9} parent=385 // pred_check_branch
          %1233 = sbr.rel (%p1231) target = $region390
        $region389: #{custom-call.9} parent=385 // pred_region
          %s1234 = sand.u32 %s28, 1
          %s1235 = sand.u32 %s28, 1
          %s1236 = smul.addr %s1235, 8
          %s1237 = scalar_lea.vmem [#allocation4], %s1236
        $region390: #{custom-call.9} parent=385 // pred_fallthru
          _
        // Predicated region
        $region391: #{custom-call.9} parent=385 // pred_check
          %p1238 = pneg %p71
        $region392: #{custom-call.9} parent=385 // pred_check_branch
          %1240 = sbr.rel (%p1238) target = $region394
        $region393: #{custom-call.9} parent=385 // pred_region
          %s1241 = sand.u32 %s56, 1
          %s1242 = sand.u32 %s56, 1
          %s1243 = smul.addr %s1242, 8
          %s1244 = scalar_lea.vmem [#allocation5], %s1243
        $region394: #{custom-call.9} parent=385 // pred_fallthru
          _
        %s1245 = sand.u32 %s18, 1
        %s1246 = sand.u32 %s18, 1
        %s1247 = smul.addr %s1246, 8
        %s1248 = scalar_lea.vmem [#allocation6], %s1247
        %s1249 = sand.u32 %s18, 1
        %s1250 = sand.u32 %s18, 1
        %s1251 = smul.addr %s1250, 8
        %s1252 = scalar_lea.vmem [#allocation7], %s1251
        %s1253 = sand.u32 %s18, 1
        %s1254 = sand.u32 %s18, 1
        %s1255 = smul.addr %s1254, 8
        %s1256 = scalar_lea.vmem [#allocation8], %s1255
        %s1257 = sand.u32 %s18, 1
        %s1258 = sand.u32 %s18, 1
        %s1259 = smul.addr %s1258, 8
        %s1260 = scalar_lea.vmem [#allocation9], %s1259
      $region386: #{custom-call.9} parent=5 // pred_fallthru
        _
    $region6: #{custom-call.9} parent=1 // loop_footer
      %s16 = sadd.s32 1, %s12
    $region7: #{custom-call.9} parent=1 // loop_footer_branch
      %11 = sbr.rel target = $region3
    $region8: #{custom-call.9} parent=1 // loop_exit
      _

// kernel: custom-call.10
$region0: #{custom-call.10}
  %s0 = inlined_call_operand.vmem [shape: f32[8,8,8], index: 0, kind: input, shape index: {}]
  %s1 = inlined_call_operand.vmem [shape: f32[8,8,8], index: 1, kind: input, shape index: {}]
  %s2 = inlined_call_operand.vmem [shape: f32[8,8,8], index: 2, kind: input, shape index: {}]
  %s3 = inlined_call_operand.vmem [shape: f32[8,8,8], index: 3, kind: input, shape index: {}]
  %s4 = inlined_call_operand.vmem [shape: f32[8,8], index: 4, kind: output, shape index: {0}]
  %s5 = inlined_call_operand.vmem [shape: f32[8,8], index: 5, kind: output, shape index: {1}]
  %s6 = inlined_call_operand.vmem [shape: f32[8,8,8], index: 6, kind: output, shape index: {2}]
  %s7 = inlined_call_operand.vmem [shape: f32[8,8,8], index: 7, kind: output, shape index: {3}]
  %s8 = inlined_call_operand.vmem [shape: f32[8,8,8], index: 8, kind: output, shape index: {4}]
  %s9 = inlined_call_operand.vmem [shape: f32[8,8,8], index: 9, kind: output, shape index: {5}]
  %10 = xla_tuple %s4, %s5, %s6, %s7, %s8, %s9
  $region1: #{custom-call.10} parent=0
    #allocation0 [shape = 'u8[8192]{0}', space=vmem, size = 0x2000, scoped, tag = 'operand span for operand 0']
    #allocation1 [shape = 'u8[8192]{0}', space=vmem, size = 0x2000, scoped, tag = 'operand span for operand 1']
    #allocation2 [shape = 'u8[8192]{0}', space=vmem, size = 0x2000, scoped, tag = 'operand span for operand 2']
    #allocation3 [shape = 'u8[8192]{0}', space=vmem, size = 0x2000, scoped, tag = 'operand span for operand 3']
    #allocation4 [shape = 'u8[8192]{0}', space=vmem, size = 0x2000, scoped, tag = 'operand span for operand 4']
    #allocation5 [shape = 'u8[8192]{0}', space=vmem, size = 0x2000, scoped, tag = 'operand span for operand 5']
    #allocation6 [shape = 'u8[8192]{0}', space=vmem, size = 0x2000, scoped, tag = 'operand span for operand 6']
    #allocation7 [shape = 'u8[8192]{0}', space=vmem, size = 0x2000, scoped, tag = 'operand span for operand 7']
    #allocation8 [shape = 'u8[8192]{0}', space=vmem, size = 0x2000, scoped, tag = 'operand span for operand 8']
    #allocation9 [shape = 'u8[8192]{0}', space=vmem, size = 0x2000, scoped, tag = 'operand span for operand 9']
    loop: start=0, step=1, limit=10
    $region2: #{custom-call.10} parent=1 // loop_pre_header
      _
    $region3: #{custom-call.10} parent=1 // loop_header
      %s12 = sphi 0, %s16
      %p13 = scmp.ge.s32.totalorder %s12, 10
      %s24 = sphi 0, %s26
      %s27 = sphi 0, %s24
      %s28 = sphi 0, %s27
      %s44 = sphi 0, %s28
      %s52 = sphi 0, %s54
      %s55 = sphi 0, %s52
      %s56 = sphi 0, %s55
      %s72 = sphi 0, %s56
    $region4: #{custom-call.10} parent=1 // loop_header_branch
      %15 = sbr.rel (%p13) target = $region8
    $region5: #{custom-call.10} parent=1 // loop_body
      %s17 = ssub.s32 %s12, 1
      %s18 = ssub.s32 %s12, 2
      %s19 = sadd.s32 %s12, 1
      %s20 = sshrl.u32 %s12, 3
      %s21 = sshrl.u32 %s19, 3
      %s22 = ssub.s32 %s20, %s21
      %p23 = scmp.eq.s32.totalorder %s22, 0
      %s25 = sadd.s32 %s24, 1
      %s26 = scalar_select %p23, %s24, %s25
      %p29 = pneg %p23
      %p30 = scmp.eq.s32.totalorder %s12, 7
      %p31 = por %p29, %p30
      %p32 = scmp.ne.s32.totalorder %s24, %s27
      %p33 = scmp.eq.s32.totalorder %s12, 0
      %p34 = por %p32, %p33
      %p35 = scmp.ne.s32.totalorder %s24, %s27
      %p36 = scmp.eq.s32.totalorder %s17, 7
      %p37 = por %p35, %p36
      %p38 = scmp.ne.s32.totalorder %s27, %s28
      %p39 = scmp.eq.s32.totalorder %s17, 0
      %p40 = por %p38, %p39
      %p41 = scmp.ne.s32.totalorder %s27, %s28
      %p42 = scmp.eq.s32.totalorder %s18, 7
      %p43 = por %p41, %p42
      %p45 = scmp.ne.s32.totalorder %s28, %s44
      %p46 = scmp.eq.s32.totalorder %s18, 0
      %p47 = por %p45, %p46
      %s48 = sshrl.u32 %s12, 3
      %s49 = sshrl.u32 %s19, 3
      %s50 = ssub.s32 %s48, %s49
      %p51 = scmp.eq.s32.totalorder %s50, 0
      %s53 = sadd.s32 %s52, 1
      %s54 = scalar_select %p51, %s52, %s53
      %p57 = pneg %p51
      %p58 = scmp.eq.s32.totalorder %s12, 7
      %p59 = por %p57, %p58
      %p60 = scmp.ne.s32.totalorder %s52, %s55
      %p61 = scmp.eq.s32.totalorder %s12, 0
      %p62 = por %p60, %p61
      %p63 = scmp.ne.s32.totalorder %s52, %s55
      %p64 = scmp.eq.s32.totalorder %s17, 7
      %p65 = por %p63, %p64
      %p66 = scmp.ne.s32.totalorder %s55, %s56
      %p67 = scmp.eq.s32.totalorder %s17, 0
      %p68 = por %p66, %p67
      %p69 = scmp.ne.s32.totalorder %s55, %s56
      %p70 = scmp.eq.s32.totalorder %s18, 7
      %p71 = por %p69, %p70
      %p73 = scmp.ne.s32.totalorder %s56, %s72
      %p74 = scmp.eq.s32.totalorder %s18, 0
      %p75 = por %p73, %p74
      %p76 = scmp.le.s32.totalorder 1, %s12
      %p77 = scmp.lt.s32.totalorder %s12, 9
      %p78 = pnand %p76, %p77
      %p79 = pneg %p78
      // Predicated region
      $region9: #{custom-call.10} parent=5 // pred_check
        _
      $region10: #{custom-call.10} parent=5 // pred_check_branch
        %81 = sbr.rel (%p78) target = $region12
      $region11: #{custom-call.10} parent=5 // pred_region
        %s82 = ssub.s32 %s12, 1
      $region12: #{custom-call.10} parent=5 // pred_fallthru
        _
      %p83 = scmp.lt.s32.totalorder %s12, 8
      // Predicated region
      $region13: #{custom-call.10} parent=5 // pred_check
        %p84 = pneg %p83
      $region14: #{custom-call.10} parent=5 // pred_check_branch
        %86 = sbr.rel (%p84) target = $region16
      $region15: #{custom-call.10} parent=5 // pred_region
        %s87 = sand.u32 %s12, 1
        %s88 = sand.u32 %s12, 1
        %s89 = smul.addr %s88, 8
        %s90 = scalar_lea.vmem [#allocation0], %s89
        %s91 = smul.addr %s12, 8
        %s92 = scalar_lea.vmem %s0, %s91
        // Predicated region
        $region17: #{custom-call.10} parent=15 // pred_check
          _
        $region18: #{custom-call.10} parent=15 // pred_check_branch
          %94 = sbr.rel (0) target = $region20
        $region19: #{custom-call.10} parent=15 // pred_region
          // Predicated region
          $region21: #{custom-call.10} parent=19 // pred_check
            _
          $region22: #{custom-call.10} parent=19 // pred_check_branch
            %96 = sbr.rel (0) target = $region24
          $region23: #{custom-call.10} parent=19 // pred_region
            // Predicated region
            $region36: #{custom-call.10} parent=23 // pred_check
              _
            $region37: #{custom-call.10} parent=23 // pred_check_branch
              %112 = sbr.rel (0) target = $region39
            $region38: #{custom-call.10} parent=23 // pred_region
              loop: start=0, step=1, limit=1
              $region40: #{custom-call.10} parent=38 // loop_pre_header
                _
              $region41: #{custom-call.10} parent=38 // loop_header
                %s114 = sphi 0, %s118
                %p115 = scmp.ge.s32.totalorder %s114, 1
                %s119 = sphi %s92, %s92
                %s120 = sphi %s90, %s90
              $region42: #{custom-call.10} parent=38 // loop_header_branch
                %117 = sbr.rel (%p115) target = $region46
              $region43: #{custom-call.10} parent=38 // loop_body
                %v121 = vld [vmem:[%s119] sm:$0xff]
                %122 = vst [vmem:[%s120] sm:$0xff] %v121
              $region44: #{custom-call.10} parent=38 // loop_footer
                %s118 = sadd.s32 1, %s114
              $region45: #{custom-call.10} parent=38 // loop_footer_branch
                %113 = sbr.rel target = $region41
              $region46: #{custom-call.10} parent=38 // loop_exit
                _
            $region39: #{custom-call.10} parent=23 // pred_fallthru
              _
            // Predicated region
            $region47: #{custom-call.10} parent=23 // pred_check
              _
            $region48: #{custom-call.10} parent=23 // pred_check_branch
              %124 = sbr.rel target = $region50
            $region49: #{custom-call.10} parent=23 // pred_region
              _
            $region50: #{custom-call.10} parent=23 // pred_fallthru
              _
          $region24: #{custom-call.10} parent=19 // pred_fallthru
            _
          // Predicated region
          $region25: #{custom-call.10} parent=19 // pred_check
            _
          $region26: #{custom-call.10} parent=19 // pred_check_branch
            %98 = sbr.rel target = $region28
          $region27: #{custom-call.10} parent=19 // pred_region
            %s100 = ssub.s32 256, 1
            loop: start=0, step=1, limit=1
            $region29: #{custom-call.10} parent=27 // loop_pre_header
              _
            $region30: #{custom-call.10} parent=27 // loop_header
              %s102 = sphi 0, %s106
              %p103 = scmp.ge.s32.totalorder %s102, 1
              %s107 = sphi %s92, %s92
              %s108 = sphi %s90, %s90
            $region31: #{custom-call.10} parent=27 // loop_header_branch
              %105 = sbr.rel (%p103) target = $region35
            $region32: #{custom-call.10} parent=27 // loop_body
              %v109 = vld [vmem:[%s107] sm:%s100]
              %110 = vst [vmem:[%s108] sm:%s100] %v109
            $region33: #{custom-call.10} parent=27 // loop_footer
              %s106 = sadd.s32 1, %s102
            $region34: #{custom-call.10} parent=27 // loop_footer_branch
              %101 = sbr.rel target = $region30
            $region35: #{custom-call.10} parent=27 // loop_exit
              _
          $region28: #{custom-call.10} parent=19 // pred_fallthru
            _
        $region20: #{custom-call.10} parent=15 // pred_fallthru
          _
        %125 = vnop
        %s126 = sand.u32 %s12, 1
        %s127 = sand.u32 %s12, 1
        %s128 = smul.addr %s127, 8
        %s129 = scalar_lea.vmem [#allocation1], %s128
        %s130 = smul.addr %s12, 8
        %s131 = scalar_lea.vmem %s1, %s130
        // Predicated region
        $region51: #{custom-call.10} parent=15 // pred_check
          _
        $region52: #{custom-call.10} parent=15 // pred_check_branch
          %133 = sbr.rel (0) target = $region54
        $region53: #{custom-call.10} parent=15 // pred_region
          // Predicated region
          $region55: #{custom-call.10} parent=53 // pred_check
            _
          $region56: #{custom-call.10} parent=53 // pred_check_branch
            %135 = sbr.rel (0) target = $region58
          $region57: #{custom-call.10} parent=53 // pred_region
            // Predicated region
            $region70: #{custom-call.10} parent=57 // pred_check
              _
            $region71: #{custom-call.10} parent=57 // pred_check_branch
              %151 = sbr.rel (0) target = $region73
            $region72: #{custom-call.10} parent=57 // pred_region
              loop: start=0, step=1, limit=1
              $region74: #{custom-call.10} parent=72 // loop_pre_header
                _
              $region75: #{custom-call.10} parent=72 // loop_header
                %s153 = sphi 0, %s157
                %p154 = scmp.ge.s32.totalorder %s153, 1
                %s158 = sphi %s131, %s131
                %s159 = sphi %s129, %s129
              $region76: #{custom-call.10} parent=72 // loop_header_branch
                %156 = sbr.rel (%p154) target = $region80
              $region77: #{custom-call.10} parent=72 // loop_body
                %v160 = vld [vmem:[%s158] sm:$0xff]
                %161 = vst [vmem:[%s159] sm:$0xff] %v160
              $region78: #{custom-call.10} parent=72 // loop_footer
                %s157 = sadd.s32 1, %s153
              $region79: #{custom-call.10} parent=72 // loop_footer_branch
                %152 = sbr.rel target = $region75
              $region80: #{custom-call.10} parent=72 // loop_exit
                _
            $region73: #{custom-call.10} parent=57 // pred_fallthru
              _
            // Predicated region
            $region81: #{custom-call.10} parent=57 // pred_check
              _
            $region82: #{custom-call.10} parent=57 // pred_check_branch
              %163 = sbr.rel target = $region84
            $region83: #{custom-call.10} parent=57 // pred_region
              _
            $region84: #{custom-call.10} parent=57 // pred_fallthru
              _
          $region58: #{custom-call.10} parent=53 // pred_fallthru
            _
          // Predicated region
          $region59: #{custom-call.10} parent=53 // pred_check
            _
          $region60: #{custom-call.10} parent=53 // pred_check_branch
            %137 = sbr.rel target = $region62
          $region61: #{custom-call.10} parent=53 // pred_region
            %s139 = ssub.s32 256, 1
            loop: start=0, step=1, limit=1
            $region63: #{custom-call.10} parent=61 // loop_pre_header
              _
            $region64: #{custom-call.10} parent=61 // loop_header
              %s141 = sphi 0, %s145
              %p142 = scmp.ge.s32.totalorder %s141, 1
              %s146 = sphi %s131, %s131
              %s147 = sphi %s129, %s129
            $region65: #{custom-call.10} parent=61 // loop_header_branch
              %144 = sbr.rel (%p142) target = $region69
            $region66: #{custom-call.10} parent=61 // loop_body
              %v148 = vld [vmem:[%s146] sm:%s139]
              %149 = vst [vmem:[%s147] sm:%s139] %v148
            $region67: #{custom-call.10} parent=61 // loop_footer
              %s145 = sadd.s32 1, %s141
            $region68: #{custom-call.10} parent=61 // loop_footer_branch
              %140 = sbr.rel target = $region64
            $region69: #{custom-call.10} parent=61 // loop_exit
              _
          $region62: #{custom-call.10} parent=53 // pred_fallthru
            _
        $region54: #{custom-call.10} parent=15 // pred_fallthru
          _
        %164 = vnop
        %s165 = sand.u32 %s12, 1
        %s166 = sand.u32 %s12, 1
        %s167 = smul.addr %s166, 8
        %s168 = scalar_lea.vmem [#allocation2], %s167
        %s169 = smul.addr %s12, 8
        %s170 = scalar_lea.vmem %s2, %s169
        // Predicated region
        $region85: #{custom-call.10} parent=15 // pred_check
          _
        $region86: #{custom-call.10} parent=15 // pred_check_branch
          %172 = sbr.rel (0) target = $region88
        $region87: #{custom-call.10} parent=15 // pred_region
          // Predicated region
          $region89: #{custom-call.10} parent=87 // pred_check
            _
          $region90: #{custom-call.10} parent=87 // pred_check_branch
            %174 = sbr.rel (0) target = $region92
          $region91: #{custom-call.10} parent=87 // pred_region
            // Predicated region
            $region104: #{custom-call.10} parent=91 // pred_check
              _
            $region105: #{custom-call.10} parent=91 // pred_check_branch
              %190 = sbr.rel (0) target = $region107
            $region106: #{custom-call.10} parent=91 // pred_region
              loop: start=0, step=1, limit=1
              $region108: #{custom-call.10} parent=106 // loop_pre_header
                _
              $region109: #{custom-call.10} parent=106 // loop_header
                %s192 = sphi 0, %s196
                %p193 = scmp.ge.s32.totalorder %s192, 1
                %s197 = sphi %s170, %s170
                %s198 = sphi %s168, %s168
              $region110: #{custom-call.10} parent=106 // loop_header_branch
                %195 = sbr.rel (%p193) target = $region114
              $region111: #{custom-call.10} parent=106 // loop_body
                %v199 = vld [vmem:[%s197] sm:$0xff]
                %200 = vst [vmem:[%s198] sm:$0xff] %v199
              $region112: #{custom-call.10} parent=106 // loop_footer
                %s196 = sadd.s32 1, %s192
              $region113: #{custom-call.10} parent=106 // loop_footer_branch
                %191 = sbr.rel target = $region109
              $region114: #{custom-call.10} parent=106 // loop_exit
                _
            $region107: #{custom-call.10} parent=91 // pred_fallthru
              _
            // Predicated region
            $region115: #{custom-call.10} parent=91 // pred_check
              _
            $region116: #{custom-call.10} parent=91 // pred_check_branch
              %202 = sbr.rel target = $region118
            $region117: #{custom-call.10} parent=91 // pred_region
              _
            $region118: #{custom-call.10} parent=91 // pred_fallthru
              _
          $region92: #{custom-call.10} parent=87 // pred_fallthru
            _
          // Predicated region
          $region93: #{custom-call.10} parent=87 // pred_check
            _
          $region94: #{custom-call.10} parent=87 // pred_check_branch
            %176 = sbr.rel target = $region96
          $region95: #{custom-call.10} parent=87 // pred_region
            %s178 = ssub.s32 256, 1
            loop: start=0, step=1, limit=1
            $region97: #{custom-call.10} parent=95 // loop_pre_header
              _
            $region98: #{custom-call.10} parent=95 // loop_header
              %s180 = sphi 0, %s184
              %p181 = scmp.ge.s32.totalorder %s180, 1
              %s185 = sphi %s170, %s170
              %s186 = sphi %s168, %s168
            $region99: #{custom-call.10} parent=95 // loop_header_branch
              %183 = sbr.rel (%p181) target = $region103
            $region100: #{custom-call.10} parent=95 // loop_body
              %v187 = vld [vmem:[%s185] sm:%s178]
              %188 = vst [vmem:[%s186] sm:%s178] %v187
            $region101: #{custom-call.10} parent=95 // loop_footer
              %s184 = sadd.s32 1, %s180
            $region102: #{custom-call.10} parent=95 // loop_footer_branch
              %179 = sbr.rel target = $region98
            $region103: #{custom-call.10} parent=95 // loop_exit
              _
          $region96: #{custom-call.10} parent=87 // pred_fallthru
            _
        $region88: #{custom-call.10} parent=15 // pred_fallthru
          _
        %203 = vnop
        %s204 = sand.u32 %s12, 1
        %s205 = sand.u32 %s12, 1
        %s206 = smul.addr %s205, 8
        %s207 = scalar_lea.vmem [#allocation3], %s206
        %s208 = smul.addr %s12, 8
        %s209 = scalar_lea.vmem %s3, %s208
        // Predicated region
        $region119: #{custom-call.10} parent=15 // pred_check
          _
        $region120: #{custom-call.10} parent=15 // pred_check_branch
          %211 = sbr.rel (0) target = $region122
        $region121: #{custom-call.10} parent=15 // pred_region
          // Predicated region
          $region123: #{custom-call.10} parent=121 // pred_check
            _
          $region124: #{custom-call.10} parent=121 // pred_check_branch
            %213 = sbr.rel (0) target = $region126
          $region125: #{custom-call.10} parent=121 // pred_region
            // Predicated region
            $region138: #{custom-call.10} parent=125 // pred_check
              _
            $region139: #{custom-call.10} parent=125 // pred_check_branch
              %229 = sbr.rel (0) target = $region141
            $region140: #{custom-call.10} parent=125 // pred_region
              loop: start=0, step=1, limit=1
              $region142: #{custom-call.10} parent=140 // loop_pre_header
                _
              $region143: #{custom-call.10} parent=140 // loop_header
                %s231 = sphi 0, %s235
                %p232 = scmp.ge.s32.totalorder %s231, 1
                %s236 = sphi %s209, %s209
                %s237 = sphi %s207, %s207
              $region144: #{custom-call.10} parent=140 // loop_header_branch
                %234 = sbr.rel (%p232) target = $region148
              $region145: #{custom-call.10} parent=140 // loop_body
                %v238 = vld [vmem:[%s236] sm:$0xff]
                %239 = vst [vmem:[%s237] sm:$0xff] %v238
              $region146: #{custom-call.10} parent=140 // loop_footer
                %s235 = sadd.s32 1, %s231
              $region147: #{custom-call.10} parent=140 // loop_footer_branch
                %230 = sbr.rel target = $region143
              $region148: #{custom-call.10} parent=140 // loop_exit
                _
            $region141: #{custom-call.10} parent=125 // pred_fallthru
              _
            // Predicated region
            $region149: #{custom-call.10} parent=125 // pred_check
              _
            $region150: #{custom-call.10} parent=125 // pred_check_branch
              %241 = sbr.rel target = $region152
            $region151: #{custom-call.10} parent=125 // pred_region
              _
            $region152: #{custom-call.10} parent=125 // pred_fallthru
              _
          $region126: #{custom-call.10} parent=121 // pred_fallthru
            _
          // Predicated region
          $region127: #{custom-call.10} parent=121 // pred_check
            _
          $region128: #{custom-call.10} parent=121 // pred_check_branch
            %215 = sbr.rel target = $region130
          $region129: #{custom-call.10} parent=121 // pred_region
            %s217 = ssub.s32 256, 1
            loop: start=0, step=1, limit=1
            $region131: #{custom-call.10} parent=129 // loop_pre_header
              _
            $region132: #{custom-call.10} parent=129 // loop_header
              %s219 = sphi 0, %s223
              %p220 = scmp.ge.s32.totalorder %s219, 1
              %s224 = sphi %s209, %s209
              %s225 = sphi %s207, %s207
            $region133: #{custom-call.10} parent=129 // loop_header_branch
              %222 = sbr.rel (%p220) target = $region137
            $region134: #{custom-call.10} parent=129 // loop_body
              %v226 = vld [vmem:[%s224] sm:%s217]
              %227 = vst [vmem:[%s225] sm:%s217] %v226
            $region135: #{custom-call.10} parent=129 // loop_footer
              %s223 = sadd.s32 1, %s219
            $region136: #{custom-call.10} parent=129 // loop_footer_branch
              %218 = sbr.rel target = $region132
            $region137: #{custom-call.10} parent=129 // loop_exit
              _
          $region130: #{custom-call.10} parent=121 // pred_fallthru
            _
        $region122: #{custom-call.10} parent=15 // pred_fallthru
          _
        %242 = vnop
      $region16: #{custom-call.10} parent=5 // pred_fallthru
        _
      %p243 = scmp.le.s32.totalorder 1, %s12
      %p244 = scmp.lt.s32.totalorder %s12, 9
      %p245 = pnand %p243, %p244
      %p246 = pneg %p245
      // Predicated region
      $region153: #{custom-call.10} parent=5 // pred_check
        _
      $region154: #{custom-call.10} parent=5 // pred_check_branch
        %248 = sbr.rel (%p245) target = $region156
      $region155: #{custom-call.10} parent=5 // pred_region
        #allocation10 [shape = 'f32[8,8]{1,0}', space=vmem, size = 0x1000, scoped, tag = 'a top-left matrix']
        #allocation11 [shape = 'f32[8,8]{1,0}', space=vmem, size = 0x1000, scoped, tag = 'a top-right matrix']
        #allocation12 [shape = 'f32[8,8]{1,0}', space=vmem, size = 0x1000, scoped, tag = 'a bottom-left matrix']
        #allocation13 [shape = 'f32[8,8]{1,0}', space=vmem, size = 0x1000, scoped, tag = 'a bottom-right matrix']
        %s249 = ssub.s32 %s12, 1
        %s250 = sand.u32 %s17, 1
        %s251 = sand.u32 %s17, 1
        %s252 = smul.addr %s251, 8
        %s253 = scalar_lea.vmem [#allocation0], %s252
        %s254 = sand.u32 %s17, 1
        %s255 = sand.u32 %s17, 1
        %s256 = smul.addr %s255, 8
        %s257 = scalar_lea.vmem [#allocation1], %s256
        %s258 = sand.u32 %s17, 1
        %s259 = sand.u32 %s17, 1
        %s260 = smul.addr %s259, 8
        %s261 = scalar_lea.vmem [#allocation2], %s260
        %s262 = sand.u32 %s17, 1
        %s263 = sand.u32 %s17, 1
        %s264 = smul.addr %s263, 8
        %s265 = scalar_lea.vmem [#allocation3], %s264
        %s266 = sand.u32 %s17, 1
        %s267 = sand.u32 %s17, 1
        %s268 = smul.addr %s267, 8
        %s269 = scalar_lea.vmem [#allocation0], %s268
        %s270 = sand.u32 %s17, 1
        %s271 = sand.u32 %s17, 1
        %s272 = smul.addr %s271, 8
        %s273 = scalar_lea.vmem [#allocation1], %s272
        %s274 = sand.u32 %s17, 1
        %s275 = sand.u32 %s17, 1
        %s276 = smul.addr %s275, 8
        %s277 = scalar_lea.vmem [#allocation2], %s276
        %s278 = sand.u32 %s17, 1
        %s279 = sand.u32 %s17, 1
        %s280 = smul.addr %s279, 8
        %s281 = scalar_lea.vmem [#allocation3], %s280
        %p282 = pneg %p40
        %p283 = pneg %p37
        %s284 = sand.u32 %s27, 1
        %s285 = sand.u32 %s27, 1
        %s286 = smul.addr %s285, 8
        %s287 = scalar_lea.vmem [#allocation4], %s286
        %p288 = pneg %p68
        %p289 = pneg %p65
        %s290 = sand.u32 %s55, 1
        %s291 = sand.u32 %s55, 1
        %s292 = smul.addr %s291, 8
        %s293 = scalar_lea.vmem [#allocation5], %s292
        %s294 = sand.u32 %s17, 1
        %s295 = sand.u32 %s17, 1
        %s296 = smul.addr %s295, 8
        %s297 = scalar_lea.vmem [#allocation6], %s296
        %s298 = sand.u32 %s17, 1
        %s299 = sand.u32 %s17, 1
        %s300 = smul.addr %s299, 8
        %s301 = scalar_lea.vmem [#allocation7], %s300
        %s302 = sand.u32 %s17, 1
        %s303 = sand.u32 %s17, 1
        %s304 = smul.addr %s303, 8
        %s305 = scalar_lea.vmem [#allocation8], %s304
        %s306 = sand.u32 %s17, 1
        %s307 = sand.u32 %s17, 1
        %s308 = smul.addr %s307, 8
        %s309 = scalar_lea.vmem [#allocation9], %s308
        %s310 = sshrl.u32 %s17, 3
        %s311 = sshrl.u32 %s17, 3
        %s312 = smov [#allocation10]
        %v313 = vld [vmem:[%s253] sm:$0xff]
        %314 = vst [vmem:[%s312] sm:$0xff] %v313
        %s315 = smov [#allocation11]
        %v316 = vld [vmem:[%s257] sm:$0xff]
        %317 = vst [vmem:[%s315] sm:$0xff] %v316
        %s318 = smov [#allocation12]
        %v319 = vld [vmem:[%s261] sm:$0xff]
        %320 = vst [vmem:[%s318] sm:$0xff] %v319
        %s321 = smov [#allocation13]
        %v322 = vld [vmem:[%s265] sm:$0xff]
        %323 = vst [vmem:[%s321] sm:$0xff] %v322
        %324 = vst [vmem:[%s297] sm:$0xff] 0.0
        %325 = vst [vmem:[%s301] sm:$0xff] 0.0
        %326 = vst [vmem:[%s305] sm:$0xff] 0.0
        %327 = vst [vmem:[%s309] sm:$0xff] 0.0
        %s328 = smov %s297
        %v329 = vlaneseq
        %v330 = vand.u32 %v329, 127
        %v331 = vmov %v330
        %v332 = vlaneseq
        %v333 = vshrl.u32 %v332, 7
        %v334 = vmov %v333
        %v335 = vld [vmem:[%s328] sm:$0xff]
        %vm338 = vcmp.eq.s32.totalorder %v334, %v331
        %v339 = vsel %vm338, 1.0, %v335
        %340 = vst [vmem:[%s328] sm:$0xff] %v339
        %s341 = smov %s309
        %v342 = vlaneseq
        %v343 = vand.u32 %v342, 127
        %v344 = vmov %v343
        %v345 = vlaneseq
        %v346 = vshrl.u32 %v345, 7
        %v347 = vmov %v346
        %v348 = vld [vmem:[%s341] sm:$0xff]
        %vm351 = vcmp.eq.s32.totalorder %v347, %v344
        %v352 = vsel %vm351, 1.0, %v348
        %353 = vst [vmem:[%s341] sm:$0xff] %v352
        // While loop
        $region157: #{custom-call.10} parent=155 // loop_pre_header
          _
        $region158: #{custom-call.10} parent=155 // loop_header
          %s355 = sphi 0, %s937
          %v356 = vlaneseq
          %v357 = vand.u32 %v356, 127
          %v358 = vmov %v357
          %v359 = vlaneseq
          %v360 = vshrl.u32 %v359, 7
          %v361 = vmov %v360
          %s362 = smov [#allocation10]
          %v363 = vlaneseq
          %v364 = vand.u32 %v363, 127
          %vm365 = vcmp.ge.s32.totalorder %v364, 0
          %vm366 = vcmp.lt.s32.totalorder %v364, 8
          %vm367 = vmand %vm365, %vm366
          %v368 = vld [vmem:[%s362] sm:$0xff]
          %v369 = vsel %vm367, %v368, 0.0
          %v370 = vmul.f32 %v369, %v369
          %vm373 = vcmp.eq.s32.totalorder %v361, %v358
          %v374 = vsel %vm373, 0.0, %v370
          %v375 = vlaneseq
          %v376 = vand.u32 %v375, 127
          %v377 = vmov %v376
          %v378 = vlaneseq
          %v379 = vshrl.u32 %v378, 7
          %v380 = vmov %v379
          %s381 = smov [#allocation11]
          %v382 = vlaneseq
          %v383 = vand.u32 %v382, 127
          %vm384 = vcmp.ge.s32.totalorder %v383, 0
          %vm385 = vcmp.lt.s32.totalorder %v383, 8
          %vm386 = vmand %vm384, %vm385
          %v387 = vld [vmem:[%s381] sm:$0xff]
          %v388 = vsel %vm386, %v387, 0.0
          %v389 = vmul.f32 %v388, %v388
          %v390 = vadd.f32 %v374, %v389
          %v391 = vadd.f32 %v370, %v389
          %v392 = vlaneseq
          %v393 = vand.u32 %v392, 127
          %v394 = vmov %v393
          %v395 = vlaneseq
          %v396 = vshrl.u32 %v395, 7
          %v397 = vmov %v396
          %s398 = smov [#allocation12]
          %v399 = vlaneseq
          %v400 = vand.u32 %v399, 127
          %vm401 = vcmp.ge.s32.totalorder %v400, 0
          %vm402 = vcmp.lt.s32.totalorder %v400, 8
          %vm403 = vmand %vm401, %vm402
          %v404 = vld [vmem:[%s398] sm:$0xff]
          %v405 = vsel %vm403, %v404, 0.0
          %v406 = vmul.f32 %v405, %v405
          %v407 = vadd.f32 %v390, %v406
          %v408 = vadd.f32 %v391, %v406
          %v409 = vlaneseq
          %v410 = vand.u32 %v409, 127
          %v411 = vmov %v410
          %v412 = vlaneseq
          %v413 = vshrl.u32 %v412, 7
          %v414 = vmov %v413
          %s415 = smov [#allocation13]
          %v416 = vlaneseq
          %v417 = vand.u32 %v416, 127
          %vm418 = vcmp.ge.s32.totalorder %v417, 0
          %vm419 = vcmp.lt.s32.totalorder %v417, 8
          %vm420 = vmand %vm418, %vm419
          %v421 = vld [vmem:[%s415] sm:$0xff]
          %v422 = vsel %vm420, %v421, 0.0
          %v423 = vmul.f32 %v422, %v422
          %vm426 = vcmp.eq.s32.totalorder %v414, %v411
          %v427 = vsel %vm426, 0.0, %v423
          %v428 = vadd.f32 %v407, %v427
          %v429 = vadd.f32 %v408, %v423
          %430 = vadd.xlane.f32.xlu0 %v429
          %v431 = vpop.xlane.xlu0 %430
          %v432 = vrot.slane %v431, 4
          %v433 = vadd.f32 %v431, %v432
          %v434 = vrot.slane %v433, 2
          %v435 = vadd.f32 %v433, %v434
          %v436 = vrot.slane %v435, 1
          %v437 = vadd.f32 %v435, %v436
          %438 = vadd.xlane.f32.xlu0 %v428
          %v439 = vpop.xlane.xlu0 %438
          %v440 = vrot.slane %v439, 4
          %v441 = vadd.f32 %v439, %v440
          %v442 = vrot.slane %v441, 2
          %v443 = vadd.f32 %v441, %v442
          %v444 = vrot.slane %v443, 1
          %v445 = vadd.f32 %v443, %v444
          %s446 = vtos %v445
          %s447 = vtos %v437
          %s448 = smul.f32 1e-10, %s447
          %p449 = scmp.le.f32.partialorder %s446, %s448
          %p450 = scmp.ge.s32.totalorder %s355, 15
          %p451 = por %p449, %p450
        $region159: #{custom-call.10} parent=155 // loop_header_branch
          %939 = sbr.rel (%p451) target = $region163
        $region160: #{custom-call.10} parent=155 // loop_body
          loop: start=0, step=1, limit=15
          $region164: #{custom-call.10} parent=160 // loop_pre_header
            _
          $region165: #{custom-call.10} parent=160 // loop_header
            %s453 = sphi 0, %s457
            %p454 = scmp.ge.s32.totalorder %s453, 15
          $region166: #{custom-call.10} parent=160 // loop_header_branch
            %456 = sbr.rel (%p454) target = $region170
          $region167: #{custom-call.10} parent=160 // loop_body
            #allocation14 [shape = 'f32[1024]{0}', space=vmem, size = 0x1000, scoped, tag = 'a_tl_diag vmem']
            #allocation15 [shape = 'f32[1024]{0}', space=vmem, size = 0x1000, scoped, tag = 'a_tr_diag vmem']
            #allocation16 [shape = 'f32[1024]{0}', space=vmem, size = 0x1000, scoped, tag = 'a_br_diag vmem']
            #allocation17 [shape = 'f32[1024]{0}', space=vmem, size = 0x1000, scoped, tag = 'rt1 vmem']
            #allocation18 [shape = 'f32[1024]{0}', space=vmem, size = 0x1000, scoped, tag = 'rt2 vmem']
            #allocation19 [shape = 'f32[1024]{0}', space=vmem, size = 0x1000, scoped, tag = 'c vmem']
            #allocation20 [shape = 'f32[1024]{0}', space=vmem, size = 0x1000, scoped, tag = 's vmem']
            #allocation21 [shape = 'f32[4096]{0}', space=vmem, size = 0x4000, scoped, tag = 'c broadcast']
            #allocation22 [shape = 'f32[4096]{0}', space=vmem, size = 0x4000, scoped, tag = 's broadcast']
            %s458 = smov [#allocation10]
            %s459 = smov [#allocation14]
            %v460 = vlaneseq
            %v461 = vand.u32 %v460, 127
            %v462 = vmov %v461
            %v463 = vlaneseq
            %v464 = vshrl.u32 %v463, 7
            %v465 = vmov %v464
            %v466 = vld [vmem:[%s458] sm:$0xff]
            %vm469 = vcmp.eq.s32.totalorder %v465, %v462
            %v470 = vsel %vm469, %v466, 0.0
            %v471 = vrot.slane %v470, 4
            %v472 = vadd.f32 %v470, %v471
            %v473 = vrot.slane %v472, 2
            %v474 = vadd.f32 %v472, %v473
            %v475 = vrot.slane %v474, 1
            %v476 = vadd.f32 %v474, %v475
            %477 = vst [vmem:[%s459] sm:$0x1] %v476
            %s478 = smov [#allocation11]
            %s479 = smov [#allocation15]
            %v480 = vlaneseq
            %v481 = vand.u32 %v480, 127
            %v482 = vmov %v481
            %v483 = vlaneseq
            %v484 = vshrl.u32 %v483, 7
            %v485 = vmov %v484
            %v486 = vld [vmem:[%s478] sm:$0xff]
            %vm489 = vcmp.eq.s32.totalorder %v485, %v482
            %v490 = vsel %vm489, %v486, 0.0
            %v491 = vrot.slane %v490, 4
            %v492 = vadd.f32 %v490, %v491
            %v493 = vrot.slane %v492, 2
            %v494 = vadd.f32 %v492, %v493
            %v495 = vrot.slane %v494, 1
            %v496 = vadd.f32 %v494, %v495
            %497 = vst [vmem:[%s479] sm:$0x1] %v496
            %s498 = smov [#allocation13]
            %s499 = smov [#allocation16]
            %v500 = vlaneseq
            %v501 = vand.u32 %v500, 127
            %v502 = vmov %v501
            %v503 = vlaneseq
            %v504 = vshrl.u32 %v503, 7
            %v505 = vmov %v504
            %v506 = vld [vmem:[%s498] sm:$0xff]
            %vm509 = vcmp.eq.s32.totalorder %v505, %v502
            %v510 = vsel %vm509, %v506, 0.0
            %v511 = vrot.slane %v510, 4
            %v512 = vadd.f32 %v510, %v511
            %v513 = vrot.slane %v512, 2
            %v514 = vadd.f32 %v512, %v513
            %v515 = vrot.slane %v514, 1
            %v516 = vadd.f32 %v514, %v515
            %517 = vst [vmem:[%s499] sm:$0x1] %v516
            %s518 = smov [#allocation19]
            %s519 = smov [#allocation20]
            %s520 = smov [#allocation14]
            %v521 = vld [vmem:[%s520] sm:$0xff]
            %s522 = smov [#allocation15]
            %v523 = vld [vmem:[%s522] sm:$0xff]
            %s524 = smov [#allocation16]
            %v525 = vld [vmem:[%s524] sm:$0xff]
            %v526 = vsub.f32 %v525, %v521
            %v527 = vmul.f32 2.0, %v523
            %v528 = vrcp.pop %v527
            %v529 = vmul.f32 %v527, %v528
            %v530 = vsub.f32 1.0, %v529
            %v531 = vmul.f32 %v528, %v530
            %v532 = vadd.f32 %v528, %v531
            %vm533 = vweird.f32 %v527
            %vm534 = vweird.f32 %v528
            %vm535 = vmor %vm533, %vm534
            %v536 = vsel %vm535, %v528, %v532
            %v537 = vand.u32 2147483647, %v527
            %vm538 = vcmp.eq.f32.partialorder %v537, 8.507059e+37
            %v539 = vand.u32 %v527, 2147483648
            %v540 = vor.u32 1.1754944e-38, %v539
            %v541 = vsel %vm538, %v540, %v536
            %v542 = vmul.f32 %v526, %v541
            %vm543 = vcmp.ge.f32.partialorder %v542, 0.0
            %v544 = vmul.f32 %v542, %v542
            %v545 = vadd.f32 1.0, %v544
            %v546 = vrsqrt.pop %v545
            %v547 = vmul.f32 %v546, %v545
            %v548 = vmul.f32 %v547, %v546
            %v549 = vmul.f32 0.5, %v548
            %v550 = vsub.f32 1.5, %v549
            %v551 = vmul.f32 %v546, %v550
            %v552 = vmul.f32 %v545, %v551
            %vm553 = vcmp.eq.f32.partialorder %v545, inf
            %v554 = vsel %vm553, %v545, %v552
            %vm555 = vcmp.eq.f32.partialorder %v545, 0.0
            %v556 = vand.u32 %v545, 2147483648
            %v557 = vsel %vm555, %v556, %v554
            %v558 = vxor.u32 %v557, 2147483648
            %v559 = vsel %vm543, %v557, %v558
            %v560 = vadd.f32 %v542, %v559
            %v561 = vrcp.pop %v560
            %v562 = vmul.f32 %v560, %v561
            %v563 = vsub.f32 1.0, %v562
            %v564 = vmul.f32 %v561, %v563
            %v565 = vadd.f32 %v561, %v564
            %vm566 = vweird.f32 %v560
            %vm567 = vweird.f32 %v561
            %vm568 = vmor %vm566, %vm567
            %v569 = vsel %vm568, %v561, %v565
            %v570 = vand.u32 2147483647, %v560
            %vm571 = vcmp.eq.f32.partialorder %v570, 8.507059e+37
            %v572 = vand.u32 %v560, 2147483648
            %v573 = vor.u32 1.1754944e-38, %v572
            %v574 = vsel %vm571, %v573, %v569
            %v575 = vand.u32 2147483647, %v521
            %v576 = vand.u32 2147483647, %v523
            %v577 = vand.u32 2147483647, %v525
            %v578 = vmin.f32 %v575, %v577
            %v579 = vmul.f32 1.1920929e-08, %v578
            %vm580 = vcmp.le.f32.partialorder %v576, %v579
            %v581 = vsel %vm580, 0.0, %v574
            %v582 = vmul.f32 %v581, %v581
            %v583 = vadd.f32 1.0, %v582
            %v584 = vrsqrt.pop %v583
            %v585 = vmul.f32 %v584, %v583
            %v586 = vmul.f32 %v585, %v584
            %v587 = vmul.f32 0.5, %v586
            %v588 = vsub.f32 1.5, %v587
            %v589 = vmul.f32 %v584, %v588
            %vm590 = vweird.f32 %v583
            %vm591 = vweird.f32 %v584
            %vm592 = vmor %vm590, %vm591
            %v593 = vsel %vm592, %v584, %v589
            %v594 = vmul.f32 %v581, %v593
            %v595 = vmul.f32 %v581, %v523
            %v596 = vsub.f32 %v521, %v595
            %v597 = vmul.f32 %v581, %v523
            %v598 = vadd.f32 %v525, %v597
            %s599 = smov [#allocation17]
            %600 = vst [vmem:[%s599] sm:$0xff] %v596
            %s601 = smov [#allocation18]
            %602 = vst [vmem:[%s601] sm:$0xff] %v598
            %s603 = smov %s518
            %604 = vst [vmem:[%s603] sm:$0xff] %v593
            %s605 = smov %s519
            %606 = vst [vmem:[%s605] sm:$0xff] %v594
            %s607 = smov [#allocation19]
            %v608 = vld [vmem:[%s607] ss:$0 sm:$0xff]
            %v609 = vlaneseq
            %v610 = vand.u32 %v609, 127
            %v611 = vmov %v610
            %v612 = vlaneseq
            %v613 = vshrl.u32 %v612, 7
            %v614 = vmov %v613
            %vm616 = vcmp.eq.s32.totalorder %v614, %v611
            %v617 = vsel %vm616, %v608, 0.0
            %618 = vadd.xlane.f32.xlu0 %v617
            %v619 = vpop.xlane.xlu0 %618
            %s620 = smov [#allocation21]
            %621 = vst [vmem:[%s620] sm:$0xff] %v619
            %s622 = smov [#allocation20]
            %v623 = vld [vmem:[%s622] ss:$0 sm:$0xff]
            %v624 = vlaneseq
            %v625 = vand.u32 %v624, 127
            %v626 = vmov %v625
            %v627 = vlaneseq
            %v628 = vshrl.u32 %v627, 7
            %v629 = vmov %v628
            %vm631 = vcmp.eq.s32.totalorder %v629, %v626
            %v632 = vsel %vm631, %v623, 0.0
            %633 = vadd.xlane.f32.xlu0 %v632
            %v634 = vpop.xlane.xlu0 %633
            %s635 = smov [#allocation22]
            %636 = vst [vmem:[%s635] sm:$0xff] %v634
            %s637 = smov [#allocation21]
            %v638 = vld [vmem:[%s637] sm:$0xff]
            %s639 = smov [#allocation22]
            %v640 = vld [vmem:[%s639] sm:$0xff]
            %s641 = smov [#allocation10]
            %s642 = smov [#allocation11]
            %s643 = smov [#allocation12]
            %s644 = smov [#allocation13]
            %v645 = vld [vmem:[%s641] sm:$0xff]
            %v646 = vld [vmem:[%s642] sm:$0xff]
            %v647 = vld [vmem:[%s643] sm:$0xff]
            %v648 = vld [vmem:[%s644] sm:$0xff]
            %v649 = vmul.f32 %v638, %v645
            %v650 = vmul.f32 %v640, %v647
            %v651 = vsub.f32 %v649, %v650
            %v652 = vmul.f32 %v638, %v646
            %v653 = vmul.f32 %v640, %v648
            %v654 = vsub.f32 %v652, %v653
            %v655 = vmul.f32 %v640, %v645
            %v656 = vmul.f32 %v638, %v647
            %v657 = vadd.f32 %v655, %v656
            %v658 = vmul.f32 %v640, %v646
            %v659 = vmul.f32 %v638, %v648
            %v660 = vadd.f32 %v658, %v659
            %661 = vst [vmem:[%s641] sm:$0xff] %v651
            %662 = vst [vmem:[%s642] sm:$0xff] %v654
            %663 = vst [vmem:[%s643] sm:$0xff] %v657
            %664 = vst [vmem:[%s644] sm:$0xff] %v660
            %s665 = smov [#allocation19]
            %v666 = vld [vmem:[%s665] ss:$0 sm:$0xff]
            %s667 = smov [#allocation20]
            %v668 = vld [vmem:[%s667] ss:$0 sm:$0xff]
            %s669 = smov [#allocation10]
            %s670 = smov [#allocation11]
            %s671 = smov [#allocation12]
            %s672 = smov [#allocation13]
            %v673 = vld [vmem:[%s669] sm:$0xff]
            %v674 = vld [vmem:[%s670] sm:$0xff]
            %v675 = vld [vmem:[%s671] sm:$0xff]
            %v676 = vld [vmem:[%s672] sm:$0xff]
            %v677 = vmul.f32 %v666, %v673
            %v678 = vmul.f32 %v668, %v674
            %v679 = vsub.f32 %v677, %v678
            %v680 = vmul.f32 %v668, %v673
            %v681 = vmul.f32 %v666, %v674
            %v682 = vadd.f32 %v680, %v681
            %v683 = vmul.f32 %v666, %v675
            %v684 = vmul.f32 %v668, %v676
            %v685 = vsub.f32 %v683, %v684
            %v686 = vmul.f32 %v668, %v675
            %v687 = vmul.f32 %v666, %v676
            %v688 = vadd.f32 %v686, %v687
            %689 = vst [vmem:[%s669] sm:$0xff] %v679
            %690 = vst [vmem:[%s670] sm:$0xff] %v682
            %691 = vst [vmem:[%s671] sm:$0xff] %v685
            %692 = vst [vmem:[%s672] sm:$0xff] %v688
            %s693 = smov [#allocation10]
            %s694 = smov [#allocation17]
            %v695 = vlaneseq
            %v696 = vand.u32 %v695, 127
            %v697 = vmov %v696
            %v698 = vlaneseq
            %v699 = vshrl.u32 %v698, 7
            %v700 = vmov %v699
            %v701 = vld [vmem:[%s694] ss:$0 sm:$0xff]
            %v702 = vld [vmem:[%s693] sm:$0xff]
            %vm705 = vcmp.eq.s32.totalorder %v700, %v697
            %v706 = vsel %vm705, %v701, %v702
            %707 = vst [vmem:[%s693] sm:$0xff] %v706
            %s708 = smov [#allocation11]
            %v709 = vlaneseq
            %v710 = vand.u32 %v709, 127
            %v711 = vmov %v710
            %v712 = vlaneseq
            %v713 = vshrl.u32 %v712, 7
            %v714 = vmov %v713
            %v715 = vld [vmem:[%s708] sm:$0xff]
            %vm718 = vcmp.eq.s32.totalorder %v714, %v711
            %v719 = vsel %vm718, 0.0, %v715
            %720 = vst [vmem:[%s708] sm:$0xff] %v719
            %s721 = smov [#allocation12]
            %v722 = vlaneseq
            %v723 = vand.u32 %v722, 127
            %v724 = vmov %v723
            %v725 = vlaneseq
            %v726 = vshrl.u32 %v725, 7
            %v727 = vmov %v726
            %v728 = vld [vmem:[%s721] sm:$0xff]
            %vm731 = vcmp.eq.s32.totalorder %v727, %v724
            %v732 = vsel %vm731, 0.0, %v728
            %733 = vst [vmem:[%s721] sm:$0xff] %v732
            %s734 = smov [#allocation13]
            %s735 = smov [#allocation18]
            %v736 = vlaneseq
            %v737 = vand.u32 %v736, 127
            %v738 = vmov %v737
            %v739 = vlaneseq
            %v740 = vshrl.u32 %v739, 7
            %v741 = vmov %v740
            %v742 = vld [vmem:[%s735] ss:$0 sm:$0xff]
            %v743 = vld [vmem:[%s734] sm:$0xff]
            %vm746 = vcmp.eq.s32.totalorder %v741, %v738
            %v747 = vsel %vm746, %v742, %v743
            %748 = vst [vmem:[%s734] sm:$0xff] %v747
            %s749 = smov [#allocation10]
            %s750 = smov [#allocation11]
            %v751 = vld [vmem:[%s750] sm:$0xff]
            %752 = vrot.lane.b32.xlu0 %v751, 1
            %v753 = vpop.permute.xlu0 %752
            %v754 = vld [vmem:[%s749] sm:$0xff]
            %v755 = vld [vmem:[%s749] sm:$0xff]
            %756 = vrot.lane.b32.xlu0 %v755, 1
            %v757 = vpop.permute.xlu0 %756
            %v758 = vlaneseq
            %v759 = vand.u32 %v758, 127
            %vm760 = vcmp.eq.s32.totalorder %v759, 0
            %v761 = vsel %vm760, %v755, %v757
            %v762 = vlaneseq
            %v763 = vand.u32 %v762, 127
            %vm764 = vcmp.eq.s32.totalorder %v763, 1
            %v765 = vsel %vm764, %v753, %v761
            %v766 = vlaneseq
            %v767 = vand.u32 %v766, 127
            %vm768 = vcmp.ge.s32.totalorder %v767, 0
            %vm769 = vcmp.lt.s32.totalorder %v767, 8
            %vm770 = vmand %vm768, %vm769
            %v771 = vsel %vm770, %v765, 0.0
            %v772 = vld [vmem:[%s750] sm:$0xff]
            %773 = vrot.lane.b32.xlu0 %v772, 127
            %v774 = vpop.permute.xlu0 %773
            %v775 = vlaneseq
            %v776 = vand.u32 %v775, 127
            %vm777 = vcmp.eq.s32.totalorder %v776, 7
            %v778 = vsel %vm777, %v754, %v774
            %779 = vst [vmem:[%s749] sm:$0xff] %v771
            %780 = vst [vmem:[%s750] sm:$0xff] %v778
            %s781 = smov [#allocation12]
            %s782 = smov [#allocation13]
            %v783 = vld [vmem:[%s782] sm:$0xff]
            %784 = vrot.lane.b32.xlu0 %v783, 1
            %v785 = vpop.permute.xlu0 %784
            %v786 = vld [vmem:[%s781] sm:$0xff]
            %v787 = vld [vmem:[%s781] sm:$0xff]
            %788 = vrot.lane.b32.xlu0 %v787, 1
            %v789 = vpop.permute.xlu0 %788
            %v790 = vlaneseq
            %v791 = vand.u32 %v790, 127
            %vm792 = vcmp.eq.s32.totalorder %v791, 0
            %v793 = vsel %vm792, %v787, %v789
            %v794 = vlaneseq
            %v795 = vand.u32 %v794, 127
            %vm796 = vcmp.eq.s32.totalorder %v795, 1
            %v797 = vsel %vm796, %v785, %v793
            %v798 = vlaneseq
            %v799 = vand.u32 %v798, 127
            %vm800 = vcmp.ge.s32.totalorder %v799, 0
            %vm801 = vcmp.lt.s32.totalorder %v799, 8
            %vm802 = vmand %vm800, %vm801
            %v803 = vsel %vm802, %v797, 0.0
            %v804 = vld [vmem:[%s782] sm:$0xff]
            %805 = vrot.lane.b32.xlu0 %v804, 127
            %v806 = vpop.permute.xlu0 %805
            %v807 = vlaneseq
            %v808 = vand.u32 %v807, 127
            %vm809 = vcmp.eq.s32.totalorder %v808, 7
            %v810 = vsel %vm809, %v786, %v806
            %811 = vst [vmem:[%s781] sm:$0xff] %v803
            %812 = vst [vmem:[%s782] sm:$0xff] %v810
            %s813 = smov [#allocation10]
            %s814 = smov [#allocation12]
            %v815 = vld [vmem:[%s813] ss:$0 sm:$0xff]
            %s817 = scalar_lea.vmem %s813, 4294967295
            %v818 = vld [vmem:[%s817] sm:$0xfe]
            %v819 = vlaneseq
            %v820 = vshrl.u32 %v819, 7
            %vm821 = vcmp.eq.s32.totalorder %v820, 0
            %v822 = vsel %vm821, %v815, %v818
            %s823 = scalar_lea.vmem %s813, 7
            %v824 = vld [vmem:[%s823] ss:$0 sm:$0xff]
            %825 = vst [vmem:[%s813] sm:$0xff] %v822
            %v826 = vld [vmem:[%s814] ss:$0 sm:$0xff]
            %s827 = scalar_lea.vmem %s813, 1
            %828 = vst [vmem:[%s827] sm:$0x1] %v826
            %s829 = scalar_lea.vmem %s814, 1
            %v830 = vld [vmem:[%s829] sm:$0x7f]
            %v831 = vlaneseq
            %v832 = vshrl.u32 %v831, 7
            %vm833 = vcmp.eq.s32.totalorder %v832, 7
            %v834 = vsel %vm833, %v824, %v830
            %v835 = vld [vmem:[%s814] ss:$0 sm:$0xff]
            %836 = vst [vmem:[%s814] sm:$0xff] %v834
            %s837 = smov [#allocation11]
            %s838 = smov [#allocation13]
            %v839 = vld [vmem:[%s837] ss:$0 sm:$0xff]
            %s841 = scalar_lea.vmem %s837, 4294967295
            %v842 = vld [vmem:[%s841] sm:$0xfe]
            %v843 = vlaneseq
            %v844 = vshrl.u32 %v843, 7
            %vm845 = vcmp.eq.s32.totalorder %v844, 0
            %v846 = vsel %vm845, %v839, %v842
            %s847 = scalar_lea.vmem %s837, 7
            %v848 = vld [vmem:[%s847] ss:$0 sm:$0xff]
            %849 = vst [vmem:[%s837] sm:$0xff] %v846
            %v850 = vld [vmem:[%s838] ss:$0 sm:$0xff]
            %s851 = scalar_lea.vmem %s837, 1
            %852 = vst [vmem:[%s851] sm:$0x1] %v850
            %s853 = scalar_lea.vmem %s838, 1
            %v854 = vld [vmem:[%s853] sm:$0x7f]
            %v855 = vlaneseq
            %v856 = vshrl.u32 %v855, 7
            %vm857 = vcmp.eq.s32.totalorder %v856, 7
            %v858 = vsel %vm857, %v848, %v854
            %v859 = vld [vmem:[%s838] ss:$0 sm:$0xff]
            %860 = vst [vmem:[%s838] sm:$0xff] %v858
            %s861 = smov [#allocation21]
            %v862 = vld [vmem:[%s861] sm:$0xff]
            %s863 = smov [#allocation22]
            %v864 = vld [vmem:[%s863] sm:$0xff]
            %s865 = smov %s297
            %s866 = smov %s301
            %s867 = smov %s305
            %s868 = smov %s309
            %v869 = vld [vmem:[%s865] sm:$0xff]
            %v870 = vld [vmem:[%s866] sm:$0xff]
            %v871 = vld [vmem:[%s867] sm:$0xff]
            %v872 = vld [vmem:[%s868] sm:$0xff]
            %v873 = vmul.f32 %v862, %v869
            %v874 = vmul.f32 %v864, %v871
            %v875 = vsub.f32 %v873, %v874
            %v876 = vmul.f32 %v862, %v870
            %v877 = vmul.f32 %v864, %v872
            %v878 = vsub.f32 %v876, %v877
            %v879 = vmul.f32 %v864, %v869
            %v880 = vmul.f32 %v862, %v871
            %v881 = vadd.f32 %v879, %v880
            %v882 = vmul.f32 %v864, %v870
            %v883 = vmul.f32 %v862, %v872
            %v884 = vadd.f32 %v882, %v883
            %885 = vst [vmem:[%s865] sm:$0xff] %v875
            %886 = vst [vmem:[%s866] sm:$0xff] %v878
            %887 = vst [vmem:[%s867] sm:$0xff] %v881
            %888 = vst [vmem:[%s868] sm:$0xff] %v884
            %s889 = smov %s297
            %s890 = smov %s305
            %v891 = vld [vmem:[%s889] ss:$0 sm:$0xff]
            %s893 = scalar_lea.vmem %s889, 4294967295
            %v894 = vld [vmem:[%s893] sm:$0xfe]
            %v895 = vlaneseq
            %v896 = vshrl.u32 %v895, 7
            %vm897 = vcmp.eq.s32.totalorder %v896, 0
            %v898 = vsel %vm897, %v891, %v894
            %s899 = scalar_lea.vmem %s889, 7
            %v900 = vld [vmem:[%s899] ss:$0 sm:$0xff]
            %901 = vst [vmem:[%s889] sm:$0xff] %v898
            %v902 = vld [vmem:[%s890] ss:$0 sm:$0xff]
            %s903 = scalar_lea.vmem %s889, 1
            %904 = vst [vmem:[%s903] sm:$0x1] %v902
            %s905 = scalar_lea.vmem %s890, 1
            %v906 = vld [vmem:[%s905] sm:$0x7f]
            %v907 = vlaneseq
            %v908 = vshrl.u32 %v907, 7
            %vm909 = vcmp.eq.s32.totalorder %v908, 7
            %v910 = vsel %vm909, %v900, %v906
            %v911 = vld [vmem:[%s890] ss:$0 sm:$0xff]
            %912 = vst [vmem:[%s890] sm:$0xff] %v910
            %s913 = smov %s301
            %s914 = smov %s309
            %v915 = vld [vmem:[%s913] ss:$0 sm:$0xff]
            %s917 = scalar_lea.vmem %s913, 4294967295
            %v918 = vld [vmem:[%s917] sm:$0xfe]
            %v919 = vlaneseq
            %v920 = vshrl.u32 %v919, 7
            %vm921 = vcmp.eq.s32.totalorder %v920, 0
            %v922 = vsel %vm921, %v915, %v918
            %s923 = scalar_lea.vmem %s913, 7
            %v924 = vld [vmem:[%s923] ss:$0 sm:$0xff]
            %925 = vst [vmem:[%s913] sm:$0xff] %v922
            %v926 = vld [vmem:[%s914] ss:$0 sm:$0xff]
            %s927 = scalar_lea.vmem %s913, 1
            %928 = vst [vmem:[%s927] sm:$0x1] %v926
            %s929 = scalar_lea.vmem %s914, 1
            %v930 = vld [vmem:[%s929] sm:$0x7f]
            %v931 = vlaneseq
            %v932 = vshrl.u32 %v931, 7
            %vm933 = vcmp.eq.s32.totalorder %v932, 7
            %v934 = vsel %vm933, %v924, %v930
            %v935 = vld [vmem:[%s914] ss:$0 sm:$0xff]
            %936 = vst [vmem:[%s914] sm:$0xff] %v934
          $region168: #{custom-call.10} parent=160 // loop_footer
            %s457 = sadd.s32 1, %s453
          $region169: #{custom-call.10} parent=160 // loop_footer_branch
            %452 = sbr.rel target = $region165
          $region170: #{custom-call.10} parent=160 // loop_exit
            _
          %s937 = sadd.s32 %s355, 1
        $region161: #{custom-call.10} parent=155 // loop_footer
          _
        $region162: #{custom-call.10} parent=155 // loop_footer_branch
          %354 = sbr.rel target = $region158
        $region163: #{custom-call.10} parent=155 // loop_exit
          _
        %s940 = sand.u32 %s17, 7
        %s941 = scalar_lea.vmem %s287, %s940 [#allocation4]
        %s942 = sand.u32 %s17, 7
        %s943 = scalar_lea.vmem %s293, %s942 [#allocation5]
        %s944 = smov [#allocation10]
        %s945 = smov %s941
        %v946 = vlaneseq
        %v947 = vand.u32 %v946, 127
        %v948 = vmov %v947
        %v949 = vlaneseq
        %v950 = vshrl.u32 %v949, 7
        %v951 = vmov %v950
        %v952 = vld [vmem:[%s944] sm:$0xff]
        %vm955 = vcmp.eq.s32.totalorder %v951, %v948
        %v956 = vsel %vm955, %v952, 0.0
        %v957 = vrot.slane %v956, 4
        %v958 = vadd.f32 %v956, %v957
        %v959 = vrot.slane %v958, 2
        %v960 = vadd.f32 %v958, %v959
        %v961 = vrot.slane %v960, 1
        %v962 = vadd.f32 %v960, %v961
        %963 = vst [vmem:[%s945] sm:$0x1] %v962
        %s964 = smov [#allocation13]
        %s965 = smov %s943
        %v966 = vlaneseq
        %v967 = vand.u32 %v966, 127
        %v968 = vmov %v967
        %v969 = vlaneseq
        %v970 = vshrl.u32 %v969, 7
        %v971 = vmov %v970
        %v972 = vld [vmem:[%s964] sm:$0xff]
        %vm975 = vcmp.eq.s32.totalorder %v971, %v968
        %v976 = vsel %vm975, %v972, 0.0
        %v977 = vrot.slane %v976, 4
        %v978 = vadd.f32 %v976, %v977
        %v979 = vrot.slane %v978, 2
        %v980 = vadd.f32 %v978, %v979
        %v981 = vrot.slane %v980, 1
        %v982 = vadd.f32 %v980, %v981
        %983 = vst [vmem:[%s965] sm:$0x1] %v982
        %s984 = sand.u32 %s27, 1
        %s985 = sand.u32 %s27, 1
        %s986 = smul.addr %s985, 8
        %s987 = scalar_lea.vmem [#allocation4], %s986
        %s988 = sand.u32 %s55, 1
        %s989 = sand.u32 %s55, 1
        %s990 = smul.addr %s989, 8
        %s991 = scalar_lea.vmem [#allocation5], %s990
        %s992 = sand.u32 %s17, 1
        %s993 = sand.u32 %s17, 1
        %s994 = smul.addr %s993, 8
        %s995 = scalar_lea.vmem [#allocation6], %s994
        %s996 = sand.u32 %s17, 1
        %s997 = sand.u32 %s17, 1
        %s998 = smul.addr %s997, 8
        %s999 = scalar_lea.vmem [#allocation7], %s998
        %s1000 = sand.u32 %s17, 1
        %s1001 = sand.u32 %s17, 1
        %s1002 = smul.addr %s1001, 8
        %s1003 = scalar_lea.vmem [#allocation8], %s1002
        %s1004 = sand.u32 %s17, 1
        %s1005 = sand.u32 %s17, 1
        %s1006 = smul.addr %s1005, 8
        %s1007 = scalar_lea.vmem [#allocation9], %s1006
        // Predicated region
        $region171: #{custom-call.10} parent=155 // pred_check
          %p1008 = pneg %p37
        $region172: #{custom-call.10} parent=155 // pred_check_branch
          %1010 = sbr.rel (%p1008) target = $region174
        $region173: #{custom-call.10} parent=155 // pred_region
          %s1011 = sshrl.u32 %s17, 3
          %s1012 = smul.addr %s1011, 8
          %s1013 = scalar_lea.vmem %s4, %s1012
          // Predicated region
          $region175: #{custom-call.10} parent=173 // pred_check
            _
          $region176: #{custom-call.10} parent=173 // pred_check_branch
            %1015 = sbr.rel (0) target = $region178
          $region177: #{custom-call.10} parent=173 // pred_region
            // Predicated region
            $region179: #{custom-call.10} parent=177 // pred_check
              _
            $region180: #{custom-call.10} parent=177 // pred_check_branch
              %1017 = sbr.rel (0) target = $region182
            $region181: #{custom-call.10} parent=177 // pred_region
              // Predicated region
              $region194: #{custom-call.10} parent=181 // pred_check
                _
              $region195: #{custom-call.10} parent=181 // pred_check_branch
                %1033 = sbr.rel (0) target = $region197
              $region196: #{custom-call.10} parent=181 // pred_region
                loop: start=0, step=1, limit=1
                $region198: #{custom-call.10} parent=196 // loop_pre_header
                  _
                $region199: #{custom-call.10} parent=196 // loop_header
                  %s1035 = sphi 0, %s1039
                  %p1036 = scmp.ge.s32.totalorder %s1035, 1
                  %s1040 = sphi %s987, %s987
                  %s1041 = sphi %s1013, %s1013
                $region200: #{custom-call.10} parent=196 // loop_header_branch
                  %1038 = sbr.rel (%p1036) target = $region204
                $region201: #{custom-call.10} parent=196 // loop_body
                  %v1042 = vld [vmem:[%s1040] sm:$0xff]
                  %1043 = vst [vmem:[%s1041] sm:$0xff] %v1042
                $region202: #{custom-call.10} parent=196 // loop_footer
                  %s1039 = sadd.s32 1, %s1035
                $region203: #{custom-call.10} parent=196 // loop_footer_branch
                  %1034 = sbr.rel target = $region199
                $region204: #{custom-call.10} parent=196 // loop_exit
                  _
              $region197: #{custom-call.10} parent=181 // pred_fallthru
                _
              // Predicated region
              $region205: #{custom-call.10} parent=181 // pred_check
                _
              $region206: #{custom-call.10} parent=181 // pred_check_branch
                %1045 = sbr.rel target = $region208
              $region207: #{custom-call.10} parent=181 // pred_region
                _
              $region208: #{custom-call.10} parent=181 // pred_fallthru
                _
            $region182: #{custom-call.10} parent=177 // pred_fallthru
              _
            // Predicated region
            $region183: #{custom-call.10} parent=177 // pred_check
              _
            $region184: #{custom-call.10} parent=177 // pred_check_branch
              %1019 = sbr.rel target = $region186
            $region185: #{custom-call.10} parent=177 // pred_region
              %s1021 = ssub.s32 256, 1
              loop: start=0, step=1, limit=1
              $region187: #{custom-call.10} parent=185 // loop_pre_header
                _
              $region188: #{custom-call.10} parent=185 // loop_header
                %s1023 = sphi 0, %s1027
                %p1024 = scmp.ge.s32.totalorder %s1023, 1
                %s1028 = sphi %s987, %s987
                %s1029 = sphi %s1013, %s1013
              $region189: #{custom-call.10} parent=185 // loop_header_branch
                %1026 = sbr.rel (%p1024) target = $region193
              $region190: #{custom-call.10} parent=185 // loop_body
                %v1030 = vld [vmem:[%s1028] sm:%s1021]
                %1031 = vst [vmem:[%s1029] sm:%s1021] %v1030
              $region191: #{custom-call.10} parent=185 // loop_footer
                %s1027 = sadd.s32 1, %s1023
              $region192: #{custom-call.10} parent=185 // loop_footer_branch
                %1022 = sbr.rel target = $region188
              $region193: #{custom-call.10} parent=185 // loop_exit
                _
            $region186: #{custom-call.10} parent=177 // pred_fallthru
              _
          $region178: #{custom-call.10} parent=173 // pred_fallthru
            _
          %1046 = vnop
        $region174: #{custom-call.10} parent=155 // pred_fallthru
          _
        // Predicated region
        $region209: #{custom-call.10} parent=155 // pred_check
          %p1047 = pneg %p65
        $region210: #{custom-call.10} parent=155 // pred_check_branch
          %1049 = sbr.rel (%p1047) target = $region212
        $region211: #{custom-call.10} parent=155 // pred_region
          %s1050 = sshrl.u32 %s17, 3
          %s1051 = smul.addr %s1050, 8
          %s1052 = scalar_lea.vmem %s5, %s1051
          // Predicated region
          $region213: #{custom-call.10} parent=211 // pred_check
            _
          $region214: #{custom-call.10} parent=211 // pred_check_branch
            %1054 = sbr.rel (0) target = $region216
          $region215: #{custom-call.10} parent=211 // pred_region
            // Predicated region
            $region217: #{custom-call.10} parent=215 // pred_check
              _
            $region218: #{custom-call.10} parent=215 // pred_check_branch
              %1056 = sbr.rel (0) target = $region220
            $region219: #{custom-call.10} parent=215 // pred_region
              // Predicated region
              $region232: #{custom-call.10} parent=219 // pred_check
                _
              $region233: #{custom-call.10} parent=219 // pred_check_branch
                %1072 = sbr.rel (0) target = $region235
              $region234: #{custom-call.10} parent=219 // pred_region
                loop: start=0, step=1, limit=1
                $region236: #{custom-call.10} parent=234 // loop_pre_header
                  _
                $region237: #{custom-call.10} parent=234 // loop_header
                  %s1074 = sphi 0, %s1078
                  %p1075 = scmp.ge.s32.totalorder %s1074, 1
                  %s1079 = sphi %s991, %s991
                  %s1080 = sphi %s1052, %s1052
                $region238: #{custom-call.10} parent=234 // loop_header_branch
                  %1077 = sbr.rel (%p1075) target = $region242
                $region239: #{custom-call.10} parent=234 // loop_body
                  %v1081 = vld [vmem:[%s1079] sm:$0xff]
                  %1082 = vst [vmem:[%s1080] sm:$0xff] %v1081
                $region240: #{custom-call.10} parent=234 // loop_footer
                  %s1078 = sadd.s32 1, %s1074
                $region241: #{custom-call.10} parent=234 // loop_footer_branch
                  %1073 = sbr.rel target = $region237
                $region242: #{custom-call.10} parent=234 // loop_exit
                  _
              $region235: #{custom-call.10} parent=219 // pred_fallthru
                _
              // Predicated region
              $region243: #{custom-call.10} parent=219 // pred_check
                _
              $region244: #{custom-call.10} parent=219 // pred_check_branch
                %1084 = sbr.rel target = $region246
              $region245: #{custom-call.10} parent=219 // pred_region
                _
              $region246: #{custom-call.10} parent=219 // pred_fallthru
                _
            $region220: #{custom-call.10} parent=215 // pred_fallthru
              _
            // Predicated region
            $region221: #{custom-call.10} parent=215 // pred_check
              _
            $region222: #{custom-call.10} parent=215 // pred_check_branch
              %1058 = sbr.rel target = $region224
            $region223: #{custom-call.10} parent=215 // pred_region
              %s1060 = ssub.s32 256, 1
              loop: start=0, step=1, limit=1
              $region225: #{custom-call.10} parent=223 // loop_pre_header
                _
              $region226: #{custom-call.10} parent=223 // loop_header
                %s1062 = sphi 0, %s1066
                %p1063 = scmp.ge.s32.totalorder %s1062, 1
                %s1067 = sphi %s991, %s991
                %s1068 = sphi %s1052, %s1052
              $region227: #{custom-call.10} parent=223 // loop_header_branch
                %1065 = sbr.rel (%p1063) target = $region231
              $region228: #{custom-call.10} parent=223 // loop_body
                %v1069 = vld [vmem:[%s1067] sm:%s1060]
                %1070 = vst [vmem:[%s1068] sm:%s1060] %v1069
              $region229: #{custom-call.10} parent=223 // loop_footer
                %s1066 = sadd.s32 1, %s1062
              $region230: #{custom-call.10} parent=223 // loop_footer_branch
                %1061 = sbr.rel target = $region226
              $region231: #{custom-call.10} parent=223 // loop_exit
                _
            $region224: #{custom-call.10} parent=215 // pred_fallthru
              _
          $region216: #{custom-call.10} parent=211 // pred_fallthru
            _
          %1085 = vnop
        $region212: #{custom-call.10} parent=155 // pred_fallthru
          _
        %s1086 = smul.addr %s17, 8
        %s1087 = scalar_lea.vmem %s6, %s1086
        // Predicated region
        $region247: #{custom-call.10} parent=155 // pred_check
          _
        $region248: #{custom-call.10} parent=155 // pred_check_branch
          %1089 = sbr.rel (0) target = $region250
        $region249: #{custom-call.10} parent=155 // pred_region
          // Predicated region
          $region251: #{custom-call.10} parent=249 // pred_check
            _
          $region252: #{custom-call.10} parent=249 // pred_check_branch
            %1091 = sbr.rel (0) target = $region254
          $region253: #{custom-call.10} parent=249 // pred_region
            // Predicated region
            $region266: #{custom-call.10} parent=253 // pred_check
              _
            $region267: #{custom-call.10} parent=253 // pred_check_branch
              %1107 = sbr.rel (0) target = $region269
            $region268: #{custom-call.10} parent=253 // pred_region
              loop: start=0, step=1, limit=1
              $region270: #{custom-call.10} parent=268 // loop_pre_header
                _
              $region271: #{custom-call.10} parent=268 // loop_header
                %s1109 = sphi 0, %s1113
                %p1110 = scmp.ge.s32.totalorder %s1109, 1
                %s1114 = sphi %s995, %s995
                %s1115 = sphi %s1087, %s1087
              $region272: #{custom-call.10} parent=268 // loop_header_branch
                %1112 = sbr.rel (%p1110) target = $region276
              $region273: #{custom-call.10} parent=268 // loop_body
                %v1116 = vld [vmem:[%s1114] sm:$0xff]
                %1117 = vst [vmem:[%s1115] sm:$0xff] %v1116
              $region274: #{custom-call.10} parent=268 // loop_footer
                %s1113 = sadd.s32 1, %s1109
              $region275: #{custom-call.10} parent=268 // loop_footer_branch
                %1108 = sbr.rel target = $region271
              $region276: #{custom-call.10} parent=268 // loop_exit
                _
            $region269: #{custom-call.10} parent=253 // pred_fallthru
              _
            // Predicated region
            $region277: #{custom-call.10} parent=253 // pred_check
              _
            $region278: #{custom-call.10} parent=253 // pred_check_branch
              %1119 = sbr.rel target = $region280
            $region279: #{custom-call.10} parent=253 // pred_region
              _
            $region280: #{custom-call.10} parent=253 // pred_fallthru
              _
          $region254: #{custom-call.10} parent=249 // pred_fallthru
            _
          // Predicated region
          $region255: #{custom-call.10} parent=249 // pred_check
            _
          $region256: #{custom-call.10} parent=249 // pred_check_branch
            %1093 = sbr.rel target = $region258
          $region257: #{custom-call.10} parent=249 // pred_region
            %s1095 = ssub.s32 256, 1
            loop: start=0, step=1, limit=1
            $region259: #{custom-call.10} parent=257 // loop_pre_header
              _
            $region260: #{custom-call.10} parent=257 // loop_header
              %s1097 = sphi 0, %s1101
              %p1098 = scmp.ge.s32.totalorder %s1097, 1
              %s1102 = sphi %s995, %s995
              %s1103 = sphi %s1087, %s1087
            $region261: #{custom-call.10} parent=257 // loop_header_branch
              %1100 = sbr.rel (%p1098) target = $region265
            $region262: #{custom-call.10} parent=257 // loop_body
              %v1104 = vld [vmem:[%s1102] sm:%s1095]
              %1105 = vst [vmem:[%s1103] sm:%s1095] %v1104
            $region263: #{custom-call.10} parent=257 // loop_footer
              %s1101 = sadd.s32 1, %s1097
            $region264: #{custom-call.10} parent=257 // loop_footer_branch
              %1096 = sbr.rel target = $region260
            $region265: #{custom-call.10} parent=257 // loop_exit
              _
          $region258: #{custom-call.10} parent=249 // pred_fallthru
            _
        $region250: #{custom-call.10} parent=155 // pred_fallthru
          _
        %1120 = vnop
        %s1121 = smul.addr %s17, 8
        %s1122 = scalar_lea.vmem %s7, %s1121
        // Predicated region
        $region281: #{custom-call.10} parent=155 // pred_check
          _
        $region282: #{custom-call.10} parent=155 // pred_check_branch
          %1124 = sbr.rel (0) target = $region284
        $region283: #{custom-call.10} parent=155 // pred_region
          // Predicated region
          $region285: #{custom-call.10} parent=283 // pred_check
            _
          $region286: #{custom-call.10} parent=283 // pred_check_branch
            %1126 = sbr.rel (0) target = $region288
          $region287: #{custom-call.10} parent=283 // pred_region
            // Predicated region
            $region300: #{custom-call.10} parent=287 // pred_check
              _
            $region301: #{custom-call.10} parent=287 // pred_check_branch
              %1142 = sbr.rel (0) target = $region303
            $region302: #{custom-call.10} parent=287 // pred_region
              loop: start=0, step=1, limit=1
              $region304: #{custom-call.10} parent=302 // loop_pre_header
                _
              $region305: #{custom-call.10} parent=302 // loop_header
                %s1144 = sphi 0, %s1148
                %p1145 = scmp.ge.s32.totalorder %s1144, 1
                %s1149 = sphi %s999, %s999
                %s1150 = sphi %s1122, %s1122
              $region306: #{custom-call.10} parent=302 // loop_header_branch
                %1147 = sbr.rel (%p1145) target = $region310
              $region307: #{custom-call.10} parent=302 // loop_body
                %v1151 = vld [vmem:[%s1149] sm:$0xff]
                %1152 = vst [vmem:[%s1150] sm:$0xff] %v1151
              $region308: #{custom-call.10} parent=302 // loop_footer
                %s1148 = sadd.s32 1, %s1144
              $region309: #{custom-call.10} parent=302 // loop_footer_branch
                %1143 = sbr.rel target = $region305
              $region310: #{custom-call.10} parent=302 // loop_exit
                _
            $region303: #{custom-call.10} parent=287 // pred_fallthru
              _
            // Predicated region
            $region311: #{custom-call.10} parent=287 // pred_check
              _
            $region312: #{custom-call.10} parent=287 // pred_check_branch
              %1154 = sbr.rel target = $region314
            $region313: #{custom-call.10} parent=287 // pred_region
              _
            $region314: #{custom-call.10} parent=287 // pred_fallthru
              _
          $region288: #{custom-call.10} parent=283 // pred_fallthru
            _
          // Predicated region
          $region289: #{custom-call.10} parent=283 // pred_check
            _
          $region290: #{custom-call.10} parent=283 // pred_check_branch
            %1128 = sbr.rel target = $region292
          $region291: #{custom-call.10} parent=283 // pred_region
            %s1130 = ssub.s32 256, 1
            loop: start=0, step=1, limit=1
            $region293: #{custom-call.10} parent=291 // loop_pre_header
              _
            $region294: #{custom-call.10} parent=291 // loop_header
              %s1132 = sphi 0, %s1136
              %p1133 = scmp.ge.s32.totalorder %s1132, 1
              %s1137 = sphi %s999, %s999
              %s1138 = sphi %s1122, %s1122
            $region295: #{custom-call.10} parent=291 // loop_header_branch
              %1135 = sbr.rel (%p1133) target = $region299
            $region296: #{custom-call.10} parent=291 // loop_body
              %v1139 = vld [vmem:[%s1137] sm:%s1130]
              %1140 = vst [vmem:[%s1138] sm:%s1130] %v1139
            $region297: #{custom-call.10} parent=291 // loop_footer
              %s1136 = sadd.s32 1, %s1132
            $region298: #{custom-call.10} parent=291 // loop_footer_branch
              %1131 = sbr.rel target = $region294
            $region299: #{custom-call.10} parent=291 // loop_exit
              _
          $region292: #{custom-call.10} parent=283 // pred_fallthru
            _
        $region284: #{custom-call.10} parent=155 // pred_fallthru
          _
        %1155 = vnop
        %s1156 = smul.addr %s17, 8
        %s1157 = scalar_lea.vmem %s8, %s1156
        // Predicated region
        $region315: #{custom-call.10} parent=155 // pred_check
          _
        $region316: #{custom-call.10} parent=155 // pred_check_branch
          %1159 = sbr.rel (0) target = $region318
        $region317: #{custom-call.10} parent=155 // pred_region
          // Predicated region
          $region319: #{custom-call.10} parent=317 // pred_check
            _
          $region320: #{custom-call.10} parent=317 // pred_check_branch
            %1161 = sbr.rel (0) target = $region322
          $region321: #{custom-call.10} parent=317 // pred_region
            // Predicated region
            $region334: #{custom-call.10} parent=321 // pred_check
              _
            $region335: #{custom-call.10} parent=321 // pred_check_branch
              %1177 = sbr.rel (0) target = $region337
            $region336: #{custom-call.10} parent=321 // pred_region
              loop: start=0, step=1, limit=1
              $region338: #{custom-call.10} parent=336 // loop_pre_header
                _
              $region339: #{custom-call.10} parent=336 // loop_header
                %s1179 = sphi 0, %s1183
                %p1180 = scmp.ge.s32.totalorder %s1179, 1
                %s1184 = sphi %s1003, %s1003
                %s1185 = sphi %s1157, %s1157
              $region340: #{custom-call.10} parent=336 // loop_header_branch
                %1182 = sbr.rel (%p1180) target = $region344
              $region341: #{custom-call.10} parent=336 // loop_body
                %v1186 = vld [vmem:[%s1184] sm:$0xff]
                %1187 = vst [vmem:[%s1185] sm:$0xff] %v1186
              $region342: #{custom-call.10} parent=336 // loop_footer
                %s1183 = sadd.s32 1, %s1179
              $region343: #{custom-call.10} parent=336 // loop_footer_branch
                %1178 = sbr.rel target = $region339
              $region344: #{custom-call.10} parent=336 // loop_exit
                _
            $region337: #{custom-call.10} parent=321 // pred_fallthru
              _
            // Predicated region
            $region345: #{custom-call.10} parent=321 // pred_check
              _
            $region346: #{custom-call.10} parent=321 // pred_check_branch
              %1189 = sbr.rel target = $region348
            $region347: #{custom-call.10} parent=321 // pred_region
              _
            $region348: #{custom-call.10} parent=321 // pred_fallthru
              _
          $region322: #{custom-call.10} parent=317 // pred_fallthru
            _
          // Predicated region
          $region323: #{custom-call.10} parent=317 // pred_check
            _
          $region324: #{custom-call.10} parent=317 // pred_check_branch
            %1163 = sbr.rel target = $region326
          $region325: #{custom-call.10} parent=317 // pred_region
            %s1165 = ssub.s32 256, 1
            loop: start=0, step=1, limit=1
            $region327: #{custom-call.10} parent=325 // loop_pre_header
              _
            $region328: #{custom-call.10} parent=325 // loop_header
              %s1167 = sphi 0, %s1171
              %p1168 = scmp.ge.s32.totalorder %s1167, 1
              %s1172 = sphi %s1003, %s1003
              %s1173 = sphi %s1157, %s1157
            $region329: #{custom-call.10} parent=325 // loop_header_branch
              %1170 = sbr.rel (%p1168) target = $region333
            $region330: #{custom-call.10} parent=325 // loop_body
              %v1174 = vld [vmem:[%s1172] sm:%s1165]
              %1175 = vst [vmem:[%s1173] sm:%s1165] %v1174
            $region331: #{custom-call.10} parent=325 // loop_footer
              %s1171 = sadd.s32 1, %s1167
            $region332: #{custom-call.10} parent=325 // loop_footer_branch
              %1166 = sbr.rel target = $region328
            $region333: #{custom-call.10} parent=325 // loop_exit
              _
          $region326: #{custom-call.10} parent=317 // pred_fallthru
            _
        $region318: #{custom-call.10} parent=155 // pred_fallthru
          _
        %1190 = vnop
        %s1191 = smul.addr %s17, 8
        %s1192 = scalar_lea.vmem %s9, %s1191
        // Predicated region
        $region349: #{custom-call.10} parent=155 // pred_check
          _
        $region350: #{custom-call.10} parent=155 // pred_check_branch
          %1194 = sbr.rel (0) target = $region352
        $region351: #{custom-call.10} parent=155 // pred_region
          // Predicated region
          $region353: #{custom-call.10} parent=351 // pred_check
            _
          $region354: #{custom-call.10} parent=351 // pred_check_branch
            %1196 = sbr.rel (0) target = $region356
          $region355: #{custom-call.10} parent=351 // pred_region
            // Predicated region
            $region368: #{custom-call.10} parent=355 // pred_check
              _
            $region369: #{custom-call.10} parent=355 // pred_check_branch
              %1212 = sbr.rel (0) target = $region371
            $region370: #{custom-call.10} parent=355 // pred_region
              loop: start=0, step=1, limit=1
              $region372: #{custom-call.10} parent=370 // loop_pre_header
                _
              $region373: #{custom-call.10} parent=370 // loop_header
                %s1214 = sphi 0, %s1218
                %p1215 = scmp.ge.s32.totalorder %s1214, 1
                %s1219 = sphi %s1007, %s1007
                %s1220 = sphi %s1192, %s1192
              $region374: #{custom-call.10} parent=370 // loop_header_branch
                %1217 = sbr.rel (%p1215) target = $region378
              $region375: #{custom-call.10} parent=370 // loop_body
                %v1221 = vld [vmem:[%s1219] sm:$0xff]
                %1222 = vst [vmem:[%s1220] sm:$0xff] %v1221
              $region376: #{custom-call.10} parent=370 // loop_footer
                %s1218 = sadd.s32 1, %s1214
              $region377: #{custom-call.10} parent=370 // loop_footer_branch
                %1213 = sbr.rel target = $region373
              $region378: #{custom-call.10} parent=370 // loop_exit
                _
            $region371: #{custom-call.10} parent=355 // pred_fallthru
              _
            // Predicated region
            $region379: #{custom-call.10} parent=355 // pred_check
              _
            $region380: #{custom-call.10} parent=355 // pred_check_branch
              %1224 = sbr.rel target = $region382
            $region381: #{custom-call.10} parent=355 // pred_region
              _
            $region382: #{custom-call.10} parent=355 // pred_fallthru
              _
          $region356: #{custom-call.10} parent=351 // pred_fallthru
            _
          // Predicated region
          $region357: #{custom-call.10} parent=351 // pred_check
            _
          $region358: #{custom-call.10} parent=351 // pred_check_branch
            %1198 = sbr.rel target = $region360
          $region359: #{custom-call.10} parent=351 // pred_region
            %s1200 = ssub.s32 256, 1
            loop: start=0, step=1, limit=1
            $region361: #{custom-call.10} parent=359 // loop_pre_header
              _
            $region362: #{custom-call.10} parent=359 // loop_header
              %s1202 = sphi 0, %s1206
              %p1203 = scmp.ge.s32.totalorder %s1202, 1
              %s1207 = sphi %s1007, %s1007
              %s1208 = sphi %s1192, %s1192
            $region363: #{custom-call.10} parent=359 // loop_header_branch
              %1205 = sbr.rel (%p1203) target = $region367
            $region364: #{custom-call.10} parent=359 // loop_body
              %v1209 = vld [vmem:[%s1207] sm:%s1200]
              %1210 = vst [vmem:[%s1208] sm:%s1200] %v1209
            $region365: #{custom-call.10} parent=359 // loop_footer
              %s1206 = sadd.s32 1, %s1202
            $region366: #{custom-call.10} parent=359 // loop_footer_branch
              %1201 = sbr.rel target = $region362
            $region367: #{custom-call.10} parent=359 // loop_exit
              _
          $region360: #{custom-call.10} parent=351 // pred_fallthru
            _
        $region352: #{custom-call.10} parent=155 // pred_fallthru
          _
        %1225 = vnop
      $region156: #{custom-call.10} parent=5 // pred_fallthru
        _
      %p1226 = scmp.le.s32.totalorder 2, %s12
      // Predicated region
      $region383: #{custom-call.10} parent=5 // pred_check
        %p1227 = pneg %p1226
      $region384: #{custom-call.10} parent=5 // pred_check_branch
        %1229 = sbr.rel (%p1227) target = $region386
      $region385: #{custom-call.10} parent=5 // pred_region
        %s1230 = ssub.s32 %s12, 2
        // Predicated region
        $region387: #{custom-call.10} parent=385 // pred_check
          %p1231 = pneg %p43
        $region388: #{custom-call.10} parent=385 // pred_check_branch
          %1233 = sbr.rel (%p1231) target = $region390
        $region389: #{custom-call.10} parent=385 // pred_region
          %s1234 = sand.u32 %s28, 1
          %s1235 = sand.u32 %s28, 1
          %s1236 = smul.addr %s1235, 8
          %s1237 = scalar_lea.vmem [#allocation4], %s1236
        $region390: #{custom-call.10} parent=385 // pred_fallthru
          _
        // Predicated region
        $region391: #{custom-call.10} parent=385 // pred_check
          %p1238 = pneg %p71
        $region392: #{custom-call.10} parent=385 // pred_check_branch
          %1240 = sbr.rel (%p1238) target = $region394
        $region393: #{custom-call.10} parent=385 // pred_region
          %s1241 = sand.u32 %s56, 1
          %s1242 = sand.u32 %s56, 1
          %s1243 = smul.addr %s1242, 8
          %s1244 = scalar_lea.vmem [#allocation5], %s1243
        $region394: #{custom-call.10} parent=385 // pred_fallthru
          _
        %s1245 = sand.u32 %s18, 1
        %s1246 = sand.u32 %s18, 1
        %s1247 = smul.addr %s1246, 8
        %s1248 = scalar_lea.vmem [#allocation6], %s1247
        %s1249 = sand.u32 %s18, 1
        %s1250 = sand.u32 %s18, 1
        %s1251 = smul.addr %s1250, 8
        %s1252 = scalar_lea.vmem [#allocation7], %s1251
        %s1253 = sand.u32 %s18, 1
        %s1254 = sand.u32 %s18, 1
        %s1255 = smul.addr %s1254, 8
        %s1256 = scalar_lea.vmem [#allocation8], %s1255
        %s1257 = sand.u32 %s18, 1
        %s1258 = sand.u32 %s18, 1
        %s1259 = smul.addr %s1258, 8
        %s1260 = scalar_lea.vmem [#allocation9], %s1259
      $region386: #{custom-call.10} parent=5 // pred_fallthru
        _
    $region6: #{custom-call.10} parent=1 // loop_footer
      %s16 = sadd.s32 1, %s12
    $region7: #{custom-call.10} parent=1 // loop_footer_branch
      %11 = sbr.rel target = $region3
    $region8: #{custom-call.10} parent=1 // loop_exit
      _

// kernel: _lambda_.11
$region0: #{_lambda_.11}
  #allocation0 [shape = 'u32[]', space=smem, size = 0x4, offset = 0x4, fixed_abs, tag = 'smem constant byte address 0x4 - core index']
  #allocation1 [shape = 'u32[72,128]{1,0:T(1,128)}', space=vmem, size = 0x9000, scoped, tag = 'internal scratch']
  %s0 = inlined_call_operand.vmem [shape: f32[2,8,16,16], index: 0, kind: input, shape index: {}]
  %s1 = inlined_call_operand.vmem [shape: f32[2,8,1,16], index: 1, kind: input, shape index: {}]
  %s2 = inlined_call_operand.vmem [shape: f32[8,16,16], index: 2, kind: output, shape index: {}]
  %s3 = sld [smem:[#allocation0]]
  $region120: #{_lambda_.11} parent=0
    _
  %s5 = ssub.s32 1, %s3
  %s6 = scalar_select 0, %s5, %s3
  $region1: #{_lambda_.11} parent=0
    #allocation2 [shape = 'u8[131072]{0}', space=vmem, size = 0x20000, scoped, tag = 'input window, operand 0']
    #allocation3 [shape = 'u8[8192]{0}', space=vmem, size = 0x2000, scoped, tag = 'input window, operand 1']
    loop: start=0, step=1, limit=4
    $region2: #{_lambda_.11} parent=1 // loop_pre_header
      _
    $region3: #{_lambda_.11} parent=1 // loop_header
      %s8 = sphi 0, %s12
      %p9 = scmp.ge.s32.totalorder %s8, 4
      %s18 = sphi 0, %s20
      %s21 = sphi 0, %s18
      %s22 = sphi 0, %s21
      %s38 = sphi 0, %s22
      %s44 = sphi 0, %s46
      %s47 = sphi 0, %s44
      %s48 = sphi 0, %s47
      %s64 = sphi 0, %s48
      %s70 = sphi 0, %s72
      %s73 = sphi 0, %s70
      %s74 = sphi 0, %s73
      %s90 = sphi 0, %s74
    $region4: #{_lambda_.11} parent=1 // loop_header_branch
      %11 = sbr.rel (%p9) target = $region8
    $region5: #{_lambda_.11} parent=1 // loop_body
      %s13 = ssub.s32 %s8, 1
      %s14 = ssub.s32 %s8, 2
      %s15 = sadd.s32 %s8, 1
      %s16 = ssub.s32 %s8, %s15
      %p17 = scmp.eq.s32.totalorder %s16, 0
      %s19 = sadd.s32 %s18, 1
      %s20 = scalar_select %p17, %s18, %s19
      %p23 = pneg %p17
      %p24 = scmp.eq.s32.totalorder %s8, 1
      %p25 = por %p23, %p24
      %p26 = scmp.ne.s32.totalorder %s18, %s21
      %p27 = scmp.eq.s32.totalorder %s8, 0
      %p28 = por %p26, %p27
      %p29 = scmp.ne.s32.totalorder %s18, %s21
      %p30 = scmp.eq.s32.totalorder %s13, 1
      %p31 = por %p29, %p30
      %p32 = scmp.ne.s32.totalorder %s21, %s22
      %p33 = scmp.eq.s32.totalorder %s13, 0
      %p34 = por %p32, %p33
      %p35 = scmp.ne.s32.totalorder %s21, %s22
      %p36 = scmp.eq.s32.totalorder %s14, 1
      %p37 = por %p35, %p36
      %p39 = scmp.ne.s32.totalorder %s22, %s38
      %p40 = scmp.eq.s32.totalorder %s14, 0
      %p41 = por %p39, %p40
      %s42 = ssub.s32 %s8, %s15
      %p43 = scmp.eq.s32.totalorder %s42, 0
      %s45 = sadd.s32 %s44, 1
      %s46 = scalar_select %p43, %s44, %s45
      %p49 = pneg %p43
      %p50 = scmp.eq.s32.totalorder %s8, 1
      %p51 = por %p49, %p50
      %p52 = scmp.ne.s32.totalorder %s44, %s47
      %p53 = scmp.eq.s32.totalorder %s8, 0
      %p54 = por %p52, %p53
      %p55 = scmp.ne.s32.totalorder %s44, %s47
      %p56 = scmp.eq.s32.totalorder %s13, 1
      %p57 = por %p55, %p56
      %p58 = scmp.ne.s32.totalorder %s47, %s48
      %p59 = scmp.eq.s32.totalorder %s13, 0
      %p60 = por %p58, %p59
      %p61 = scmp.ne.s32.totalorder %s47, %s48
      %p62 = scmp.eq.s32.totalorder %s14, 1
      %p63 = por %p61, %p62
      %p65 = scmp.ne.s32.totalorder %s48, %s64
      %p66 = scmp.eq.s32.totalorder %s14, 0
      %p67 = por %p65, %p66
      %s68 = ssub.s32 %s8, %s15
      %p69 = scmp.eq.s32.totalorder %s68, 0
      %s71 = sadd.s32 %s70, 1
      %s72 = scalar_select %p69, %s70, %s71
      %p75 = pneg %p69
      %p76 = scmp.eq.s32.totalorder %s8, 1
      %p77 = por %p75, %p76
      %p78 = scmp.ne.s32.totalorder %s70, %s73
      %p79 = scmp.eq.s32.totalorder %s8, 0
      %p80 = por %p78, %p79
      %p81 = scmp.ne.s32.totalorder %s70, %s73
      %p82 = scmp.eq.s32.totalorder %s13, 1
      %p83 = por %p81, %p82
      %p84 = scmp.ne.s32.totalorder %s73, %s74
      %p85 = scmp.eq.s32.totalorder %s13, 0
      %p86 = por %p84, %p85
      %p87 = scmp.ne.s32.totalorder %s73, %s74
      %p88 = scmp.eq.s32.totalorder %s14, 1
      %p89 = por %p87, %p88
      %p91 = scmp.ne.s32.totalorder %s74, %s90
      %p92 = scmp.eq.s32.totalorder %s14, 0
      %p93 = por %p91, %p92
      %p94 = scmp.le.s32.totalorder 1, %s8
      %p95 = scmp.lt.s32.totalorder %s8, 3
      %p96 = pnand %p94, %p95
      %p97 = pneg %p96
      // Predicated region
      $region9: #{_lambda_.11} parent=5 // pred_check
        _
      $region10: #{_lambda_.11} parent=5 // pred_check_branch
        %99 = sbr.rel (%p96) target = $region12
      $region11: #{_lambda_.11} parent=5 // pred_region
        %s100 = ssub.s32 %s8, 1
      $region12: #{_lambda_.11} parent=5 // pred_fallthru
        _
      %p101 = scmp.lt.s32.totalorder %s8, 2
      // Predicated region
      $region13: #{_lambda_.11} parent=5 // pred_check
        %p102 = pneg %p101
      $region14: #{_lambda_.11} parent=5 // pred_check_branch
        %104 = sbr.rel (%p102) target = $region16
      $region15: #{_lambda_.11} parent=5 // pred_region
        // Predicated region
        $region17: #{_lambda_.11} parent=15 // pred_check
          %p105 = pneg %p28
        $region18: #{_lambda_.11} parent=15 // pred_check_branch
          %107 = sbr.rel (%p105) target = $region20
        $region19: #{_lambda_.11} parent=15 // pred_region
          %s108 = sand.u32 %s18, 1
          %s109 = sand.u32 %s18, 1
          %s110 = smul.addr %s109, 128
          %s111 = scalar_lea.vmem [#allocation2], %s110
          %s112 = smul.u32 4, %s8
          %s113 = smul.addr %s112, 2
          %s114 = smul.addr %s113, 8
          %s115 = scalar_lea.vmem %s0, %s114
          // Predicated region
          $region21: #{_lambda_.11} parent=19 // pred_check
            _
          $region22: #{_lambda_.11} parent=19 // pred_check_branch
            %117 = sbr.rel (0) target = $region24
          $region23: #{_lambda_.11} parent=19 // pred_region
            // Predicated region
            $region25: #{_lambda_.11} parent=23 // pred_check
              _
            $region26: #{_lambda_.11} parent=23 // pred_check_branch
              %119 = sbr.rel (0) target = $region28
            $region27: #{_lambda_.11} parent=23 // pred_region
              // Predicated region
              $region40: #{_lambda_.11} parent=27 // pred_check
                _
              $region41: #{_lambda_.11} parent=27 // pred_check_branch
                %165 = sbr.rel (0) target = $region43
              $region42: #{_lambda_.11} parent=27 // pred_region
                loop: start=0, step=1, limit=1
                $region44: #{_lambda_.11} parent=42 // loop_pre_header
                  _
                $region45: #{_lambda_.11} parent=42 // loop_header
                  %s167 = sphi 0, %s171
                  %p168 = scmp.ge.s32.totalorder %s167, 1
                  %s172 = sphi %s115, %s115
                  %s173 = sphi %s111, %s111
                $region46: #{_lambda_.11} parent=42 // loop_header_branch
                  %170 = sbr.rel (%p168) target = $region50
                $region47: #{_lambda_.11} parent=42 // loop_body
                  %v174 = vld [vmem:[%s172] sm:$0xff]
                  %175 = vst [vmem:[%s173] sm:$0xff] %v174
                  %v176 = vld [vmem:[%s172 + $0x8] sm:$0xff]
                  %177 = vst [vmem:[%s173 + $0x8] sm:$0xff] %v176
                  %v178 = vld [vmem:[%s172 + $0x10] sm:$0xff]
                  %179 = vst [vmem:[%s173 + $0x10] sm:$0xff] %v178
                  %v180 = vld [vmem:[%s172 + $0x18] sm:$0xff]
                  %181 = vst [vmem:[%s173 + $0x18] sm:$0xff] %v180
                  %v182 = vld [vmem:[%s172 + $0x20] sm:$0xff]
                  %183 = vst [vmem:[%s173 + $0x20] sm:$0xff] %v182
                  %v184 = vld [vmem:[%s172 + $0x28] sm:$0xff]
                  %185 = vst [vmem:[%s173 + $0x28] sm:$0xff] %v184
                  %v186 = vld [vmem:[%s172 + $0x30] sm:$0xff]
                  %187 = vst [vmem:[%s173 + $0x30] sm:$0xff] %v186
                  %v188 = vld [vmem:[%s172 + $0x38] sm:$0xff]
                  %189 = vst [vmem:[%s173 + $0x38] sm:$0xff] %v188
                  %v190 = vld [vmem:[%s172 + $0x80] sm:$0xff]
                  %191 = vst [vmem:[%s173 + $0x40] sm:$0xff] %v190
                  %v192 = vld [vmem:[%s172 + $0x88] sm:$0xff]
                  %193 = vst [vmem:[%s173 + $0x48] sm:$0xff] %v192
                  %v194 = vld [vmem:[%s172 + $0x90] sm:$0xff]
                  %195 = vst [vmem:[%s173 + $0x50] sm:$0xff] %v194
                  %v196 = vld [vmem:[%s172 + $0x98] sm:$0xff]
                  %197 = vst [vmem:[%s173 + $0x58] sm:$0xff] %v196
                  %v198 = vld [vmem:[%s172 + $0xa0] sm:$0xff]
                  %199 = vst [vmem:[%s173 + $0x60] sm:$0xff] %v198
                  %v200 = vld [vmem:[%s172 + $0xa8] sm:$0xff]
                  %201 = vst [vmem:[%s173 + $0x68] sm:$0xff] %v200
                  %v202 = vld [vmem:[%s172 + $0xb0] sm:$0xff]
                  %203 = vst [vmem:[%s173 + $0x70] sm:$0xff] %v202
                  %v204 = vld [vmem:[%s172 + $0xb8] sm:$0xff]
                  %205 = vst [vmem:[%s173 + $0x78] sm:$0xff] %v204
                $region48: #{_lambda_.11} parent=42 // loop_footer
                  %s171 = sadd.s32 1, %s167
                $region49: #{_lambda_.11} parent=42 // loop_footer_branch
                  %166 = sbr.rel target = $region45
                $region50: #{_lambda_.11} parent=42 // loop_exit
                  _
              $region43: #{_lambda_.11} parent=27 // pred_fallthru
                _
              // Predicated region
              $region51: #{_lambda_.11} parent=27 // pred_check
                _
              $region52: #{_lambda_.11} parent=27 // pred_check_branch
                %207 = sbr.rel target = $region54
              $region53: #{_lambda_.11} parent=27 // pred_region
                _
              $region54: #{_lambda_.11} parent=27 // pred_fallthru
                _
            $region28: #{_lambda_.11} parent=23 // pred_fallthru
              _
            // Predicated region
            $region29: #{_lambda_.11} parent=23 // pred_check
              _
            $region30: #{_lambda_.11} parent=23 // pred_check_branch
              %121 = sbr.rel target = $region32
            $region31: #{_lambda_.11} parent=23 // pred_region
              %s123 = ssub.s32 256, 1
              loop: start=0, step=1, limit=1
              $region33: #{_lambda_.11} parent=31 // loop_pre_header
                _
              $region34: #{_lambda_.11} parent=31 // loop_header
                %s125 = sphi 0, %s129
                %p126 = scmp.ge.s32.totalorder %s125, 1
                %s130 = sphi %s115, %s115
                %s131 = sphi %s111, %s111
              $region35: #{_lambda_.11} parent=31 // loop_header_branch
                %128 = sbr.rel (%p126) target = $region39
              $region36: #{_lambda_.11} parent=31 // loop_body
                %v132 = vld [vmem:[%s130] sm:%s123]
                %133 = vst [vmem:[%s131] sm:%s123] %v132
                %v134 = vld [vmem:[%s130 + $0x8] sm:%s123]
                %135 = vst [vmem:[%s131 + $0x8] sm:%s123] %v134
                %v136 = vld [vmem:[%s130 + $0x10] sm:%s123]
                %137 = vst [vmem:[%s131 + $0x10] sm:%s123] %v136
                %v138 = vld [vmem:[%s130 + $0x18] sm:%s123]
                %139 = vst [vmem:[%s131 + $0x18] sm:%s123] %v138
                %v140 = vld [vmem:[%s130 + $0x20] sm:%s123]
                %141 = vst [vmem:[%s131 + $0x20] sm:%s123] %v140
                %v142 = vld [vmem:[%s130 + $0x28] sm:%s123]
                %143 = vst [vmem:[%s131 + $0x28] sm:%s123] %v142
                %v144 = vld [vmem:[%s130 + $0x30] sm:%s123]
                %145 = vst [vmem:[%s131 + $0x30] sm:%s123] %v144
                %v146 = vld [vmem:[%s130 + $0x38] sm:%s123]
                %147 = vst [vmem:[%s131 + $0x38] sm:%s123] %v146
                %v148 = vld [vmem:[%s130 + $0x80] sm:%s123]
                %149 = vst [vmem:[%s131 + $0x40] sm:%s123] %v148
                %v150 = vld [vmem:[%s130 + $0x88] sm:%s123]
                %151 = vst [vmem:[%s131 + $0x48] sm:%s123] %v150
                %v152 = vld [vmem:[%s130 + $0x90] sm:%s123]
                %153 = vst [vmem:[%s131 + $0x50] sm:%s123] %v152
                %v154 = vld [vmem:[%s130 + $0x98] sm:%s123]
                %155 = vst [vmem:[%s131 + $0x58] sm:%s123] %v154
                %v156 = vld [vmem:[%s130 + $0xa0] sm:%s123]
                %157 = vst [vmem:[%s131 + $0x60] sm:%s123] %v156
                %v158 = vld [vmem:[%s130 + $0xa8] sm:%s123]
                %159 = vst [vmem:[%s131 + $0x68] sm:%s123] %v158
                %v160 = vld [vmem:[%s130 + $0xb0] sm:%s123]
                %161 = vst [vmem:[%s131 + $0x70] sm:%s123] %v160
                %v162 = vld [vmem:[%s130 + $0xb8] sm:%s123]
                %163 = vst [vmem:[%s131 + $0x78] sm:%s123] %v162
              $region37: #{_lambda_.11} parent=31 // loop_footer
                %s129 = sadd.s32 1, %s125
              $region38: #{_lambda_.11} parent=31 // loop_footer_branch
                %124 = sbr.rel target = $region34
              $region39: #{_lambda_.11} parent=31 // loop_exit
                _
            $region32: #{_lambda_.11} parent=23 // pred_fallthru
              _
          $region24: #{_lambda_.11} parent=19 // pred_fallthru
            _
          %208 = vnop
        $region20: #{_lambda_.11} parent=15 // pred_fallthru
          _
        // Predicated region
        $region55: #{_lambda_.11} parent=15 // pred_check
          %p209 = pneg %p54
        $region56: #{_lambda_.11} parent=15 // pred_check_branch
          %211 = sbr.rel (%p209) target = $region58
        $region57: #{_lambda_.11} parent=15 // pred_region
          %s212 = sand.u32 %s44, 1
          %s213 = sand.u32 %s44, 1
          %s214 = smul.addr %s213, 8
          %s215 = scalar_lea.vmem [#allocation3], %s214
          %s216 = smul.u32 4, %s8
          %s217 = scalar_lea.vmem %s1, %s216
          // Predicated region
          $region59: #{_lambda_.11} parent=57 // pred_check
            _
          $region60: #{_lambda_.11} parent=57 // pred_check_branch
            %219 = sbr.rel (0) target = $region62
          $region61: #{_lambda_.11} parent=57 // pred_region
            // Predicated region
            $region63: #{_lambda_.11} parent=61 // pred_check
              _
            $region64: #{_lambda_.11} parent=61 // pred_check_branch
              %221 = sbr.rel target = $region66
            $region65: #{_lambda_.11} parent=61 // pred_region
              // Predicated region
              $region78: #{_lambda_.11} parent=65 // pred_check
                _
              $region79: #{_lambda_.11} parent=65 // pred_check_branch
                %239 = sbr.rel (0) target = $region81
              $region80: #{_lambda_.11} parent=65 // pred_region
                loop: start=0, step=1, limit=1
                $region82: #{_lambda_.11} parent=80 // loop_pre_header
                  _
                $region83: #{_lambda_.11} parent=80 // loop_header
                  %s241 = sphi 0, %s245
                  %p242 = scmp.ge.s32.totalorder %s241, 1
                  %s246 = sphi %s217, %s217
                  %s247 = sphi %s215, %s215
                $region84: #{_lambda_.11} parent=80 // loop_header_branch
                  %244 = sbr.rel (%p242) target = $region88
                $region85: #{_lambda_.11} parent=80 // loop_body
                  _
                $region86: #{_lambda_.11} parent=80 // loop_footer
                  %s245 = sadd.s32 1, %s241
                $region87: #{_lambda_.11} parent=80 // loop_footer_branch
                  %240 = sbr.rel target = $region83
                $region88: #{_lambda_.11} parent=80 // loop_exit
                  _
                %s249 = ssub.s32 16, 1
                loop: start=0, step=1, limit=1
                $region89: #{_lambda_.11} parent=80 // loop_pre_header
                  _
                $region90: #{_lambda_.11} parent=80 // loop_header
                  %s251 = sphi 0, %s255
                  %p252 = scmp.ge.s32.totalorder %s251, 1
                  %s256 = sphi %s217, %s217
                  %s257 = sphi %s215, %s215
                $region91: #{_lambda_.11} parent=80 // loop_header_branch
                  %254 = sbr.rel (%p252) target = $region95
                $region92: #{_lambda_.11} parent=80 // loop_body
                  %v258 = vld [vmem:[%s256] sm:%s249]
                  %259 = vst [vmem:[%s257] sm:%s249] %v258
                  %v260 = vld [vmem:[%s256 + $0x8] sm:%s249]
                  %261 = vst [vmem:[%s257 + $0x4] sm:%s249] %v260
                $region93: #{_lambda_.11} parent=80 // loop_footer
                  %s255 = sadd.s32 1, %s251
                $region94: #{_lambda_.11} parent=80 // loop_footer_branch
                  %250 = sbr.rel target = $region90
                $region95: #{_lambda_.11} parent=80 // loop_exit
                  _
              $region81: #{_lambda_.11} parent=65 // pred_fallthru
                _
            $region66: #{_lambda_.11} parent=61 // pred_fallthru
              _
            // Predicated region
            $region67: #{_lambda_.11} parent=61 // pred_check
              _
            $region68: #{_lambda_.11} parent=61 // pred_check_branch
              %223 = sbr.rel (0) target = $region70
            $region69: #{_lambda_.11} parent=61 // pred_region
              %s225 = ssub.s32 16, 1
              loop: start=0, step=1, limit=1
              $region71: #{_lambda_.11} parent=69 // loop_pre_header
                _
              $region72: #{_lambda_.11} parent=69 // loop_header
                %s227 = sphi 0, %s231
                %p228 = scmp.ge.s32.totalorder %s227, 1
                %s232 = sphi %s217, %s217
                %s233 = sphi %s215, %s215
              $region73: #{_lambda_.11} parent=69 // loop_header_branch
                %230 = sbr.rel (%p228) target = $region77
              $region74: #{_lambda_.11} parent=69 // loop_body
                %v234 = vld [vmem:[%s232] sm:%s225]
                %235 = vst [vmem:[%s233] sm:%s225] %v234
                %v236 = vld [vmem:[%s232 + $0x8] sm:%s225]
                %237 = vst [vmem:[%s233 + $0x4] sm:%s225] %v236
              $region75: #{_lambda_.11} parent=69 // loop_footer
                %s231 = sadd.s32 1, %s227
              $region76: #{_lambda_.11} parent=69 // loop_footer_branch
                %226 = sbr.rel target = $region72
              $region77: #{_lambda_.11} parent=69 // loop_exit
                _
            $region70: #{_lambda_.11} parent=61 // pred_fallthru
              _
          $region62: #{_lambda_.11} parent=57 // pred_fallthru
            _
          %262 = vnop
        $region58: #{_lambda_.11} parent=15 // pred_fallthru
          _
      $region16: #{_lambda_.11} parent=5 // pred_fallthru
        _
      %p263 = scmp.le.s32.totalorder 1, %s8
      %p264 = scmp.lt.s32.totalorder %s8, 3
      %p265 = pnand %p263, %p264
      %p266 = pneg %p265
      // Predicated region
      $region96: #{_lambda_.11} parent=5 // pred_check
        _
      $region97: #{_lambda_.11} parent=5 // pred_check_branch
        %268 = sbr.rel (%p265) target = $region99
      $region98: #{_lambda_.11} parent=5 // pred_region
        %s269 = ssub.s32 %s8, 1
        %s270 = sand.u32 %s21, 1
        %s271 = sand.u32 %s21, 1
        %s272 = smul.addr %s271, 128
        %s273 = scalar_lea.vmem [#allocation2], %s272
        // Predicated region
        $region100: #{_lambda_.11} parent=98 // pred_check
          %p274 = pneg %p34
        $region101: #{_lambda_.11} parent=98 // pred_check_branch
          %276 = sbr.rel (%p274) target = $region103
        $region102: #{_lambda_.11} parent=98 // pred_region
          _
        $region103: #{_lambda_.11} parent=98 // pred_fallthru
          _
        %s277 = sand.u32 %s47, 1
        %s278 = sand.u32 %s47, 1
        %s279 = smul.addr %s278, 8
        %s280 = scalar_lea.vmem [#allocation3], %s279
        // Predicated region
        $region104: #{_lambda_.11} parent=98 // pred_check
          %p281 = pneg %p60
        $region105: #{_lambda_.11} parent=98 // pred_check_branch
          %283 = sbr.rel (%p281) target = $region107
        $region106: #{_lambda_.11} parent=98 // pred_region
          _
        $region107: #{_lambda_.11} parent=98 // pred_fallthru
          _
        %s284 = sand.u32 %s21, 1
        %s285 = sand.u32 %s21, 1
        %s286 = smul.addr %s285, 128
        %s287 = scalar_lea.vmem [#allocation2], %s286
        %p288 = pneg %p34
        %p289 = pneg %p31
        %s290 = sand.u32 %s47, 1
        %s291 = sand.u32 %s47, 1
        %s292 = smul.addr %s291, 8
        %s293 = scalar_lea.vmem [#allocation3], %s292
        %p294 = pneg %p60
        %p295 = pneg %p57
        %p296 = pneg %p86
        %p297 = pneg %p83
        %s298 = smul.u32 4, %s13
        %p299 = scmp.lt.s32.totalorder %s298, 7
        %s300 = scalar_select %p299, %s298, 7
        %s301 = smul.addr %s300, 2
        %s302 = smul.addr %s301, 8
        %s303 = scalar_lea.vmem %s2, %s302
        %s304 = smul.u32 4, %s13
        %s305 = smul.u32 4, %s13
        %s306 = smul.u32 4, %s13
        %p307 = scmp.lt.s32.totalorder %s306, 7
        %s308 = scalar_select %p307, %s306, 7
        %s309 = smul.addr %s308, 2
        %s310 = smul.addr %s309, 8
        %s311 = scalar_lea.vmem %s2, %s310
        %s312 = smul.u32 4, %s13
        %v313 = vld [vmem:[%s280] sm:$0x1]
        %v314 = vld [vmem:[%s280 + $0x1] sm:$0x1]
        %v315 = vld [vmem:[%s280 + $0x2] sm:$0x1]
        %v316 = vld [vmem:[%s280 + $0x3] sm:$0x1]
        %v317 = vld [vmem:[%s280 + $0x4] sm:$0x1]
        %v318 = vld [vmem:[%s280 + $0x5] sm:$0x1]
        %v319 = vld [vmem:[%s280 + $0x6] sm:$0x1]
        %v320 = vld [vmem:[%s280 + $0x7] sm:$0x1]
        %v321 = vmax.f32 %v313, 1e-08
        %v322 = vmax.f32 %v314, 1e-08
        %v323 = vmax.f32 %v315, 1e-08
        %v324 = vmax.f32 %v316, 1e-08
        %v325 = vmax.f32 %v317, 1e-08
        %v326 = vmax.f32 %v318, 1e-08
        %v327 = vmax.f32 %v319, 1e-08
        %v328 = vmax.f32 %v320, 1e-08
        %v329 = vlog2.pop %v321
        %v330 = vmul.f32 %v329, 0.6931472
        %v331 = vlog2.pop %v322
        %v332 = vmul.f32 %v331, 0.6931472
        %v333 = vlog2.pop %v323
        %v334 = vmul.f32 %v333, 0.6931472
        %v335 = vlog2.pop %v324
        %v336 = vmul.f32 %v335, 0.6931472
        %v337 = vlog2.pop %v325
        %v338 = vmul.f32 %v337, 0.6931472
        %v339 = vlog2.pop %v326
        %v340 = vmul.f32 %v339, 0.6931472
        %v341 = vlog2.pop %v327
        %v342 = vmul.f32 %v341, 0.6931472
        %v343 = vlog2.pop %v328
        %v344 = vmul.f32 %v343, 0.6931472
        %v345 = vld [vmem:[%s273] sm:$0xff]
        %v346 = vld [vmem:[%s273 + $0x8] sm:$0xff]
        %v347 = vld [vmem:[%s273 + $0x10] sm:$0xff]
        %v348 = vld [vmem:[%s273 + $0x18] sm:$0xff]
        %v349 = vld [vmem:[%s273 + $0x20] sm:$0xff]
        %v350 = vld [vmem:[%s273 + $0x28] sm:$0xff]
        %v351 = vld [vmem:[%s273 + $0x30] sm:$0xff]
        %v352 = vld [vmem:[%s273 + $0x38] sm:$0xff]
        %s353 = scalar_lea.vmem %s273, 64 [#allocation2]
        %v354 = vld [vmem:[%s353] sm:$0xff]
        %v355 = vld [vmem:[%s353 + $0x8] sm:$0xff]
        %v356 = vld [vmem:[%s353 + $0x10] sm:$0xff]
        %v357 = vld [vmem:[%s353 + $0x18] sm:$0xff]
        %v358 = vld [vmem:[%s353 + $0x20] sm:$0xff]
        %v359 = vld [vmem:[%s353 + $0x28] sm:$0xff]
        %v360 = vld [vmem:[%s353 + $0x30] sm:$0xff]
        %v361 = vld [vmem:[%s353 + $0x38] sm:$0xff]
        %v366 = vperm.slane %v330, 0
        %v367 = vperm.slane %v332, 0
        %v368 = vperm.slane %v334, 0
        %v369 = vperm.slane %v336, 0
        %v374 = vmul.f32 %v345, %v366
        %v375 = vmul.f32 %v346, %v366
        %v376 = vmul.f32 %v347, %v367
        %v377 = vmul.f32 %v348, %v367
        %v378 = vmul.f32 %v349, %v368
        %v379 = vmul.f32 %v350, %v368
        %v380 = vmul.f32 %v351, %v369
        %v381 = vmul.f32 %v352, %v369
        %vm382 = vcmask 130048
        %v384 = vsel %vm382, %v345, 0
        %v387 = vsel %vm382, %v346, 0
        %v390 = vsel %vm382, %v374, 0
        %v393 = vsel %vm382, %v375, 0
        %395 = vmatpush.xpose.msra.mxu0 0.0
        %396 = vmatpush.xpose.msra.mxu0 0.0
        %397 = vmatpush.xpose.msra.mxu0 0.0
        %398 = vmatpush.xpose.msra.mxu0 0.0
        %399 = vmatpush.xpose.msra.mxu0 0.0
        %400 = vmatpush.xpose.msra.mxu0 0.0
        %401 = vmatpush.xpose.msra.mxu0 0.0
        %402 = vmatpush.xpose.msra.mxu0 0.0
        %403 = vmatpush.xpose.msra.mxu0 0.0
        %404 = vmatpush.xpose.msra.mxu0 0.0
        %405 = vmatpush.xpose.msra.mxu0 0.0
        %406 = vmatpush.xpose.msra.mxu0 0.0
        %407 = vmatpush.xpose.msra.mxu0 0.0
        %408 = vmatpush.xpose.msra.mxu0 0.0
        %409 = vmatpush.xpose.msra.mxu0 %v393
        %410 = vmatpush.xpose.msra.mxu0 %v390
        %411 = vmatmul.f32.gmra.mxu0 %v384
        %v412 = vpop.f32.mrf.mxu0
        %v413 = vadd.f32 0.0, %v412
        %414 = vmatmul.f32.gmra.mxu0 %v387
        %v415 = vpop.f32.mrf.mxu0
        %v416 = vadd.f32 0.0, %v415
        %417 = vdwg.mxu0
        %v419 = vsel %vm382, %v347, 0
        %v422 = vsel %vm382, %v348, 0
        %v425 = vsel %vm382, %v376, 0
        %v428 = vsel %vm382, %v377, 0
        %430 = vmatpush.xpose.msra.mxu0 0.0
        %431 = vmatpush.xpose.msra.mxu0 0.0
        %432 = vmatpush.xpose.msra.mxu0 0.0
        %433 = vmatpush.xpose.msra.mxu0 0.0
        %434 = vmatpush.xpose.msra.mxu0 0.0
        %435 = vmatpush.xpose.msra.mxu0 0.0
        %436 = vmatpush.xpose.msra.mxu0 0.0
        %437 = vmatpush.xpose.msra.mxu0 0.0
        %438 = vmatpush.xpose.msra.mxu0 0.0
        %439 = vmatpush.xpose.msra.mxu0 0.0
        %440 = vmatpush.xpose.msra.mxu0 0.0
        %441 = vmatpush.xpose.msra.mxu0 0.0
        %442 = vmatpush.xpose.msra.mxu0 0.0
        %443 = vmatpush.xpose.msra.mxu0 0.0
        %444 = vmatpush.xpose.msra.mxu0 %v428
        %445 = vmatpush.xpose.msra.mxu0 %v425
        %446 = vmatmul.f32.gmra.mxu0 %v419
        %v447 = vpop.f32.mrf.mxu0
        %v448 = vadd.f32 0.0, %v447
        %449 = vmatmul.f32.gmra.mxu0 %v422
        %v450 = vpop.f32.mrf.mxu0
        %v451 = vadd.f32 0.0, %v450
        %452 = vdwg.mxu0
        %v454 = vsel %vm382, %v349, 0
        %v457 = vsel %vm382, %v350, 0
        %v460 = vsel %vm382, %v378, 0
        %v463 = vsel %vm382, %v379, 0
        %465 = vmatpush.xpose.msra.mxu0 0.0
        %466 = vmatpush.xpose.msra.mxu0 0.0
        %467 = vmatpush.xpose.msra.mxu0 0.0
        %468 = vmatpush.xpose.msra.mxu0 0.0
        %469 = vmatpush.xpose.msra.mxu0 0.0
        %470 = vmatpush.xpose.msra.mxu0 0.0
        %471 = vmatpush.xpose.msra.mxu0 0.0
        %472 = vmatpush.xpose.msra.mxu0 0.0
        %473 = vmatpush.xpose.msra.mxu0 0.0
        %474 = vmatpush.xpose.msra.mxu0 0.0
        %475 = vmatpush.xpose.msra.mxu0 0.0
        %476 = vmatpush.xpose.msra.mxu0 0.0
        %477 = vmatpush.xpose.msra.mxu0 0.0
        %478 = vmatpush.xpose.msra.mxu0 0.0
        %479 = vmatpush.xpose.msra.mxu0 %v463
        %480 = vmatpush.xpose.msra.mxu0 %v460
        %481 = vmatmul.f32.gmra.mxu0 %v454
        %v482 = vpop.f32.mrf.mxu0
        %v483 = vadd.f32 0.0, %v482
        %484 = vmatmul.f32.gmra.mxu0 %v457
        %v485 = vpop.f32.mrf.mxu0
        %v486 = vadd.f32 0.0, %v485
        %487 = vdwg.mxu0
        %v489 = vsel %vm382, %v351, 0
        %v492 = vsel %vm382, %v352, 0
        %v495 = vsel %vm382, %v380, 0
        %v498 = vsel %vm382, %v381, 0
        %500 = vmatpush.xpose.msra.mxu0 0.0
        %501 = vmatpush.xpose.msra.mxu0 0.0
        %502 = vmatpush.xpose.msra.mxu0 0.0
        %503 = vmatpush.xpose.msra.mxu0 0.0
        %504 = vmatpush.xpose.msra.mxu0 0.0
        %505 = vmatpush.xpose.msra.mxu0 0.0
        %506 = vmatpush.xpose.msra.mxu0 0.0
        %507 = vmatpush.xpose.msra.mxu0 0.0
        %508 = vmatpush.xpose.msra.mxu0 0.0
        %509 = vmatpush.xpose.msra.mxu0 0.0
        %510 = vmatpush.xpose.msra.mxu0 0.0
        %511 = vmatpush.xpose.msra.mxu0 0.0
        %512 = vmatpush.xpose.msra.mxu0 0.0
        %513 = vmatpush.xpose.msra.mxu0 0.0
        %514 = vmatpush.xpose.msra.mxu0 %v498
        %515 = vmatpush.xpose.msra.mxu0 %v495
        %516 = vmatmul.f32.gmra.mxu0 %v489
        %v517 = vpop.f32.mrf.mxu0
        %v518 = vadd.f32 0.0, %v517
        %519 = vmatmul.f32.gmra.mxu0 %v492
        %v520 = vpop.f32.mrf.mxu0
        %v521 = vadd.f32 0.0, %v520
        %522 = vdwg.mxu0
        %v527 = vperm.slane %v338, 0
        %v528 = vperm.slane %v340, 0
        %v529 = vperm.slane %v342, 0
        %v530 = vperm.slane %v344, 0
        %v535 = vmul.f32 %v354, %v527
        %v536 = vmul.f32 %v355, %v527
        %v537 = vmul.f32 %v356, %v528
        %v538 = vmul.f32 %v357, %v528
        %v539 = vmul.f32 %v358, %v529
        %v540 = vmul.f32 %v359, %v529
        %v541 = vmul.f32 %v360, %v530
        %v542 = vmul.f32 %v361, %v530
        %v544 = vsel %vm382, %v354, 0
        %v547 = vsel %vm382, %v355, 0
        %v550 = vsel %vm382, %v535, 0
        %v553 = vsel %vm382, %v536, 0
        %555 = vmatpush.xpose.msra.mxu0 0.0
        %556 = vmatpush.xpose.msra.mxu0 0.0
        %557 = vmatpush.xpose.msra.mxu0 0.0
        %558 = vmatpush.xpose.msra.mxu0 0.0
        %559 = vmatpush.xpose.msra.mxu0 0.0
        %560 = vmatpush.xpose.msra.mxu0 0.0
        %561 = vmatpush.xpose.msra.mxu0 0.0
        %562 = vmatpush.xpose.msra.mxu0 0.0
        %563 = vmatpush.xpose.msra.mxu0 0.0
        %564 = vmatpush.xpose.msra.mxu0 0.0
        %565 = vmatpush.xpose.msra.mxu0 0.0
        %566 = vmatpush.xpose.msra.mxu0 0.0
        %567 = vmatpush.xpose.msra.mxu0 0.0
        %568 = vmatpush.xpose.msra.mxu0 0.0
        %569 = vmatpush.xpose.msra.mxu0 %v553
        %570 = vmatpush.xpose.msra.mxu0 %v550
        %571 = vmatmul.f32.gmra.mxu0 %v544
        %v572 = vpop.f32.mrf.mxu0
        %v573 = vadd.f32 0.0, %v572
        %574 = vmatmul.f32.gmra.mxu0 %v547
        %v575 = vpop.f32.mrf.mxu0
        %v576 = vadd.f32 0.0, %v575
        %577 = vdwg.mxu0
        %v579 = vsel %vm382, %v356, 0
        %v582 = vsel %vm382, %v357, 0
        %v585 = vsel %vm382, %v537, 0
        %v588 = vsel %vm382, %v538, 0
        %590 = vmatpush.xpose.msra.mxu0 0.0
        %591 = vmatpush.xpose.msra.mxu0 0.0
        %592 = vmatpush.xpose.msra.mxu0 0.0
        %593 = vmatpush.xpose.msra.mxu0 0.0
        %594 = vmatpush.xpose.msra.mxu0 0.0
        %595 = vmatpush.xpose.msra.mxu0 0.0
        %596 = vmatpush.xpose.msra.mxu0 0.0
        %597 = vmatpush.xpose.msra.mxu0 0.0
        %598 = vmatpush.xpose.msra.mxu0 0.0
        %599 = vmatpush.xpose.msra.mxu0 0.0
        %600 = vmatpush.xpose.msra.mxu0 0.0
        %601 = vmatpush.xpose.msra.mxu0 0.0
        %602 = vmatpush.xpose.msra.mxu0 0.0
        %603 = vmatpush.xpose.msra.mxu0 0.0
        %604 = vmatpush.xpose.msra.mxu0 %v588
        %605 = vmatpush.xpose.msra.mxu0 %v585
        %606 = vmatmul.f32.gmra.mxu0 %v579
        %v607 = vpop.f32.mrf.mxu0
        %v608 = vadd.f32 0.0, %v607
        %609 = vmatmul.f32.gmra.mxu0 %v582
        %v610 = vpop.f32.mrf.mxu0
        %v611 = vadd.f32 0.0, %v610
        %612 = vdwg.mxu0
        %v614 = vsel %vm382, %v358, 0
        %v617 = vsel %vm382, %v359, 0
        %v620 = vsel %vm382, %v539, 0
        %v623 = vsel %vm382, %v540, 0
        %625 = vmatpush.xpose.msra.mxu0 0.0
        %626 = vmatpush.xpose.msra.mxu0 0.0
        %627 = vmatpush.xpose.msra.mxu0 0.0
        %628 = vmatpush.xpose.msra.mxu0 0.0
        %629 = vmatpush.xpose.msra.mxu0 0.0
        %630 = vmatpush.xpose.msra.mxu0 0.0
        %631 = vmatpush.xpose.msra.mxu0 0.0
        %632 = vmatpush.xpose.msra.mxu0 0.0
        %633 = vmatpush.xpose.msra.mxu0 0.0
        %634 = vmatpush.xpose.msra.mxu0 0.0
        %635 = vmatpush.xpose.msra.mxu0 0.0
        %636 = vmatpush.xpose.msra.mxu0 0.0
        %637 = vmatpush.xpose.msra.mxu0 0.0
        %638 = vmatpush.xpose.msra.mxu0 0.0
        %639 = vmatpush.xpose.msra.mxu0 %v623
        %640 = vmatpush.xpose.msra.mxu0 %v620
        %641 = vmatmul.f32.gmra.mxu0 %v614
        %v642 = vpop.f32.mrf.mxu0
        %v643 = vadd.f32 0.0, %v642
        %644 = vmatmul.f32.gmra.mxu0 %v617
        %v645 = vpop.f32.mrf.mxu0
        %v646 = vadd.f32 0.0, %v645
        %647 = vdwg.mxu0
        %v649 = vsel %vm382, %v360, 0
        %v652 = vsel %vm382, %v361, 0
        %v655 = vsel %vm382, %v541, 0
        %v658 = vsel %vm382, %v542, 0
        %660 = vmatpush.xpose.msra.mxu0 0.0
        %661 = vmatpush.xpose.msra.mxu0 0.0
        %662 = vmatpush.xpose.msra.mxu0 0.0
        %663 = vmatpush.xpose.msra.mxu0 0.0
        %664 = vmatpush.xpose.msra.mxu0 0.0
        %665 = vmatpush.xpose.msra.mxu0 0.0
        %666 = vmatpush.xpose.msra.mxu0 0.0
        %667 = vmatpush.xpose.msra.mxu0 0.0
        %668 = vmatpush.xpose.msra.mxu0 0.0
        %669 = vmatpush.xpose.msra.mxu0 0.0
        %670 = vmatpush.xpose.msra.mxu0 0.0
        %671 = vmatpush.xpose.msra.mxu0 0.0
        %672 = vmatpush.xpose.msra.mxu0 0.0
        %673 = vmatpush.xpose.msra.mxu0 0.0
        %674 = vmatpush.xpose.msra.mxu0 %v658
        %675 = vmatpush.xpose.msra.mxu0 %v655
        %676 = vmatmul.f32.gmra.mxu0 %v649
        %v677 = vpop.f32.mrf.mxu0
        %v678 = vadd.f32 0.0, %v677
        %679 = vmatmul.f32.gmra.mxu0 %v652
        %v680 = vpop.f32.mrf.mxu0
        %v681 = vadd.f32 0.0, %v680
        %682 = vdwg.mxu0
        %683 = vmatpush.xpose.msra.mxu0 0.0
        %684 = vmatpush.xpose.msra.mxu0 0.0
        %685 = vmatpush.xpose.msra.mxu0 0.0
        %686 = vmatpush.xpose.msra.mxu0 0.0
        %687 = vmatpush.xpose.msra.mxu0 0.0
        %688 = vmatpush.xpose.msra.mxu0 0.0
        %689 = vmatpush.xpose.msra.mxu0 0.0
        %690 = vmatpush.xpose.msra.mxu0 0.0
        %691 = vmatpush.xpose.msra.mxu0 0.0
        %692 = vmatpush.xpose.msra.mxu0 0.0
        %693 = vmatpush.xpose.msra.mxu0 0.0
        %694 = vmatpush.xpose.msra.mxu0 0.0
        %695 = vmatpush.xpose.msra.mxu0 0.0
        %696 = vmatpush.xpose.msra.mxu0 0.0
        %697 = vmatpush.xpose.msra.mxu0 %v387
        %698 = vmatpush.xpose.msra.mxu0 %v384
        %699 = vmatmul.f32.gmra.mxu0 %v390
        %v700 = vpop.f32.mrf.mxu0
        %v701 = vadd.f32 %v413, %v700
        %702 = vmatmul.f32.gmra.mxu0 %v393
        %v703 = vpop.f32.mrf.mxu0
        %v704 = vadd.f32 %v416, %v703
        %705 = vdwg.mxu0
        %706 = vmatpush.xpose.msra.mxu0 0.0
        %707 = vmatpush.xpose.msra.mxu0 0.0
        %708 = vmatpush.xpose.msra.mxu0 0.0
        %709 = vmatpush.xpose.msra.mxu0 0.0
        %710 = vmatpush.xpose.msra.mxu0 0.0
        %711 = vmatpush.xpose.msra.mxu0 0.0
        %712 = vmatpush.xpose.msra.mxu0 0.0
        %713 = vmatpush.xpose.msra.mxu0 0.0
        %714 = vmatpush.xpose.msra.mxu0 0.0
        %715 = vmatpush.xpose.msra.mxu0 0.0
        %716 = vmatpush.xpose.msra.mxu0 0.0
        %717 = vmatpush.xpose.msra.mxu0 0.0
        %718 = vmatpush.xpose.msra.mxu0 0.0
        %719 = vmatpush.xpose.msra.mxu0 0.0
        %720 = vmatpush.xpose.msra.mxu0 %v422
        %721 = vmatpush.xpose.msra.mxu0 %v419
        %722 = vmatmul.f32.gmra.mxu0 %v425
        %v723 = vpop.f32.mrf.mxu0
        %v724 = vadd.f32 %v448, %v723
        %725 = vmatmul.f32.gmra.mxu0 %v428
        %v726 = vpop.f32.mrf.mxu0
        %v727 = vadd.f32 %v451, %v726
        %728 = vdwg.mxu0
        %729 = vmatpush.xpose.msra.mxu0 0.0
        %730 = vmatpush.xpose.msra.mxu0 0.0
        %731 = vmatpush.xpose.msra.mxu0 0.0
        %732 = vmatpush.xpose.msra.mxu0 0.0
        %733 = vmatpush.xpose.msra.mxu0 0.0
        %734 = vmatpush.xpose.msra.mxu0 0.0
        %735 = vmatpush.xpose.msra.mxu0 0.0
        %736 = vmatpush.xpose.msra.mxu0 0.0
        %737 = vmatpush.xpose.msra.mxu0 0.0
        %738 = vmatpush.xpose.msra.mxu0 0.0
        %739 = vmatpush.xpose.msra.mxu0 0.0
        %740 = vmatpush.xpose.msra.mxu0 0.0
        %741 = vmatpush.xpose.msra.mxu0 0.0
        %742 = vmatpush.xpose.msra.mxu0 0.0
        %743 = vmatpush.xpose.msra.mxu0 %v457
        %744 = vmatpush.xpose.msra.mxu0 %v454
        %745 = vmatmul.f32.gmra.mxu0 %v460
        %v746 = vpop.f32.mrf.mxu0
        %v747 = vadd.f32 %v483, %v746
        %748 = vmatmul.f32.gmra.mxu0 %v463
        %v749 = vpop.f32.mrf.mxu0
        %v750 = vadd.f32 %v486, %v749
        %751 = vdwg.mxu0
        %752 = vmatpush.xpose.msra.mxu0 0.0
        %753 = vmatpush.xpose.msra.mxu0 0.0
        %754 = vmatpush.xpose.msra.mxu0 0.0
        %755 = vmatpush.xpose.msra.mxu0 0.0
        %756 = vmatpush.xpose.msra.mxu0 0.0
        %757 = vmatpush.xpose.msra.mxu0 0.0
        %758 = vmatpush.xpose.msra.mxu0 0.0
        %759 = vmatpush.xpose.msra.mxu0 0.0
        %760 = vmatpush.xpose.msra.mxu0 0.0
        %761 = vmatpush.xpose.msra.mxu0 0.0
        %762 = vmatpush.xpose.msra.mxu0 0.0
        %763 = vmatpush.xpose.msra.mxu0 0.0
        %764 = vmatpush.xpose.msra.mxu0 0.0
        %765 = vmatpush.xpose.msra.mxu0 0.0
        %766 = vmatpush.xpose.msra.mxu0 %v492
        %767 = vmatpush.xpose.msra.mxu0 %v489
        %768 = vmatmul.f32.gmra.mxu0 %v495
        %v769 = vpop.f32.mrf.mxu0
        %v770 = vadd.f32 %v518, %v769
        %771 = vmatmul.f32.gmra.mxu0 %v498
        %v772 = vpop.f32.mrf.mxu0
        %v773 = vadd.f32 %v521, %v772
        %774 = vdwg.mxu0
        %v775 = vmul.f32 %v701, 0.5
        %v776 = vmul.f32 %v704, 0.5
        %v777 = vmul.f32 %v724, 0.5
        %v778 = vmul.f32 %v727, 0.5
        %v779 = vmul.f32 %v747, 0.5
        %v780 = vmul.f32 %v750, 0.5
        %v781 = vmul.f32 %v770, 0.5
        %v782 = vmul.f32 %v773, 0.5
        %783 = vmatpush.xpose.msra.mxu0 0.0
        %784 = vmatpush.xpose.msra.mxu0 0.0
        %785 = vmatpush.xpose.msra.mxu0 0.0
        %786 = vmatpush.xpose.msra.mxu0 0.0
        %787 = vmatpush.xpose.msra.mxu0 0.0
        %788 = vmatpush.xpose.msra.mxu0 0.0
        %789 = vmatpush.xpose.msra.mxu0 0.0
        %790 = vmatpush.xpose.msra.mxu0 0.0
        %791 = vmatpush.xpose.msra.mxu0 0.0
        %792 = vmatpush.xpose.msra.mxu0 0.0
        %793 = vmatpush.xpose.msra.mxu0 0.0
        %794 = vmatpush.xpose.msra.mxu0 0.0
        %795 = vmatpush.xpose.msra.mxu0 0.0
        %796 = vmatpush.xpose.msra.mxu0 0.0
        %797 = vmatpush.xpose.msra.mxu0 %v547
        %798 = vmatpush.xpose.msra.mxu0 %v544
        %799 = vmatmul.f32.gmra.mxu0 %v550
        %v800 = vpop.f32.mrf.mxu0
        %v801 = vadd.f32 %v573, %v800
        %802 = vmatmul.f32.gmra.mxu0 %v553
        %v803 = vpop.f32.mrf.mxu0
        %v804 = vadd.f32 %v576, %v803
        %805 = vdwg.mxu0
        %806 = vmatpush.xpose.msra.mxu0 0.0
        %807 = vmatpush.xpose.msra.mxu0 0.0
        %808 = vmatpush.xpose.msra.mxu0 0.0
        %809 = vmatpush.xpose.msra.mxu0 0.0
        %810 = vmatpush.xpose.msra.mxu0 0.0
        %811 = vmatpush.xpose.msra.mxu0 0.0
        %812 = vmatpush.xpose.msra.mxu0 0.0
        %813 = vmatpush.xpose.msra.mxu0 0.0
        %814 = vmatpush.xpose.msra.mxu0 0.0
        %815 = vmatpush.xpose.msra.mxu0 0.0
        %816 = vmatpush.xpose.msra.mxu0 0.0
        %817 = vmatpush.xpose.msra.mxu0 0.0
        %818 = vmatpush.xpose.msra.mxu0 0.0
        %819 = vmatpush.xpose.msra.mxu0 0.0
        %820 = vmatpush.xpose.msra.mxu0 %v582
        %821 = vmatpush.xpose.msra.mxu0 %v579
        %822 = vmatmul.f32.gmra.mxu0 %v585
        %v823 = vpop.f32.mrf.mxu0
        %v824 = vadd.f32 %v608, %v823
        %825 = vmatmul.f32.gmra.mxu0 %v588
        %v826 = vpop.f32.mrf.mxu0
        %v827 = vadd.f32 %v611, %v826
        %828 = vdwg.mxu0
        %829 = vmatpush.xpose.msra.mxu0 0.0
        %830 = vmatpush.xpose.msra.mxu0 0.0
        %831 = vmatpush.xpose.msra.mxu0 0.0
        %832 = vmatpush.xpose.msra.mxu0 0.0
        %833 = vmatpush.xpose.msra.mxu0 0.0
        %834 = vmatpush.xpose.msra.mxu0 0.0
        %835 = vmatpush.xpose.msra.mxu0 0.0
        %836 = vmatpush.xpose.msra.mxu0 0.0
        %837 = vmatpush.xpose.msra.mxu0 0.0
        %838 = vmatpush.xpose.msra.mxu0 0.0
        %839 = vmatpush.xpose.msra.mxu0 0.0
        %840 = vmatpush.xpose.msra.mxu0 0.0
        %841 = vmatpush.xpose.msra.mxu0 0.0
        %842 = vmatpush.xpose.msra.mxu0 0.0
        %843 = vmatpush.xpose.msra.mxu0 %v617
        %844 = vmatpush.xpose.msra.mxu0 %v614
        %845 = vmatmul.f32.gmra.mxu0 %v620
        %v846 = vpop.f32.mrf.mxu0
        %v847 = vadd.f32 %v643, %v846
        %848 = vmatmul.f32.gmra.mxu0 %v623
        %v849 = vpop.f32.mrf.mxu0
        %v850 = vadd.f32 %v646, %v849
        %851 = vdwg.mxu0
        %852 = vmatpush.xpose.msra.mxu0 0.0
        %853 = vmatpush.xpose.msra.mxu0 0.0
        %854 = vmatpush.xpose.msra.mxu0 0.0
        %855 = vmatpush.xpose.msra.mxu0 0.0
        %856 = vmatpush.xpose.msra.mxu0 0.0
        %857 = vmatpush.xpose.msra.mxu0 0.0
        %858 = vmatpush.xpose.msra.mxu0 0.0
        %859 = vmatpush.xpose.msra.mxu0 0.0
        %860 = vmatpush.xpose.msra.mxu0 0.0
        %861 = vmatpush.xpose.msra.mxu0 0.0
        %862 = vmatpush.xpose.msra.mxu0 0.0
        %863 = vmatpush.xpose.msra.mxu0 0.0
        %864 = vmatpush.xpose.msra.mxu0 0.0
        %865 = vmatpush.xpose.msra.mxu0 0.0
        %866 = vmatpush.xpose.msra.mxu0 %v652
        %867 = vmatpush.xpose.msra.mxu0 %v649
        %868 = vmatmul.f32.gmra.mxu0 %v655
        %v869 = vpop.f32.mrf.mxu0
        %v870 = vadd.f32 %v678, %v869
        %871 = vmatmul.f32.gmra.mxu0 %v658
        %v872 = vpop.f32.mrf.mxu0
        %v873 = vadd.f32 %v681, %v872
        %874 = vdwg.mxu0
        %v875 = vmul.f32 %v801, 0.5
        %v876 = vmul.f32 %v804, 0.5
        %v877 = vmul.f32 %v824, 0.5
        %v878 = vmul.f32 %v827, 0.5
        %v879 = vmul.f32 %v847, 0.5
        %v880 = vmul.f32 %v850, 0.5
        %v881 = vmul.f32 %v870, 0.5
        %v882 = vmul.f32 %v873, 0.5
        %v883 = vadd.f32 %v775, %v875
        %v884 = vadd.f32 %v776, %v876
        %v885 = vadd.f32 %v777, %v877
        %v886 = vadd.f32 %v778, %v878
        %v887 = vadd.f32 %v779, %v879
        %v888 = vadd.f32 %v780, %v880
        %v889 = vadd.f32 %v781, %v881
        %v890 = vadd.f32 %v782, %v882
        %v891 = vmul.f32 %v883, 0.5
        %v892 = vmul.f32 %v884, 0.5
        %v893 = vmul.f32 %v885, 0.5
        %v894 = vmul.f32 %v886, 0.5
        %v895 = vmul.f32 %v887, 0.5
        %v896 = vmul.f32 %v888, 0.5
        %v897 = vmul.f32 %v889, 0.5
        %v898 = vmul.f32 %v890, 0.5
        %899 = vst.msk [vmem:[%s311] sm:$0xff] %vm382, %v891
        %900 = vst.msk [vmem:[%s311 + $0x8] sm:$0xff] %vm382, %v892
        %901 = vst.msk [vmem:[%s311 + $0x10] sm:$0xff] %vm382, %v893
        %902 = vst.msk [vmem:[%s311 + $0x18] sm:$0xff] %vm382, %v894
        %903 = vst.msk [vmem:[%s311 + $0x20] sm:$0xff] %vm382, %v895
        %904 = vst.msk [vmem:[%s311 + $0x28] sm:$0xff] %vm382, %v896
        %905 = vst.msk [vmem:[%s311 + $0x30] sm:$0xff] %vm382, %v897
        %906 = vst.msk [vmem:[%s311 + $0x38] sm:$0xff] %vm382, %v898
        %s907 = smul.u32 4, %s13
        %p908 = scmp.lt.s32.totalorder %s907, 7
        %s909 = scalar_select %p908, %s907, 7
        %s910 = smul.addr %s909, 2
        %s911 = smul.addr %s910, 8
        %s912 = scalar_lea.vmem %s2, %s911
        // Predicated region
        $region108: #{_lambda_.11} parent=98 // pred_check
          %p913 = pneg %p83
        $region109: #{_lambda_.11} parent=98 // pred_check_branch
          %915 = sbr.rel (%p913) target = $region111
        $region110: #{_lambda_.11} parent=98 // pred_region
          %s916 = smul.u32 4, %s13
        $region111: #{_lambda_.11} parent=98 // pred_fallthru
          _
      $region99: #{_lambda_.11} parent=5 // pred_fallthru
        _
      %p917 = scmp.le.s32.totalorder 2, %s8
      // Predicated region
      $region112: #{_lambda_.11} parent=5 // pred_check
        %p918 = pneg %p917
      $region113: #{_lambda_.11} parent=5 // pred_check_branch
        %920 = sbr.rel (%p918) target = $region115
      $region114: #{_lambda_.11} parent=5 // pred_region
        %s921 = ssub.s32 %s8, 2
        // Predicated region
        $region116: #{_lambda_.11} parent=114 // pred_check
          %p922 = pneg %p89
        $region117: #{_lambda_.11} parent=114 // pred_check_branch
          %924 = sbr.rel (%p922) target = $region119
        $region118: #{_lambda_.11} parent=114 // pred_region
          %s925 = smul.u32 4, %s14
          %p926 = scmp.lt.s32.totalorder %s925, 7
          %s927 = scalar_select %p926, %s925, 7
          %s928 = smul.addr %s927, 2
          %s929 = smul.addr %s928, 8
          %s930 = scalar_lea.vmem %s2, %s929
        $region119: #{_lambda_.11} parent=114 // pred_fallthru
          _
      $region115: #{_lambda_.11} parent=5 // pred_fallthru
        _
    $region6: #{_lambda_.11} parent=1 // loop_footer
      %s12 = sadd.s32 1, %s8
    $region7: #{_lambda_.11} parent=1 // loop_footer_branch
      %7 = sbr.rel target = $region3
    $region8: #{_lambda_.11} parent=1 // loop_exit
      _

// kernel: _lambda_.10
$region0: #{_lambda_.10}
  #allocation0 [shape = 'u32[]', space=smem, size = 0x4, offset = 0x4, fixed_abs, tag = 'smem constant byte address 0x4 - core index']
  #allocation1 [shape = 'u32[72,128]{1,0:T(1,128)}', space=vmem, size = 0x9000, scoped, tag = 'internal scratch']
  %s0 = inlined_call_operand.vmem [shape: f32[8,16,16], index: 0, kind: input, shape index: {}]
  %s1 = inlined_call_operand.vmem [shape: f32[8,1,16], index: 1, kind: input, shape index: {}]
  %s2 = inlined_call_operand.vmem [shape: f32[8,16,16], index: 2, kind: input, shape index: {}]
  %s3 = inlined_call_operand.vmem [shape: f32[8,16,16], index: 3, kind: input, shape index: {}]
  %s4 = inlined_call_operand.vmem [shape: f32[8,16,16], index: 4, kind: output, shape index: {0}]
  %s5 = inlined_call_operand.vmem [shape: f32[2,8,16,16], index: 5, kind: output, shape index: {1}]
  %6 = xla_tuple %s4, %s5
  %s7 = sld [smem:[#allocation0]]
  $region91: #{_lambda_.10} parent=0
    _
  %s9 = ssub.s32 1, %s7
  %s10 = scalar_select 0, %s9, %s7
  $region1: #{_lambda_.10} parent=0
    #allocation2 [shape = 'u8[131072]{0}', space=vmem, size = 0x20000, scoped, tag = 'output window, operand 1']
    loop: start=0, step=1, limit=4
    $region2: #{_lambda_.10} parent=1 // loop_pre_header
      _
    $region3: #{_lambda_.10} parent=1 // loop_header
      %s12 = sphi 0, %s16
      %p13 = scmp.ge.s32.totalorder %s12, 4
      %s22 = sphi 0, %s24
      %s25 = sphi 0, %s22
      %s26 = sphi 0, %s25
      %s42 = sphi 0, %s26
      %s48 = sphi 0, %s50
      %s51 = sphi 0, %s48
      %s52 = sphi 0, %s51
      %s68 = sphi 0, %s52
      %s74 = sphi 0, %s76
      %s77 = sphi 0, %s74
      %s78 = sphi 0, %s77
      %s94 = sphi 0, %s78
      %s100 = sphi 0, %s102
      %s103 = sphi 0, %s100
      %s104 = sphi 0, %s103
      %s120 = sphi 0, %s104
      %s126 = sphi 0, %s128
      %s129 = sphi 0, %s126
      %s130 = sphi 0, %s129
      %s146 = sphi 0, %s130
      %s152 = sphi 0, %s154
      %s155 = sphi 0, %s152
      %s156 = sphi 0, %s155
      %s172 = sphi 0, %s156
    $region4: #{_lambda_.10} parent=1 // loop_header_branch
      %15 = sbr.rel (%p13) target = $region8
    $region5: #{_lambda_.10} parent=1 // loop_body
      %s17 = ssub.s32 %s12, 1
      %s18 = ssub.s32 %s12, 2
      %s19 = sadd.s32 %s12, 1
      %s20 = ssub.s32 %s12, %s19
      %p21 = scmp.eq.s32.totalorder %s20, 0
      %s23 = sadd.s32 %s22, 1
      %s24 = scalar_select %p21, %s22, %s23
      %p27 = pneg %p21
      %p28 = scmp.eq.s32.totalorder %s12, 1
      %p29 = por %p27, %p28
      %p30 = scmp.ne.s32.totalorder %s22, %s25
      %p31 = scmp.eq.s32.totalorder %s12, 0
      %p32 = por %p30, %p31
      %p33 = scmp.ne.s32.totalorder %s22, %s25
      %p34 = scmp.eq.s32.totalorder %s17, 1
      %p35 = por %p33, %p34
      %p36 = scmp.ne.s32.totalorder %s25, %s26
      %p37 = scmp.eq.s32.totalorder %s17, 0
      %p38 = por %p36, %p37
      %p39 = scmp.ne.s32.totalorder %s25, %s26
      %p40 = scmp.eq.s32.totalorder %s18, 1
      %p41 = por %p39, %p40
      %p43 = scmp.ne.s32.totalorder %s26, %s42
      %p44 = scmp.eq.s32.totalorder %s18, 0
      %p45 = por %p43, %p44
      %s46 = ssub.s32 %s12, %s19
      %p47 = scmp.eq.s32.totalorder %s46, 0
      %s49 = sadd.s32 %s48, 1
      %s50 = scalar_select %p47, %s48, %s49
      %p53 = pneg %p47
      %p54 = scmp.eq.s32.totalorder %s12, 1
      %p55 = por %p53, %p54
      %p56 = scmp.ne.s32.totalorder %s48, %s51
      %p57 = scmp.eq.s32.totalorder %s12, 0
      %p58 = por %p56, %p57
      %p59 = scmp.ne.s32.totalorder %s48, %s51
      %p60 = scmp.eq.s32.totalorder %s17, 1
      %p61 = por %p59, %p60
      %p62 = scmp.ne.s32.totalorder %s51, %s52
      %p63 = scmp.eq.s32.totalorder %s17, 0
      %p64 = por %p62, %p63
      %p65 = scmp.ne.s32.totalorder %s51, %s52
      %p66 = scmp.eq.s32.totalorder %s18, 1
      %p67 = por %p65, %p66
      %p69 = scmp.ne.s32.totalorder %s52, %s68
      %p70 = scmp.eq.s32.totalorder %s18, 0
      %p71 = por %p69, %p70
      %s72 = ssub.s32 %s12, %s19
      %p73 = scmp.eq.s32.totalorder %s72, 0
      %s75 = sadd.s32 %s74, 1
      %s76 = scalar_select %p73, %s74, %s75
      %p79 = pneg %p73
      %p80 = scmp.eq.s32.totalorder %s12, 1
      %p81 = por %p79, %p80
      %p82 = scmp.ne.s32.totalorder %s74, %s77
      %p83 = scmp.eq.s32.totalorder %s12, 0
      %p84 = por %p82, %p83
      %p85 = scmp.ne.s32.totalorder %s74, %s77
      %p86 = scmp.eq.s32.totalorder %s17, 1
      %p87 = por %p85, %p86
      %p88 = scmp.ne.s32.totalorder %s77, %s78
      %p89 = scmp.eq.s32.totalorder %s17, 0
      %p90 = por %p88, %p89
      %p91 = scmp.ne.s32.totalorder %s77, %s78
      %p92 = scmp.eq.s32.totalorder %s18, 1
      %p93 = por %p91, %p92
      %p95 = scmp.ne.s32.totalorder %s78, %s94
      %p96 = scmp.eq.s32.totalorder %s18, 0
      %p97 = por %p95, %p96
      %s98 = ssub.s32 %s12, %s19
      %p99 = scmp.eq.s32.totalorder %s98, 0
      %s101 = sadd.s32 %s100, 1
      %s102 = scalar_select %p99, %s100, %s101
      %p105 = pneg %p99
      %p106 = scmp.eq.s32.totalorder %s12, 1
      %p107 = por %p105, %p106
      %p108 = scmp.ne.s32.totalorder %s100, %s103
      %p109 = scmp.eq.s32.totalorder %s12, 0
      %p110 = por %p108, %p109
      %p111 = scmp.ne.s32.totalorder %s100, %s103
      %p112 = scmp.eq.s32.totalorder %s17, 1
      %p113 = por %p111, %p112
      %p114 = scmp.ne.s32.totalorder %s103, %s104
      %p115 = scmp.eq.s32.totalorder %s17, 0
      %p116 = por %p114, %p115
      %p117 = scmp.ne.s32.totalorder %s103, %s104
      %p118 = scmp.eq.s32.totalorder %s18, 1
      %p119 = por %p117, %p118
      %p121 = scmp.ne.s32.totalorder %s104, %s120
      %p122 = scmp.eq.s32.totalorder %s18, 0
      %p123 = por %p121, %p122
      %s124 = ssub.s32 %s12, %s19
      %p125 = scmp.eq.s32.totalorder %s124, 0
      %s127 = sadd.s32 %s126, 1
      %s128 = scalar_select %p125, %s126, %s127
      %p131 = pneg %p125
      %p132 = scmp.eq.s32.totalorder %s12, 1
      %p133 = por %p131, %p132
      %p134 = scmp.ne.s32.totalorder %s126, %s129
      %p135 = scmp.eq.s32.totalorder %s12, 0
      %p136 = por %p134, %p135
      %p137 = scmp.ne.s32.totalorder %s126, %s129
      %p138 = scmp.eq.s32.totalorder %s17, 1
      %p139 = por %p137, %p138
      %p140 = scmp.ne.s32.totalorder %s129, %s130
      %p141 = scmp.eq.s32.totalorder %s17, 0
      %p142 = por %p140, %p141
      %p143 = scmp.ne.s32.totalorder %s129, %s130
      %p144 = scmp.eq.s32.totalorder %s18, 1
      %p145 = por %p143, %p144
      %p147 = scmp.ne.s32.totalorder %s130, %s146
      %p148 = scmp.eq.s32.totalorder %s18, 0
      %p149 = por %p147, %p148
      %s150 = ssub.s32 %s12, %s19
      %p151 = scmp.eq.s32.totalorder %s150, 0
      %s153 = sadd.s32 %s152, 1
      %s154 = scalar_select %p151, %s152, %s153
      %p157 = pneg %p151
      %p158 = scmp.eq.s32.totalorder %s12, 1
      %p159 = por %p157, %p158
      %p160 = scmp.ne.s32.totalorder %s152, %s155
      %p161 = scmp.eq.s32.totalorder %s12, 0
      %p162 = por %p160, %p161
      %p163 = scmp.ne.s32.totalorder %s152, %s155
      %p164 = scmp.eq.s32.totalorder %s17, 1
      %p165 = por %p163, %p164
      %p166 = scmp.ne.s32.totalorder %s155, %s156
      %p167 = scmp.eq.s32.totalorder %s17, 0
      %p168 = por %p166, %p167
      %p169 = scmp.ne.s32.totalorder %s155, %s156
      %p170 = scmp.eq.s32.totalorder %s18, 1
      %p171 = por %p169, %p170
      %p173 = scmp.ne.s32.totalorder %s156, %s172
      %p174 = scmp.eq.s32.totalorder %s18, 0
      %p175 = por %p173, %p174
      %p176 = scmp.le.s32.totalorder 1, %s12
      %p177 = scmp.lt.s32.totalorder %s12, 3
      %p178 = pnand %p176, %p177
      %p179 = pneg %p178
      // Predicated region
      $region9: #{_lambda_.10} parent=5 // pred_check
        _
      $region10: #{_lambda_.10} parent=5 // pred_check_branch
        %181 = sbr.rel (%p178) target = $region12
      $region11: #{_lambda_.10} parent=5 // pred_region
        %s182 = ssub.s32 %s12, 1
      $region12: #{_lambda_.10} parent=5 // pred_fallthru
        _
      %p183 = scmp.lt.s32.totalorder %s12, 2
      // Predicated region
      $region13: #{_lambda_.10} parent=5 // pred_check
        %p184 = pneg %p183
      $region14: #{_lambda_.10} parent=5 // pred_check_branch
        %186 = sbr.rel (%p184) target = $region16
      $region15: #{_lambda_.10} parent=5 // pred_region
        // Predicated region
        $region17: #{_lambda_.10} parent=15 // pred_check
          %p187 = pneg %p32
        $region18: #{_lambda_.10} parent=15 // pred_check_branch
          %189 = sbr.rel (%p187) target = $region20
        $region19: #{_lambda_.10} parent=15 // pred_region
          %s190 = smul.u32 4, %s12
          %p191 = scmp.lt.s32.totalorder %s190, 7
          %s192 = scalar_select %p191, %s190, 7
          %s193 = smul.addr %s192, 2
          %s194 = smul.addr %s193, 8
          %s195 = scalar_lea.vmem %s0, %s194
          %s196 = smul.u32 4, %s12
        $region20: #{_lambda_.10} parent=15 // pred_fallthru
          _
        // Predicated region
        $region21: #{_lambda_.10} parent=15 // pred_check
          %p197 = pneg %p58
        $region22: #{_lambda_.10} parent=15 // pred_check_branch
          %199 = sbr.rel (%p197) target = $region24
        $region23: #{_lambda_.10} parent=15 // pred_region
          %s200 = smul.u32 4, %s12
          %p201 = scmp.lt.s32.totalorder %s200, 7
          %s202 = scalar_select %p201, %s200, 7
          %s203 = scalar_lea.vmem %s1, %s202
          %s204 = smul.u32 4, %s12
        $region24: #{_lambda_.10} parent=15 // pred_fallthru
          _
        // Predicated region
        $region25: #{_lambda_.10} parent=15 // pred_check
          %p205 = pneg %p84
        $region26: #{_lambda_.10} parent=15 // pred_check_branch
          %207 = sbr.rel (%p205) target = $region28
        $region27: #{_lambda_.10} parent=15 // pred_region
          %s208 = smul.u32 4, %s12
          %p209 = scmp.lt.s32.totalorder %s208, 7
          %s210 = scalar_select %p209, %s208, 7
          %s211 = smul.addr %s210, 2
          %s212 = smul.addr %s211, 8
          %s213 = scalar_lea.vmem %s2, %s212
          %s214 = smul.u32 4, %s12
        $region28: #{_lambda_.10} parent=15 // pred_fallthru
          _
        // Predicated region
        $region29: #{_lambda_.10} parent=15 // pred_check
          %p215 = pneg %p110
        $region30: #{_lambda_.10} parent=15 // pred_check_branch
          %217 = sbr.rel (%p215) target = $region32
        $region31: #{_lambda_.10} parent=15 // pred_region
          %s218 = smul.u32 4, %s12
          %p219 = scmp.lt.s32.totalorder %s218, 7
          %s220 = scalar_select %p219, %s218, 7
          %s221 = smul.addr %s220, 2
          %s222 = smul.addr %s221, 8
          %s223 = scalar_lea.vmem %s3, %s222
          %s224 = smul.u32 4, %s12
        $region32: #{_lambda_.10} parent=15 // pred_fallthru
          _
      $region16: #{_lambda_.10} parent=5 // pred_fallthru
        _
      %p225 = scmp.le.s32.totalorder 1, %s12
      %p226 = scmp.lt.s32.totalorder %s12, 3
      %p227 = pnand %p225, %p226
      %p228 = pneg %p227
      // Predicated region
      $region33: #{_lambda_.10} parent=5 // pred_check
        _
      $region34: #{_lambda_.10} parent=5 // pred_check_branch
        %230 = sbr.rel (%p227) target = $region36
      $region35: #{_lambda_.10} parent=5 // pred_region
        %s231 = ssub.s32 %s12, 1
        %s232 = smul.u32 4, %s17
        %p233 = scmp.lt.s32.totalorder %s232, 7
        %s234 = scalar_select %p233, %s232, 7
        %s235 = smul.addr %s234, 2
        %s236 = smul.addr %s235, 8
        %s237 = scalar_lea.vmem %s0, %s236
        %p238 = pneg %p38
        %p239 = pneg %p35
        %s240 = smul.u32 4, %s17
        %p241 = scmp.lt.s32.totalorder %s240, 7
        %s242 = scalar_select %p241, %s240, 7
        %s243 = scalar_lea.vmem %s1, %s242
        %p244 = pneg %p64
        %p245 = pneg %p61
        %s246 = smul.u32 4, %s17
        %p247 = scmp.lt.s32.totalorder %s246, 7
        %s248 = scalar_select %p247, %s246, 7
        %s249 = smul.addr %s248, 2
        %s250 = smul.addr %s249, 8
        %s251 = scalar_lea.vmem %s2, %s250
        %p252 = pneg %p90
        %p253 = pneg %p87
        %s254 = smul.u32 4, %s17
        %p255 = scmp.lt.s32.totalorder %s254, 7
        %s256 = scalar_select %p255, %s254, 7
        %s257 = smul.addr %s256, 2
        %s258 = smul.addr %s257, 8
        %s259 = scalar_lea.vmem %s3, %s258
        %p260 = pneg %p116
        %p261 = pneg %p113
        %p262 = pneg %p142
        %p263 = pneg %p139
        %s264 = smul.u32 4, %s17
        %p265 = scmp.lt.s32.totalorder %s264, 7
        %s266 = scalar_select %p265, %s264, 7
        %s267 = smul.addr %s266, 2
        %s268 = smul.addr %s267, 8
        %s269 = scalar_lea.vmem %s4, %s268
        %p270 = pneg %p168
        %p271 = pneg %p165
        %s272 = sand.u32 %s155, 1
        %s273 = sand.u32 %s155, 1
        %s274 = smul.addr %s273, 128
        %s275 = scalar_lea.vmem [#allocation2], %s274
        %s276 = smul.u32 4, %s17
        %p277 = scmp.lt.s32.totalorder %s276, 7
        %s278 = scalar_select %p277, %s276, 7
        %s279 = smul.addr %s278, 2
        %s280 = smul.addr %s279, 8
        %s281 = scalar_lea.vmem %s0, %s280
        %s282 = smul.u32 4, %s17
        %s283 = smul.u32 4, %s17
        %p284 = scmp.lt.s32.totalorder %s283, 7
        %s285 = scalar_select %p284, %s283, 7
        %s286 = scalar_lea.vmem %s1, %s285
        %s287 = smul.u32 4, %s17
        %s288 = smul.u32 4, %s17
        %p289 = scmp.lt.s32.totalorder %s288, 7
        %s290 = scalar_select %p289, %s288, 7
        %s291 = smul.addr %s290, 2
        %s292 = smul.addr %s291, 8
        %s293 = scalar_lea.vmem %s2, %s292
        %s294 = smul.u32 4, %s17
        %s295 = smul.u32 4, %s17
        %p296 = scmp.lt.s32.totalorder %s295, 7
        %s297 = scalar_select %p296, %s295, 7
        %s298 = smul.addr %s297, 2
        %s299 = smul.addr %s298, 8
        %s300 = scalar_lea.vmem %s3, %s299
        %s301 = smul.u32 4, %s17
        %s302 = smul.u32 4, %s17
        %p303 = scmp.lt.s32.totalorder %s302, 7
        %s304 = scalar_select %p303, %s302, 7
        %s305 = smul.addr %s304, 2
        %s306 = smul.addr %s305, 8
        %s307 = scalar_lea.vmem %s4, %s306
        %s308 = smul.u32 4, %s17
        %s309 = smul.u32 4, %s17
        %v310 = vld [vmem:[%s281] sm:$0xff]
        %v311 = vld [vmem:[%s281 + $0x8] sm:$0xff]
        %v312 = vld [vmem:[%s281 + $0x10] sm:$0xff]
        %v313 = vld [vmem:[%s281 + $0x18] sm:$0xff]
        %v314 = vld [vmem:[%s281 + $0x20] sm:$0xff]
        %v315 = vld [vmem:[%s281 + $0x28] sm:$0xff]
        %v316 = vld [vmem:[%s281 + $0x30] sm:$0xff]
        %v317 = vld [vmem:[%s281 + $0x38] sm:$0xff]
        %v318 = vld [vmem:[%s286] sm:$0x1]
        %v319 = vld [vmem:[%s286 + $0x1] sm:$0x1]
        %v320 = vld [vmem:[%s286 + $0x2] sm:$0x1]
        %v321 = vld [vmem:[%s286 + $0x3] sm:$0x1]
        %v322 = vmax.f32 %v318, 1e-08
        %v323 = vmax.f32 %v319, 1e-08
        %v324 = vmax.f32 %v320, 1e-08
        %v325 = vmax.f32 %v321, 1e-08
        %v326 = vrsqrt.pop %v322
        %v327 = vmul.f32 %v326, %v322
        %v328 = vmul.f32 %v327, %v326
        %v329 = vmul.f32 0.5, %v328
        %v330 = vsub.f32 1.5, %v329
        %v331 = vmul.f32 %v326, %v330
        %v332 = vmul.f32 %v322, %v331
        %vm333 = vcmp.eq.f32.partialorder %v322, inf
        %v334 = vsel %vm333, %v322, %v332
        %vm335 = vcmp.eq.f32.partialorder %v322, 0.0
        %v336 = vand.u32 %v322, 2147483648
        %v337 = vsel %vm335, %v336, %v334
        %v338 = vrsqrt.pop %v323
        %v339 = vmul.f32 %v338, %v323
        %v340 = vmul.f32 %v339, %v338
        %v341 = vmul.f32 0.5, %v340
        %v342 = vsub.f32 1.5, %v341
        %v343 = vmul.f32 %v338, %v342
        %v344 = vmul.f32 %v323, %v343
        %vm345 = vcmp.eq.f32.partialorder %v323, inf
        %v346 = vsel %vm345, %v323, %v344
        %vm347 = vcmp.eq.f32.partialorder %v323, 0.0
        %v348 = vand.u32 %v323, 2147483648
        %v349 = vsel %vm347, %v348, %v346
        %v350 = vrsqrt.pop %v324
        %v351 = vmul.f32 %v350, %v324
        %v352 = vmul.f32 %v351, %v350
        %v353 = vmul.f32 0.5, %v352
        %v354 = vsub.f32 1.5, %v353
        %v355 = vmul.f32 %v350, %v354
        %v356 = vmul.f32 %v324, %v355
        %vm357 = vcmp.eq.f32.partialorder %v324, inf
        %v358 = vsel %vm357, %v324, %v356
        %vm359 = vcmp.eq.f32.partialorder %v324, 0.0
        %v360 = vand.u32 %v324, 2147483648
        %v361 = vsel %vm359, %v360, %v358
        %v362 = vrsqrt.pop %v325
        %v363 = vmul.f32 %v362, %v325
        %v364 = vmul.f32 %v363, %v362
        %v365 = vmul.f32 0.5, %v364
        %v366 = vsub.f32 1.5, %v365
        %v367 = vmul.f32 %v362, %v366
        %v368 = vmul.f32 %v325, %v367
        %vm369 = vcmp.eq.f32.partialorder %v325, inf
        %v370 = vsel %vm369, %v325, %v368
        %vm371 = vcmp.eq.f32.partialorder %v325, 0.0
        %v372 = vand.u32 %v325, 2147483648
        %v373 = vsel %vm371, %v372, %v370
        %v374 = vrcp.pop %v337
        %v375 = vmul.f32 %v337, %v374
        %v376 = vsub.f32 1.0, %v375
        %v377 = vmul.f32 %v374, %v376
        %v378 = vadd.f32 %v374, %v377
        %vm379 = vweird.f32 %v337
        %vm380 = vweird.f32 %v374
        %vm381 = vmor %vm379, %vm380
        %v382 = vsel %vm381, %v374, %v378
        %v383 = vand.u32 2147483647, %v337
        %vm384 = vcmp.eq.f32.partialorder %v383, 8.507059e+37
        %v385 = vand.u32 %v337, 2147483648
        %v386 = vor.u32 1.1754944e-38, %v385
        %v387 = vsel %vm384, %v386, %v382
        %v388 = vmul.f32 1.0, %v387
        %v389 = vrcp.pop %v349
        %v390 = vmul.f32 %v349, %v389
        %v391 = vsub.f32 1.0, %v390
        %v392 = vmul.f32 %v389, %v391
        %v393 = vadd.f32 %v389, %v392
        %vm394 = vweird.f32 %v349
        %vm395 = vweird.f32 %v389
        %vm396 = vmor %vm394, %vm395
        %v397 = vsel %vm396, %v389, %v393
        %v398 = vand.u32 2147483647, %v349
        %vm399 = vcmp.eq.f32.partialorder %v398, 8.507059e+37
        %v400 = vand.u32 %v349, 2147483648
        %v401 = vor.u32 1.1754944e-38, %v400
        %v402 = vsel %vm399, %v401, %v397
        %v403 = vmul.f32 1.0, %v402
        %v404 = vrcp.pop %v361
        %v405 = vmul.f32 %v361, %v404
        %v406 = vsub.f32 1.0, %v405
        %v407 = vmul.f32 %v404, %v406
        %v408 = vadd.f32 %v404, %v407
        %vm409 = vweird.f32 %v361
        %vm410 = vweird.f32 %v404
        %vm411 = vmor %vm409, %vm410
        %v412 = vsel %vm411, %v404, %v408
        %v413 = vand.u32 2147483647, %v361
        %vm414 = vcmp.eq.f32.partialorder %v413, 8.507059e+37
        %v415 = vand.u32 %v361, 2147483648
        %v416 = vor.u32 1.1754944e-38, %v415
        %v417 = vsel %vm414, %v416, %v412
        %v418 = vmul.f32 1.0, %v417
        %v419 = vrcp.pop %v373
        %v420 = vmul.f32 %v373, %v419
        %v421 = vsub.f32 1.0, %v420
        %v422 = vmul.f32 %v419, %v421
        %v423 = vadd.f32 %v419, %v422
        %vm424 = vweird.f32 %v373
        %vm425 = vweird.f32 %v419
        %vm426 = vmor %vm424, %vm425
        %v427 = vsel %vm426, %v419, %v423
        %v428 = vand.u32 2147483647, %v373
        %vm429 = vcmp.eq.f32.partialorder %v428, 8.507059e+37
        %v430 = vand.u32 %v373, 2147483648
        %v431 = vor.u32 1.1754944e-38, %v430
        %v432 = vsel %vm429, %v431, %v427
        %v433 = vmul.f32 1.0, %v432
        %v438 = vperm.slane %v337, 0
        %v439 = vperm.slane %v349, 0
        %v440 = vperm.slane %v361, 0
        %v441 = vperm.slane %v373, 0
        %v446 = vmul.f32 %v310, %v438
        %v447 = vmul.f32 %v311, %v438
        %v448 = vmul.f32 %v312, %v439
        %v449 = vmul.f32 %v313, %v439
        %v450 = vmul.f32 %v314, %v440
        %v451 = vmul.f32 %v315, %v440
        %v452 = vmul.f32 %v316, %v441
        %v453 = vmul.f32 %v317, %v441
        %vm454 = vcmask 130048
        %v456 = vsel %vm454, %v446, 0
        %v459 = vsel %vm454, %v447, 0
        %v462 = vsel %vm454, %v310, 0
        %v465 = vsel %vm454, %v311, 0
        %467 = vmatpush.xpose.msra.mxu0 0.0
        %468 = vmatpush.xpose.msra.mxu0 0.0
        %469 = vmatpush.xpose.msra.mxu0 0.0
        %470 = vmatpush.xpose.msra.mxu0 0.0
        %471 = vmatpush.xpose.msra.mxu0 0.0
        %472 = vmatpush.xpose.msra.mxu0 0.0
        %473 = vmatpush.xpose.msra.mxu0 0.0
        %474 = vmatpush.xpose.msra.mxu0 0.0
        %475 = vmatpush.xpose.msra.mxu0 0.0
        %476 = vmatpush.xpose.msra.mxu0 0.0
        %477 = vmatpush.xpose.msra.mxu0 0.0
        %478 = vmatpush.xpose.msra.mxu0 0.0
        %479 = vmatpush.xpose.msra.mxu0 0.0
        %480 = vmatpush.xpose.msra.mxu0 0.0
        %481 = vmatpush.xpose.msra.mxu0 %v465
        %482 = vmatpush.xpose.msra.mxu0 %v462
        %483 = vmatmul.f32.gmra.mxu0 %v456
        %v484 = vpop.f32.mrf.mxu0
        %v485 = vadd.f32 0.0, %v484
        %486 = vmatmul.f32.gmra.mxu0 %v459
        %v487 = vpop.f32.mrf.mxu0
        %v488 = vadd.f32 0.0, %v487
        %489 = vdwg.mxu0
        %v491 = vsel %vm454, %v448, 0
        %v494 = vsel %vm454, %v449, 0
        %v497 = vsel %vm454, %v312, 0
        %v500 = vsel %vm454, %v313, 0
        %502 = vmatpush.xpose.msra.mxu0 0.0
        %503 = vmatpush.xpose.msra.mxu0 0.0
        %504 = vmatpush.xpose.msra.mxu0 0.0
        %505 = vmatpush.xpose.msra.mxu0 0.0
        %506 = vmatpush.xpose.msra.mxu0 0.0
        %507 = vmatpush.xpose.msra.mxu0 0.0
        %508 = vmatpush.xpose.msra.mxu0 0.0
        %509 = vmatpush.xpose.msra.mxu0 0.0
        %510 = vmatpush.xpose.msra.mxu0 0.0
        %511 = vmatpush.xpose.msra.mxu0 0.0
        %512 = vmatpush.xpose.msra.mxu0 0.0
        %513 = vmatpush.xpose.msra.mxu0 0.0
        %514 = vmatpush.xpose.msra.mxu0 0.0
        %515 = vmatpush.xpose.msra.mxu0 0.0
        %516 = vmatpush.xpose.msra.mxu0 %v500
        %517 = vmatpush.xpose.msra.mxu0 %v497
        %518 = vmatmul.f32.gmra.mxu0 %v491
        %v519 = vpop.f32.mrf.mxu0
        %v520 = vadd.f32 0.0, %v519
        %521 = vmatmul.f32.gmra.mxu0 %v494
        %v522 = vpop.f32.mrf.mxu0
        %v523 = vadd.f32 0.0, %v522
        %524 = vdwg.mxu0
        %v526 = vsel %vm454, %v450, 0
        %v529 = vsel %vm454, %v451, 0
        %v532 = vsel %vm454, %v314, 0
        %v535 = vsel %vm454, %v315, 0
        %537 = vmatpush.xpose.msra.mxu0 0.0
        %538 = vmatpush.xpose.msra.mxu0 0.0
        %539 = vmatpush.xpose.msra.mxu0 0.0
        %540 = vmatpush.xpose.msra.mxu0 0.0
        %541 = vmatpush.xpose.msra.mxu0 0.0
        %542 = vmatpush.xpose.msra.mxu0 0.0
        %543 = vmatpush.xpose.msra.mxu0 0.0
        %544 = vmatpush.xpose.msra.mxu0 0.0
        %545 = vmatpush.xpose.msra.mxu0 0.0
        %546 = vmatpush.xpose.msra.mxu0 0.0
        %547 = vmatpush.xpose.msra.mxu0 0.0
        %548 = vmatpush.xpose.msra.mxu0 0.0
        %549 = vmatpush.xpose.msra.mxu0 0.0
        %550 = vmatpush.xpose.msra.mxu0 0.0
        %551 = vmatpush.xpose.msra.mxu0 %v535
        %552 = vmatpush.xpose.msra.mxu0 %v532
        %553 = vmatmul.f32.gmra.mxu0 %v526
        %v554 = vpop.f32.mrf.mxu0
        %v555 = vadd.f32 0.0, %v554
        %556 = vmatmul.f32.gmra.mxu0 %v529
        %v557 = vpop.f32.mrf.mxu0
        %v558 = vadd.f32 0.0, %v557
        %559 = vdwg.mxu0
        %v561 = vsel %vm454, %v452, 0
        %v564 = vsel %vm454, %v453, 0
        %v567 = vsel %vm454, %v316, 0
        %v570 = vsel %vm454, %v317, 0
        %572 = vmatpush.xpose.msra.mxu0 0.0
        %573 = vmatpush.xpose.msra.mxu0 0.0
        %574 = vmatpush.xpose.msra.mxu0 0.0
        %575 = vmatpush.xpose.msra.mxu0 0.0
        %576 = vmatpush.xpose.msra.mxu0 0.0
        %577 = vmatpush.xpose.msra.mxu0 0.0
        %578 = vmatpush.xpose.msra.mxu0 0.0
        %579 = vmatpush.xpose.msra.mxu0 0.0
        %580 = vmatpush.xpose.msra.mxu0 0.0
        %581 = vmatpush.xpose.msra.mxu0 0.0
        %582 = vmatpush.xpose.msra.mxu0 0.0
        %583 = vmatpush.xpose.msra.mxu0 0.0
        %584 = vmatpush.xpose.msra.mxu0 0.0
        %585 = vmatpush.xpose.msra.mxu0 0.0
        %586 = vmatpush.xpose.msra.mxu0 %v570
        %587 = vmatpush.xpose.msra.mxu0 %v567
        %588 = vmatmul.f32.gmra.mxu0 %v561
        %v589 = vpop.f32.mrf.mxu0
        %v590 = vadd.f32 0.0, %v589
        %591 = vmatmul.f32.gmra.mxu0 %v564
        %v592 = vpop.f32.mrf.mxu0
        %v593 = vadd.f32 0.0, %v592
        %594 = vdwg.mxu0
        %v599 = vperm.slane %v388, 0
        %v600 = vperm.slane %v403, 0
        %v601 = vperm.slane %v418, 0
        %v602 = vperm.slane %v433, 0
        %v607 = vmul.f32 %v310, %v599
        %v608 = vmul.f32 %v311, %v599
        %v609 = vmul.f32 %v312, %v600
        %v610 = vmul.f32 %v313, %v600
        %v611 = vmul.f32 %v314, %v601
        %v612 = vmul.f32 %v315, %v601
        %v613 = vmul.f32 %v316, %v602
        %v614 = vmul.f32 %v317, %v602
        %v616 = vsel %vm454, %v607, 0
        %v619 = vsel %vm454, %v608, 0
        %621 = vmatpush.xpose.msra.mxu0 0.0
        %622 = vmatpush.xpose.msra.mxu0 0.0
        %623 = vmatpush.xpose.msra.mxu0 0.0
        %624 = vmatpush.xpose.msra.mxu0 0.0
        %625 = vmatpush.xpose.msra.mxu0 0.0
        %626 = vmatpush.xpose.msra.mxu0 0.0
        %627 = vmatpush.xpose.msra.mxu0 0.0
        %628 = vmatpush.xpose.msra.mxu0 0.0
        %629 = vmatpush.xpose.msra.mxu0 0.0
        %630 = vmatpush.xpose.msra.mxu0 0.0
        %631 = vmatpush.xpose.msra.mxu0 0.0
        %632 = vmatpush.xpose.msra.mxu0 0.0
        %633 = vmatpush.xpose.msra.mxu0 0.0
        %634 = vmatpush.xpose.msra.mxu0 0.0
        %635 = vmatpush.xpose.msra.mxu0 %v465
        %636 = vmatpush.xpose.msra.mxu0 %v462
        %637 = vmatmul.f32.gmra.mxu0 %v616
        %v638 = vpop.f32.mrf.mxu0
        %v639 = vadd.f32 0.0, %v638
        %640 = vmatmul.f32.gmra.mxu0 %v619
        %v641 = vpop.f32.mrf.mxu0
        %v642 = vadd.f32 0.0, %v641
        %643 = vdwg.mxu0
        %v645 = vsel %vm454, %v609, 0
        %v648 = vsel %vm454, %v610, 0
        %650 = vmatpush.xpose.msra.mxu0 0.0
        %651 = vmatpush.xpose.msra.mxu0 0.0
        %652 = vmatpush.xpose.msra.mxu0 0.0
        %653 = vmatpush.xpose.msra.mxu0 0.0
        %654 = vmatpush.xpose.msra.mxu0 0.0
        %655 = vmatpush.xpose.msra.mxu0 0.0
        %656 = vmatpush.xpose.msra.mxu0 0.0
        %657 = vmatpush.xpose.msra.mxu0 0.0
        %658 = vmatpush.xpose.msra.mxu0 0.0
        %659 = vmatpush.xpose.msra.mxu0 0.0
        %660 = vmatpush.xpose.msra.mxu0 0.0
        %661 = vmatpush.xpose.msra.mxu0 0.0
        %662 = vmatpush.xpose.msra.mxu0 0.0
        %663 = vmatpush.xpose.msra.mxu0 0.0
        %664 = vmatpush.xpose.msra.mxu0 %v500
        %665 = vmatpush.xpose.msra.mxu0 %v497
        %666 = vmatmul.f32.gmra.mxu0 %v645
        %v667 = vpop.f32.mrf.mxu0
        %v668 = vadd.f32 0.0, %v667
        %669 = vmatmul.f32.gmra.mxu0 %v648
        %v670 = vpop.f32.mrf.mxu0
        %v671 = vadd.f32 0.0, %v670
        %672 = vdwg.mxu0
        %v674 = vsel %vm454, %v611, 0
        %v677 = vsel %vm454, %v612, 0
        %679 = vmatpush.xpose.msra.mxu0 0.0
        %680 = vmatpush.xpose.msra.mxu0 0.0
        %681 = vmatpush.xpose.msra.mxu0 0.0
        %682 = vmatpush.xpose.msra.mxu0 0.0
        %683 = vmatpush.xpose.msra.mxu0 0.0
        %684 = vmatpush.xpose.msra.mxu0 0.0
        %685 = vmatpush.xpose.msra.mxu0 0.0
        %686 = vmatpush.xpose.msra.mxu0 0.0
        %687 = vmatpush.xpose.msra.mxu0 0.0
        %688 = vmatpush.xpose.msra.mxu0 0.0
        %689 = vmatpush.xpose.msra.mxu0 0.0
        %690 = vmatpush.xpose.msra.mxu0 0.0
        %691 = vmatpush.xpose.msra.mxu0 0.0
        %692 = vmatpush.xpose.msra.mxu0 0.0
        %693 = vmatpush.xpose.msra.mxu0 %v535
        %694 = vmatpush.xpose.msra.mxu0 %v532
        %695 = vmatmul.f32.gmra.mxu0 %v674
        %v696 = vpop.f32.mrf.mxu0
        %v697 = vadd.f32 0.0, %v696
        %698 = vmatmul.f32.gmra.mxu0 %v677
        %v699 = vpop.f32.mrf.mxu0
        %v700 = vadd.f32 0.0, %v699
        %701 = vdwg.mxu0
        %v703 = vsel %vm454, %v613, 0
        %v706 = vsel %vm454, %v614, 0
        %708 = vmatpush.xpose.msra.mxu0 0.0
        %709 = vmatpush.xpose.msra.mxu0 0.0
        %710 = vmatpush.xpose.msra.mxu0 0.0
        %711 = vmatpush.xpose.msra.mxu0 0.0
        %712 = vmatpush.xpose.msra.mxu0 0.0
        %713 = vmatpush.xpose.msra.mxu0 0.0
        %714 = vmatpush.xpose.msra.mxu0 0.0
        %715 = vmatpush.xpose.msra.mxu0 0.0
        %716 = vmatpush.xpose.msra.mxu0 0.0
        %717 = vmatpush.xpose.msra.mxu0 0.0
        %718 = vmatpush.xpose.msra.mxu0 0.0
        %719 = vmatpush.xpose.msra.mxu0 0.0
        %720 = vmatpush.xpose.msra.mxu0 0.0
        %721 = vmatpush.xpose.msra.mxu0 0.0
        %722 = vmatpush.xpose.msra.mxu0 %v570
        %723 = vmatpush.xpose.msra.mxu0 %v567
        %724 = vmatmul.f32.gmra.mxu0 %v703
        %v725 = vpop.f32.mrf.mxu0
        %v726 = vadd.f32 0.0, %v725
        %727 = vmatmul.f32.gmra.mxu0 %v706
        %v728 = vpop.f32.mrf.mxu0
        %v729 = vadd.f32 0.0, %v728
        %730 = vdwg.mxu0
        %731 = vst.msk [vmem:[%s307] sm:$0xff] %vm454, %v485
        %732 = vst.msk [vmem:[%s307 + $0x8] sm:$0xff] %vm454, %v488
        %733 = vst.msk [vmem:[%s307 + $0x10] sm:$0xff] %vm454, %v520
        %734 = vst.msk [vmem:[%s307 + $0x18] sm:$0xff] %vm454, %v523
        %735 = vst.msk [vmem:[%s307 + $0x20] sm:$0xff] %vm454, %v555
        %736 = vst.msk [vmem:[%s307 + $0x28] sm:$0xff] %vm454, %v558
        %737 = vst.msk [vmem:[%s307 + $0x30] sm:$0xff] %vm454, %v590
        %738 = vst.msk [vmem:[%s307 + $0x38] sm:$0xff] %vm454, %v593
        %v739 = vld [vmem:[%s293] sm:$0xff]
        %v740 = vld [vmem:[%s293 + $0x8] sm:$0xff]
        %v741 = vld [vmem:[%s293 + $0x10] sm:$0xff]
        %v742 = vld [vmem:[%s293 + $0x18] sm:$0xff]
        %v743 = vld [vmem:[%s293 + $0x20] sm:$0xff]
        %v744 = vld [vmem:[%s293 + $0x28] sm:$0xff]
        %v745 = vld [vmem:[%s293 + $0x30] sm:$0xff]
        %v746 = vld [vmem:[%s293 + $0x38] sm:$0xff]
        %v748 = vsel %vm454, %v639, 0
        %v751 = vsel %vm454, %v642, 0
        %753 = vmatpush.msra.mxu0 0.0
        %754 = vmatpush.msra.mxu0 0.0
        %755 = vmatpush.msra.mxu0 0.0
        %756 = vmatpush.msra.mxu0 0.0
        %757 = vmatpush.msra.mxu0 0.0
        %758 = vmatpush.msra.mxu0 0.0
        %759 = vmatpush.msra.mxu0 0.0
        %760 = vmatpush.msra.mxu0 0.0
        %761 = vmatpush.msra.mxu0 0.0
        %762 = vmatpush.msra.mxu0 0.0
        %763 = vmatpush.msra.mxu0 0.0
        %764 = vmatpush.msra.mxu0 0.0
        %765 = vmatpush.msra.mxu0 0.0
        %766 = vmatpush.msra.mxu0 0.0
        %767 = vmatpush.msra.mxu0 %v740
        %768 = vmatpush.msra.mxu0 %v739
        %769 = vmatmul.f32.gmra.mxu0 %v748
        %v770 = vpop.f32.mrf.mxu0
        %v771 = vadd.f32 0.0, %v770
        %772 = vmatmul.f32.gmra.mxu0 %v751
        %v773 = vpop.f32.mrf.mxu0
        %v774 = vadd.f32 0.0, %v773
        %775 = vdwg.mxu0
        %v777 = vsel %vm454, %v668, 0
        %v780 = vsel %vm454, %v671, 0
        %782 = vmatpush.msra.mxu0 0.0
        %783 = vmatpush.msra.mxu0 0.0
        %784 = vmatpush.msra.mxu0 0.0
        %785 = vmatpush.msra.mxu0 0.0
        %786 = vmatpush.msra.mxu0 0.0
        %787 = vmatpush.msra.mxu0 0.0
        %788 = vmatpush.msra.mxu0 0.0
        %789 = vmatpush.msra.mxu0 0.0
        %790 = vmatpush.msra.mxu0 0.0
        %791 = vmatpush.msra.mxu0 0.0
        %792 = vmatpush.msra.mxu0 0.0
        %793 = vmatpush.msra.mxu0 0.0
        %794 = vmatpush.msra.mxu0 0.0
        %795 = vmatpush.msra.mxu0 0.0
        %796 = vmatpush.msra.mxu0 %v742
        %797 = vmatpush.msra.mxu0 %v741
        %798 = vmatmul.f32.gmra.mxu0 %v777
        %v799 = vpop.f32.mrf.mxu0
        %v800 = vadd.f32 0.0, %v799
        %801 = vmatmul.f32.gmra.mxu0 %v780
        %v802 = vpop.f32.mrf.mxu0
        %v803 = vadd.f32 0.0, %v802
        %804 = vdwg.mxu0
        %v806 = vsel %vm454, %v697, 0
        %v809 = vsel %vm454, %v700, 0
        %811 = vmatpush.msra.mxu0 0.0
        %812 = vmatpush.msra.mxu0 0.0
        %813 = vmatpush.msra.mxu0 0.0
        %814 = vmatpush.msra.mxu0 0.0
        %815 = vmatpush.msra.mxu0 0.0
        %816 = vmatpush.msra.mxu0 0.0
        %817 = vmatpush.msra.mxu0 0.0
        %818 = vmatpush.msra.mxu0 0.0
        %819 = vmatpush.msra.mxu0 0.0
        %820 = vmatpush.msra.mxu0 0.0
        %821 = vmatpush.msra.mxu0 0.0
        %822 = vmatpush.msra.mxu0 0.0
        %823 = vmatpush.msra.mxu0 0.0
        %824 = vmatpush.msra.mxu0 0.0
        %825 = vmatpush.msra.mxu0 %v744
        %826 = vmatpush.msra.mxu0 %v743
        %827 = vmatmul.f32.gmra.mxu0 %v806
        %v828 = vpop.f32.mrf.mxu0
        %v829 = vadd.f32 0.0, %v828
        %830 = vmatmul.f32.gmra.mxu0 %v809
        %v831 = vpop.f32.mrf.mxu0
        %v832 = vadd.f32 0.0, %v831
        %833 = vdwg.mxu0
        %v835 = vsel %vm454, %v726, 0
        %v838 = vsel %vm454, %v729, 0
        %840 = vmatpush.msra.mxu0 0.0
        %841 = vmatpush.msra.mxu0 0.0
        %842 = vmatpush.msra.mxu0 0.0
        %843 = vmatpush.msra.mxu0 0.0
        %844 = vmatpush.msra.mxu0 0.0
        %845 = vmatpush.msra.mxu0 0.0
        %846 = vmatpush.msra.mxu0 0.0
        %847 = vmatpush.msra.mxu0 0.0
        %848 = vmatpush.msra.mxu0 0.0
        %849 = vmatpush.msra.mxu0 0.0
        %850 = vmatpush.msra.mxu0 0.0
        %851 = vmatpush.msra.mxu0 0.0
        %852 = vmatpush.msra.mxu0 0.0
        %853 = vmatpush.msra.mxu0 0.0
        %854 = vmatpush.msra.mxu0 %v746
        %855 = vmatpush.msra.mxu0 %v745
        %856 = vmatmul.f32.gmra.mxu0 %v835
        %v857 = vpop.f32.mrf.mxu0
        %v858 = vadd.f32 0.0, %v857
        %859 = vmatmul.f32.gmra.mxu0 %v838
        %v860 = vpop.f32.mrf.mxu0
        %v861 = vadd.f32 0.0, %v860
        %862 = vdwg.mxu0
        %v864 = vsel %vm454, %v771, 0
        %v867 = vsel %vm454, %v774, 0
        %869 = vmatpush.xpose.msra.mxu0 0.0
        %870 = vmatpush.xpose.msra.mxu0 0.0
        %871 = vmatpush.xpose.msra.mxu0 0.0
        %872 = vmatpush.xpose.msra.mxu0 0.0
        %873 = vmatpush.xpose.msra.mxu0 0.0
        %874 = vmatpush.xpose.msra.mxu0 0.0
        %875 = vmatpush.xpose.msra.mxu0 0.0
        %876 = vmatpush.xpose.msra.mxu0 0.0
        %877 = vmatpush.xpose.msra.mxu0 0.0
        %878 = vmatpush.xpose.msra.mxu0 0.0
        %879 = vmatpush.xpose.msra.mxu0 0.0
        %880 = vmatpush.xpose.msra.mxu0 0.0
        %881 = vmatpush.xpose.msra.mxu0 0.0
        %882 = vmatpush.xpose.msra.mxu0 0.0
        %883 = vmatpush.xpose.msra.mxu0 %v867
        %884 = vmatpush.xpose.msra.mxu0 %v864
        %885 = vmatmul.f32.gmra.mxu0 %v748
        %v886 = vpop.f32.mrf.mxu0
        %v887 = vadd.f32 0.0, %v886
        %888 = vmatmul.f32.gmra.mxu0 %v751
        %v889 = vpop.f32.mrf.mxu0
        %v890 = vadd.f32 0.0, %v889
        %891 = vdwg.mxu0
        %v893 = vsel %vm454, %v800, 0
        %v896 = vsel %vm454, %v803, 0
        %898 = vmatpush.xpose.msra.mxu0 0.0
        %899 = vmatpush.xpose.msra.mxu0 0.0
        %900 = vmatpush.xpose.msra.mxu0 0.0
        %901 = vmatpush.xpose.msra.mxu0 0.0
        %902 = vmatpush.xpose.msra.mxu0 0.0
        %903 = vmatpush.xpose.msra.mxu0 0.0
        %904 = vmatpush.xpose.msra.mxu0 0.0
        %905 = vmatpush.xpose.msra.mxu0 0.0
        %906 = vmatpush.xpose.msra.mxu0 0.0
        %907 = vmatpush.xpose.msra.mxu0 0.0
        %908 = vmatpush.xpose.msra.mxu0 0.0
        %909 = vmatpush.xpose.msra.mxu0 0.0
        %910 = vmatpush.xpose.msra.mxu0 0.0
        %911 = vmatpush.xpose.msra.mxu0 0.0
        %912 = vmatpush.xpose.msra.mxu0 %v896
        %913 = vmatpush.xpose.msra.mxu0 %v893
        %914 = vmatmul.f32.gmra.mxu0 %v777
        %v915 = vpop.f32.mrf.mxu0
        %v916 = vadd.f32 0.0, %v915
        %917 = vmatmul.f32.gmra.mxu0 %v780
        %v918 = vpop.f32.mrf.mxu0
        %v919 = vadd.f32 0.0, %v918
        %920 = vdwg.mxu0
        %v922 = vsel %vm454, %v829, 0
        %v925 = vsel %vm454, %v832, 0
        %927 = vmatpush.xpose.msra.mxu0 0.0
        %928 = vmatpush.xpose.msra.mxu0 0.0
        %929 = vmatpush.xpose.msra.mxu0 0.0
        %930 = vmatpush.xpose.msra.mxu0 0.0
        %931 = vmatpush.xpose.msra.mxu0 0.0
        %932 = vmatpush.xpose.msra.mxu0 0.0
        %933 = vmatpush.xpose.msra.mxu0 0.0
        %934 = vmatpush.xpose.msra.mxu0 0.0
        %935 = vmatpush.xpose.msra.mxu0 0.0
        %936 = vmatpush.xpose.msra.mxu0 0.0
        %937 = vmatpush.xpose.msra.mxu0 0.0
        %938 = vmatpush.xpose.msra.mxu0 0.0
        %939 = vmatpush.xpose.msra.mxu0 0.0
        %940 = vmatpush.xpose.msra.mxu0 0.0
        %941 = vmatpush.xpose.msra.mxu0 %v925
        %942 = vmatpush.xpose.msra.mxu0 %v922
        %943 = vmatmul.f32.gmra.mxu0 %v806
        %v944 = vpop.f32.mrf.mxu0
        %v945 = vadd.f32 0.0, %v944
        %946 = vmatmul.f32.gmra.mxu0 %v809
        %v947 = vpop.f32.mrf.mxu0
        %v948 = vadd.f32 0.0, %v947
        %949 = vdwg.mxu0
        %v951 = vsel %vm454, %v858, 0
        %v954 = vsel %vm454, %v861, 0
        %956 = vmatpush.xpose.msra.mxu0 0.0
        %957 = vmatpush.xpose.msra.mxu0 0.0
        %958 = vmatpush.xpose.msra.mxu0 0.0
        %959 = vmatpush.xpose.msra.mxu0 0.0
        %960 = vmatpush.xpose.msra.mxu0 0.0
        %961 = vmatpush.xpose.msra.mxu0 0.0
        %962 = vmatpush.xpose.msra.mxu0 0.0
        %963 = vmatpush.xpose.msra.mxu0 0.0
        %964 = vmatpush.xpose.msra.mxu0 0.0
        %965 = vmatpush.xpose.msra.mxu0 0.0
        %966 = vmatpush.xpose.msra.mxu0 0.0
        %967 = vmatpush.xpose.msra.mxu0 0.0
        %968 = vmatpush.xpose.msra.mxu0 0.0
        %969 = vmatpush.xpose.msra.mxu0 0.0
        %970 = vmatpush.xpose.msra.mxu0 %v954
        %971 = vmatpush.xpose.msra.mxu0 %v951
        %972 = vmatmul.f32.gmra.mxu0 %v835
        %v973 = vpop.f32.mrf.mxu0
        %v974 = vadd.f32 0.0, %v973
        %975 = vmatmul.f32.gmra.mxu0 %v838
        %v976 = vpop.f32.mrf.mxu0
        %v977 = vadd.f32 0.0, %v976
        %978 = vdwg.mxu0
        %979 = vmatpush.xpose.msra.mxu0 0.0
        %980 = vmatpush.xpose.msra.mxu0 0.0
        %981 = vmatpush.xpose.msra.mxu0 0.0
        %982 = vmatpush.xpose.msra.mxu0 0.0
        %983 = vmatpush.xpose.msra.mxu0 0.0
        %984 = vmatpush.xpose.msra.mxu0 0.0
        %985 = vmatpush.xpose.msra.mxu0 0.0
        %986 = vmatpush.xpose.msra.mxu0 0.0
        %987 = vmatpush.xpose.msra.mxu0 0.0
        %988 = vmatpush.xpose.msra.mxu0 0.0
        %989 = vmatpush.xpose.msra.mxu0 0.0
        %990 = vmatpush.xpose.msra.mxu0 0.0
        %991 = vmatpush.xpose.msra.mxu0 0.0
        %992 = vmatpush.xpose.msra.mxu0 0.0
        %993 = vmatpush.xpose.msra.mxu0 %v751
        %994 = vmatpush.xpose.msra.mxu0 %v748
        %995 = vmatmul.f32.gmra.mxu0 %v864
        %v996 = vpop.f32.mrf.mxu0
        %v997 = vadd.f32 %v887, %v996
        %998 = vmatmul.f32.gmra.mxu0 %v867
        %v999 = vpop.f32.mrf.mxu0
        %v1000 = vadd.f32 %v890, %v999
        %1001 = vdwg.mxu0
        %1002 = vmatpush.xpose.msra.mxu0 0.0
        %1003 = vmatpush.xpose.msra.mxu0 0.0
        %1004 = vmatpush.xpose.msra.mxu0 0.0
        %1005 = vmatpush.xpose.msra.mxu0 0.0
        %1006 = vmatpush.xpose.msra.mxu0 0.0
        %1007 = vmatpush.xpose.msra.mxu0 0.0
        %1008 = vmatpush.xpose.msra.mxu0 0.0
        %1009 = vmatpush.xpose.msra.mxu0 0.0
        %1010 = vmatpush.xpose.msra.mxu0 0.0
        %1011 = vmatpush.xpose.msra.mxu0 0.0
        %1012 = vmatpush.xpose.msra.mxu0 0.0
        %1013 = vmatpush.xpose.msra.mxu0 0.0
        %1014 = vmatpush.xpose.msra.mxu0 0.0
        %1015 = vmatpush.xpose.msra.mxu0 0.0
        %1016 = vmatpush.xpose.msra.mxu0 %v780
        %1017 = vmatpush.xpose.msra.mxu0 %v777
        %1018 = vmatmul.f32.gmra.mxu0 %v893
        %v1019 = vpop.f32.mrf.mxu0
        %v1020 = vadd.f32 %v916, %v1019
        %1021 = vmatmul.f32.gmra.mxu0 %v896
        %v1022 = vpop.f32.mrf.mxu0
        %v1023 = vadd.f32 %v919, %v1022
        %1024 = vdwg.mxu0
        %1025 = vmatpush.xpose.msra.mxu0 0.0
        %1026 = vmatpush.xpose.msra.mxu0 0.0
        %1027 = vmatpush.xpose.msra.mxu0 0.0
        %1028 = vmatpush.xpose.msra.mxu0 0.0
        %1029 = vmatpush.xpose.msra.mxu0 0.0
        %1030 = vmatpush.xpose.msra.mxu0 0.0
        %1031 = vmatpush.xpose.msra.mxu0 0.0
        %1032 = vmatpush.xpose.msra.mxu0 0.0
        %1033 = vmatpush.xpose.msra.mxu0 0.0
        %1034 = vmatpush.xpose.msra.mxu0 0.0
        %1035 = vmatpush.xpose.msra.mxu0 0.0
        %1036 = vmatpush.xpose.msra.mxu0 0.0
        %1037 = vmatpush.xpose.msra.mxu0 0.0
        %1038 = vmatpush.xpose.msra.mxu0 0.0
        %1039 = vmatpush.xpose.msra.mxu0 %v809
        %1040 = vmatpush.xpose.msra.mxu0 %v806
        %1041 = vmatmul.f32.gmra.mxu0 %v922
        %v1042 = vpop.f32.mrf.mxu0
        %v1043 = vadd.f32 %v945, %v1042
        %1044 = vmatmul.f32.gmra.mxu0 %v925
        %v1045 = vpop.f32.mrf.mxu0
        %v1046 = vadd.f32 %v948, %v1045
        %1047 = vdwg.mxu0
        %1048 = vmatpush.xpose.msra.mxu0 0.0
        %1049 = vmatpush.xpose.msra.mxu0 0.0
        %1050 = vmatpush.xpose.msra.mxu0 0.0
        %1051 = vmatpush.xpose.msra.mxu0 0.0
        %1052 = vmatpush.xpose.msra.mxu0 0.0
        %1053 = vmatpush.xpose.msra.mxu0 0.0
        %1054 = vmatpush.xpose.msra.mxu0 0.0
        %1055 = vmatpush.xpose.msra.mxu0 0.0
        %1056 = vmatpush.xpose.msra.mxu0 0.0
        %1057 = vmatpush.xpose.msra.mxu0 0.0
        %1058 = vmatpush.xpose.msra.mxu0 0.0
        %1059 = vmatpush.xpose.msra.mxu0 0.0
        %1060 = vmatpush.xpose.msra.mxu0 0.0
        %1061 = vmatpush.xpose.msra.mxu0 0.0
        %1062 = vmatpush.xpose.msra.mxu0 %v838
        %1063 = vmatpush.xpose.msra.mxu0 %v835
        %1064 = vmatmul.f32.gmra.mxu0 %v951
        %v1065 = vpop.f32.mrf.mxu0
        %v1066 = vadd.f32 %v974, %v1065
        %1067 = vmatmul.f32.gmra.mxu0 %v954
        %v1068 = vpop.f32.mrf.mxu0
        %v1069 = vadd.f32 %v977, %v1068
        %1070 = vdwg.mxu0
        %v1071 = vmul.f32 %v997, 0.5
        %v1072 = vmul.f32 %v1000, 0.5
        %v1073 = vmul.f32 %v1020, 0.5
        %v1074 = vmul.f32 %v1023, 0.5
        %v1075 = vmul.f32 %v1043, 0.5
        %v1076 = vmul.f32 %v1046, 0.5
        %v1077 = vmul.f32 %v1066, 0.5
        %v1078 = vmul.f32 %v1069, 0.5
        %1079 = vst.msk [vmem:[%s275] sm:$0xff] %vm454, %v1071
        %1080 = vst.msk [vmem:[%s275 + $0x8] sm:$0xff] %vm454, %v1072
        %1081 = vst.msk [vmem:[%s275 + $0x10] sm:$0xff] %vm454, %v1073
        %1082 = vst.msk [vmem:[%s275 + $0x18] sm:$0xff] %vm454, %v1074
        %1083 = vst.msk [vmem:[%s275 + $0x20] sm:$0xff] %vm454, %v1075
        %1084 = vst.msk [vmem:[%s275 + $0x28] sm:$0xff] %vm454, %v1076
        %1085 = vst.msk [vmem:[%s275 + $0x30] sm:$0xff] %vm454, %v1077
        %1086 = vst.msk [vmem:[%s275 + $0x38] sm:$0xff] %vm454, %v1078
        %v1087 = vld [vmem:[%s300] sm:$0xff]
        %v1088 = vld [vmem:[%s300 + $0x8] sm:$0xff]
        %v1089 = vld [vmem:[%s300 + $0x10] sm:$0xff]
        %v1090 = vld [vmem:[%s300 + $0x18] sm:$0xff]
        %v1091 = vld [vmem:[%s300 + $0x20] sm:$0xff]
        %v1092 = vld [vmem:[%s300 + $0x28] sm:$0xff]
        %v1093 = vld [vmem:[%s300 + $0x30] sm:$0xff]
        %v1094 = vld [vmem:[%s300 + $0x38] sm:$0xff]
        %1095 = vmatpush.msra.mxu0 0.0
        %1096 = vmatpush.msra.mxu0 0.0
        %1097 = vmatpush.msra.mxu0 0.0
        %1098 = vmatpush.msra.mxu0 0.0
        %1099 = vmatpush.msra.mxu0 0.0
        %1100 = vmatpush.msra.mxu0 0.0
        %1101 = vmatpush.msra.mxu0 0.0
        %1102 = vmatpush.msra.mxu0 0.0
        %1103 = vmatpush.msra.mxu0 0.0
        %1104 = vmatpush.msra.mxu0 0.0
        %1105 = vmatpush.msra.mxu0 0.0
        %1106 = vmatpush.msra.mxu0 0.0
        %1107 = vmatpush.msra.mxu0 0.0
        %1108 = vmatpush.msra.mxu0 0.0
        %1109 = vmatpush.msra.mxu0 %v1088
        %1110 = vmatpush.msra.mxu0 %v1087
        %1111 = vmatmul.f32.gmra.mxu0 %v748
        %v1112 = vpop.f32.mrf.mxu0
        %v1113 = vadd.f32 0.0, %v1112
        %1114 = vmatmul.f32.gmra.mxu0 %v751
        %v1115 = vpop.f32.mrf.mxu0
        %v1116 = vadd.f32 0.0, %v1115
        %1117 = vdwg.mxu0
        %1118 = vmatpush.msra.mxu0 0.0
        %1119 = vmatpush.msra.mxu0 0.0
        %1120 = vmatpush.msra.mxu0 0.0
        %1121 = vmatpush.msra.mxu0 0.0
        %1122 = vmatpush.msra.mxu0 0.0
        %1123 = vmatpush.msra.mxu0 0.0
        %1124 = vmatpush.msra.mxu0 0.0
        %1125 = vmatpush.msra.mxu0 0.0
        %1126 = vmatpush.msra.mxu0 0.0
        %1127 = vmatpush.msra.mxu0 0.0
        %1128 = vmatpush.msra.mxu0 0.0
        %1129 = vmatpush.msra.mxu0 0.0
        %1130 = vmatpush.msra.mxu0 0.0
        %1131 = vmatpush.msra.mxu0 0.0
        %1132 = vmatpush.msra.mxu0 %v1090
        %1133 = vmatpush.msra.mxu0 %v1089
        %1134 = vmatmul.f32.gmra.mxu0 %v777
        %v1135 = vpop.f32.mrf.mxu0
        %v1136 = vadd.f32 0.0, %v1135
        %1137 = vmatmul.f32.gmra.mxu0 %v780
        %v1138 = vpop.f32.mrf.mxu0
        %v1139 = vadd.f32 0.0, %v1138
        %1140 = vdwg.mxu0
        %1141 = vmatpush.msra.mxu0 0.0
        %1142 = vmatpush.msra.mxu0 0.0
        %1143 = vmatpush.msra.mxu0 0.0
        %1144 = vmatpush.msra.mxu0 0.0
        %1145 = vmatpush.msra.mxu0 0.0
        %1146 = vmatpush.msra.mxu0 0.0
        %1147 = vmatpush.msra.mxu0 0.0
        %1148 = vmatpush.msra.mxu0 0.0
        %1149 = vmatpush.msra.mxu0 0.0
        %1150 = vmatpush.msra.mxu0 0.0
        %1151 = vmatpush.msra.mxu0 0.0
        %1152 = vmatpush.msra.mxu0 0.0
        %1153 = vmatpush.msra.mxu0 0.0
        %1154 = vmatpush.msra.mxu0 0.0
        %1155 = vmatpush.msra.mxu0 %v1092
        %1156 = vmatpush.msra.mxu0 %v1091
        %1157 = vmatmul.f32.gmra.mxu0 %v806
        %v1158 = vpop.f32.mrf.mxu0
        %v1159 = vadd.f32 0.0, %v1158
        %1160 = vmatmul.f32.gmra.mxu0 %v809
        %v1161 = vpop.f32.mrf.mxu0
        %v1162 = vadd.f32 0.0, %v1161
        %1163 = vdwg.mxu0
        %1164 = vmatpush.msra.mxu0 0.0
        %1165 = vmatpush.msra.mxu0 0.0
        %1166 = vmatpush.msra.mxu0 0.0
        %1167 = vmatpush.msra.mxu0 0.0
        %1168 = vmatpush.msra.mxu0 0.0
        %1169 = vmatpush.msra.mxu0 0.0
        %1170 = vmatpush.msra.mxu0 0.0
        %1171 = vmatpush.msra.mxu0 0.0
        %1172 = vmatpush.msra.mxu0 0.0
        %1173 = vmatpush.msra.mxu0 0.0
        %1174 = vmatpush.msra.mxu0 0.0
        %1175 = vmatpush.msra.mxu0 0.0
        %1176 = vmatpush.msra.mxu0 0.0
        %1177 = vmatpush.msra.mxu0 0.0
        %1178 = vmatpush.msra.mxu0 %v1094
        %1179 = vmatpush.msra.mxu0 %v1093
        %1180 = vmatmul.f32.gmra.mxu0 %v835
        %v1181 = vpop.f32.mrf.mxu0
        %v1182 = vadd.f32 0.0, %v1181
        %1183 = vmatmul.f32.gmra.mxu0 %v838
        %v1184 = vpop.f32.mrf.mxu0
        %v1185 = vadd.f32 0.0, %v1184
        %1186 = vdwg.mxu0
        %v1188 = vsel %vm454, %v1113, 0
        %v1191 = vsel %vm454, %v1116, 0
        %1193 = vmatpush.xpose.msra.mxu0 0.0
        %1194 = vmatpush.xpose.msra.mxu0 0.0
        %1195 = vmatpush.xpose.msra.mxu0 0.0
        %1196 = vmatpush.xpose.msra.mxu0 0.0
        %1197 = vmatpush.xpose.msra.mxu0 0.0
        %1198 = vmatpush.xpose.msra.mxu0 0.0
        %1199 = vmatpush.xpose.msra.mxu0 0.0
        %1200 = vmatpush.xpose.msra.mxu0 0.0
        %1201 = vmatpush.xpose.msra.mxu0 0.0
        %1202 = vmatpush.xpose.msra.mxu0 0.0
        %1203 = vmatpush.xpose.msra.mxu0 0.0
        %1204 = vmatpush.xpose.msra.mxu0 0.0
        %1205 = vmatpush.xpose.msra.mxu0 0.0
        %1206 = vmatpush.xpose.msra.mxu0 0.0
        %1207 = vmatpush.xpose.msra.mxu0 %v1191
        %1208 = vmatpush.xpose.msra.mxu0 %v1188
        %1209 = vmatmul.f32.gmra.mxu0 %v748
        %v1210 = vpop.f32.mrf.mxu0
        %v1211 = vadd.f32 0.0, %v1210
        %1212 = vmatmul.f32.gmra.mxu0 %v751
        %v1213 = vpop.f32.mrf.mxu0
        %v1214 = vadd.f32 0.0, %v1213
        %1215 = vdwg.mxu0
        %v1217 = vsel %vm454, %v1136, 0
        %v1220 = vsel %vm454, %v1139, 0
        %1222 = vmatpush.xpose.msra.mxu0 0.0
        %1223 = vmatpush.xpose.msra.mxu0 0.0
        %1224 = vmatpush.xpose.msra.mxu0 0.0
        %1225 = vmatpush.xpose.msra.mxu0 0.0
        %1226 = vmatpush.xpose.msra.mxu0 0.0
        %1227 = vmatpush.xpose.msra.mxu0 0.0
        %1228 = vmatpush.xpose.msra.mxu0 0.0
        %1229 = vmatpush.xpose.msra.mxu0 0.0
        %1230 = vmatpush.xpose.msra.mxu0 0.0
        %1231 = vmatpush.xpose.msra.mxu0 0.0
        %1232 = vmatpush.xpose.msra.mxu0 0.0
        %1233 = vmatpush.xpose.msra.mxu0 0.0
        %1234 = vmatpush.xpose.msra.mxu0 0.0
        %1235 = vmatpush.xpose.msra.mxu0 0.0
        %1236 = vmatpush.xpose.msra.mxu0 %v1220
        %1237 = vmatpush.xpose.msra.mxu0 %v1217
        %1238 = vmatmul.f32.gmra.mxu0 %v777
        %v1239 = vpop.f32.mrf.mxu0
        %v1240 = vadd.f32 0.0, %v1239
        %1241 = vmatmul.f32.gmra.mxu0 %v780
        %v1242 = vpop.f32.mrf.mxu0
        %v1243 = vadd.f32 0.0, %v1242
        %1244 = vdwg.mxu0
        %v1246 = vsel %vm454, %v1159, 0
        %v1249 = vsel %vm454, %v1162, 0
        %1251 = vmatpush.xpose.msra.mxu0 0.0
        %1252 = vmatpush.xpose.msra.mxu0 0.0
        %1253 = vmatpush.xpose.msra.mxu0 0.0
        %1254 = vmatpush.xpose.msra.mxu0 0.0
        %1255 = vmatpush.xpose.msra.mxu0 0.0
        %1256 = vmatpush.xpose.msra.mxu0 0.0
        %1257 = vmatpush.xpose.msra.mxu0 0.0
        %1258 = vmatpush.xpose.msra.mxu0 0.0
        %1259 = vmatpush.xpose.msra.mxu0 0.0
        %1260 = vmatpush.xpose.msra.mxu0 0.0
        %1261 = vmatpush.xpose.msra.mxu0 0.0
        %1262 = vmatpush.xpose.msra.mxu0 0.0
        %1263 = vmatpush.xpose.msra.mxu0 0.0
        %1264 = vmatpush.xpose.msra.mxu0 0.0
        %1265 = vmatpush.xpose.msra.mxu0 %v1249
        %1266 = vmatpush.xpose.msra.mxu0 %v1246
        %1267 = vmatmul.f32.gmra.mxu0 %v806
        %v1268 = vpop.f32.mrf.mxu0
        %v1269 = vadd.f32 0.0, %v1268
        %1270 = vmatmul.f32.gmra.mxu0 %v809
        %v1271 = vpop.f32.mrf.mxu0
        %v1272 = vadd.f32 0.0, %v1271
        %1273 = vdwg.mxu0
        %v1275 = vsel %vm454, %v1182, 0
        %v1278 = vsel %vm454, %v1185, 0
        %1280 = vmatpush.xpose.msra.mxu0 0.0
        %1281 = vmatpush.xpose.msra.mxu0 0.0
        %1282 = vmatpush.xpose.msra.mxu0 0.0
        %1283 = vmatpush.xpose.msra.mxu0 0.0
        %1284 = vmatpush.xpose.msra.mxu0 0.0
        %1285 = vmatpush.xpose.msra.mxu0 0.0
        %1286 = vmatpush.xpose.msra.mxu0 0.0
        %1287 = vmatpush.xpose.msra.mxu0 0.0
        %1288 = vmatpush.xpose.msra.mxu0 0.0
        %1289 = vmatpush.xpose.msra.mxu0 0.0
        %1290 = vmatpush.xpose.msra.mxu0 0.0
        %1291 = vmatpush.xpose.msra.mxu0 0.0
        %1292 = vmatpush.xpose.msra.mxu0 0.0
        %1293 = vmatpush.xpose.msra.mxu0 0.0
        %1294 = vmatpush.xpose.msra.mxu0 %v1278
        %1295 = vmatpush.xpose.msra.mxu0 %v1275
        %1296 = vmatmul.f32.gmra.mxu0 %v835
        %v1297 = vpop.f32.mrf.mxu0
        %v1298 = vadd.f32 0.0, %v1297
        %1299 = vmatmul.f32.gmra.mxu0 %v838
        %v1300 = vpop.f32.mrf.mxu0
        %v1301 = vadd.f32 0.0, %v1300
        %1302 = vdwg.mxu0
        %1303 = vmatpush.xpose.msra.mxu0 0.0
        %1304 = vmatpush.xpose.msra.mxu0 0.0
        %1305 = vmatpush.xpose.msra.mxu0 0.0
        %1306 = vmatpush.xpose.msra.mxu0 0.0
        %1307 = vmatpush.xpose.msra.mxu0 0.0
        %1308 = vmatpush.xpose.msra.mxu0 0.0
        %1309 = vmatpush.xpose.msra.mxu0 0.0
        %1310 = vmatpush.xpose.msra.mxu0 0.0
        %1311 = vmatpush.xpose.msra.mxu0 0.0
        %1312 = vmatpush.xpose.msra.mxu0 0.0
        %1313 = vmatpush.xpose.msra.mxu0 0.0
        %1314 = vmatpush.xpose.msra.mxu0 0.0
        %1315 = vmatpush.xpose.msra.mxu0 0.0
        %1316 = vmatpush.xpose.msra.mxu0 0.0
        %1317 = vmatpush.xpose.msra.mxu0 %v751
        %1318 = vmatpush.xpose.msra.mxu0 %v748
        %1319 = vmatmul.f32.gmra.mxu0 %v1188
        %v1320 = vpop.f32.mrf.mxu0
        %v1321 = vadd.f32 %v1211, %v1320
        %1322 = vmatmul.f32.gmra.mxu0 %v1191
        %v1323 = vpop.f32.mrf.mxu0
        %v1324 = vadd.f32 %v1214, %v1323
        %1325 = vdwg.mxu0
        %1326 = vmatpush.xpose.msra.mxu0 0.0
        %1327 = vmatpush.xpose.msra.mxu0 0.0
        %1328 = vmatpush.xpose.msra.mxu0 0.0
        %1329 = vmatpush.xpose.msra.mxu0 0.0
        %1330 = vmatpush.xpose.msra.mxu0 0.0
        %1331 = vmatpush.xpose.msra.mxu0 0.0
        %1332 = vmatpush.xpose.msra.mxu0 0.0
        %1333 = vmatpush.xpose.msra.mxu0 0.0
        %1334 = vmatpush.xpose.msra.mxu0 0.0
        %1335 = vmatpush.xpose.msra.mxu0 0.0
        %1336 = vmatpush.xpose.msra.mxu0 0.0
        %1337 = vmatpush.xpose.msra.mxu0 0.0
        %1338 = vmatpush.xpose.msra.mxu0 0.0
        %1339 = vmatpush.xpose.msra.mxu0 0.0
        %1340 = vmatpush.xpose.msra.mxu0 %v780
        %1341 = vmatpush.xpose.msra.mxu0 %v777
        %1342 = vmatmul.f32.gmra.mxu0 %v1217
        %v1343 = vpop.f32.mrf.mxu0
        %v1344 = vadd.f32 %v1240, %v1343
        %1345 = vmatmul.f32.gmra.mxu0 %v1220
        %v1346 = vpop.f32.mrf.mxu0
        %v1347 = vadd.f32 %v1243, %v1346
        %1348 = vdwg.mxu0
        %1349 = vmatpush.xpose.msra.mxu0 0.0
        %1350 = vmatpush.xpose.msra.mxu0 0.0
        %1351 = vmatpush.xpose.msra.mxu0 0.0
        %1352 = vmatpush.xpose.msra.mxu0 0.0
        %1353 = vmatpush.xpose.msra.mxu0 0.0
        %1354 = vmatpush.xpose.msra.mxu0 0.0
        %1355 = vmatpush.xpose.msra.mxu0 0.0
        %1356 = vmatpush.xpose.msra.mxu0 0.0
        %1357 = vmatpush.xpose.msra.mxu0 0.0
        %1358 = vmatpush.xpose.msra.mxu0 0.0
        %1359 = vmatpush.xpose.msra.mxu0 0.0
        %1360 = vmatpush.xpose.msra.mxu0 0.0
        %1361 = vmatpush.xpose.msra.mxu0 0.0
        %1362 = vmatpush.xpose.msra.mxu0 0.0
        %1363 = vmatpush.xpose.msra.mxu0 %v809
        %1364 = vmatpush.xpose.msra.mxu0 %v806
        %1365 = vmatmul.f32.gmra.mxu0 %v1246
        %v1366 = vpop.f32.mrf.mxu0
        %v1367 = vadd.f32 %v1269, %v1366
        %1368 = vmatmul.f32.gmra.mxu0 %v1249
        %v1369 = vpop.f32.mrf.mxu0
        %v1370 = vadd.f32 %v1272, %v1369
        %1371 = vdwg.mxu0
        %1372 = vmatpush.xpose.msra.mxu0 0.0
        %1373 = vmatpush.xpose.msra.mxu0 0.0
        %1374 = vmatpush.xpose.msra.mxu0 0.0
        %1375 = vmatpush.xpose.msra.mxu0 0.0
        %1376 = vmatpush.xpose.msra.mxu0 0.0
        %1377 = vmatpush.xpose.msra.mxu0 0.0
        %1378 = vmatpush.xpose.msra.mxu0 0.0
        %1379 = vmatpush.xpose.msra.mxu0 0.0
        %1380 = vmatpush.xpose.msra.mxu0 0.0
        %1381 = vmatpush.xpose.msra.mxu0 0.0
        %1382 = vmatpush.xpose.msra.mxu0 0.0
        %1383 = vmatpush.xpose.msra.mxu0 0.0
        %1384 = vmatpush.xpose.msra.mxu0 0.0
        %1385 = vmatpush.xpose.msra.mxu0 0.0
        %1386 = vmatpush.xpose.msra.mxu0 %v838
        %1387 = vmatpush.xpose.msra.mxu0 %v835
        %1388 = vmatmul.f32.gmra.mxu0 %v1275
        %v1389 = vpop.f32.mrf.mxu0
        %v1390 = vadd.f32 %v1298, %v1389
        %1391 = vmatmul.f32.gmra.mxu0 %v1278
        %v1392 = vpop.f32.mrf.mxu0
        %v1393 = vadd.f32 %v1301, %v1392
        %1394 = vdwg.mxu0
        %v1395 = vmul.f32 %v1321, 0.5
        %v1396 = vmul.f32 %v1324, 0.5
        %v1397 = vmul.f32 %v1344, 0.5
        %v1398 = vmul.f32 %v1347, 0.5
        %v1399 = vmul.f32 %v1367, 0.5
        %v1400 = vmul.f32 %v1370, 0.5
        %v1401 = vmul.f32 %v1390, 0.5
        %v1402 = vmul.f32 %v1393, 0.5
        %s1403 = scalar_lea.vmem %s275, 64 [#allocation2]
        %1404 = vst.msk [vmem:[%s1403] sm:$0xff] %vm454, %v1395
        %1405 = vst.msk [vmem:[%s1403 + $0x8] sm:$0xff] %vm454, %v1396
        %1406 = vst.msk [vmem:[%s1403 + $0x10] sm:$0xff] %vm454, %v1397
        %1407 = vst.msk [vmem:[%s1403 + $0x18] sm:$0xff] %vm454, %v1398
        %1408 = vst.msk [vmem:[%s1403 + $0x20] sm:$0xff] %vm454, %v1399
        %1409 = vst.msk [vmem:[%s1403 + $0x28] sm:$0xff] %vm454, %v1400
        %1410 = vst.msk [vmem:[%s1403 + $0x30] sm:$0xff] %vm454, %v1401
        %1411 = vst.msk [vmem:[%s1403 + $0x38] sm:$0xff] %vm454, %v1402
        %s1412 = smul.u32 4, %s17
        %p1413 = scmp.lt.s32.totalorder %s1412, 7
        %s1414 = scalar_select %p1413, %s1412, 7
        %s1415 = smul.addr %s1414, 2
        %s1416 = smul.addr %s1415, 8
        %s1417 = scalar_lea.vmem %s4, %s1416
        %s1418 = sand.u32 %s155, 1
        %s1419 = sand.u32 %s155, 1
        %s1420 = smul.addr %s1419, 128
        %s1421 = scalar_lea.vmem [#allocation2], %s1420
        // Predicated region
        $region37: #{_lambda_.10} parent=35 // pred_check
          %p1422 = pneg %p139
        $region38: #{_lambda_.10} parent=35 // pred_check_branch
          %1424 = sbr.rel (%p1422) target = $region40
        $region39: #{_lambda_.10} parent=35 // pred_region
          %s1425 = smul.u32 4, %s17
        $region40: #{_lambda_.10} parent=35 // pred_fallthru
          _
        // Predicated region
        $region41: #{_lambda_.10} parent=35 // pred_check
          %p1426 = pneg %p165
        $region42: #{_lambda_.10} parent=35 // pred_check_branch
          %1428 = sbr.rel (%p1426) target = $region44
        $region43: #{_lambda_.10} parent=35 // pred_region
          %s1429 = smul.u32 4, %s17
          %s1430 = smul.addr %s1429, 2
          %s1431 = smul.addr %s1430, 8
          %s1432 = scalar_lea.vmem %s5, %s1431
          // Predicated region
          $region45: #{_lambda_.10} parent=43 // pred_check
            _
          $region46: #{_lambda_.10} parent=43 // pred_check_branch
            %1434 = sbr.rel (0) target = $region48
          $region47: #{_lambda_.10} parent=43 // pred_region
            // Predicated region
            $region49: #{_lambda_.10} parent=47 // pred_check
              _
            $region50: #{_lambda_.10} parent=47 // pred_check_branch
              %1436 = sbr.rel (0) target = $region52
            $region51: #{_lambda_.10} parent=47 // pred_region
              // Predicated region
              $region64: #{_lambda_.10} parent=51 // pred_check
                _
              $region65: #{_lambda_.10} parent=51 // pred_check_branch
                %1482 = sbr.rel (0) target = $region67
              $region66: #{_lambda_.10} parent=51 // pred_region
                loop: start=0, step=1, limit=1
                $region68: #{_lambda_.10} parent=66 // loop_pre_header
                  _
                $region69: #{_lambda_.10} parent=66 // loop_header
                  %s1484 = sphi 0, %s1488
                  %p1485 = scmp.ge.s32.totalorder %s1484, 1
                  %s1489 = sphi %s1421, %s1421
                  %s1490 = sphi %s1432, %s1432
                $region70: #{_lambda_.10} parent=66 // loop_header_branch
                  %1487 = sbr.rel (%p1485) target = $region74
                $region71: #{_lambda_.10} parent=66 // loop_body
                  %v1491 = vld [vmem:[%s1489] sm:$0xff]
                  %1492 = vst [vmem:[%s1490] sm:$0xff] %v1491
                  %v1493 = vld [vmem:[%s1489 + $0x8] sm:$0xff]
                  %1494 = vst [vmem:[%s1490 + $0x8] sm:$0xff] %v1493
                  %v1495 = vld [vmem:[%s1489 + $0x10] sm:$0xff]
                  %1496 = vst [vmem:[%s1490 + $0x10] sm:$0xff] %v1495
                  %v1497 = vld [vmem:[%s1489 + $0x18] sm:$0xff]
                  %1498 = vst [vmem:[%s1490 + $0x18] sm:$0xff] %v1497
                  %v1499 = vld [vmem:[%s1489 + $0x20] sm:$0xff]
                  %1500 = vst [vmem:[%s1490 + $0x20] sm:$0xff] %v1499
                  %v1501 = vld [vmem:[%s1489 + $0x28] sm:$0xff]
                  %1502 = vst [vmem:[%s1490 + $0x28] sm:$0xff] %v1501
                  %v1503 = vld [vmem:[%s1489 + $0x30] sm:$0xff]
                  %1504 = vst [vmem:[%s1490 + $0x30] sm:$0xff] %v1503
                  %v1505 = vld [vmem:[%s1489 + $0x38] sm:$0xff]
                  %1506 = vst [vmem:[%s1490 + $0x38] sm:$0xff] %v1505
                  %v1507 = vld [vmem:[%s1489 + $0x40] sm:$0xff]
                  %1508 = vst [vmem:[%s1490 + $0x80] sm:$0xff] %v1507
                  %v1509 = vld [vmem:[%s1489 + $0x48] sm:$0xff]
                  %1510 = vst [vmem:[%s1490 + $0x88] sm:$0xff] %v1509
                  %v1511 = vld [vmem:[%s1489 + $0x50] sm:$0xff]
                  %1512 = vst [vmem:[%s1490 + $0x90] sm:$0xff] %v1511
                  %v1513 = vld [vmem:[%s1489 + $0x58] sm:$0xff]
                  %1514 = vst [vmem:[%s1490 + $0x98] sm:$0xff] %v1513
                  %v1515 = vld [vmem:[%s1489 + $0x60] sm:$0xff]
                  %1516 = vst [vmem:[%s1490 + $0xa0] sm:$0xff] %v1515
                  %v1517 = vld [vmem:[%s1489 + $0x68] sm:$0xff]
                  %1518 = vst [vmem:[%s1490 + $0xa8] sm:$0xff] %v1517
                  %v1519 = vld [vmem:[%s1489 + $0x70] sm:$0xff]
                  %1520 = vst [vmem:[%s1490 + $0xb0] sm:$0xff] %v1519
                  %v1521 = vld [vmem:[%s1489 + $0x78] sm:$0xff]
                  %1522 = vst [vmem:[%s1490 + $0xb8] sm:$0xff] %v1521
                $region72: #{_lambda_.10} parent=66 // loop_footer
                  %s1488 = sadd.s32 1, %s1484
                $region73: #{_lambda_.10} parent=66 // loop_footer_branch
                  %1483 = sbr.rel target = $region69
                $region74: #{_lambda_.10} parent=66 // loop_exit
                  _
              $region67: #{_lambda_.10} parent=51 // pred_fallthru
                _
              // Predicated region
              $region75: #{_lambda_.10} parent=51 // pred_check
                _
              $region76: #{_lambda_.10} parent=51 // pred_check_branch
                %1524 = sbr.rel target = $region78
              $region77: #{_lambda_.10} parent=51 // pred_region
                _
              $region78: #{_lambda_.10} parent=51 // pred_fallthru
                _
            $region52: #{_lambda_.10} parent=47 // pred_fallthru
              _
            // Predicated region
            $region53: #{_lambda_.10} parent=47 // pred_check
              _
            $region54: #{_lambda_.10} parent=47 // pred_check_branch
              %1438 = sbr.rel target = $region56
            $region55: #{_lambda_.10} parent=47 // pred_region
              %s1440 = ssub.s32 256, 1
              loop: start=0, step=1, limit=1
              $region57: #{_lambda_.10} parent=55 // loop_pre_header
                _
              $region58: #{_lambda_.10} parent=55 // loop_header
                %s1442 = sphi 0, %s1446
                %p1443 = scmp.ge.s32.totalorder %s1442, 1
                %s1447 = sphi %s1421, %s1421
                %s1448 = sphi %s1432, %s1432
              $region59: #{_lambda_.10} parent=55 // loop_header_branch
                %1445 = sbr.rel (%p1443) target = $region63
              $region60: #{_lambda_.10} parent=55 // loop_body
                %v1449 = vld [vmem:[%s1447] sm:%s1440]
                %1450 = vst [vmem:[%s1448] sm:%s1440] %v1449
                %v1451 = vld [vmem:[%s1447 + $0x8] sm:%s1440]
                %1452 = vst [vmem:[%s1448 + $0x8] sm:%s1440] %v1451
                %v1453 = vld [vmem:[%s1447 + $0x10] sm:%s1440]
                %1454 = vst [vmem:[%s1448 + $0x10] sm:%s1440] %v1453
                %v1455 = vld [vmem:[%s1447 + $0x18] sm:%s1440]
                %1456 = vst [vmem:[%s1448 + $0x18] sm:%s1440] %v1455
                %v1457 = vld [vmem:[%s1447 + $0x20] sm:%s1440]
                %1458 = vst [vmem:[%s1448 + $0x20] sm:%s1440] %v1457
                %v1459 = vld [vmem:[%s1447 + $0x28] sm:%s1440]
                %1460 = vst [vmem:[%s1448 + $0x28] sm:%s1440] %v1459
                %v1461 = vld [vmem:[%s1447 + $0x30] sm:%s1440]
                %1462 = vst [vmem:[%s1448 + $0x30] sm:%s1440] %v1461
                %v1463 = vld [vmem:[%s1447 + $0x38] sm:%s1440]
                %1464 = vst [vmem:[%s1448 + $0x38] sm:%s1440] %v1463
                %v1465 = vld [vmem:[%s1447 + $0x40] sm:%s1440]
                %1466 = vst [vmem:[%s1448 + $0x80] sm:%s1440] %v1465
                %v1467 = vld [vmem:[%s1447 + $0x48] sm:%s1440]
                %1468 = vst [vmem:[%s1448 + $0x88] sm:%s1440] %v1467
                %v1469 = vld [vmem:[%s1447 + $0x50] sm:%s1440]
                %1470 = vst [vmem:[%s1448 + $0x90] sm:%s1440] %v1469
                %v1471 = vld [vmem:[%s1447 + $0x58] sm:%s1440]
                %1472 = vst [vmem:[%s1448 + $0x98] sm:%s1440] %v1471
                %v1473 = vld [vmem:[%s1447 + $0x60] sm:%s1440]
                %1474 = vst [vmem:[%s1448 + $0xa0] sm:%s1440] %v1473
                %v1475 = vld [vmem:[%s1447 + $0x68] sm:%s1440]
                %1476 = vst [vmem:[%s1448 + $0xa8] sm:%s1440] %v1475
                %v1477 = vld [vmem:[%s1447 + $0x70] sm:%s1440]
                %1478 = vst [vmem:[%s1448 + $0xb0] sm:%s1440] %v1477
                %v1479 = vld [vmem:[%s1447 + $0x78] sm:%s1440]
                %1480 = vst [vmem:[%s1448 + $0xb8] sm:%s1440] %v1479
              $region61: #{_lambda_.10} parent=55 // loop_footer
                %s1446 = sadd.s32 1, %s1442
              $region62: #{_lambda_.10} parent=55 // loop_footer_branch
                %1441 = sbr.rel target = $region58
              $region63: #{_lambda_.10} parent=55 // loop_exit
                _
            $region56: #{_lambda_.10} parent=47 // pred_fallthru
              _
          $region48: #{_lambda_.10} parent=43 // pred_fallthru
            _
          %1525 = vnop
        $region44: #{_lambda_.10} parent=35 // pred_fallthru
          _
      $region36: #{_lambda_.10} parent=5 // pred_fallthru
        _
      %p1526 = scmp.le.s32.totalorder 2, %s12
      // Predicated region
      $region79: #{_lambda_.10} parent=5 // pred_check
        %p1527 = pneg %p1526
      $region80: #{_lambda_.10} parent=5 // pred_check_branch
        %1529 = sbr.rel (%p1527) target = $region82
      $region81: #{_lambda_.10} parent=5 // pred_region
        %s1530 = ssub.s32 %s12, 2
        // Predicated region
        $region83: #{_lambda_.10} parent=81 // pred_check
          %p1531 = pneg %p145
        $region84: #{_lambda_.10} parent=81 // pred_check_branch
          %1533 = sbr.rel (%p1531) target = $region86
        $region85: #{_lambda_.10} parent=81 // pred_region
          %s1534 = smul.u32 4, %s18
          %p1535 = scmp.lt.s32.totalorder %s1534, 7
          %s1536 = scalar_select %p1535, %s1534, 7
          %s1537 = smul.addr %s1536, 2
          %s1538 = smul.addr %s1537, 8
          %s1539 = scalar_lea.vmem %s4, %s1538
        $region86: #{_lambda_.10} parent=81 // pred_fallthru
          _
        // Predicated region
        $region87: #{_lambda_.10} parent=81 // pred_check
          %p1540 = pneg %p171
        $region88: #{_lambda_.10} parent=81 // pred_check_branch
          %1542 = sbr.rel (%p1540) target = $region90
        $region89: #{_lambda_.10} parent=81 // pred_region
          %s1543 = sand.u32 %s156, 1
          %s1544 = sand.u32 %s156, 1
          %s1545 = smul.addr %s1544, 128
          %s1546 = scalar_lea.vmem [#allocation2], %s1545
        $region90: #{_lambda_.10} parent=81 // pred_fallthru
          _
      $region82: #{_lambda_.10} parent=5 // pred_fallthru
        _
    $region6: #{_lambda_.10} parent=1 // loop_footer
      %s16 = sadd.s32 1, %s12
    $region7: #{_lambda_.10} parent=1 // loop_footer_branch
      %11 = sbr.rel target = $region3
    $region8: #{_lambda_.10} parent=1 // loop_exit
      _

// kernel: _lambda_.9
$region0: #{_lambda_.9}
  #allocation0 [shape = 'u32[]', space=smem, size = 0x4, offset = 0x4, fixed_abs, tag = 'smem constant byte address 0x4 - core index']
  #allocation1 [shape = 'u32[72,128]{1,0:T(1,128)}', space=vmem, size = 0x9000, scoped, tag = 'internal scratch']
  %s0 = inlined_call_operand.vmem [shape: f32[2,4,16,16], index: 0, kind: input, shape index: {}]
  %s1 = inlined_call_operand.vmem [shape: f32[2,4,1,16], index: 1, kind: input, shape index: {}]
  %s2 = inlined_call_operand.vmem [shape: f32[4,4,16,16], index: 2, kind: input, shape index: {}]
  %s3 = inlined_call_operand.vmem [shape: f32[2,4,16,16], index: 3, kind: output, shape index: {}]
  %s4 = sld [smem:[#allocation0]]
  $region45: #{_lambda_.9} parent=0
    _
  %s6 = ssub.s32 1, %s4
  %s7 = scalar_select 0, %s6, %s4
  loop: start=0, step=1, limit=4
  $region2: #{_lambda_.9} parent=0 // loop_pre_header
    _
  $region3: #{_lambda_.9} parent=0 // loop_header
    %s9 = sphi 0, %s13
    %p10 = scmp.ge.s32.totalorder %s9, 4
    %s19 = sphi 0, %s21
    %s22 = sphi 0, %s19
    %s23 = sphi 0, %s22
    %s39 = sphi 0, %s23
    %s45 = sphi 0, %s47
    %s48 = sphi 0, %s45
    %s49 = sphi 0, %s48
    %s65 = sphi 0, %s49
    %s69 = sphi 0, %s69
    %s71 = sphi 0, %s69
    %s72 = sphi 0, %s71
    %s86 = sphi 0, %s72
    %s92 = sphi 0, %s94
    %s95 = sphi 0, %s92
    %s96 = sphi 0, %s95
    %s112 = sphi 0, %s96
  $region4: #{_lambda_.9} parent=0 // loop_header_branch
    %12 = sbr.rel (%p10) target = $region8
  $region5: #{_lambda_.9} parent=0 // loop_body
    %s14 = ssub.s32 %s9, 1
    %s15 = ssub.s32 %s9, 2
    %s16 = sadd.s32 %s9, 1
    %s17 = ssub.s32 %s9, %s16
    %p18 = scmp.eq.s32.totalorder %s17, 0
    %s20 = sadd.s32 %s19, 1
    %s21 = scalar_select %p18, %s19, %s20
    %p24 = pneg %p18
    %p25 = scmp.eq.s32.totalorder %s9, 1
    %p26 = por %p24, %p25
    %p27 = scmp.ne.s32.totalorder %s19, %s22
    %p28 = scmp.eq.s32.totalorder %s9, 0
    %p29 = por %p27, %p28
    %p30 = scmp.ne.s32.totalorder %s19, %s22
    %p31 = scmp.eq.s32.totalorder %s14, 1
    %p32 = por %p30, %p31
    %p33 = scmp.ne.s32.totalorder %s22, %s23
    %p34 = scmp.eq.s32.totalorder %s14, 0
    %p35 = por %p33, %p34
    %p36 = scmp.ne.s32.totalorder %s22, %s23
    %p37 = scmp.eq.s32.totalorder %s15, 1
    %p38 = por %p36, %p37
    %p40 = scmp.ne.s32.totalorder %s23, %s39
    %p41 = scmp.eq.s32.totalorder %s15, 0
    %p42 = por %p40, %p41
    %s43 = ssub.s32 %s9, %s16
    %p44 = scmp.eq.s32.totalorder %s43, 0
    %s46 = sadd.s32 %s45, 1
    %s47 = scalar_select %p44, %s45, %s46
    %p50 = pneg %p44
    %p51 = scmp.eq.s32.totalorder %s9, 1
    %p52 = por %p50, %p51
    %p53 = scmp.ne.s32.totalorder %s45, %s48
    %p54 = scmp.eq.s32.totalorder %s9, 0
    %p55 = por %p53, %p54
    %p56 = scmp.ne.s32.totalorder %s45, %s48
    %p57 = scmp.eq.s32.totalorder %s14, 1
    %p58 = por %p56, %p57
    %p59 = scmp.ne.s32.totalorder %s48, %s49
    %p60 = scmp.eq.s32.totalorder %s14, 0
    %p61 = por %p59, %p60
    %p62 = scmp.ne.s32.totalorder %s48, %s49
    %p63 = scmp.eq.s32.totalorder %s15, 1
    %p64 = por %p62, %p63
    %p66 = scmp.ne.s32.totalorder %s49, %s65
    %p67 = scmp.eq.s32.totalorder %s15, 0
    %p68 = por %p66, %p67
    %s70 = sadd.s32 %s69, 1
    %p73 = scmp.eq.s32.totalorder %s9, 1
    %p74 = scmp.ne.s32.totalorder %s69, %s71
    %p75 = scmp.eq.s32.totalorder %s9, 0
    %p76 = por %p74, %p75
    %p77 = scmp.ne.s32.totalorder %s69, %s71
    %p78 = scmp.eq.s32.totalorder %s14, 1
    %p79 = por %p77, %p78
    %p80 = scmp.ne.s32.totalorder %s71, %s72
    %p81 = scmp.eq.s32.totalorder %s14, 0
    %p82 = por %p80, %p81
    %p83 = scmp.ne.s32.totalorder %s71, %s72
    %p84 = scmp.eq.s32.totalorder %s15, 1
    %p85 = por %p83, %p84
    %p87 = scmp.ne.s32.totalorder %s72, %s86
    %p88 = scmp.eq.s32.totalorder %s15, 0
    %p89 = por %p87, %p88
    %s90 = ssub.s32 %s9, %s16
    %p91 = scmp.eq.s32.totalorder %s90, 0
    %s93 = sadd.s32 %s92, 1
    %s94 = scalar_select %p91, %s92, %s93
    %p97 = pneg %p91
    %p98 = scmp.eq.s32.totalorder %s9, 1
    %p99 = por %p97, %p98
    %p100 = scmp.ne.s32.totalorder %s92, %s95
    %p101 = scmp.eq.s32.totalorder %s9, 0
    %p102 = por %p100, %p101
    %p103 = scmp.ne.s32.totalorder %s92, %s95
    %p104 = scmp.eq.s32.totalorder %s14, 1
    %p105 = por %p103, %p104
    %p106 = scmp.ne.s32.totalorder %s95, %s96
    %p107 = scmp.eq.s32.totalorder %s14, 0
    %p108 = por %p106, %p107
    %p109 = scmp.ne.s32.totalorder %s95, %s96
    %p110 = scmp.eq.s32.totalorder %s15, 1
    %p111 = por %p109, %p110
    %p113 = scmp.ne.s32.totalorder %s96, %s112
    %p114 = scmp.eq.s32.totalorder %s15, 0
    %p115 = por %p113, %p114
    %p116 = scmp.le.s32.totalorder 1, %s9
    %p117 = scmp.lt.s32.totalorder %s9, 3
    %p118 = pnand %p116, %p117
    %p119 = pneg %p118
    // Predicated region
    $region9: #{_lambda_.9} parent=5 // pred_check
      _
    $region10: #{_lambda_.9} parent=5 // pred_check_branch
      %121 = sbr.rel (%p118) target = $region12
    $region11: #{_lambda_.9} parent=5 // pred_region
      %s122 = ssub.s32 %s9, 1
      // Predicated region
      $region13: #{_lambda_.9} parent=11 // pred_check
        %p123 = pneg %p82
      $region14: #{_lambda_.9} parent=11 // pred_check_branch
        %125 = sbr.rel (%p123) target = $region16
      $region15: #{_lambda_.9} parent=11 // pred_region
        _
      $region16: #{_lambda_.9} parent=11 // pred_fallthru
        _
    $region12: #{_lambda_.9} parent=5 // pred_fallthru
      _
    %p126 = scmp.lt.s32.totalorder %s9, 2
    // Predicated region
    $region17: #{_lambda_.9} parent=5 // pred_check
      %p127 = pneg %p126
    $region18: #{_lambda_.9} parent=5 // pred_check_branch
      %129 = sbr.rel (%p127) target = $region20
    $region19: #{_lambda_.9} parent=5 // pred_region
      // Predicated region
      $region21: #{_lambda_.9} parent=19 // pred_check
        %p130 = pneg %p29
      $region22: #{_lambda_.9} parent=19 // pred_check_branch
        %132 = sbr.rel (%p130) target = $region24
      $region23: #{_lambda_.9} parent=19 // pred_region
        %p133 = scmp.lt.s32.totalorder %s9, 1
        %s134 = scalar_select %p133, %s9, 1
        %s135 = smul.addr %s134, 8
        %s136 = smul.addr %s135, 8
        %s137 = scalar_lea.vmem %s0, %s136
      $region24: #{_lambda_.9} parent=19 // pred_fallthru
        _
      // Predicated region
      $region25: #{_lambda_.9} parent=19 // pred_check
        %p138 = pneg %p55
      $region26: #{_lambda_.9} parent=19 // pred_check_branch
        %140 = sbr.rel (%p138) target = $region28
      $region27: #{_lambda_.9} parent=19 // pred_region
        %p141 = scmp.lt.s32.totalorder %s9, 1
        %s142 = scalar_select %p141, %s9, 1
        %s143 = smul.addr %s142, 4
        %s144 = scalar_lea.vmem %s1, %s143
      $region28: #{_lambda_.9} parent=19 // pred_fallthru
        _
    $region20: #{_lambda_.9} parent=5 // pred_fallthru
      _
    %p145 = scmp.le.s32.totalorder 1, %s9
    %p146 = scmp.lt.s32.totalorder %s9, 3
    %p147 = pnand %p145, %p146
    %p148 = pneg %p147
    // Predicated region
    $region29: #{_lambda_.9} parent=5 // pred_check
      _
    $region30: #{_lambda_.9} parent=5 // pred_check_branch
      %150 = sbr.rel (%p147) target = $region32
    $region31: #{_lambda_.9} parent=5 // pred_region
      %s151 = ssub.s32 %s9, 1
      %p152 = scmp.lt.s32.totalorder %s14, 1
      %s153 = scalar_select %p152, %s14, 1
      %s154 = smul.addr %s153, 8
      %s155 = smul.addr %s154, 8
      %s156 = scalar_lea.vmem %s0, %s155
      %p157 = pneg %p35
      %p158 = pneg %p32
      %p159 = scmp.lt.s32.totalorder %s14, 1
      %s160 = scalar_select %p159, %s14, 1
      %s161 = smul.addr %s160, 4
      %s162 = scalar_lea.vmem %s1, %s161
      %p163 = pneg %p61
      %p164 = pneg %p58
      %p165 = pneg %p82
      %p166 = pneg %p79
      %p167 = pneg %p108
      %p168 = pneg %p105
      %p169 = scmp.lt.s32.totalorder %s14, 1
      %s170 = scalar_select %p169, %s14, 1
      %s171 = smul.addr %s170, 8
      %s172 = smul.addr %s171, 8
      %s173 = scalar_lea.vmem %s3, %s172
      %p174 = scmp.lt.s32.totalorder %s14, 1
      %s175 = scalar_select %p174, %s14, 1
      %s176 = smul.addr %s175, 8
      %s177 = smul.addr %s176, 8
      %s178 = scalar_lea.vmem %s0, %s177
      %p179 = scmp.lt.s32.totalorder %s14, 1
      %s180 = scalar_select %p179, %s14, 1
      %s181 = smul.addr %s180, 4
      %s182 = scalar_lea.vmem %s1, %s181
      %p183 = scmp.lt.s32.totalorder %s14, 1
      %s184 = scalar_select %p183, %s14, 1
      %s185 = smul.addr %s184, 8
      %s186 = smul.addr %s185, 8
      %s187 = scalar_lea.vmem %s3, %s186
      %v188 = vld [vmem:[%s178] sm:$0xff]
      %v189 = vld [vmem:[%s178 + $0x8] sm:$0xff]
      %v190 = vld [vmem:[%s178 + $0x10] sm:$0xff]
      %v191 = vld [vmem:[%s178 + $0x18] sm:$0xff]
      %v192 = vld [vmem:[%s178 + $0x20] sm:$0xff]
      %v193 = vld [vmem:[%s178 + $0x28] sm:$0xff]
      %v194 = vld [vmem:[%s178 + $0x30] sm:$0xff]
      %v195 = vld [vmem:[%s178 + $0x38] sm:$0xff]
      %v196 = vld [vmem:[%s182] sm:$0x1]
      %v197 = vld [vmem:[%s182 + $0x1] sm:$0x1]
      %v198 = vld [vmem:[%s182 + $0x2] sm:$0x1]
      %v199 = vld [vmem:[%s182 + $0x3] sm:$0x1]
      %v200 = vmax.f32 %v196, 0.0001
      %v201 = vmax.f32 %v197, 0.0001
      %v202 = vmax.f32 %v198, 0.0001
      %v203 = vmax.f32 %v199, 0.0001
      %v204 = vld [vmem:[%s2] sm:$0xff]
      %v205 = vld [vmem:[%s2 + $0x8] sm:$0xff]
      %v206 = vld [vmem:[%s2 + $0x10] sm:$0xff]
      %v207 = vld [vmem:[%s2 + $0x18] sm:$0xff]
      %v208 = vld [vmem:[%s2 + $0x20] sm:$0xff]
      %v209 = vld [vmem:[%s2 + $0x28] sm:$0xff]
      %v210 = vld [vmem:[%s2 + $0x30] sm:$0xff]
      %v211 = vld [vmem:[%s2 + $0x38] sm:$0xff]
      %v212 = vld [vmem:[%s2 + $0x40] sm:$0xff]
      %v213 = vld [vmem:[%s2 + $0x48] sm:$0xff]
      %v214 = vld [vmem:[%s2 + $0x50] sm:$0xff]
      %v215 = vld [vmem:[%s2 + $0x58] sm:$0xff]
      %v216 = vld [vmem:[%s2 + $0x60] sm:$0xff]
      %v217 = vld [vmem:[%s2 + $0x68] sm:$0xff]
      %v218 = vld [vmem:[%s2 + $0x70] sm:$0xff]
      %v219 = vld [vmem:[%s2 + $0x78] sm:$0xff]
      %v220 = vld [vmem:[%s2 + $0x80] sm:$0xff]
      %v221 = vld [vmem:[%s2 + $0x88] sm:$0xff]
      %v222 = vld [vmem:[%s2 + $0x90] sm:$0xff]
      %v223 = vld [vmem:[%s2 + $0x98] sm:$0xff]
      %v224 = vld [vmem:[%s2 + $0xa0] sm:$0xff]
      %v225 = vld [vmem:[%s2 + $0xa8] sm:$0xff]
      %v226 = vld [vmem:[%s2 + $0xb0] sm:$0xff]
      %v227 = vld [vmem:[%s2 + $0xb8] sm:$0xff]
      %v228 = vld [vmem:[%s2 + $0xc0] sm:$0xff]
      %v229 = vld [vmem:[%s2 + $0xc8] sm:$0xff]
      %v230 = vld [vmem:[%s2 + $0xd0] sm:$0xff]
      %v231 = vld [vmem:[%s2 + $0xd8] sm:$0xff]
      %v232 = vld [vmem:[%s2 + $0xe0] sm:$0xff]
      %v233 = vld [vmem:[%s2 + $0xe8] sm:$0xff]
      %v234 = vld [vmem:[%s2 + $0xf0] sm:$0xff]
      %v235 = vld [vmem:[%s2 + $0xf8] sm:$0xff]
      %v240 = vperm.slane %v200, 0
      %v241 = vperm.slane %v201, 0
      %v242 = vperm.slane %v202, 0
      %v243 = vperm.slane %v203, 0
      %v248 = vmul.f32 %v188, %v240
      %v249 = vmul.f32 %v189, %v240
      %v250 = vmul.f32 %v190, %v241
      %v251 = vmul.f32 %v191, %v241
      %v252 = vmul.f32 %v192, %v242
      %v253 = vmul.f32 %v193, %v242
      %v254 = vmul.f32 %v194, %v243
      %v255 = vmul.f32 %v195, %v243
      %vm256 = vcmask 130048
      %v258 = vsel %vm256, %v248, 0
      %v261 = vsel %vm256, %v249, 0
      %v264 = vsel %vm256, %v188, 0
      %v267 = vsel %vm256, %v189, 0
      %269 = vmatpush.xpose.msra.mxu0 0.0
      %270 = vmatpush.xpose.msra.mxu0 0.0
      %271 = vmatpush.xpose.msra.mxu0 0.0
      %272 = vmatpush.xpose.msra.mxu0 0.0
      %273 = vmatpush.xpose.msra.mxu0 0.0
      %274 = vmatpush.xpose.msra.mxu0 0.0
      %275 = vmatpush.xpose.msra.mxu0 0.0
      %276 = vmatpush.xpose.msra.mxu0 0.0
      %277 = vmatpush.xpose.msra.mxu0 0.0
      %278 = vmatpush.xpose.msra.mxu0 0.0
      %279 = vmatpush.xpose.msra.mxu0 0.0
      %280 = vmatpush.xpose.msra.mxu0 0.0
      %281 = vmatpush.xpose.msra.mxu0 0.0
      %282 = vmatpush.xpose.msra.mxu0 0.0
      %283 = vmatpush.xpose.msra.mxu0 %v267
      %284 = vmatpush.xpose.msra.mxu0 %v264
      %285 = vmatmul.f32.gmra.mxu0 %v258
      %v286 = vpop.f32.mrf.mxu0
      %v287 = vadd.f32 0.0, %v286
      %288 = vmatmul.f32.gmra.mxu0 %v261
      %v289 = vpop.f32.mrf.mxu0
      %v290 = vadd.f32 0.0, %v289
      %291 = vdwg.mxu0
      %v293 = vsel %vm256, %v250, 0
      %v296 = vsel %vm256, %v251, 0
      %v299 = vsel %vm256, %v190, 0
      %v302 = vsel %vm256, %v191, 0
      %304 = vmatpush.xpose.msra.mxu0 0.0
      %305 = vmatpush.xpose.msra.mxu0 0.0
      %306 = vmatpush.xpose.msra.mxu0 0.0
      %307 = vmatpush.xpose.msra.mxu0 0.0
      %308 = vmatpush.xpose.msra.mxu0 0.0
      %309 = vmatpush.xpose.msra.mxu0 0.0
      %310 = vmatpush.xpose.msra.mxu0 0.0
      %311 = vmatpush.xpose.msra.mxu0 0.0
      %312 = vmatpush.xpose.msra.mxu0 0.0
      %313 = vmatpush.xpose.msra.mxu0 0.0
      %314 = vmatpush.xpose.msra.mxu0 0.0
      %315 = vmatpush.xpose.msra.mxu0 0.0
      %316 = vmatpush.xpose.msra.mxu0 0.0
      %317 = vmatpush.xpose.msra.mxu0 0.0
      %318 = vmatpush.xpose.msra.mxu0 %v302
      %319 = vmatpush.xpose.msra.mxu0 %v299
      %320 = vmatmul.f32.gmra.mxu0 %v293
      %v321 = vpop.f32.mrf.mxu0
      %v322 = vadd.f32 0.0, %v321
      %323 = vmatmul.f32.gmra.mxu0 %v296
      %v324 = vpop.f32.mrf.mxu0
      %v325 = vadd.f32 0.0, %v324
      %326 = vdwg.mxu0
      %v328 = vsel %vm256, %v252, 0
      %v331 = vsel %vm256, %v253, 0
      %v334 = vsel %vm256, %v192, 0
      %v337 = vsel %vm256, %v193, 0
      %339 = vmatpush.xpose.msra.mxu0 0.0
      %340 = vmatpush.xpose.msra.mxu0 0.0
      %341 = vmatpush.xpose.msra.mxu0 0.0
      %342 = vmatpush.xpose.msra.mxu0 0.0
      %343 = vmatpush.xpose.msra.mxu0 0.0
      %344 = vmatpush.xpose.msra.mxu0 0.0
      %345 = vmatpush.xpose.msra.mxu0 0.0
      %346 = vmatpush.xpose.msra.mxu0 0.0
      %347 = vmatpush.xpose.msra.mxu0 0.0
      %348 = vmatpush.xpose.msra.mxu0 0.0
      %349 = vmatpush.xpose.msra.mxu0 0.0
      %350 = vmatpush.xpose.msra.mxu0 0.0
      %351 = vmatpush.xpose.msra.mxu0 0.0
      %352 = vmatpush.xpose.msra.mxu0 0.0
      %353 = vmatpush.xpose.msra.mxu0 %v337
      %354 = vmatpush.xpose.msra.mxu0 %v334
      %355 = vmatmul.f32.gmra.mxu0 %v328
      %v356 = vpop.f32.mrf.mxu0
      %v357 = vadd.f32 0.0, %v356
      %358 = vmatmul.f32.gmra.mxu0 %v331
      %v359 = vpop.f32.mrf.mxu0
      %v360 = vadd.f32 0.0, %v359
      %361 = vdwg.mxu0
      %v363 = vsel %vm256, %v254, 0
      %v366 = vsel %vm256, %v255, 0
      %v369 = vsel %vm256, %v194, 0
      %v372 = vsel %vm256, %v195, 0
      %374 = vmatpush.xpose.msra.mxu0 0.0
      %375 = vmatpush.xpose.msra.mxu0 0.0
      %376 = vmatpush.xpose.msra.mxu0 0.0
      %377 = vmatpush.xpose.msra.mxu0 0.0
      %378 = vmatpush.xpose.msra.mxu0 0.0
      %379 = vmatpush.xpose.msra.mxu0 0.0
      %380 = vmatpush.xpose.msra.mxu0 0.0
      %381 = vmatpush.xpose.msra.mxu0 0.0
      %382 = vmatpush.xpose.msra.mxu0 0.0
      %383 = vmatpush.xpose.msra.mxu0 0.0
      %384 = vmatpush.xpose.msra.mxu0 0.0
      %385 = vmatpush.xpose.msra.mxu0 0.0
      %386 = vmatpush.xpose.msra.mxu0 0.0
      %387 = vmatpush.xpose.msra.mxu0 0.0
      %388 = vmatpush.xpose.msra.mxu0 %v372
      %389 = vmatpush.xpose.msra.mxu0 %v369
      %390 = vmatmul.f32.gmra.mxu0 %v363
      %v391 = vpop.f32.mrf.mxu0
      %v392 = vadd.f32 0.0, %v391
      %393 = vmatmul.f32.gmra.mxu0 %v366
      %v394 = vpop.f32.mrf.mxu0
      %v395 = vadd.f32 0.0, %v394
      %396 = vdwg.mxu0
      %v398 = vsel %vm256, %v204, 0
      %v401 = vsel %vm256, %v205, 0
      %403 = vmatpush.msra.mxu0 0.0
      %404 = vmatpush.msra.mxu0 0.0
      %405 = vmatpush.msra.mxu0 0.0
      %406 = vmatpush.msra.mxu0 0.0
      %407 = vmatpush.msra.mxu0 0.0
      %408 = vmatpush.msra.mxu0 0.0
      %409 = vmatpush.msra.mxu0 0.0
      %410 = vmatpush.msra.mxu0 0.0
      %411 = vmatpush.msra.mxu0 0.0
      %412 = vmatpush.msra.mxu0 0.0
      %413 = vmatpush.msra.mxu0 0.0
      %414 = vmatpush.msra.mxu0 0.0
      %415 = vmatpush.msra.mxu0 0.0
      %416 = vmatpush.msra.mxu0 0.0
      %417 = vmatpush.msra.mxu0 %v290
      %418 = vmatpush.msra.mxu0 %v287
      %419 = vmatmul.f32.gmra.mxu0 %v398
      %v420 = vpop.f32.mrf.mxu0
      %v421 = vadd.f32 0.0, %v420
      %422 = vmatmul.f32.gmra.mxu0 %v401
      %v423 = vpop.f32.mrf.mxu0
      %v424 = vadd.f32 0.0, %v423
      %425 = vdwg.mxu0
      %v427 = vsel %vm256, %v206, 0
      %v430 = vsel %vm256, %v207, 0
      %432 = vmatpush.msra.mxu0 0.0
      %433 = vmatpush.msra.mxu0 0.0
      %434 = vmatpush.msra.mxu0 0.0
      %435 = vmatpush.msra.mxu0 0.0
      %436 = vmatpush.msra.mxu0 0.0
      %437 = vmatpush.msra.mxu0 0.0
      %438 = vmatpush.msra.mxu0 0.0
      %439 = vmatpush.msra.mxu0 0.0
      %440 = vmatpush.msra.mxu0 0.0
      %441 = vmatpush.msra.mxu0 0.0
      %442 = vmatpush.msra.mxu0 0.0
      %443 = vmatpush.msra.mxu0 0.0
      %444 = vmatpush.msra.mxu0 0.0
      %445 = vmatpush.msra.mxu0 0.0
      %446 = vmatpush.msra.mxu0 %v325
      %447 = vmatpush.msra.mxu0 %v322
      %448 = vmatmul.f32.gmra.mxu0 %v427
      %v449 = vpop.f32.mrf.mxu0
      %v450 = vadd.f32 0.0, %v449
      %451 = vmatmul.f32.gmra.mxu0 %v430
      %v452 = vpop.f32.mrf.mxu0
      %v453 = vadd.f32 0.0, %v452
      %454 = vdwg.mxu0
      %v456 = vsel %vm256, %v208, 0
      %v459 = vsel %vm256, %v209, 0
      %461 = vmatpush.msra.mxu0 0.0
      %462 = vmatpush.msra.mxu0 0.0
      %463 = vmatpush.msra.mxu0 0.0
      %464 = vmatpush.msra.mxu0 0.0
      %465 = vmatpush.msra.mxu0 0.0
      %466 = vmatpush.msra.mxu0 0.0
      %467 = vmatpush.msra.mxu0 0.0
      %468 = vmatpush.msra.mxu0 0.0
      %469 = vmatpush.msra.mxu0 0.0
      %470 = vmatpush.msra.mxu0 0.0
      %471 = vmatpush.msra.mxu0 0.0
      %472 = vmatpush.msra.mxu0 0.0
      %473 = vmatpush.msra.mxu0 0.0
      %474 = vmatpush.msra.mxu0 0.0
      %475 = vmatpush.msra.mxu0 %v360
      %476 = vmatpush.msra.mxu0 %v357
      %477 = vmatmul.f32.gmra.mxu0 %v456
      %v478 = vpop.f32.mrf.mxu0
      %v479 = vadd.f32 0.0, %v478
      %480 = vmatmul.f32.gmra.mxu0 %v459
      %v481 = vpop.f32.mrf.mxu0
      %v482 = vadd.f32 0.0, %v481
      %483 = vdwg.mxu0
      %v485 = vsel %vm256, %v210, 0
      %v488 = vsel %vm256, %v211, 0
      %490 = vmatpush.msra.mxu0 0.0
      %491 = vmatpush.msra.mxu0 0.0
      %492 = vmatpush.msra.mxu0 0.0
      %493 = vmatpush.msra.mxu0 0.0
      %494 = vmatpush.msra.mxu0 0.0
      %495 = vmatpush.msra.mxu0 0.0
      %496 = vmatpush.msra.mxu0 0.0
      %497 = vmatpush.msra.mxu0 0.0
      %498 = vmatpush.msra.mxu0 0.0
      %499 = vmatpush.msra.mxu0 0.0
      %500 = vmatpush.msra.mxu0 0.0
      %501 = vmatpush.msra.mxu0 0.0
      %502 = vmatpush.msra.mxu0 0.0
      %503 = vmatpush.msra.mxu0 0.0
      %504 = vmatpush.msra.mxu0 %v395
      %505 = vmatpush.msra.mxu0 %v392
      %506 = vmatmul.f32.gmra.mxu0 %v485
      %v507 = vpop.f32.mrf.mxu0
      %v508 = vadd.f32 0.0, %v507
      %509 = vmatmul.f32.gmra.mxu0 %v488
      %v510 = vpop.f32.mrf.mxu0
      %v511 = vadd.f32 0.0, %v510
      %512 = vdwg.mxu0
      %v514 = vsel %vm256, %v421, 0
      %v517 = vsel %vm256, %v424, 0
      %519 = vmatpush.xpose.msra.mxu0 0.0
      %520 = vmatpush.xpose.msra.mxu0 0.0
      %521 = vmatpush.xpose.msra.mxu0 0.0
      %522 = vmatpush.xpose.msra.mxu0 0.0
      %523 = vmatpush.xpose.msra.mxu0 0.0
      %524 = vmatpush.xpose.msra.mxu0 0.0
      %525 = vmatpush.xpose.msra.mxu0 0.0
      %526 = vmatpush.xpose.msra.mxu0 0.0
      %527 = vmatpush.xpose.msra.mxu0 0.0
      %528 = vmatpush.xpose.msra.mxu0 0.0
      %529 = vmatpush.xpose.msra.mxu0 0.0
      %530 = vmatpush.xpose.msra.mxu0 0.0
      %531 = vmatpush.xpose.msra.mxu0 0.0
      %532 = vmatpush.xpose.msra.mxu0 0.0
      %533 = vmatpush.xpose.msra.mxu0 %v517
      %534 = vmatpush.xpose.msra.mxu0 %v514
      %535 = vmatmul.f32.gmra.mxu0 %v398
      %v536 = vpop.f32.mrf.mxu0
      %v537 = vadd.f32 0.0, %v536
      %538 = vmatmul.f32.gmra.mxu0 %v401
      %v539 = vpop.f32.mrf.mxu0
      %v540 = vadd.f32 0.0, %v539
      %541 = vdwg.mxu0
      %v543 = vsel %vm256, %v450, 0
      %v546 = vsel %vm256, %v453, 0
      %548 = vmatpush.xpose.msra.mxu0 0.0
      %549 = vmatpush.xpose.msra.mxu0 0.0
      %550 = vmatpush.xpose.msra.mxu0 0.0
      %551 = vmatpush.xpose.msra.mxu0 0.0
      %552 = vmatpush.xpose.msra.mxu0 0.0
      %553 = vmatpush.xpose.msra.mxu0 0.0
      %554 = vmatpush.xpose.msra.mxu0 0.0
      %555 = vmatpush.xpose.msra.mxu0 0.0
      %556 = vmatpush.xpose.msra.mxu0 0.0
      %557 = vmatpush.xpose.msra.mxu0 0.0
      %558 = vmatpush.xpose.msra.mxu0 0.0
      %559 = vmatpush.xpose.msra.mxu0 0.0
      %560 = vmatpush.xpose.msra.mxu0 0.0
      %561 = vmatpush.xpose.msra.mxu0 0.0
      %562 = vmatpush.xpose.msra.mxu0 %v546
      %563 = vmatpush.xpose.msra.mxu0 %v543
      %564 = vmatmul.f32.gmra.mxu0 %v427
      %v565 = vpop.f32.mrf.mxu0
      %v566 = vadd.f32 0.0, %v565
      %567 = vmatmul.f32.gmra.mxu0 %v430
      %v568 = vpop.f32.mrf.mxu0
      %v569 = vadd.f32 0.0, %v568
      %570 = vdwg.mxu0
      %v572 = vsel %vm256, %v479, 0
      %v575 = vsel %vm256, %v482, 0
      %577 = vmatpush.xpose.msra.mxu0 0.0
      %578 = vmatpush.xpose.msra.mxu0 0.0
      %579 = vmatpush.xpose.msra.mxu0 0.0
      %580 = vmatpush.xpose.msra.mxu0 0.0
      %581 = vmatpush.xpose.msra.mxu0 0.0
      %582 = vmatpush.xpose.msra.mxu0 0.0
      %583 = vmatpush.xpose.msra.mxu0 0.0
      %584 = vmatpush.xpose.msra.mxu0 0.0
      %585 = vmatpush.xpose.msra.mxu0 0.0
      %586 = vmatpush.xpose.msra.mxu0 0.0
      %587 = vmatpush.xpose.msra.mxu0 0.0
      %588 = vmatpush.xpose.msra.mxu0 0.0
      %589 = vmatpush.xpose.msra.mxu0 0.0
      %590 = vmatpush.xpose.msra.mxu0 0.0
      %591 = vmatpush.xpose.msra.mxu0 %v575
      %592 = vmatpush.xpose.msra.mxu0 %v572
      %593 = vmatmul.f32.gmra.mxu0 %v456
      %v594 = vpop.f32.mrf.mxu0
      %v595 = vadd.f32 0.0, %v594
      %596 = vmatmul.f32.gmra.mxu0 %v459
      %v597 = vpop.f32.mrf.mxu0
      %v598 = vadd.f32 0.0, %v597
      %599 = vdwg.mxu0
      %v601 = vsel %vm256, %v508, 0
      %v604 = vsel %vm256, %v511, 0
      %606 = vmatpush.xpose.msra.mxu0 0.0
      %607 = vmatpush.xpose.msra.mxu0 0.0
      %608 = vmatpush.xpose.msra.mxu0 0.0
      %609 = vmatpush.xpose.msra.mxu0 0.0
      %610 = vmatpush.xpose.msra.mxu0 0.0
      %611 = vmatpush.xpose.msra.mxu0 0.0
      %612 = vmatpush.xpose.msra.mxu0 0.0
      %613 = vmatpush.xpose.msra.mxu0 0.0
      %614 = vmatpush.xpose.msra.mxu0 0.0
      %615 = vmatpush.xpose.msra.mxu0 0.0
      %616 = vmatpush.xpose.msra.mxu0 0.0
      %617 = vmatpush.xpose.msra.mxu0 0.0
      %618 = vmatpush.xpose.msra.mxu0 0.0
      %619 = vmatpush.xpose.msra.mxu0 0.0
      %620 = vmatpush.xpose.msra.mxu0 %v604
      %621 = vmatpush.xpose.msra.mxu0 %v601
      %622 = vmatmul.f32.gmra.mxu0 %v485
      %v623 = vpop.f32.mrf.mxu0
      %v624 = vadd.f32 0.0, %v623
      %625 = vmatmul.f32.gmra.mxu0 %v488
      %v626 = vpop.f32.mrf.mxu0
      %v627 = vadd.f32 0.0, %v626
      %628 = vdwg.mxu0
      %629 = vmatpush.xpose.msra.mxu0 0.0
      %630 = vmatpush.xpose.msra.mxu0 0.0
      %631 = vmatpush.xpose.msra.mxu0 0.0
      %632 = vmatpush.xpose.msra.mxu0 0.0
      %633 = vmatpush.xpose.msra.mxu0 0.0
      %634 = vmatpush.xpose.msra.mxu0 0.0
      %635 = vmatpush.xpose.msra.mxu0 0.0
      %636 = vmatpush.xpose.msra.mxu0 0.0
      %637 = vmatpush.xpose.msra.mxu0 0.0
      %638 = vmatpush.xpose.msra.mxu0 0.0
      %639 = vmatpush.xpose.msra.mxu0 0.0
      %640 = vmatpush.xpose.msra.mxu0 0.0
      %641 = vmatpush.xpose.msra.mxu0 0.0
      %642 = vmatpush.xpose.msra.mxu0 0.0
      %643 = vmatpush.xpose.msra.mxu0 %v401
      %644 = vmatpush.xpose.msra.mxu0 %v398
      %645 = vmatmul.f32.gmra.mxu0 %v514
      %v646 = vpop.f32.mrf.mxu0
      %v647 = vadd.f32 %v537, %v646
      %648 = vmatmul.f32.gmra.mxu0 %v517
      %v649 = vpop.f32.mrf.mxu0
      %v650 = vadd.f32 %v540, %v649
      %651 = vdwg.mxu0
      %652 = vmatpush.xpose.msra.mxu0 0.0
      %653 = vmatpush.xpose.msra.mxu0 0.0
      %654 = vmatpush.xpose.msra.mxu0 0.0
      %655 = vmatpush.xpose.msra.mxu0 0.0
      %656 = vmatpush.xpose.msra.mxu0 0.0
      %657 = vmatpush.xpose.msra.mxu0 0.0
      %658 = vmatpush.xpose.msra.mxu0 0.0
      %659 = vmatpush.xpose.msra.mxu0 0.0
      %660 = vmatpush.xpose.msra.mxu0 0.0
      %661 = vmatpush.xpose.msra.mxu0 0.0
      %662 = vmatpush.xpose.msra.mxu0 0.0
      %663 = vmatpush.xpose.msra.mxu0 0.0
      %664 = vmatpush.xpose.msra.mxu0 0.0
      %665 = vmatpush.xpose.msra.mxu0 0.0
      %666 = vmatpush.xpose.msra.mxu0 %v430
      %667 = vmatpush.xpose.msra.mxu0 %v427
      %668 = vmatmul.f32.gmra.mxu0 %v543
      %v669 = vpop.f32.mrf.mxu0
      %v670 = vadd.f32 %v566, %v669
      %671 = vmatmul.f32.gmra.mxu0 %v546
      %v672 = vpop.f32.mrf.mxu0
      %v673 = vadd.f32 %v569, %v672
      %674 = vdwg.mxu0
      %675 = vmatpush.xpose.msra.mxu0 0.0
      %676 = vmatpush.xpose.msra.mxu0 0.0
      %677 = vmatpush.xpose.msra.mxu0 0.0
      %678 = vmatpush.xpose.msra.mxu0 0.0
      %679 = vmatpush.xpose.msra.mxu0 0.0
      %680 = vmatpush.xpose.msra.mxu0 0.0
      %681 = vmatpush.xpose.msra.mxu0 0.0
      %682 = vmatpush.xpose.msra.mxu0 0.0
      %683 = vmatpush.xpose.msra.mxu0 0.0
      %684 = vmatpush.xpose.msra.mxu0 0.0
      %685 = vmatpush.xpose.msra.mxu0 0.0
      %686 = vmatpush.xpose.msra.mxu0 0.0
      %687 = vmatpush.xpose.msra.mxu0 0.0
      %688 = vmatpush.xpose.msra.mxu0 0.0
      %689 = vmatpush.xpose.msra.mxu0 %v459
      %690 = vmatpush.xpose.msra.mxu0 %v456
      %691 = vmatmul.f32.gmra.mxu0 %v572
      %v692 = vpop.f32.mrf.mxu0
      %v693 = vadd.f32 %v595, %v692
      %694 = vmatmul.f32.gmra.mxu0 %v575
      %v695 = vpop.f32.mrf.mxu0
      %v696 = vadd.f32 %v598, %v695
      %697 = vdwg.mxu0
      %698 = vmatpush.xpose.msra.mxu0 0.0
      %699 = vmatpush.xpose.msra.mxu0 0.0
      %700 = vmatpush.xpose.msra.mxu0 0.0
      %701 = vmatpush.xpose.msra.mxu0 0.0
      %702 = vmatpush.xpose.msra.mxu0 0.0
      %703 = vmatpush.xpose.msra.mxu0 0.0
      %704 = vmatpush.xpose.msra.mxu0 0.0
      %705 = vmatpush.xpose.msra.mxu0 0.0
      %706 = vmatpush.xpose.msra.mxu0 0.0
      %707 = vmatpush.xpose.msra.mxu0 0.0
      %708 = vmatpush.xpose.msra.mxu0 0.0
      %709 = vmatpush.xpose.msra.mxu0 0.0
      %710 = vmatpush.xpose.msra.mxu0 0.0
      %711 = vmatpush.xpose.msra.mxu0 0.0
      %712 = vmatpush.xpose.msra.mxu0 %v488
      %713 = vmatpush.xpose.msra.mxu0 %v485
      %714 = vmatmul.f32.gmra.mxu0 %v601
      %v715 = vpop.f32.mrf.mxu0
      %v716 = vadd.f32 %v624, %v715
      %717 = vmatmul.f32.gmra.mxu0 %v604
      %v718 = vpop.f32.mrf.mxu0
      %v719 = vadd.f32 %v627, %v718
      %720 = vdwg.mxu0
      %v721 = vsel %vm256, %v647, 0.0
      %v722 = vsel %vm256, %v670, 0.0
      %v723 = vadd.f32 %v721, %v722
      %v724 = vsel %vm256, %v693, 0.0
      %v725 = vadd.f32 %v723, %v724
      %v726 = vsel %vm256, %v716, 0.0
      %v727 = vadd.f32 %v725, %v726
      %v728 = vsel %vm256, %v650, 0.0
      %v729 = vsel %vm256, %v673, 0.0
      %v730 = vadd.f32 %v728, %v729
      %v731 = vsel %vm256, %v696, 0.0
      %v732 = vadd.f32 %v730, %v731
      %v733 = vsel %vm256, %v719, 0.0
      %v734 = vadd.f32 %v732, %v733
      %v735 = vmul.f32 %v727, 0.5
      %v736 = vmul.f32 %v734, 0.5
      %737 = vst.msk [vmem:[%s187] sm:$0xff] %vm256, %v735
      %738 = vst.msk [vmem:[%s187 + $0x8] sm:$0xff] %vm256, %v736
      %v740 = vsel %vm256, %v212, 0
      %v743 = vsel %vm256, %v213, 0
      %745 = vmatpush.msra.mxu0 0.0
      %746 = vmatpush.msra.mxu0 0.0
      %747 = vmatpush.msra.mxu0 0.0
      %748 = vmatpush.msra.mxu0 0.0
      %749 = vmatpush.msra.mxu0 0.0
      %750 = vmatpush.msra.mxu0 0.0
      %751 = vmatpush.msra.mxu0 0.0
      %752 = vmatpush.msra.mxu0 0.0
      %753 = vmatpush.msra.mxu0 0.0
      %754 = vmatpush.msra.mxu0 0.0
      %755 = vmatpush.msra.mxu0 0.0
      %756 = vmatpush.msra.mxu0 0.0
      %757 = vmatpush.msra.mxu0 0.0
      %758 = vmatpush.msra.mxu0 0.0
      %759 = vmatpush.msra.mxu0 %v290
      %760 = vmatpush.msra.mxu0 %v287
      %761 = vmatmul.f32.gmra.mxu0 %v740
      %v762 = vpop.f32.mrf.mxu0
      %v763 = vadd.f32 0.0, %v762
      %764 = vmatmul.f32.gmra.mxu0 %v743
      %v765 = vpop.f32.mrf.mxu0
      %v766 = vadd.f32 0.0, %v765
      %767 = vdwg.mxu0
      %v769 = vsel %vm256, %v214, 0
      %v772 = vsel %vm256, %v215, 0
      %774 = vmatpush.msra.mxu0 0.0
      %775 = vmatpush.msra.mxu0 0.0
      %776 = vmatpush.msra.mxu0 0.0
      %777 = vmatpush.msra.mxu0 0.0
      %778 = vmatpush.msra.mxu0 0.0
      %779 = vmatpush.msra.mxu0 0.0
      %780 = vmatpush.msra.mxu0 0.0
      %781 = vmatpush.msra.mxu0 0.0
      %782 = vmatpush.msra.mxu0 0.0
      %783 = vmatpush.msra.mxu0 0.0
      %784 = vmatpush.msra.mxu0 0.0
      %785 = vmatpush.msra.mxu0 0.0
      %786 = vmatpush.msra.mxu0 0.0
      %787 = vmatpush.msra.mxu0 0.0
      %788 = vmatpush.msra.mxu0 %v325
      %789 = vmatpush.msra.mxu0 %v322
      %790 = vmatmul.f32.gmra.mxu0 %v769
      %v791 = vpop.f32.mrf.mxu0
      %v792 = vadd.f32 0.0, %v791
      %793 = vmatmul.f32.gmra.mxu0 %v772
      %v794 = vpop.f32.mrf.mxu0
      %v795 = vadd.f32 0.0, %v794
      %796 = vdwg.mxu0
      %v798 = vsel %vm256, %v216, 0
      %v801 = vsel %vm256, %v217, 0
      %803 = vmatpush.msra.mxu0 0.0
      %804 = vmatpush.msra.mxu0 0.0
      %805 = vmatpush.msra.mxu0 0.0
      %806 = vmatpush.msra.mxu0 0.0
      %807 = vmatpush.msra.mxu0 0.0
      %808 = vmatpush.msra.mxu0 0.0
      %809 = vmatpush.msra.mxu0 0.0
      %810 = vmatpush.msra.mxu0 0.0
      %811 = vmatpush.msra.mxu0 0.0
      %812 = vmatpush.msra.mxu0 0.0
      %813 = vmatpush.msra.mxu0 0.0
      %814 = vmatpush.msra.mxu0 0.0
      %815 = vmatpush.msra.mxu0 0.0
      %816 = vmatpush.msra.mxu0 0.0
      %817 = vmatpush.msra.mxu0 %v360
      %818 = vmatpush.msra.mxu0 %v357
      %819 = vmatmul.f32.gmra.mxu0 %v798
      %v820 = vpop.f32.mrf.mxu0
      %v821 = vadd.f32 0.0, %v820
      %822 = vmatmul.f32.gmra.mxu0 %v801
      %v823 = vpop.f32.mrf.mxu0
      %v824 = vadd.f32 0.0, %v823
      %825 = vdwg.mxu0
      %v827 = vsel %vm256, %v218, 0
      %v830 = vsel %vm256, %v219, 0
      %832 = vmatpush.msra.mxu0 0.0
      %833 = vmatpush.msra.mxu0 0.0
      %834 = vmatpush.msra.mxu0 0.0
      %835 = vmatpush.msra.mxu0 0.0
      %836 = vmatpush.msra.mxu0 0.0
      %837 = vmatpush.msra.mxu0 0.0
      %838 = vmatpush.msra.mxu0 0.0
      %839 = vmatpush.msra.mxu0 0.0
      %840 = vmatpush.msra.mxu0 0.0
      %841 = vmatpush.msra.mxu0 0.0
      %842 = vmatpush.msra.mxu0 0.0
      %843 = vmatpush.msra.mxu0 0.0
      %844 = vmatpush.msra.mxu0 0.0
      %845 = vmatpush.msra.mxu0 0.0
      %846 = vmatpush.msra.mxu0 %v395
      %847 = vmatpush.msra.mxu0 %v392
      %848 = vmatmul.f32.gmra.mxu0 %v827
      %v849 = vpop.f32.mrf.mxu0
      %v850 = vadd.f32 0.0, %v849
      %851 = vmatmul.f32.gmra.mxu0 %v830
      %v852 = vpop.f32.mrf.mxu0
      %v853 = vadd.f32 0.0, %v852
      %854 = vdwg.mxu0
      %v856 = vsel %vm256, %v763, 0
      %v859 = vsel %vm256, %v766, 0
      %861 = vmatpush.xpose.msra.mxu0 0.0
      %862 = vmatpush.xpose.msra.mxu0 0.0
      %863 = vmatpush.xpose.msra.mxu0 0.0
      %864 = vmatpush.xpose.msra.mxu0 0.0
      %865 = vmatpush.xpose.msra.mxu0 0.0
      %866 = vmatpush.xpose.msra.mxu0 0.0
      %867 = vmatpush.xpose.msra.mxu0 0.0
      %868 = vmatpush.xpose.msra.mxu0 0.0
      %869 = vmatpush.xpose.msra.mxu0 0.0
      %870 = vmatpush.xpose.msra.mxu0 0.0
      %871 = vmatpush.xpose.msra.mxu0 0.0
      %872 = vmatpush.xpose.msra.mxu0 0.0
      %873 = vmatpush.xpose.msra.mxu0 0.0
      %874 = vmatpush.xpose.msra.mxu0 0.0
      %875 = vmatpush.xpose.msra.mxu0 %v859
      %876 = vmatpush.xpose.msra.mxu0 %v856
      %877 = vmatmul.f32.gmra.mxu0 %v740
      %v878 = vpop.f32.mrf.mxu0
      %v879 = vadd.f32 0.0, %v878
      %880 = vmatmul.f32.gmra.mxu0 %v743
      %v881 = vpop.f32.mrf.mxu0
      %v882 = vadd.f32 0.0, %v881
      %883 = vdwg.mxu0
      %v885 = vsel %vm256, %v792, 0
      %v888 = vsel %vm256, %v795, 0
      %890 = vmatpush.xpose.msra.mxu0 0.0
      %891 = vmatpush.xpose.msra.mxu0 0.0
      %892 = vmatpush.xpose.msra.mxu0 0.0
      %893 = vmatpush.xpose.msra.mxu0 0.0
      %894 = vmatpush.xpose.msra.mxu0 0.0
      %895 = vmatpush.xpose.msra.mxu0 0.0
      %896 = vmatpush.xpose.msra.mxu0 0.0
      %897 = vmatpush.xpose.msra.mxu0 0.0
      %898 = vmatpush.xpose.msra.mxu0 0.0
      %899 = vmatpush.xpose.msra.mxu0 0.0
      %900 = vmatpush.xpose.msra.mxu0 0.0
      %901 = vmatpush.xpose.msra.mxu0 0.0
      %902 = vmatpush.xpose.msra.mxu0 0.0
      %903 = vmatpush.xpose.msra.mxu0 0.0
      %904 = vmatpush.xpose.msra.mxu0 %v888
      %905 = vmatpush.xpose.msra.mxu0 %v885
      %906 = vmatmul.f32.gmra.mxu0 %v769
      %v907 = vpop.f32.mrf.mxu0
      %v908 = vadd.f32 0.0, %v907
      %909 = vmatmul.f32.gmra.mxu0 %v772
      %v910 = vpop.f32.mrf.mxu0
      %v911 = vadd.f32 0.0, %v910
      %912 = vdwg.mxu0
      %v914 = vsel %vm256, %v821, 0
      %v917 = vsel %vm256, %v824, 0
      %919 = vmatpush.xpose.msra.mxu0 0.0
      %920 = vmatpush.xpose.msra.mxu0 0.0
      %921 = vmatpush.xpose.msra.mxu0 0.0
      %922 = vmatpush.xpose.msra.mxu0 0.0
      %923 = vmatpush.xpose.msra.mxu0 0.0
      %924 = vmatpush.xpose.msra.mxu0 0.0
      %925 = vmatpush.xpose.msra.mxu0 0.0
      %926 = vmatpush.xpose.msra.mxu0 0.0
      %927 = vmatpush.xpose.msra.mxu0 0.0
      %928 = vmatpush.xpose.msra.mxu0 0.0
      %929 = vmatpush.xpose.msra.mxu0 0.0
      %930 = vmatpush.xpose.msra.mxu0 0.0
      %931 = vmatpush.xpose.msra.mxu0 0.0
      %932 = vmatpush.xpose.msra.mxu0 0.0
      %933 = vmatpush.xpose.msra.mxu0 %v917
      %934 = vmatpush.xpose.msra.mxu0 %v914
      %935 = vmatmul.f32.gmra.mxu0 %v798
      %v936 = vpop.f32.mrf.mxu0
      %v937 = vadd.f32 0.0, %v936
      %938 = vmatmul.f32.gmra.mxu0 %v801
      %v939 = vpop.f32.mrf.mxu0
      %v940 = vadd.f32 0.0, %v939
      %941 = vdwg.mxu0
      %v943 = vsel %vm256, %v850, 0
      %v946 = vsel %vm256, %v853, 0
      %948 = vmatpush.xpose.msra.mxu0 0.0
      %949 = vmatpush.xpose.msra.mxu0 0.0
      %950 = vmatpush.xpose.msra.mxu0 0.0
      %951 = vmatpush.xpose.msra.mxu0 0.0
      %952 = vmatpush.xpose.msra.mxu0 0.0
      %953 = vmatpush.xpose.msra.mxu0 0.0
      %954 = vmatpush.xpose.msra.mxu0 0.0
      %955 = vmatpush.xpose.msra.mxu0 0.0
      %956 = vmatpush.xpose.msra.mxu0 0.0
      %957 = vmatpush.xpose.msra.mxu0 0.0
      %958 = vmatpush.xpose.msra.mxu0 0.0
      %959 = vmatpush.xpose.msra.mxu0 0.0
      %960 = vmatpush.xpose.msra.mxu0 0.0
      %961 = vmatpush.xpose.msra.mxu0 0.0
      %962 = vmatpush.xpose.msra.mxu0 %v946
      %963 = vmatpush.xpose.msra.mxu0 %v943
      %964 = vmatmul.f32.gmra.mxu0 %v827
      %v965 = vpop.f32.mrf.mxu0
      %v966 = vadd.f32 0.0, %v965
      %967 = vmatmul.f32.gmra.mxu0 %v830
      %v968 = vpop.f32.mrf.mxu0
      %v969 = vadd.f32 0.0, %v968
      %970 = vdwg.mxu0
      %971 = vmatpush.xpose.msra.mxu0 0.0
      %972 = vmatpush.xpose.msra.mxu0 0.0
      %973 = vmatpush.xpose.msra.mxu0 0.0
      %974 = vmatpush.xpose.msra.mxu0 0.0
      %975 = vmatpush.xpose.msra.mxu0 0.0
      %976 = vmatpush.xpose.msra.mxu0 0.0
      %977 = vmatpush.xpose.msra.mxu0 0.0
      %978 = vmatpush.xpose.msra.mxu0 0.0
      %979 = vmatpush.xpose.msra.mxu0 0.0
      %980 = vmatpush.xpose.msra.mxu0 0.0
      %981 = vmatpush.xpose.msra.mxu0 0.0
      %982 = vmatpush.xpose.msra.mxu0 0.0
      %983 = vmatpush.xpose.msra.mxu0 0.0
      %984 = vmatpush.xpose.msra.mxu0 0.0
      %985 = vmatpush.xpose.msra.mxu0 %v743
      %986 = vmatpush.xpose.msra.mxu0 %v740
      %987 = vmatmul.f32.gmra.mxu0 %v856
      %v988 = vpop.f32.mrf.mxu0
      %v989 = vadd.f32 %v879, %v988
      %990 = vmatmul.f32.gmra.mxu0 %v859
      %v991 = vpop.f32.mrf.mxu0
      %v992 = vadd.f32 %v882, %v991
      %993 = vdwg.mxu0
      %994 = vmatpush.xpose.msra.mxu0 0.0
      %995 = vmatpush.xpose.msra.mxu0 0.0
      %996 = vmatpush.xpose.msra.mxu0 0.0
      %997 = vmatpush.xpose.msra.mxu0 0.0
      %998 = vmatpush.xpose.msra.mxu0 0.0
      %999 = vmatpush.xpose.msra.mxu0 0.0
      %1000 = vmatpush.xpose.msra.mxu0 0.0
      %1001 = vmatpush.xpose.msra.mxu0 0.0
      %1002 = vmatpush.xpose.msra.mxu0 0.0
      %1003 = vmatpush.xpose.msra.mxu0 0.0
      %1004 = vmatpush.xpose.msra.mxu0 0.0
      %1005 = vmatpush.xpose.msra.mxu0 0.0
      %1006 = vmatpush.xpose.msra.mxu0 0.0
      %1007 = vmatpush.xpose.msra.mxu0 0.0
      %1008 = vmatpush.xpose.msra.mxu0 %v772
      %1009 = vmatpush.xpose.msra.mxu0 %v769
      %1010 = vmatmul.f32.gmra.mxu0 %v885
      %v1011 = vpop.f32.mrf.mxu0
      %v1012 = vadd.f32 %v908, %v1011
      %1013 = vmatmul.f32.gmra.mxu0 %v888
      %v1014 = vpop.f32.mrf.mxu0
      %v1015 = vadd.f32 %v911, %v1014
      %1016 = vdwg.mxu0
      %1017 = vmatpush.xpose.msra.mxu0 0.0
      %1018 = vmatpush.xpose.msra.mxu0 0.0
      %1019 = vmatpush.xpose.msra.mxu0 0.0
      %1020 = vmatpush.xpose.msra.mxu0 0.0
      %1021 = vmatpush.xpose.msra.mxu0 0.0
      %1022 = vmatpush.xpose.msra.mxu0 0.0
      %1023 = vmatpush.xpose.msra.mxu0 0.0
      %1024 = vmatpush.xpose.msra.mxu0 0.0
      %1025 = vmatpush.xpose.msra.mxu0 0.0
      %1026 = vmatpush.xpose.msra.mxu0 0.0
      %1027 = vmatpush.xpose.msra.mxu0 0.0
      %1028 = vmatpush.xpose.msra.mxu0 0.0
      %1029 = vmatpush.xpose.msra.mxu0 0.0
      %1030 = vmatpush.xpose.msra.mxu0 0.0
      %1031 = vmatpush.xpose.msra.mxu0 %v801
      %1032 = vmatpush.xpose.msra.mxu0 %v798
      %1033 = vmatmul.f32.gmra.mxu0 %v914
      %v1034 = vpop.f32.mrf.mxu0
      %v1035 = vadd.f32 %v937, %v1034
      %1036 = vmatmul.f32.gmra.mxu0 %v917
      %v1037 = vpop.f32.mrf.mxu0
      %v1038 = vadd.f32 %v940, %v1037
      %1039 = vdwg.mxu0
      %1040 = vmatpush.xpose.msra.mxu0 0.0
      %1041 = vmatpush.xpose.msra.mxu0 0.0
      %1042 = vmatpush.xpose.msra.mxu0 0.0
      %1043 = vmatpush.xpose.msra.mxu0 0.0
      %1044 = vmatpush.xpose.msra.mxu0 0.0
      %1045 = vmatpush.xpose.msra.mxu0 0.0
      %1046 = vmatpush.xpose.msra.mxu0 0.0
      %1047 = vmatpush.xpose.msra.mxu0 0.0
      %1048 = vmatpush.xpose.msra.mxu0 0.0
      %1049 = vmatpush.xpose.msra.mxu0 0.0
      %1050 = vmatpush.xpose.msra.mxu0 0.0
      %1051 = vmatpush.xpose.msra.mxu0 0.0
      %1052 = vmatpush.xpose.msra.mxu0 0.0
      %1053 = vmatpush.xpose.msra.mxu0 0.0
      %1054 = vmatpush.xpose.msra.mxu0 %v830
      %1055 = vmatpush.xpose.msra.mxu0 %v827
      %1056 = vmatmul.f32.gmra.mxu0 %v943
      %v1057 = vpop.f32.mrf.mxu0
      %v1058 = vadd.f32 %v966, %v1057
      %1059 = vmatmul.f32.gmra.mxu0 %v946
      %v1060 = vpop.f32.mrf.mxu0
      %v1061 = vadd.f32 %v969, %v1060
      %1062 = vdwg.mxu0
      %v1063 = vsel %vm256, %v989, 0.0
      %v1064 = vsel %vm256, %v1012, 0.0
      %v1065 = vadd.f32 %v1063, %v1064
      %v1066 = vsel %vm256, %v1035, 0.0
      %v1067 = vadd.f32 %v1065, %v1066
      %v1068 = vsel %vm256, %v1058, 0.0
      %v1069 = vadd.f32 %v1067, %v1068
      %v1070 = vsel %vm256, %v992, 0.0
      %v1071 = vsel %vm256, %v1015, 0.0
      %v1072 = vadd.f32 %v1070, %v1071
      %v1073 = vsel %vm256, %v1038, 0.0
      %v1074 = vadd.f32 %v1072, %v1073
      %v1075 = vsel %vm256, %v1061, 0.0
      %v1076 = vadd.f32 %v1074, %v1075
      %v1077 = vmul.f32 %v1069, 0.5
      %v1078 = vmul.f32 %v1076, 0.5
      %s1079 = scalar_lea.vmem %s187, 16
      %1080 = vst.msk [vmem:[%s1079] sm:$0xff] %vm256, %v1077
      %1081 = vst.msk [vmem:[%s1079 + $0x8] sm:$0xff] %vm256, %v1078
      %v1083 = vsel %vm256, %v220, 0
      %v1086 = vsel %vm256, %v221, 0
      %1088 = vmatpush.msra.mxu0 0.0
      %1089 = vmatpush.msra.mxu0 0.0
      %1090 = vmatpush.msra.mxu0 0.0
      %1091 = vmatpush.msra.mxu0 0.0
      %1092 = vmatpush.msra.mxu0 0.0
      %1093 = vmatpush.msra.mxu0 0.0
      %1094 = vmatpush.msra.mxu0 0.0
      %1095 = vmatpush.msra.mxu0 0.0
      %1096 = vmatpush.msra.mxu0 0.0
      %1097 = vmatpush.msra.mxu0 0.0
      %1098 = vmatpush.msra.mxu0 0.0
      %1099 = vmatpush.msra.mxu0 0.0
      %1100 = vmatpush.msra.mxu0 0.0
      %1101 = vmatpush.msra.mxu0 0.0
      %1102 = vmatpush.msra.mxu0 %v290
      %1103 = vmatpush.msra.mxu0 %v287
      %1104 = vmatmul.f32.gmra.mxu0 %v1083
      %v1105 = vpop.f32.mrf.mxu0
      %v1106 = vadd.f32 0.0, %v1105
      %1107 = vmatmul.f32.gmra.mxu0 %v1086
      %v1108 = vpop.f32.mrf.mxu0
      %v1109 = vadd.f32 0.0, %v1108
      %1110 = vdwg.mxu0
      %v1112 = vsel %vm256, %v222, 0
      %v1115 = vsel %vm256, %v223, 0
      %1117 = vmatpush.msra.mxu0 0.0
      %1118 = vmatpush.msra.mxu0 0.0
      %1119 = vmatpush.msra.mxu0 0.0
      %1120 = vmatpush.msra.mxu0 0.0
      %1121 = vmatpush.msra.mxu0 0.0
      %1122 = vmatpush.msra.mxu0 0.0
      %1123 = vmatpush.msra.mxu0 0.0
      %1124 = vmatpush.msra.mxu0 0.0
      %1125 = vmatpush.msra.mxu0 0.0
      %1126 = vmatpush.msra.mxu0 0.0
      %1127 = vmatpush.msra.mxu0 0.0
      %1128 = vmatpush.msra.mxu0 0.0
      %1129 = vmatpush.msra.mxu0 0.0
      %1130 = vmatpush.msra.mxu0 0.0
      %1131 = vmatpush.msra.mxu0 %v325
      %1132 = vmatpush.msra.mxu0 %v322
      %1133 = vmatmul.f32.gmra.mxu0 %v1112
      %v1134 = vpop.f32.mrf.mxu0
      %v1135 = vadd.f32 0.0, %v1134
      %1136 = vmatmul.f32.gmra.mxu0 %v1115
      %v1137 = vpop.f32.mrf.mxu0
      %v1138 = vadd.f32 0.0, %v1137
      %1139 = vdwg.mxu0
      %v1141 = vsel %vm256, %v224, 0
      %v1144 = vsel %vm256, %v225, 0
      %1146 = vmatpush.msra.mxu0 0.0
      %1147 = vmatpush.msra.mxu0 0.0
      %1148 = vmatpush.msra.mxu0 0.0
      %1149 = vmatpush.msra.mxu0 0.0
      %1150 = vmatpush.msra.mxu0 0.0
      %1151 = vmatpush.msra.mxu0 0.0
      %1152 = vmatpush.msra.mxu0 0.0
      %1153 = vmatpush.msra.mxu0 0.0
      %1154 = vmatpush.msra.mxu0 0.0
      %1155 = vmatpush.msra.mxu0 0.0
      %1156 = vmatpush.msra.mxu0 0.0
      %1157 = vmatpush.msra.mxu0 0.0
      %1158 = vmatpush.msra.mxu0 0.0
      %1159 = vmatpush.msra.mxu0 0.0
      %1160 = vmatpush.msra.mxu0 %v360
      %1161 = vmatpush.msra.mxu0 %v357
      %1162 = vmatmul.f32.gmra.mxu0 %v1141
      %v1163 = vpop.f32.mrf.mxu0
      %v1164 = vadd.f32 0.0, %v1163
      %1165 = vmatmul.f32.gmra.mxu0 %v1144
      %v1166 = vpop.f32.mrf.mxu0
      %v1167 = vadd.f32 0.0, %v1166
      %1168 = vdwg.mxu0
      %v1170 = vsel %vm256, %v226, 0
      %v1173 = vsel %vm256, %v227, 0
      %1175 = vmatpush.msra.mxu0 0.0
      %1176 = vmatpush.msra.mxu0 0.0
      %1177 = vmatpush.msra.mxu0 0.0
      %1178 = vmatpush.msra.mxu0 0.0
      %1179 = vmatpush.msra.mxu0 0.0
      %1180 = vmatpush.msra.mxu0 0.0
      %1181 = vmatpush.msra.mxu0 0.0
      %1182 = vmatpush.msra.mxu0 0.0
      %1183 = vmatpush.msra.mxu0 0.0
      %1184 = vmatpush.msra.mxu0 0.0
      %1185 = vmatpush.msra.mxu0 0.0
      %1186 = vmatpush.msra.mxu0 0.0
      %1187 = vmatpush.msra.mxu0 0.0
      %1188 = vmatpush.msra.mxu0 0.0
      %1189 = vmatpush.msra.mxu0 %v395
      %1190 = vmatpush.msra.mxu0 %v392
      %1191 = vmatmul.f32.gmra.mxu0 %v1170
      %v1192 = vpop.f32.mrf.mxu0
      %v1193 = vadd.f32 0.0, %v1192
      %1194 = vmatmul.f32.gmra.mxu0 %v1173
      %v1195 = vpop.f32.mrf.mxu0
      %v1196 = vadd.f32 0.0, %v1195
      %1197 = vdwg.mxu0
      %v1199 = vsel %vm256, %v1106, 0
      %v1202 = vsel %vm256, %v1109, 0
      %1204 = vmatpush.xpose.msra.mxu0 0.0
      %1205 = vmatpush.xpose.msra.mxu0 0.0
      %1206 = vmatpush.xpose.msra.mxu0 0.0
      %1207 = vmatpush.xpose.msra.mxu0 0.0
      %1208 = vmatpush.xpose.msra.mxu0 0.0
      %1209 = vmatpush.xpose.msra.mxu0 0.0
      %1210 = vmatpush.xpose.msra.mxu0 0.0
      %1211 = vmatpush.xpose.msra.mxu0 0.0
      %1212 = vmatpush.xpose.msra.mxu0 0.0
      %1213 = vmatpush.xpose.msra.mxu0 0.0
      %1214 = vmatpush.xpose.msra.mxu0 0.0
      %1215 = vmatpush.xpose.msra.mxu0 0.0
      %1216 = vmatpush.xpose.msra.mxu0 0.0
      %1217 = vmatpush.xpose.msra.mxu0 0.0
      %1218 = vmatpush.xpose.msra.mxu0 %v1202
      %1219 = vmatpush.xpose.msra.mxu0 %v1199
      %1220 = vmatmul.f32.gmra.mxu0 %v1083
      %v1221 = vpop.f32.mrf.mxu0
      %v1222 = vadd.f32 0.0, %v1221
      %1223 = vmatmul.f32.gmra.mxu0 %v1086
      %v1224 = vpop.f32.mrf.mxu0
      %v1225 = vadd.f32 0.0, %v1224
      %1226 = vdwg.mxu0
      %v1228 = vsel %vm256, %v1135, 0
      %v1231 = vsel %vm256, %v1138, 0
      %1233 = vmatpush.xpose.msra.mxu0 0.0
      %1234 = vmatpush.xpose.msra.mxu0 0.0
      %1235 = vmatpush.xpose.msra.mxu0 0.0
      %1236 = vmatpush.xpose.msra.mxu0 0.0
      %1237 = vmatpush.xpose.msra.mxu0 0.0
      %1238 = vmatpush.xpose.msra.mxu0 0.0
      %1239 = vmatpush.xpose.msra.mxu0 0.0
      %1240 = vmatpush.xpose.msra.mxu0 0.0
      %1241 = vmatpush.xpose.msra.mxu0 0.0
      %1242 = vmatpush.xpose.msra.mxu0 0.0
      %1243 = vmatpush.xpose.msra.mxu0 0.0
      %1244 = vmatpush.xpose.msra.mxu0 0.0
      %1245 = vmatpush.xpose.msra.mxu0 0.0
      %1246 = vmatpush.xpose.msra.mxu0 0.0
      %1247 = vmatpush.xpose.msra.mxu0 %v1231
      %1248 = vmatpush.xpose.msra.mxu0 %v1228
      %1249 = vmatmul.f32.gmra.mxu0 %v1112
      %v1250 = vpop.f32.mrf.mxu0
      %v1251 = vadd.f32 0.0, %v1250
      %1252 = vmatmul.f32.gmra.mxu0 %v1115
      %v1253 = vpop.f32.mrf.mxu0
      %v1254 = vadd.f32 0.0, %v1253
      %1255 = vdwg.mxu0
      %v1257 = vsel %vm256, %v1164, 0
      %v1260 = vsel %vm256, %v1167, 0
      %1262 = vmatpush.xpose.msra.mxu0 0.0
      %1263 = vmatpush.xpose.msra.mxu0 0.0
      %1264 = vmatpush.xpose.msra.mxu0 0.0
      %1265 = vmatpush.xpose.msra.mxu0 0.0
      %1266 = vmatpush.xpose.msra.mxu0 0.0
      %1267 = vmatpush.xpose.msra.mxu0 0.0
      %1268 = vmatpush.xpose.msra.mxu0 0.0
      %1269 = vmatpush.xpose.msra.mxu0 0.0
      %1270 = vmatpush.xpose.msra.mxu0 0.0
      %1271 = vmatpush.xpose.msra.mxu0 0.0
      %1272 = vmatpush.xpose.msra.mxu0 0.0
      %1273 = vmatpush.xpose.msra.mxu0 0.0
      %1274 = vmatpush.xpose.msra.mxu0 0.0
      %1275 = vmatpush.xpose.msra.mxu0 0.0
      %1276 = vmatpush.xpose.msra.mxu0 %v1260
      %1277 = vmatpush.xpose.msra.mxu0 %v1257
      %1278 = vmatmul.f32.gmra.mxu0 %v1141
      %v1279 = vpop.f32.mrf.mxu0
      %v1280 = vadd.f32 0.0, %v1279
      %1281 = vmatmul.f32.gmra.mxu0 %v1144
      %v1282 = vpop.f32.mrf.mxu0
      %v1283 = vadd.f32 0.0, %v1282
      %1284 = vdwg.mxu0
      %v1286 = vsel %vm256, %v1193, 0
      %v1289 = vsel %vm256, %v1196, 0
      %1291 = vmatpush.xpose.msra.mxu0 0.0
      %1292 = vmatpush.xpose.msra.mxu0 0.0
      %1293 = vmatpush.xpose.msra.mxu0 0.0
      %1294 = vmatpush.xpose.msra.mxu0 0.0
      %1295 = vmatpush.xpose.msra.mxu0 0.0
      %1296 = vmatpush.xpose.msra.mxu0 0.0
      %1297 = vmatpush.xpose.msra.mxu0 0.0
      %1298 = vmatpush.xpose.msra.mxu0 0.0
      %1299 = vmatpush.xpose.msra.mxu0 0.0
      %1300 = vmatpush.xpose.msra.mxu0 0.0
      %1301 = vmatpush.xpose.msra.mxu0 0.0
      %1302 = vmatpush.xpose.msra.mxu0 0.0
      %1303 = vmatpush.xpose.msra.mxu0 0.0
      %1304 = vmatpush.xpose.msra.mxu0 0.0
      %1305 = vmatpush.xpose.msra.mxu0 %v1289
      %1306 = vmatpush.xpose.msra.mxu0 %v1286
      %1307 = vmatmul.f32.gmra.mxu0 %v1170
      %v1308 = vpop.f32.mrf.mxu0
      %v1309 = vadd.f32 0.0, %v1308
      %1310 = vmatmul.f32.gmra.mxu0 %v1173
      %v1311 = vpop.f32.mrf.mxu0
      %v1312 = vadd.f32 0.0, %v1311
      %1313 = vdwg.mxu0
      %1314 = vmatpush.xpose.msra.mxu0 0.0
      %1315 = vmatpush.xpose.msra.mxu0 0.0
      %1316 = vmatpush.xpose.msra.mxu0 0.0
      %1317 = vmatpush.xpose.msra.mxu0 0.0
      %1318 = vmatpush.xpose.msra.mxu0 0.0
      %1319 = vmatpush.xpose.msra.mxu0 0.0
      %1320 = vmatpush.xpose.msra.mxu0 0.0
      %1321 = vmatpush.xpose.msra.mxu0 0.0
      %1322 = vmatpush.xpose.msra.mxu0 0.0
      %1323 = vmatpush.xpose.msra.mxu0 0.0
      %1324 = vmatpush.xpose.msra.mxu0 0.0
      %1325 = vmatpush.xpose.msra.mxu0 0.0
      %1326 = vmatpush.xpose.msra.mxu0 0.0
      %1327 = vmatpush.xpose.msra.mxu0 0.0
      %1328 = vmatpush.xpose.msra.mxu0 %v1086
      %1329 = vmatpush.xpose.msra.mxu0 %v1083
      %1330 = vmatmul.f32.gmra.mxu0 %v1199
      %v1331 = vpop.f32.mrf.mxu0
      %v1332 = vadd.f32 %v1222, %v1331
      %1333 = vmatmul.f32.gmra.mxu0 %v1202
      %v1334 = vpop.f32.mrf.mxu0
      %v1335 = vadd.f32 %v1225, %v1334
      %1336 = vdwg.mxu0
      %1337 = vmatpush.xpose.msra.mxu0 0.0
      %1338 = vmatpush.xpose.msra.mxu0 0.0
      %1339 = vmatpush.xpose.msra.mxu0 0.0
      %1340 = vmatpush.xpose.msra.mxu0 0.0
      %1341 = vmatpush.xpose.msra.mxu0 0.0
      %1342 = vmatpush.xpose.msra.mxu0 0.0
      %1343 = vmatpush.xpose.msra.mxu0 0.0
      %1344 = vmatpush.xpose.msra.mxu0 0.0
      %1345 = vmatpush.xpose.msra.mxu0 0.0
      %1346 = vmatpush.xpose.msra.mxu0 0.0
      %1347 = vmatpush.xpose.msra.mxu0 0.0
      %1348 = vmatpush.xpose.msra.mxu0 0.0
      %1349 = vmatpush.xpose.msra.mxu0 0.0
      %1350 = vmatpush.xpose.msra.mxu0 0.0
      %1351 = vmatpush.xpose.msra.mxu0 %v1115
      %1352 = vmatpush.xpose.msra.mxu0 %v1112
      %1353 = vmatmul.f32.gmra.mxu0 %v1228
      %v1354 = vpop.f32.mrf.mxu0
      %v1355 = vadd.f32 %v1251, %v1354
      %1356 = vmatmul.f32.gmra.mxu0 %v1231
      %v1357 = vpop.f32.mrf.mxu0
      %v1358 = vadd.f32 %v1254, %v1357
      %1359 = vdwg.mxu0
      %1360 = vmatpush.xpose.msra.mxu0 0.0
      %1361 = vmatpush.xpose.msra.mxu0 0.0
      %1362 = vmatpush.xpose.msra.mxu0 0.0
      %1363 = vmatpush.xpose.msra.mxu0 0.0
      %1364 = vmatpush.xpose.msra.mxu0 0.0
      %1365 = vmatpush.xpose.msra.mxu0 0.0
      %1366 = vmatpush.xpose.msra.mxu0 0.0
      %1367 = vmatpush.xpose.msra.mxu0 0.0
      %1368 = vmatpush.xpose.msra.mxu0 0.0
      %1369 = vmatpush.xpose.msra.mxu0 0.0
      %1370 = vmatpush.xpose.msra.mxu0 0.0
      %1371 = vmatpush.xpose.msra.mxu0 0.0
      %1372 = vmatpush.xpose.msra.mxu0 0.0
      %1373 = vmatpush.xpose.msra.mxu0 0.0
      %1374 = vmatpush.xpose.msra.mxu0 %v1144
      %1375 = vmatpush.xpose.msra.mxu0 %v1141
      %1376 = vmatmul.f32.gmra.mxu0 %v1257
      %v1377 = vpop.f32.mrf.mxu0
      %v1378 = vadd.f32 %v1280, %v1377
      %1379 = vmatmul.f32.gmra.mxu0 %v1260
      %v1380 = vpop.f32.mrf.mxu0
      %v1381 = vadd.f32 %v1283, %v1380
      %1382 = vdwg.mxu0
      %1383 = vmatpush.xpose.msra.mxu0 0.0
      %1384 = vmatpush.xpose.msra.mxu0 0.0
      %1385 = vmatpush.xpose.msra.mxu0 0.0
      %1386 = vmatpush.xpose.msra.mxu0 0.0
      %1387 = vmatpush.xpose.msra.mxu0 0.0
      %1388 = vmatpush.xpose.msra.mxu0 0.0
      %1389 = vmatpush.xpose.msra.mxu0 0.0
      %1390 = vmatpush.xpose.msra.mxu0 0.0
      %1391 = vmatpush.xpose.msra.mxu0 0.0
      %1392 = vmatpush.xpose.msra.mxu0 0.0
      %1393 = vmatpush.xpose.msra.mxu0 0.0
      %1394 = vmatpush.xpose.msra.mxu0 0.0
      %1395 = vmatpush.xpose.msra.mxu0 0.0
      %1396 = vmatpush.xpose.msra.mxu0 0.0
      %1397 = vmatpush.xpose.msra.mxu0 %v1173
      %1398 = vmatpush.xpose.msra.mxu0 %v1170
      %1399 = vmatmul.f32.gmra.mxu0 %v1286
      %v1400 = vpop.f32.mrf.mxu0
      %v1401 = vadd.f32 %v1309, %v1400
      %1402 = vmatmul.f32.gmra.mxu0 %v1289
      %v1403 = vpop.f32.mrf.mxu0
      %v1404 = vadd.f32 %v1312, %v1403
      %1405 = vdwg.mxu0
      %v1406 = vsel %vm256, %v1332, 0.0
      %v1407 = vsel %vm256, %v1355, 0.0
      %v1408 = vadd.f32 %v1406, %v1407
      %v1409 = vsel %vm256, %v1378, 0.0
      %v1410 = vadd.f32 %v1408, %v1409
      %v1411 = vsel %vm256, %v1401, 0.0
      %v1412 = vadd.f32 %v1410, %v1411
      %v1413 = vsel %vm256, %v1335, 0.0
      %v1414 = vsel %vm256, %v1358, 0.0
      %v1415 = vadd.f32 %v1413, %v1414
      %v1416 = vsel %vm256, %v1381, 0.0
      %v1417 = vadd.f32 %v1415, %v1416
      %v1418 = vsel %vm256, %v1404, 0.0
      %v1419 = vadd.f32 %v1417, %v1418
      %v1420 = vmul.f32 %v1412, 0.5
      %v1421 = vmul.f32 %v1419, 0.5
      %s1422 = scalar_lea.vmem %s187, 32
      %1423 = vst.msk [vmem:[%s1422] sm:$0xff] %vm256, %v1420
      %1424 = vst.msk [vmem:[%s1422 + $0x8] sm:$0xff] %vm256, %v1421
      %v1426 = vsel %vm256, %v228, 0
      %v1429 = vsel %vm256, %v229, 0
      %1431 = vmatpush.msra.mxu0 0.0
      %1432 = vmatpush.msra.mxu0 0.0
      %1433 = vmatpush.msra.mxu0 0.0
      %1434 = vmatpush.msra.mxu0 0.0
      %1435 = vmatpush.msra.mxu0 0.0
      %1436 = vmatpush.msra.mxu0 0.0
      %1437 = vmatpush.msra.mxu0 0.0
      %1438 = vmatpush.msra.mxu0 0.0
      %1439 = vmatpush.msra.mxu0 0.0
      %1440 = vmatpush.msra.mxu0 0.0
      %1441 = vmatpush.msra.mxu0 0.0
      %1442 = vmatpush.msra.mxu0 0.0
      %1443 = vmatpush.msra.mxu0 0.0
      %1444 = vmatpush.msra.mxu0 0.0
      %1445 = vmatpush.msra.mxu0 %v290
      %1446 = vmatpush.msra.mxu0 %v287
      %1447 = vmatmul.f32.gmra.mxu0 %v1426
      %v1448 = vpop.f32.mrf.mxu0
      %v1449 = vadd.f32 0.0, %v1448
      %1450 = vmatmul.f32.gmra.mxu0 %v1429
      %v1451 = vpop.f32.mrf.mxu0
      %v1452 = vadd.f32 0.0, %v1451
      %1453 = vdwg.mxu0
      %v1455 = vsel %vm256, %v230, 0
      %v1458 = vsel %vm256, %v231, 0
      %1460 = vmatpush.msra.mxu0 0.0
      %1461 = vmatpush.msra.mxu0 0.0
      %1462 = vmatpush.msra.mxu0 0.0
      %1463 = vmatpush.msra.mxu0 0.0
      %1464 = vmatpush.msra.mxu0 0.0
      %1465 = vmatpush.msra.mxu0 0.0
      %1466 = vmatpush.msra.mxu0 0.0
      %1467 = vmatpush.msra.mxu0 0.0
      %1468 = vmatpush.msra.mxu0 0.0
      %1469 = vmatpush.msra.mxu0 0.0
      %1470 = vmatpush.msra.mxu0 0.0
      %1471 = vmatpush.msra.mxu0 0.0
      %1472 = vmatpush.msra.mxu0 0.0
      %1473 = vmatpush.msra.mxu0 0.0
      %1474 = vmatpush.msra.mxu0 %v325
      %1475 = vmatpush.msra.mxu0 %v322
      %1476 = vmatmul.f32.gmra.mxu0 %v1455
      %v1477 = vpop.f32.mrf.mxu0
      %v1478 = vadd.f32 0.0, %v1477
      %1479 = vmatmul.f32.gmra.mxu0 %v1458
      %v1480 = vpop.f32.mrf.mxu0
      %v1481 = vadd.f32 0.0, %v1480
      %1482 = vdwg.mxu0
      %v1484 = vsel %vm256, %v232, 0
      %v1487 = vsel %vm256, %v233, 0
      %1489 = vmatpush.msra.mxu0 0.0
      %1490 = vmatpush.msra.mxu0 0.0
      %1491 = vmatpush.msra.mxu0 0.0
      %1492 = vmatpush.msra.mxu0 0.0
      %1493 = vmatpush.msra.mxu0 0.0
      %1494 = vmatpush.msra.mxu0 0.0
      %1495 = vmatpush.msra.mxu0 0.0
      %1496 = vmatpush.msra.mxu0 0.0
      %1497 = vmatpush.msra.mxu0 0.0
      %1498 = vmatpush.msra.mxu0 0.0
      %1499 = vmatpush.msra.mxu0 0.0
      %1500 = vmatpush.msra.mxu0 0.0
      %1501 = vmatpush.msra.mxu0 0.0
      %1502 = vmatpush.msra.mxu0 0.0
      %1503 = vmatpush.msra.mxu0 %v360
      %1504 = vmatpush.msra.mxu0 %v357
      %1505 = vmatmul.f32.gmra.mxu0 %v1484
      %v1506 = vpop.f32.mrf.mxu0
      %v1507 = vadd.f32 0.0, %v1506
      %1508 = vmatmul.f32.gmra.mxu0 %v1487
      %v1509 = vpop.f32.mrf.mxu0
      %v1510 = vadd.f32 0.0, %v1509
      %1511 = vdwg.mxu0
      %v1513 = vsel %vm256, %v234, 0
      %v1516 = vsel %vm256, %v235, 0
      %1518 = vmatpush.msra.mxu0 0.0
      %1519 = vmatpush.msra.mxu0 0.0
      %1520 = vmatpush.msra.mxu0 0.0
      %1521 = vmatpush.msra.mxu0 0.0
      %1522 = vmatpush.msra.mxu0 0.0
      %1523 = vmatpush.msra.mxu0 0.0
      %1524 = vmatpush.msra.mxu0 0.0
      %1525 = vmatpush.msra.mxu0 0.0
      %1526 = vmatpush.msra.mxu0 0.0
      %1527 = vmatpush.msra.mxu0 0.0
      %1528 = vmatpush.msra.mxu0 0.0
      %1529 = vmatpush.msra.mxu0 0.0
      %1530 = vmatpush.msra.mxu0 0.0
      %1531 = vmatpush.msra.mxu0 0.0
      %1532 = vmatpush.msra.mxu0 %v395
      %1533 = vmatpush.msra.mxu0 %v392
      %1534 = vmatmul.f32.gmra.mxu0 %v1513
      %v1535 = vpop.f32.mrf.mxu0
      %v1536 = vadd.f32 0.0, %v1535
      %1537 = vmatmul.f32.gmra.mxu0 %v1516
      %v1538 = vpop.f32.mrf.mxu0
      %v1539 = vadd.f32 0.0, %v1538
      %1540 = vdwg.mxu0
      %v1542 = vsel %vm256, %v1449, 0
      %v1545 = vsel %vm256, %v1452, 0
      %1547 = vmatpush.xpose.msra.mxu0 0.0
      %1548 = vmatpush.xpose.msra.mxu0 0.0
      %1549 = vmatpush.xpose.msra.mxu0 0.0
      %1550 = vmatpush.xpose.msra.mxu0 0.0
      %1551 = vmatpush.xpose.msra.mxu0 0.0
      %1552 = vmatpush.xpose.msra.mxu0 0.0
      %1553 = vmatpush.xpose.msra.mxu0 0.0
      %1554 = vmatpush.xpose.msra.mxu0 0.0
      %1555 = vmatpush.xpose.msra.mxu0 0.0
      %1556 = vmatpush.xpose.msra.mxu0 0.0
      %1557 = vmatpush.xpose.msra.mxu0 0.0
      %1558 = vmatpush.xpose.msra.mxu0 0.0
      %1559 = vmatpush.xpose.msra.mxu0 0.0
      %1560 = vmatpush.xpose.msra.mxu0 0.0
      %1561 = vmatpush.xpose.msra.mxu0 %v1545
      %1562 = vmatpush.xpose.msra.mxu0 %v1542
      %1563 = vmatmul.f32.gmra.mxu0 %v1426
      %v1564 = vpop.f32.mrf.mxu0
      %v1565 = vadd.f32 0.0, %v1564
      %1566 = vmatmul.f32.gmra.mxu0 %v1429
      %v1567 = vpop.f32.mrf.mxu0
      %v1568 = vadd.f32 0.0, %v1567
      %1569 = vdwg.mxu0
      %v1571 = vsel %vm256, %v1478, 0
      %v1574 = vsel %vm256, %v1481, 0
      %1576 = vmatpush.xpose.msra.mxu0 0.0
      %1577 = vmatpush.xpose.msra.mxu0 0.0
      %1578 = vmatpush.xpose.msra.mxu0 0.0
      %1579 = vmatpush.xpose.msra.mxu0 0.0
      %1580 = vmatpush.xpose.msra.mxu0 0.0
      %1581 = vmatpush.xpose.msra.mxu0 0.0
      %1582 = vmatpush.xpose.msra.mxu0 0.0
      %1583 = vmatpush.xpose.msra.mxu0 0.0
      %1584 = vmatpush.xpose.msra.mxu0 0.0
      %1585 = vmatpush.xpose.msra.mxu0 0.0
      %1586 = vmatpush.xpose.msra.mxu0 0.0
      %1587 = vmatpush.xpose.msra.mxu0 0.0
      %1588 = vmatpush.xpose.msra.mxu0 0.0
      %1589 = vmatpush.xpose.msra.mxu0 0.0
      %1590 = vmatpush.xpose.msra.mxu0 %v1574
      %1591 = vmatpush.xpose.msra.mxu0 %v1571
      %1592 = vmatmul.f32.gmra.mxu0 %v1455
      %v1593 = vpop.f32.mrf.mxu0
      %v1594 = vadd.f32 0.0, %v1593
      %1595 = vmatmul.f32.gmra.mxu0 %v1458
      %v1596 = vpop.f32.mrf.mxu0
      %v1597 = vadd.f32 0.0, %v1596
      %1598 = vdwg.mxu0
      %v1600 = vsel %vm256, %v1507, 0
      %v1603 = vsel %vm256, %v1510, 0
      %1605 = vmatpush.xpose.msra.mxu0 0.0
      %1606 = vmatpush.xpose.msra.mxu0 0.0
      %1607 = vmatpush.xpose.msra.mxu0 0.0
      %1608 = vmatpush.xpose.msra.mxu0 0.0
      %1609 = vmatpush.xpose.msra.mxu0 0.0
      %1610 = vmatpush.xpose.msra.mxu0 0.0
      %1611 = vmatpush.xpose.msra.mxu0 0.0
      %1612 = vmatpush.xpose.msra.mxu0 0.0
      %1613 = vmatpush.xpose.msra.mxu0 0.0
      %1614 = vmatpush.xpose.msra.mxu0 0.0
      %1615 = vmatpush.xpose.msra.mxu0 0.0
      %1616 = vmatpush.xpose.msra.mxu0 0.0
      %1617 = vmatpush.xpose.msra.mxu0 0.0
      %1618 = vmatpush.xpose.msra.mxu0 0.0
      %1619 = vmatpush.xpose.msra.mxu0 %v1603
      %1620 = vmatpush.xpose.msra.mxu0 %v1600
      %1621 = vmatmul.f32.gmra.mxu0 %v1484
      %v1622 = vpop.f32.mrf.mxu0
      %v1623 = vadd.f32 0.0, %v1622
      %1624 = vmatmul.f32.gmra.mxu0 %v1487
      %v1625 = vpop.f32.mrf.mxu0
      %v1626 = vadd.f32 0.0, %v1625
      %1627 = vdwg.mxu0
      %v1629 = vsel %vm256, %v1536, 0
      %v1632 = vsel %vm256, %v1539, 0
      %1634 = vmatpush.xpose.msra.mxu0 0.0
      %1635 = vmatpush.xpose.msra.mxu0 0.0
      %1636 = vmatpush.xpose.msra.mxu0 0.0
      %1637 = vmatpush.xpose.msra.mxu0 0.0
      %1638 = vmatpush.xpose.msra.mxu0 0.0
      %1639 = vmatpush.xpose.msra.mxu0 0.0
      %1640 = vmatpush.xpose.msra.mxu0 0.0
      %1641 = vmatpush.xpose.msra.mxu0 0.0
      %1642 = vmatpush.xpose.msra.mxu0 0.0
      %1643 = vmatpush.xpose.msra.mxu0 0.0
      %1644 = vmatpush.xpose.msra.mxu0 0.0
      %1645 = vmatpush.xpose.msra.mxu0 0.0
      %1646 = vmatpush.xpose.msra.mxu0 0.0
      %1647 = vmatpush.xpose.msra.mxu0 0.0
      %1648 = vmatpush.xpose.msra.mxu0 %v1632
      %1649 = vmatpush.xpose.msra.mxu0 %v1629
      %1650 = vmatmul.f32.gmra.mxu0 %v1513
      %v1651 = vpop.f32.mrf.mxu0
      %v1652 = vadd.f32 0.0, %v1651
      %1653 = vmatmul.f32.gmra.mxu0 %v1516
      %v1654 = vpop.f32.mrf.mxu0
      %v1655 = vadd.f32 0.0, %v1654
      %1656 = vdwg.mxu0
      %1657 = vmatpush.xpose.msra.mxu0 0.0
      %1658 = vmatpush.xpose.msra.mxu0 0.0
      %1659 = vmatpush.xpose.msra.mxu0 0.0
      %1660 = vmatpush.xpose.msra.mxu0 0.0
      %1661 = vmatpush.xpose.msra.mxu0 0.0
      %1662 = vmatpush.xpose.msra.mxu0 0.0
      %1663 = vmatpush.xpose.msra.mxu0 0.0
      %1664 = vmatpush.xpose.msra.mxu0 0.0
      %1665 = vmatpush.xpose.msra.mxu0 0.0
      %1666 = vmatpush.xpose.msra.mxu0 0.0
      %1667 = vmatpush.xpose.msra.mxu0 0.0
      %1668 = vmatpush.xpose.msra.mxu0 0.0
      %1669 = vmatpush.xpose.msra.mxu0 0.0
      %1670 = vmatpush.xpose.msra.mxu0 0.0
      %1671 = vmatpush.xpose.msra.mxu0 %v1429
      %1672 = vmatpush.xpose.msra.mxu0 %v1426
      %1673 = vmatmul.f32.gmra.mxu0 %v1542
      %v1674 = vpop.f32.mrf.mxu0
      %v1675 = vadd.f32 %v1565, %v1674
      %1676 = vmatmul.f32.gmra.mxu0 %v1545
      %v1677 = vpop.f32.mrf.mxu0
      %v1678 = vadd.f32 %v1568, %v1677
      %1679 = vdwg.mxu0
      %1680 = vmatpush.xpose.msra.mxu0 0.0
      %1681 = vmatpush.xpose.msra.mxu0 0.0
      %1682 = vmatpush.xpose.msra.mxu0 0.0
      %1683 = vmatpush.xpose.msra.mxu0 0.0
      %1684 = vmatpush.xpose.msra.mxu0 0.0
      %1685 = vmatpush.xpose.msra.mxu0 0.0
      %1686 = vmatpush.xpose.msra.mxu0 0.0
      %1687 = vmatpush.xpose.msra.mxu0 0.0
      %1688 = vmatpush.xpose.msra.mxu0 0.0
      %1689 = vmatpush.xpose.msra.mxu0 0.0
      %1690 = vmatpush.xpose.msra.mxu0 0.0
      %1691 = vmatpush.xpose.msra.mxu0 0.0
      %1692 = vmatpush.xpose.msra.mxu0 0.0
      %1693 = vmatpush.xpose.msra.mxu0 0.0
      %1694 = vmatpush.xpose.msra.mxu0 %v1458
      %1695 = vmatpush.xpose.msra.mxu0 %v1455
      %1696 = vmatmul.f32.gmra.mxu0 %v1571
      %v1697 = vpop.f32.mrf.mxu0
      %v1698 = vadd.f32 %v1594, %v1697
      %1699 = vmatmul.f32.gmra.mxu0 %v1574
      %v1700 = vpop.f32.mrf.mxu0
      %v1701 = vadd.f32 %v1597, %v1700
      %1702 = vdwg.mxu0
      %1703 = vmatpush.xpose.msra.mxu0 0.0
      %1704 = vmatpush.xpose.msra.mxu0 0.0
      %1705 = vmatpush.xpose.msra.mxu0 0.0
      %1706 = vmatpush.xpose.msra.mxu0 0.0
      %1707 = vmatpush.xpose.msra.mxu0 0.0
      %1708 = vmatpush.xpose.msra.mxu0 0.0
      %1709 = vmatpush.xpose.msra.mxu0 0.0
      %1710 = vmatpush.xpose.msra.mxu0 0.0
      %1711 = vmatpush.xpose.msra.mxu0 0.0
      %1712 = vmatpush.xpose.msra.mxu0 0.0
      %1713 = vmatpush.xpose.msra.mxu0 0.0
      %1714 = vmatpush.xpose.msra.mxu0 0.0
      %1715 = vmatpush.xpose.msra.mxu0 0.0
      %1716 = vmatpush.xpose.msra.mxu0 0.0
      %1717 = vmatpush.xpose.msra.mxu0 %v1487
      %1718 = vmatpush.xpose.msra.mxu0 %v1484
      %1719 = vmatmul.f32.gmra.mxu0 %v1600
      %v1720 = vpop.f32.mrf.mxu0
      %v1721 = vadd.f32 %v1623, %v1720
      %1722 = vmatmul.f32.gmra.mxu0 %v1603
      %v1723 = vpop.f32.mrf.mxu0
      %v1724 = vadd.f32 %v1626, %v1723
      %1725 = vdwg.mxu0
      %1726 = vmatpush.xpose.msra.mxu0 0.0
      %1727 = vmatpush.xpose.msra.mxu0 0.0
      %1728 = vmatpush.xpose.msra.mxu0 0.0
      %1729 = vmatpush.xpose.msra.mxu0 0.0
      %1730 = vmatpush.xpose.msra.mxu0 0.0
      %1731 = vmatpush.xpose.msra.mxu0 0.0
      %1732 = vmatpush.xpose.msra.mxu0 0.0
      %1733 = vmatpush.xpose.msra.mxu0 0.0
      %1734 = vmatpush.xpose.msra.mxu0 0.0
      %1735 = vmatpush.xpose.msra.mxu0 0.0
      %1736 = vmatpush.xpose.msra.mxu0 0.0
      %1737 = vmatpush.xpose.msra.mxu0 0.0
      %1738 = vmatpush.xpose.msra.mxu0 0.0
      %1739 = vmatpush.xpose.msra.mxu0 0.0
      %1740 = vmatpush.xpose.msra.mxu0 %v1516
      %1741 = vmatpush.xpose.msra.mxu0 %v1513
      %1742 = vmatmul.f32.gmra.mxu0 %v1629
      %v1743 = vpop.f32.mrf.mxu0
      %v1744 = vadd.f32 %v1652, %v1743
      %1745 = vmatmul.f32.gmra.mxu0 %v1632
      %v1746 = vpop.f32.mrf.mxu0
      %v1747 = vadd.f32 %v1655, %v1746
      %1748 = vdwg.mxu0
      %v1749 = vsel %vm256, %v1675, 0.0
      %v1750 = vsel %vm256, %v1698, 0.0
      %v1751 = vadd.f32 %v1749, %v1750
      %v1752 = vsel %vm256, %v1721, 0.0
      %v1753 = vadd.f32 %v1751, %v1752
      %v1754 = vsel %vm256, %v1744, 0.0
      %v1755 = vadd.f32 %v1753, %v1754
      %v1756 = vsel %vm256, %v1678, 0.0
      %v1757 = vsel %vm256, %v1701, 0.0
      %v1758 = vadd.f32 %v1756, %v1757
      %v1759 = vsel %vm256, %v1724, 0.0
      %v1760 = vadd.f32 %v1758, %v1759
      %v1761 = vsel %vm256, %v1747, 0.0
      %v1762 = vadd.f32 %v1760, %v1761
      %v1763 = vmul.f32 %v1755, 0.5
      %v1764 = vmul.f32 %v1762, 0.5
      %s1765 = scalar_lea.vmem %s187, 48
      %1766 = vst.msk [vmem:[%s1765] sm:$0xff] %vm256, %v1763
      %1767 = vst.msk [vmem:[%s1765 + $0x8] sm:$0xff] %vm256, %v1764
      %p1768 = scmp.lt.s32.totalorder %s14, 1
      %s1769 = scalar_select %p1768, %s14, 1
      %s1770 = smul.addr %s1769, 8
      %s1771 = smul.addr %s1770, 8
      %s1772 = scalar_lea.vmem %s3, %s1771
      // Predicated region
      $region33: #{_lambda_.9} parent=31 // pred_check
        %p1773 = pneg %p105
      $region34: #{_lambda_.9} parent=31 // pred_check_branch
        %1775 = sbr.rel (%p1773) target = $region36
      $region35: #{_lambda_.9} parent=31 // pred_region
        _
      $region36: #{_lambda_.9} parent=31 // pred_fallthru
        _
    $region32: #{_lambda_.9} parent=5 // pred_fallthru
      _
    %p1776 = scmp.le.s32.totalorder 2, %s9
    // Predicated region
    $region37: #{_lambda_.9} parent=5 // pred_check
      %p1777 = pneg %p1776
    $region38: #{_lambda_.9} parent=5 // pred_check_branch
      %1779 = sbr.rel (%p1777) target = $region40
    $region39: #{_lambda_.9} parent=5 // pred_region
      %s1780 = ssub.s32 %s9, 2
      // Predicated region
      $region41: #{_lambda_.9} parent=39 // pred_check
        %p1781 = pneg %p111
      $region42: #{_lambda_.9} parent=39 // pred_check_branch
        %1783 = sbr.rel (%p1781) target = $region44
      $region43: #{_lambda_.9} parent=39 // pred_region
        %p1784 = scmp.lt.s32.totalorder %s15, 1
        %s1785 = scalar_select %p1784, %s15, 1
        %s1786 = smul.addr %s1785, 8
        %s1787 = smul.addr %s1786, 8
        %s1788 = scalar_lea.vmem %s3, %s1787
      $region44: #{_lambda_.9} parent=39 // pred_fallthru
        _
    $region40: #{_lambda_.9} parent=5 // pred_fallthru
      _
  $region6: #{_lambda_.9} parent=0 // loop_footer
    %s13 = sadd.s32 1, %s9
  $region7: #{_lambda_.9} parent=0 // loop_footer_branch
    %8 = sbr.rel target = $region3
  $region8: #{_lambda_.9} parent=0 // loop_exit
    _

// kernel: _lambda_.12
$region0: #{_lambda_.12}
  #allocation0 [shape = 'u32[]', space=smem, size = 0x4, offset = 0x4, fixed_abs, tag = 'smem constant byte address 0x4 - core index']
  #allocation1 [shape = 'u32[72,128]{1,0:T(1,128)}', space=vmem, size = 0x9000, scoped, tag = 'internal scratch']
  %s0 = inlined_call_operand.vmem [shape: f32[8,16,16], index: 0, kind: input, shape index: {}]
  %s1 = inlined_call_operand.vmem [shape: f32[8,1,16], index: 1, kind: input, shape index: {}]
  %s2 = inlined_call_operand.vmem [shape: f32[8,16,16], index: 2, kind: input, shape index: {}]
  %s3 = inlined_call_operand.vmem [shape: f32[8,16,16], index: 3, kind: output, shape index: {}]
  %s4 = sld [smem:[#allocation0]]
  $region45: #{_lambda_.12} parent=0
    _
  %s6 = ssub.s32 1, %s4
  %s7 = scalar_select 0, %s6, %s4
  loop: start=0, step=1, limit=4
  $region2: #{_lambda_.12} parent=0 // loop_pre_header
    _
  $region3: #{_lambda_.12} parent=0 // loop_header
    %s9 = sphi 0, %s13
    %p10 = scmp.ge.s32.totalorder %s9, 4
    %s19 = sphi 0, %s21
    %s22 = sphi 0, %s19
    %s23 = sphi 0, %s22
    %s39 = sphi 0, %s23
    %s45 = sphi 0, %s47
    %s48 = sphi 0, %s45
    %s49 = sphi 0, %s48
    %s65 = sphi 0, %s49
    %s71 = sphi 0, %s73
    %s74 = sphi 0, %s71
    %s75 = sphi 0, %s74
    %s91 = sphi 0, %s75
    %s97 = sphi 0, %s99
    %s100 = sphi 0, %s97
    %s101 = sphi 0, %s100
    %s117 = sphi 0, %s101
  $region4: #{_lambda_.12} parent=0 // loop_header_branch
    %12 = sbr.rel (%p10) target = $region8
  $region5: #{_lambda_.12} parent=0 // loop_body
    %s14 = ssub.s32 %s9, 1
    %s15 = ssub.s32 %s9, 2
    %s16 = sadd.s32 %s9, 1
    %s17 = ssub.s32 %s9, %s16
    %p18 = scmp.eq.s32.totalorder %s17, 0
    %s20 = sadd.s32 %s19, 1
    %s21 = scalar_select %p18, %s19, %s20
    %p24 = pneg %p18
    %p25 = scmp.eq.s32.totalorder %s9, 1
    %p26 = por %p24, %p25
    %p27 = scmp.ne.s32.totalorder %s19, %s22
    %p28 = scmp.eq.s32.totalorder %s9, 0
    %p29 = por %p27, %p28
    %p30 = scmp.ne.s32.totalorder %s19, %s22
    %p31 = scmp.eq.s32.totalorder %s14, 1
    %p32 = por %p30, %p31
    %p33 = scmp.ne.s32.totalorder %s22, %s23
    %p34 = scmp.eq.s32.totalorder %s14, 0
    %p35 = por %p33, %p34
    %p36 = scmp.ne.s32.totalorder %s22, %s23
    %p37 = scmp.eq.s32.totalorder %s15, 1
    %p38 = por %p36, %p37
    %p40 = scmp.ne.s32.totalorder %s23, %s39
    %p41 = scmp.eq.s32.totalorder %s15, 0
    %p42 = por %p40, %p41
    %s43 = ssub.s32 %s9, %s16
    %p44 = scmp.eq.s32.totalorder %s43, 0
    %s46 = sadd.s32 %s45, 1
    %s47 = scalar_select %p44, %s45, %s46
    %p50 = pneg %p44
    %p51 = scmp.eq.s32.totalorder %s9, 1
    %p52 = por %p50, %p51
    %p53 = scmp.ne.s32.totalorder %s45, %s48
    %p54 = scmp.eq.s32.totalorder %s9, 0
    %p55 = por %p53, %p54
    %p56 = scmp.ne.s32.totalorder %s45, %s48
    %p57 = scmp.eq.s32.totalorder %s14, 1
    %p58 = por %p56, %p57
    %p59 = scmp.ne.s32.totalorder %s48, %s49
    %p60 = scmp.eq.s32.totalorder %s14, 0
    %p61 = por %p59, %p60
    %p62 = scmp.ne.s32.totalorder %s48, %s49
    %p63 = scmp.eq.s32.totalorder %s15, 1
    %p64 = por %p62, %p63
    %p66 = scmp.ne.s32.totalorder %s49, %s65
    %p67 = scmp.eq.s32.totalorder %s15, 0
    %p68 = por %p66, %p67
    %s69 = ssub.s32 %s9, %s16
    %p70 = scmp.eq.s32.totalorder %s69, 0
    %s72 = sadd.s32 %s71, 1
    %s73 = scalar_select %p70, %s71, %s72
    %p76 = pneg %p70
    %p77 = scmp.eq.s32.totalorder %s9, 1
    %p78 = por %p76, %p77
    %p79 = scmp.ne.s32.totalorder %s71, %s74
    %p80 = scmp.eq.s32.totalorder %s9, 0
    %p81 = por %p79, %p80
    %p82 = scmp.ne.s32.totalorder %s71, %s74
    %p83 = scmp.eq.s32.totalorder %s14, 1
    %p84 = por %p82, %p83
    %p85 = scmp.ne.s32.totalorder %s74, %s75
    %p86 = scmp.eq.s32.totalorder %s14, 0
    %p87 = por %p85, %p86
    %p88 = scmp.ne.s32.totalorder %s74, %s75
    %p89 = scmp.eq.s32.totalorder %s15, 1
    %p90 = por %p88, %p89
    %p92 = scmp.ne.s32.totalorder %s75, %s91
    %p93 = scmp.eq.s32.totalorder %s15, 0
    %p94 = por %p92, %p93
    %s95 = ssub.s32 %s9, %s16
    %p96 = scmp.eq.s32.totalorder %s95, 0
    %s98 = sadd.s32 %s97, 1
    %s99 = scalar_select %p96, %s97, %s98
    %p102 = pneg %p96
    %p103 = scmp.eq.s32.totalorder %s9, 1
    %p104 = por %p102, %p103
    %p105 = scmp.ne.s32.totalorder %s97, %s100
    %p106 = scmp.eq.s32.totalorder %s9, 0
    %p107 = por %p105, %p106
    %p108 = scmp.ne.s32.totalorder %s97, %s100
    %p109 = scmp.eq.s32.totalorder %s14, 1
    %p110 = por %p108, %p109
    %p111 = scmp.ne.s32.totalorder %s100, %s101
    %p112 = scmp.eq.s32.totalorder %s14, 0
    %p113 = por %p111, %p112
    %p114 = scmp.ne.s32.totalorder %s100, %s101
    %p115 = scmp.eq.s32.totalorder %s15, 1
    %p116 = por %p114, %p115
    %p118 = scmp.ne.s32.totalorder %s101, %s117
    %p119 = scmp.eq.s32.totalorder %s15, 0
    %p120 = por %p118, %p119
    %p121 = scmp.le.s32.totalorder 1, %s9
    %p122 = scmp.lt.s32.totalorder %s9, 3
    %p123 = pnand %p121, %p122
    %p124 = pneg %p123
    // Predicated region
    $region9: #{_lambda_.12} parent=5 // pred_check
      _
    $region10: #{_lambda_.12} parent=5 // pred_check_branch
      %126 = sbr.rel (%p123) target = $region12
    $region11: #{_lambda_.12} parent=5 // pred_region
      %s127 = ssub.s32 %s9, 1
    $region12: #{_lambda_.12} parent=5 // pred_fallthru
      _
    %p128 = scmp.lt.s32.totalorder %s9, 2
    // Predicated region
    $region13: #{_lambda_.12} parent=5 // pred_check
      %p129 = pneg %p128
    $region14: #{_lambda_.12} parent=5 // pred_check_branch
      %131 = sbr.rel (%p129) target = $region16
    $region15: #{_lambda_.12} parent=5 // pred_region
      // Predicated region
      $region17: #{_lambda_.12} parent=15 // pred_check
        %p132 = pneg %p29
      $region18: #{_lambda_.12} parent=15 // pred_check_branch
        %134 = sbr.rel (%p132) target = $region20
      $region19: #{_lambda_.12} parent=15 // pred_region
        %s135 = smul.u32 4, %s9
        %p136 = scmp.lt.s32.totalorder %s135, 7
        %s137 = scalar_select %p136, %s135, 7
        %s138 = smul.addr %s137, 2
        %s139 = smul.addr %s138, 8
        %s140 = scalar_lea.vmem %s0, %s139
        %s141 = smul.u32 4, %s9
      $region20: #{_lambda_.12} parent=15 // pred_fallthru
        _
      // Predicated region
      $region21: #{_lambda_.12} parent=15 // pred_check
        %p142 = pneg %p55
      $region22: #{_lambda_.12} parent=15 // pred_check_branch
        %144 = sbr.rel (%p142) target = $region24
      $region23: #{_lambda_.12} parent=15 // pred_region
        %s145 = smul.u32 4, %s9
        %p146 = scmp.lt.s32.totalorder %s145, 7
        %s147 = scalar_select %p146, %s145, 7
        %s148 = scalar_lea.vmem %s1, %s147
        %s149 = smul.u32 4, %s9
      $region24: #{_lambda_.12} parent=15 // pred_fallthru
        _
      // Predicated region
      $region25: #{_lambda_.12} parent=15 // pred_check
        %p150 = pneg %p81
      $region26: #{_lambda_.12} parent=15 // pred_check_branch
        %152 = sbr.rel (%p150) target = $region28
      $region27: #{_lambda_.12} parent=15 // pred_region
        %s153 = smul.u32 4, %s9
        %p154 = scmp.lt.s32.totalorder %s153, 7
        %s155 = scalar_select %p154, %s153, 7
        %s156 = smul.addr %s155, 2
        %s157 = smul.addr %s156, 8
        %s158 = scalar_lea.vmem %s2, %s157
        %s159 = smul.u32 4, %s9
      $region28: #{_lambda_.12} parent=15 // pred_fallthru
        _
    $region16: #{_lambda_.12} parent=5 // pred_fallthru
      _
    %p160 = scmp.le.s32.totalorder 1, %s9
    %p161 = scmp.lt.s32.totalorder %s9, 3
    %p162 = pnand %p160, %p161
    %p163 = pneg %p162
    // Predicated region
    $region29: #{_lambda_.12} parent=5 // pred_check
      _
    $region30: #{_lambda_.12} parent=5 // pred_check_branch
      %165 = sbr.rel (%p162) target = $region32
    $region31: #{_lambda_.12} parent=5 // pred_region
      %s166 = ssub.s32 %s9, 1
      %s167 = smul.u32 4, %s14
      %p168 = scmp.lt.s32.totalorder %s167, 7
      %s169 = scalar_select %p168, %s167, 7
      %s170 = smul.addr %s169, 2
      %s171 = smul.addr %s170, 8
      %s172 = scalar_lea.vmem %s0, %s171
      %p173 = pneg %p35
      %p174 = pneg %p32
      %s175 = smul.u32 4, %s14
      %p176 = scmp.lt.s32.totalorder %s175, 7
      %s177 = scalar_select %p176, %s175, 7
      %s178 = scalar_lea.vmem %s1, %s177
      %p179 = pneg %p61
      %p180 = pneg %p58
      %s181 = smul.u32 4, %s14
      %p182 = scmp.lt.s32.totalorder %s181, 7
      %s183 = scalar_select %p182, %s181, 7
      %s184 = smul.addr %s183, 2
      %s185 = smul.addr %s184, 8
      %s186 = scalar_lea.vmem %s2, %s185
      %p187 = pneg %p87
      %p188 = pneg %p84
      %p189 = pneg %p113
      %p190 = pneg %p110
      %s191 = smul.u32 4, %s14
      %p192 = scmp.lt.s32.totalorder %s191, 7
      %s193 = scalar_select %p192, %s191, 7
      %s194 = smul.addr %s193, 2
      %s195 = smul.addr %s194, 8
      %s196 = scalar_lea.vmem %s3, %s195
      %s197 = smul.u32 4, %s14
      %p198 = scmp.lt.s32.totalorder %s197, 7
      %s199 = scalar_select %p198, %s197, 7
      %s200 = smul.addr %s199, 2
      %s201 = smul.addr %s200, 8
      %s202 = scalar_lea.vmem %s0, %s201
      %s203 = smul.u32 4, %s14
      %s204 = smul.u32 4, %s14
      %p205 = scmp.lt.s32.totalorder %s204, 7
      %s206 = scalar_select %p205, %s204, 7
      %s207 = scalar_lea.vmem %s1, %s206
      %s208 = smul.u32 4, %s14
      %s209 = smul.u32 4, %s14
      %p210 = scmp.lt.s32.totalorder %s209, 7
      %s211 = scalar_select %p210, %s209, 7
      %s212 = smul.addr %s211, 2
      %s213 = smul.addr %s212, 8
      %s214 = scalar_lea.vmem %s2, %s213
      %s215 = smul.u32 4, %s14
      %s216 = smul.u32 4, %s14
      %p217 = scmp.lt.s32.totalorder %s216, 7
      %s218 = scalar_select %p217, %s216, 7
      %s219 = smul.addr %s218, 2
      %s220 = smul.addr %s219, 8
      %s221 = scalar_lea.vmem %s3, %s220
      %s222 = smul.u32 4, %s14
      %v223 = vld [vmem:[%s202] sm:$0xff]
      %v224 = vld [vmem:[%s202 + $0x8] sm:$0xff]
      %v225 = vld [vmem:[%s202 + $0x10] sm:$0xff]
      %v226 = vld [vmem:[%s202 + $0x18] sm:$0xff]
      %v227 = vld [vmem:[%s202 + $0x20] sm:$0xff]
      %v228 = vld [vmem:[%s202 + $0x28] sm:$0xff]
      %v229 = vld [vmem:[%s202 + $0x30] sm:$0xff]
      %v230 = vld [vmem:[%s202 + $0x38] sm:$0xff]
      %v231 = vld [vmem:[%s207] sm:$0x1]
      %v232 = vld [vmem:[%s207 + $0x1] sm:$0x1]
      %v233 = vld [vmem:[%s207 + $0x2] sm:$0x1]
      %v234 = vld [vmem:[%s207 + $0x3] sm:$0x1]
      %v235 = vmul.f32 %v231, 1.442695
      %v236 = vpow.pop %v235
      %v237 = vmul.f32 %v232, 1.442695
      %v238 = vpow.pop %v237
      %v239 = vmul.f32 %v233, 1.442695
      %v240 = vpow.pop %v239
      %v241 = vmul.f32 %v234, 1.442695
      %v242 = vpow.pop %v241
      %v247 = vperm.slane %v236, 0
      %v248 = vperm.slane %v238, 0
      %v249 = vperm.slane %v240, 0
      %v250 = vperm.slane %v242, 0
      %v255 = vmul.f32 %v223, %v247
      %v256 = vmul.f32 %v224, %v247
      %v257 = vmul.f32 %v225, %v248
      %v258 = vmul.f32 %v226, %v248
      %v259 = vmul.f32 %v227, %v249
      %v260 = vmul.f32 %v228, %v249
      %v261 = vmul.f32 %v229, %v250
      %v262 = vmul.f32 %v230, %v250
      %vm263 = vcmask 130048
      %v265 = vsel %vm263, %v255, 0
      %v268 = vsel %vm263, %v256, 0
      %v271 = vsel %vm263, %v223, 0
      %v274 = vsel %vm263, %v224, 0
      %276 = vmatpush.xpose.msra.mxu0 0.0
      %277 = vmatpush.xpose.msra.mxu0 0.0
      %278 = vmatpush.xpose.msra.mxu0 0.0
      %279 = vmatpush.xpose.msra.mxu0 0.0
      %280 = vmatpush.xpose.msra.mxu0 0.0
      %281 = vmatpush.xpose.msra.mxu0 0.0
      %282 = vmatpush.xpose.msra.mxu0 0.0
      %283 = vmatpush.xpose.msra.mxu0 0.0
      %284 = vmatpush.xpose.msra.mxu0 0.0
      %285 = vmatpush.xpose.msra.mxu0 0.0
      %286 = vmatpush.xpose.msra.mxu0 0.0
      %287 = vmatpush.xpose.msra.mxu0 0.0
      %288 = vmatpush.xpose.msra.mxu0 0.0
      %289 = vmatpush.xpose.msra.mxu0 0.0
      %290 = vmatpush.xpose.msra.mxu0 %v274
      %291 = vmatpush.xpose.msra.mxu0 %v271
      %292 = vmatmul.f32.gmra.mxu0 %v265
      %v293 = vpop.f32.mrf.mxu0
      %v294 = vadd.f32 0.0, %v293
      %295 = vmatmul.f32.gmra.mxu0 %v268
      %v296 = vpop.f32.mrf.mxu0
      %v297 = vadd.f32 0.0, %v296
      %298 = vdwg.mxu0
      %v300 = vsel %vm263, %v257, 0
      %v303 = vsel %vm263, %v258, 0
      %v306 = vsel %vm263, %v225, 0
      %v309 = vsel %vm263, %v226, 0
      %311 = vmatpush.xpose.msra.mxu0 0.0
      %312 = vmatpush.xpose.msra.mxu0 0.0
      %313 = vmatpush.xpose.msra.mxu0 0.0
      %314 = vmatpush.xpose.msra.mxu0 0.0
      %315 = vmatpush.xpose.msra.mxu0 0.0
      %316 = vmatpush.xpose.msra.mxu0 0.0
      %317 = vmatpush.xpose.msra.mxu0 0.0
      %318 = vmatpush.xpose.msra.mxu0 0.0
      %319 = vmatpush.xpose.msra.mxu0 0.0
      %320 = vmatpush.xpose.msra.mxu0 0.0
      %321 = vmatpush.xpose.msra.mxu0 0.0
      %322 = vmatpush.xpose.msra.mxu0 0.0
      %323 = vmatpush.xpose.msra.mxu0 0.0
      %324 = vmatpush.xpose.msra.mxu0 0.0
      %325 = vmatpush.xpose.msra.mxu0 %v309
      %326 = vmatpush.xpose.msra.mxu0 %v306
      %327 = vmatmul.f32.gmra.mxu0 %v300
      %v328 = vpop.f32.mrf.mxu0
      %v329 = vadd.f32 0.0, %v328
      %330 = vmatmul.f32.gmra.mxu0 %v303
      %v331 = vpop.f32.mrf.mxu0
      %v332 = vadd.f32 0.0, %v331
      %333 = vdwg.mxu0
      %v335 = vsel %vm263, %v259, 0
      %v338 = vsel %vm263, %v260, 0
      %v341 = vsel %vm263, %v227, 0
      %v344 = vsel %vm263, %v228, 0
      %346 = vmatpush.xpose.msra.mxu0 0.0
      %347 = vmatpush.xpose.msra.mxu0 0.0
      %348 = vmatpush.xpose.msra.mxu0 0.0
      %349 = vmatpush.xpose.msra.mxu0 0.0
      %350 = vmatpush.xpose.msra.mxu0 0.0
      %351 = vmatpush.xpose.msra.mxu0 0.0
      %352 = vmatpush.xpose.msra.mxu0 0.0
      %353 = vmatpush.xpose.msra.mxu0 0.0
      %354 = vmatpush.xpose.msra.mxu0 0.0
      %355 = vmatpush.xpose.msra.mxu0 0.0
      %356 = vmatpush.xpose.msra.mxu0 0.0
      %357 = vmatpush.xpose.msra.mxu0 0.0
      %358 = vmatpush.xpose.msra.mxu0 0.0
      %359 = vmatpush.xpose.msra.mxu0 0.0
      %360 = vmatpush.xpose.msra.mxu0 %v344
      %361 = vmatpush.xpose.msra.mxu0 %v341
      %362 = vmatmul.f32.gmra.mxu0 %v335
      %v363 = vpop.f32.mrf.mxu0
      %v364 = vadd.f32 0.0, %v363
      %365 = vmatmul.f32.gmra.mxu0 %v338
      %v366 = vpop.f32.mrf.mxu0
      %v367 = vadd.f32 0.0, %v366
      %368 = vdwg.mxu0
      %v370 = vsel %vm263, %v261, 0
      %v373 = vsel %vm263, %v262, 0
      %v376 = vsel %vm263, %v229, 0
      %v379 = vsel %vm263, %v230, 0
      %381 = vmatpush.xpose.msra.mxu0 0.0
      %382 = vmatpush.xpose.msra.mxu0 0.0
      %383 = vmatpush.xpose.msra.mxu0 0.0
      %384 = vmatpush.xpose.msra.mxu0 0.0
      %385 = vmatpush.xpose.msra.mxu0 0.0
      %386 = vmatpush.xpose.msra.mxu0 0.0
      %387 = vmatpush.xpose.msra.mxu0 0.0
      %388 = vmatpush.xpose.msra.mxu0 0.0
      %389 = vmatpush.xpose.msra.mxu0 0.0
      %390 = vmatpush.xpose.msra.mxu0 0.0
      %391 = vmatpush.xpose.msra.mxu0 0.0
      %392 = vmatpush.xpose.msra.mxu0 0.0
      %393 = vmatpush.xpose.msra.mxu0 0.0
      %394 = vmatpush.xpose.msra.mxu0 0.0
      %395 = vmatpush.xpose.msra.mxu0 %v379
      %396 = vmatpush.xpose.msra.mxu0 %v376
      %397 = vmatmul.f32.gmra.mxu0 %v370
      %v398 = vpop.f32.mrf.mxu0
      %v399 = vadd.f32 0.0, %v398
      %400 = vmatmul.f32.gmra.mxu0 %v373
      %v401 = vpop.f32.mrf.mxu0
      %v402 = vadd.f32 0.0, %v401
      %403 = vdwg.mxu0
      %v404 = vld [vmem:[%s214] sm:$0xff]
      %v405 = vld [vmem:[%s214 + $0x8] sm:$0xff]
      %v406 = vld [vmem:[%s214 + $0x10] sm:$0xff]
      %v407 = vld [vmem:[%s214 + $0x18] sm:$0xff]
      %v408 = vld [vmem:[%s214 + $0x20] sm:$0xff]
      %v409 = vld [vmem:[%s214 + $0x28] sm:$0xff]
      %v410 = vld [vmem:[%s214 + $0x30] sm:$0xff]
      %v411 = vld [vmem:[%s214 + $0x38] sm:$0xff]
      %v413 = vsel %vm263, %v404, 0
      %v416 = vsel %vm263, %v405, 0
      %418 = vmatpush.msra.mxu0 0.0
      %419 = vmatpush.msra.mxu0 0.0
      %420 = vmatpush.msra.mxu0 0.0
      %421 = vmatpush.msra.mxu0 0.0
      %422 = vmatpush.msra.mxu0 0.0
      %423 = vmatpush.msra.mxu0 0.0
      %424 = vmatpush.msra.mxu0 0.0
      %425 = vmatpush.msra.mxu0 0.0
      %426 = vmatpush.msra.mxu0 0.0
      %427 = vmatpush.msra.mxu0 0.0
      %428 = vmatpush.msra.mxu0 0.0
      %429 = vmatpush.msra.mxu0 0.0
      %430 = vmatpush.msra.mxu0 0.0
      %431 = vmatpush.msra.mxu0 0.0
      %432 = vmatpush.msra.mxu0 %v297
      %433 = vmatpush.msra.mxu0 %v294
      %434 = vmatmul.f32.gmra.mxu0 %v413
      %v435 = vpop.f32.mrf.mxu0
      %v436 = vadd.f32 0.0, %v435
      %437 = vmatmul.f32.gmra.mxu0 %v416
      %v438 = vpop.f32.mrf.mxu0
      %v439 = vadd.f32 0.0, %v438
      %440 = vdwg.mxu0
      %v442 = vsel %vm263, %v406, 0
      %v445 = vsel %vm263, %v407, 0
      %447 = vmatpush.msra.mxu0 0.0
      %448 = vmatpush.msra.mxu0 0.0
      %449 = vmatpush.msra.mxu0 0.0
      %450 = vmatpush.msra.mxu0 0.0
      %451 = vmatpush.msra.mxu0 0.0
      %452 = vmatpush.msra.mxu0 0.0
      %453 = vmatpush.msra.mxu0 0.0
      %454 = vmatpush.msra.mxu0 0.0
      %455 = vmatpush.msra.mxu0 0.0
      %456 = vmatpush.msra.mxu0 0.0
      %457 = vmatpush.msra.mxu0 0.0
      %458 = vmatpush.msra.mxu0 0.0
      %459 = vmatpush.msra.mxu0 0.0
      %460 = vmatpush.msra.mxu0 0.0
      %461 = vmatpush.msra.mxu0 %v332
      %462 = vmatpush.msra.mxu0 %v329
      %463 = vmatmul.f32.gmra.mxu0 %v442
      %v464 = vpop.f32.mrf.mxu0
      %v465 = vadd.f32 0.0, %v464
      %466 = vmatmul.f32.gmra.mxu0 %v445
      %v467 = vpop.f32.mrf.mxu0
      %v468 = vadd.f32 0.0, %v467
      %469 = vdwg.mxu0
      %v471 = vsel %vm263, %v408, 0
      %v474 = vsel %vm263, %v409, 0
      %476 = vmatpush.msra.mxu0 0.0
      %477 = vmatpush.msra.mxu0 0.0
      %478 = vmatpush.msra.mxu0 0.0
      %479 = vmatpush.msra.mxu0 0.0
      %480 = vmatpush.msra.mxu0 0.0
      %481 = vmatpush.msra.mxu0 0.0
      %482 = vmatpush.msra.mxu0 0.0
      %483 = vmatpush.msra.mxu0 0.0
      %484 = vmatpush.msra.mxu0 0.0
      %485 = vmatpush.msra.mxu0 0.0
      %486 = vmatpush.msra.mxu0 0.0
      %487 = vmatpush.msra.mxu0 0.0
      %488 = vmatpush.msra.mxu0 0.0
      %489 = vmatpush.msra.mxu0 0.0
      %490 = vmatpush.msra.mxu0 %v367
      %491 = vmatpush.msra.mxu0 %v364
      %492 = vmatmul.f32.gmra.mxu0 %v471
      %v493 = vpop.f32.mrf.mxu0
      %v494 = vadd.f32 0.0, %v493
      %495 = vmatmul.f32.gmra.mxu0 %v474
      %v496 = vpop.f32.mrf.mxu0
      %v497 = vadd.f32 0.0, %v496
      %498 = vdwg.mxu0
      %v500 = vsel %vm263, %v410, 0
      %v503 = vsel %vm263, %v411, 0
      %505 = vmatpush.msra.mxu0 0.0
      %506 = vmatpush.msra.mxu0 0.0
      %507 = vmatpush.msra.mxu0 0.0
      %508 = vmatpush.msra.mxu0 0.0
      %509 = vmatpush.msra.mxu0 0.0
      %510 = vmatpush.msra.mxu0 0.0
      %511 = vmatpush.msra.mxu0 0.0
      %512 = vmatpush.msra.mxu0 0.0
      %513 = vmatpush.msra.mxu0 0.0
      %514 = vmatpush.msra.mxu0 0.0
      %515 = vmatpush.msra.mxu0 0.0
      %516 = vmatpush.msra.mxu0 0.0
      %517 = vmatpush.msra.mxu0 0.0
      %518 = vmatpush.msra.mxu0 0.0
      %519 = vmatpush.msra.mxu0 %v402
      %520 = vmatpush.msra.mxu0 %v399
      %521 = vmatmul.f32.gmra.mxu0 %v500
      %v522 = vpop.f32.mrf.mxu0
      %v523 = vadd.f32 0.0, %v522
      %524 = vmatmul.f32.gmra.mxu0 %v503
      %v525 = vpop.f32.mrf.mxu0
      %v526 = vadd.f32 0.0, %v525
      %527 = vdwg.mxu0
      %v529 = vsel %vm263, %v436, 0
      %v532 = vsel %vm263, %v439, 0
      %534 = vmatpush.xpose.msra.mxu0 0.0
      %535 = vmatpush.xpose.msra.mxu0 0.0
      %536 = vmatpush.xpose.msra.mxu0 0.0
      %537 = vmatpush.xpose.msra.mxu0 0.0
      %538 = vmatpush.xpose.msra.mxu0 0.0
      %539 = vmatpush.xpose.msra.mxu0 0.0
      %540 = vmatpush.xpose.msra.mxu0 0.0
      %541 = vmatpush.xpose.msra.mxu0 0.0
      %542 = vmatpush.xpose.msra.mxu0 0.0
      %543 = vmatpush.xpose.msra.mxu0 0.0
      %544 = vmatpush.xpose.msra.mxu0 0.0
      %545 = vmatpush.xpose.msra.mxu0 0.0
      %546 = vmatpush.xpose.msra.mxu0 0.0
      %547 = vmatpush.xpose.msra.mxu0 0.0
      %548 = vmatpush.xpose.msra.mxu0 %v532
      %549 = vmatpush.xpose.msra.mxu0 %v529
      %550 = vmatmul.f32.gmra.mxu0 %v413
      %v551 = vpop.f32.mrf.mxu0
      %v552 = vadd.f32 0.0, %v551
      %553 = vmatmul.f32.gmra.mxu0 %v416
      %v554 = vpop.f32.mrf.mxu0
      %v555 = vadd.f32 0.0, %v554
      %556 = vdwg.mxu0
      %v558 = vsel %vm263, %v465, 0
      %v561 = vsel %vm263, %v468, 0
      %563 = vmatpush.xpose.msra.mxu0 0.0
      %564 = vmatpush.xpose.msra.mxu0 0.0
      %565 = vmatpush.xpose.msra.mxu0 0.0
      %566 = vmatpush.xpose.msra.mxu0 0.0
      %567 = vmatpush.xpose.msra.mxu0 0.0
      %568 = vmatpush.xpose.msra.mxu0 0.0
      %569 = vmatpush.xpose.msra.mxu0 0.0
      %570 = vmatpush.xpose.msra.mxu0 0.0
      %571 = vmatpush.xpose.msra.mxu0 0.0
      %572 = vmatpush.xpose.msra.mxu0 0.0
      %573 = vmatpush.xpose.msra.mxu0 0.0
      %574 = vmatpush.xpose.msra.mxu0 0.0
      %575 = vmatpush.xpose.msra.mxu0 0.0
      %576 = vmatpush.xpose.msra.mxu0 0.0
      %577 = vmatpush.xpose.msra.mxu0 %v561
      %578 = vmatpush.xpose.msra.mxu0 %v558
      %579 = vmatmul.f32.gmra.mxu0 %v442
      %v580 = vpop.f32.mrf.mxu0
      %v581 = vadd.f32 0.0, %v580
      %582 = vmatmul.f32.gmra.mxu0 %v445
      %v583 = vpop.f32.mrf.mxu0
      %v584 = vadd.f32 0.0, %v583
      %585 = vdwg.mxu0
      %v587 = vsel %vm263, %v494, 0
      %v590 = vsel %vm263, %v497, 0
      %592 = vmatpush.xpose.msra.mxu0 0.0
      %593 = vmatpush.xpose.msra.mxu0 0.0
      %594 = vmatpush.xpose.msra.mxu0 0.0
      %595 = vmatpush.xpose.msra.mxu0 0.0
      %596 = vmatpush.xpose.msra.mxu0 0.0
      %597 = vmatpush.xpose.msra.mxu0 0.0
      %598 = vmatpush.xpose.msra.mxu0 0.0
      %599 = vmatpush.xpose.msra.mxu0 0.0
      %600 = vmatpush.xpose.msra.mxu0 0.0
      %601 = vmatpush.xpose.msra.mxu0 0.0
      %602 = vmatpush.xpose.msra.mxu0 0.0
      %603 = vmatpush.xpose.msra.mxu0 0.0
      %604 = vmatpush.xpose.msra.mxu0 0.0
      %605 = vmatpush.xpose.msra.mxu0 0.0
      %606 = vmatpush.xpose.msra.mxu0 %v590
      %607 = vmatpush.xpose.msra.mxu0 %v587
      %608 = vmatmul.f32.gmra.mxu0 %v471
      %v609 = vpop.f32.mrf.mxu0
      %v610 = vadd.f32 0.0, %v609
      %611 = vmatmul.f32.gmra.mxu0 %v474
      %v612 = vpop.f32.mrf.mxu0
      %v613 = vadd.f32 0.0, %v612
      %614 = vdwg.mxu0
      %v616 = vsel %vm263, %v523, 0
      %v619 = vsel %vm263, %v526, 0
      %621 = vmatpush.xpose.msra.mxu0 0.0
      %622 = vmatpush.xpose.msra.mxu0 0.0
      %623 = vmatpush.xpose.msra.mxu0 0.0
      %624 = vmatpush.xpose.msra.mxu0 0.0
      %625 = vmatpush.xpose.msra.mxu0 0.0
      %626 = vmatpush.xpose.msra.mxu0 0.0
      %627 = vmatpush.xpose.msra.mxu0 0.0
      %628 = vmatpush.xpose.msra.mxu0 0.0
      %629 = vmatpush.xpose.msra.mxu0 0.0
      %630 = vmatpush.xpose.msra.mxu0 0.0
      %631 = vmatpush.xpose.msra.mxu0 0.0
      %632 = vmatpush.xpose.msra.mxu0 0.0
      %633 = vmatpush.xpose.msra.mxu0 0.0
      %634 = vmatpush.xpose.msra.mxu0 0.0
      %635 = vmatpush.xpose.msra.mxu0 %v619
      %636 = vmatpush.xpose.msra.mxu0 %v616
      %637 = vmatmul.f32.gmra.mxu0 %v500
      %v638 = vpop.f32.mrf.mxu0
      %v639 = vadd.f32 0.0, %v638
      %640 = vmatmul.f32.gmra.mxu0 %v503
      %v641 = vpop.f32.mrf.mxu0
      %v642 = vadd.f32 0.0, %v641
      %643 = vdwg.mxu0
      %644 = vmatpush.xpose.msra.mxu0 0.0
      %645 = vmatpush.xpose.msra.mxu0 0.0
      %646 = vmatpush.xpose.msra.mxu0 0.0
      %647 = vmatpush.xpose.msra.mxu0 0.0
      %648 = vmatpush.xpose.msra.mxu0 0.0
      %649 = vmatpush.xpose.msra.mxu0 0.0
      %650 = vmatpush.xpose.msra.mxu0 0.0
      %651 = vmatpush.xpose.msra.mxu0 0.0
      %652 = vmatpush.xpose.msra.mxu0 0.0
      %653 = vmatpush.xpose.msra.mxu0 0.0
      %654 = vmatpush.xpose.msra.mxu0 0.0
      %655 = vmatpush.xpose.msra.mxu0 0.0
      %656 = vmatpush.xpose.msra.mxu0 0.0
      %657 = vmatpush.xpose.msra.mxu0 0.0
      %658 = vmatpush.xpose.msra.mxu0 %v416
      %659 = vmatpush.xpose.msra.mxu0 %v413
      %660 = vmatmul.f32.gmra.mxu0 %v529
      %v661 = vpop.f32.mrf.mxu0
      %v662 = vadd.f32 %v552, %v661
      %663 = vmatmul.f32.gmra.mxu0 %v532
      %v664 = vpop.f32.mrf.mxu0
      %v665 = vadd.f32 %v555, %v664
      %666 = vdwg.mxu0
      %667 = vmatpush.xpose.msra.mxu0 0.0
      %668 = vmatpush.xpose.msra.mxu0 0.0
      %669 = vmatpush.xpose.msra.mxu0 0.0
      %670 = vmatpush.xpose.msra.mxu0 0.0
      %671 = vmatpush.xpose.msra.mxu0 0.0
      %672 = vmatpush.xpose.msra.mxu0 0.0
      %673 = vmatpush.xpose.msra.mxu0 0.0
      %674 = vmatpush.xpose.msra.mxu0 0.0
      %675 = vmatpush.xpose.msra.mxu0 0.0
      %676 = vmatpush.xpose.msra.mxu0 0.0
      %677 = vmatpush.xpose.msra.mxu0 0.0
      %678 = vmatpush.xpose.msra.mxu0 0.0
      %679 = vmatpush.xpose.msra.mxu0 0.0
      %680 = vmatpush.xpose.msra.mxu0 0.0
      %681 = vmatpush.xpose.msra.mxu0 %v445
      %682 = vmatpush.xpose.msra.mxu0 %v442
      %683 = vmatmul.f32.gmra.mxu0 %v558
      %v684 = vpop.f32.mrf.mxu0
      %v685 = vadd.f32 %v581, %v684
      %686 = vmatmul.f32.gmra.mxu0 %v561
      %v687 = vpop.f32.mrf.mxu0
      %v688 = vadd.f32 %v584, %v687
      %689 = vdwg.mxu0
      %690 = vmatpush.xpose.msra.mxu0 0.0
      %691 = vmatpush.xpose.msra.mxu0 0.0
      %692 = vmatpush.xpose.msra.mxu0 0.0
      %693 = vmatpush.xpose.msra.mxu0 0.0
      %694 = vmatpush.xpose.msra.mxu0 0.0
      %695 = vmatpush.xpose.msra.mxu0 0.0
      %696 = vmatpush.xpose.msra.mxu0 0.0
      %697 = vmatpush.xpose.msra.mxu0 0.0
      %698 = vmatpush.xpose.msra.mxu0 0.0
      %699 = vmatpush.xpose.msra.mxu0 0.0
      %700 = vmatpush.xpose.msra.mxu0 0.0
      %701 = vmatpush.xpose.msra.mxu0 0.0
      %702 = vmatpush.xpose.msra.mxu0 0.0
      %703 = vmatpush.xpose.msra.mxu0 0.0
      %704 = vmatpush.xpose.msra.mxu0 %v474
      %705 = vmatpush.xpose.msra.mxu0 %v471
      %706 = vmatmul.f32.gmra.mxu0 %v587
      %v707 = vpop.f32.mrf.mxu0
      %v708 = vadd.f32 %v610, %v707
      %709 = vmatmul.f32.gmra.mxu0 %v590
      %v710 = vpop.f32.mrf.mxu0
      %v711 = vadd.f32 %v613, %v710
      %712 = vdwg.mxu0
      %713 = vmatpush.xpose.msra.mxu0 0.0
      %714 = vmatpush.xpose.msra.mxu0 0.0
      %715 = vmatpush.xpose.msra.mxu0 0.0
      %716 = vmatpush.xpose.msra.mxu0 0.0
      %717 = vmatpush.xpose.msra.mxu0 0.0
      %718 = vmatpush.xpose.msra.mxu0 0.0
      %719 = vmatpush.xpose.msra.mxu0 0.0
      %720 = vmatpush.xpose.msra.mxu0 0.0
      %721 = vmatpush.xpose.msra.mxu0 0.0
      %722 = vmatpush.xpose.msra.mxu0 0.0
      %723 = vmatpush.xpose.msra.mxu0 0.0
      %724 = vmatpush.xpose.msra.mxu0 0.0
      %725 = vmatpush.xpose.msra.mxu0 0.0
      %726 = vmatpush.xpose.msra.mxu0 0.0
      %727 = vmatpush.xpose.msra.mxu0 %v503
      %728 = vmatpush.xpose.msra.mxu0 %v500
      %729 = vmatmul.f32.gmra.mxu0 %v616
      %v730 = vpop.f32.mrf.mxu0
      %v731 = vadd.f32 %v639, %v730
      %732 = vmatmul.f32.gmra.mxu0 %v619
      %v733 = vpop.f32.mrf.mxu0
      %v734 = vadd.f32 %v642, %v733
      %735 = vdwg.mxu0
      %v736 = vmul.f32 %v662, 0.5
      %v737 = vmul.f32 %v665, 0.5
      %v738 = vmul.f32 %v685, 0.5
      %v739 = vmul.f32 %v688, 0.5
      %v740 = vmul.f32 %v708, 0.5
      %v741 = vmul.f32 %v711, 0.5
      %v742 = vmul.f32 %v731, 0.5
      %v743 = vmul.f32 %v734, 0.5
      %744 = vst.msk [vmem:[%s221] sm:$0xff] %vm263, %v736
      %745 = vst.msk [vmem:[%s221 + $0x8] sm:$0xff] %vm263, %v737
      %746 = vst.msk [vmem:[%s221 + $0x10] sm:$0xff] %vm263, %v738
      %747 = vst.msk [vmem:[%s221 + $0x18] sm:$0xff] %vm263, %v739
      %748 = vst.msk [vmem:[%s221 + $0x20] sm:$0xff] %vm263, %v740
      %749 = vst.msk [vmem:[%s221 + $0x28] sm:$0xff] %vm263, %v741
      %750 = vst.msk [vmem:[%s221 + $0x30] sm:$0xff] %vm263, %v742
      %751 = vst.msk [vmem:[%s221 + $0x38] sm:$0xff] %vm263, %v743
      %s752 = smul.u32 4, %s14
      %p753 = scmp.lt.s32.totalorder %s752, 7
      %s754 = scalar_select %p753, %s752, 7
      %s755 = smul.addr %s754, 2
      %s756 = smul.addr %s755, 8
      %s757 = scalar_lea.vmem %s3, %s756
      // Predicated region
      $region33: #{_lambda_.12} parent=31 // pred_check
        %p758 = pneg %p110
      $region34: #{_lambda_.12} parent=31 // pred_check_branch
        %760 = sbr.rel (%p758) target = $region36
      $region35: #{_lambda_.12} parent=31 // pred_region
        %s761 = smul.u32 4, %s14
      $region36: #{_lambda_.12} parent=31 // pred_fallthru
        _
    $region32: #{_lambda_.12} parent=5 // pred_fallthru
      _
    %p762 = scmp.le.s32.totalorder 2, %s9
    // Predicated region
    $region37: #{_lambda_.12} parent=5 // pred_check
      %p763 = pneg %p762
    $region38: #{_lambda_.12} parent=5 // pred_check_branch
      %765 = sbr.rel (%p763) target = $region40
    $region39: #{_lambda_.12} parent=5 // pred_region
      %s766 = ssub.s32 %s9, 2
      // Predicated region
      $region41: #{_lambda_.12} parent=39 // pred_check
        %p767 = pneg %p116
      $region42: #{_lambda_.12} parent=39 // pred_check_branch
        %769 = sbr.rel (%p767) target = $region44
      $region43: #{_lambda_.12} parent=39 // pred_region
        %s770 = smul.u32 4, %s15
        %p771 = scmp.lt.s32.totalorder %s770, 7
        %s772 = scalar_select %p771, %s770, 7
        %s773 = smul.addr %s772, 2
        %s774 = smul.addr %s773, 8
        %s775 = scalar_lea.vmem %s3, %s774
      $region44: #{_lambda_.12} parent=39 // pred_fallthru
        _
    $region40: #{_lambda_.12} parent=5 // pred_fallthru
      _
  $region6: #{_lambda_.12} parent=0 // loop_footer
    %s13 = sadd.s32 1, %s9
  $region7: #{_lambda_.12} parent=0 // loop_footer_branch
    %8 = sbr.rel target = $region3
  $region8: #{_lambda_.12} parent=0 // loop_exit
    _

</llo_original>
